<compile_context>
chip_gen: v6e
topology: v6e:2x2x1
jax: 0.10.0
libtpu: 0.0.40
codegen_flags: <defaults>
</compile_context>

<pallas_src>
import functools
import math

import jax
import jax.numpy as jnp
from jax.experimental import pallas as pl
from jax.experimental.pallas import tpu as pltpu

# ----------------------------- model config ---------------------------------
VOCAB = 100
HIDDEN = 32          # bert hidden size == args.orig_d_txt
N_LAYERS = 2
N_HEADS = 2
HEAD_DIM = HIDDEN // N_HEADS
INTERMEDIATE = 64
MAX_POS = 64
D_TXT = 16           # args.d_txt
NUM_CLASSES = 3      # args.num_classes
LN_EPS = 1e-12


# ----------------------------- fused kernel ----------------------------------
def _ln(x, g, b):
    mu = jnp.mean(x, axis=-1, keepdims=True)
    var = jnp.mean(jnp.square(x - mu), axis=-1, keepdims=True)
    return (x - mu) * jax.lax.rsqrt(var + LN_EPS) * g + b


def _fused_forward_kernel(
    emb_ref, bias_ref,
    emb_ln_g_ref, emb_ln_b_ref,
    w_qkv_ref, b_qkv_ref, w_out_ref, b_out_ref,
    ln1_g_ref, ln1_b_ref,
    w_ffn1_ref, b_ffn1_ref, w_ffn2_ref, b_ffn2_ref,
    ln2_g_ref, ln2_b_ref,
    proj_w_ref, proj_b_ref, cls_w_ref, cls_b_ref,
    feats_ref, preds_ref,
):
    """One grid step == one sequence of notes (all N notes, all layers, head)."""
    n_layers, n_heads, _, _, head_dim = w_qkv_ref.shape
    n_notes, seq_len = bias_ref.shape
    rows = n_notes * seq_len
    scale = 1.0 / math.sqrt(head_dim)

    bias3 = bias_ref[...][:, None, :]            # (n_notes, 1, seq_len) additive

    # embedding layernorm
    h = _ln(emb_ref[...], emb_ln_g_ref[...], emb_ln_b_ref[...])   # (rows, H)

    for lp in range(n_layers):
        # ---- multi-head self-attention (per-head weight slabs, no lane slicing)
        attn_out = b_out_ref[lp]                 # (1, H) broadcasts over rows
        for hd in range(n_heads):
            q = (jnp.dot(h, w_qkv_ref[lp, hd, 0],
                         preferred_element_type=jnp.float32)
                 + b_qkv_ref[lp, hd, 0]).reshape(n_notes, seq_len, head_dim)
            k = (jnp.dot(h, w_qkv_ref[lp, hd, 1],
                         preferred_element_type=jnp.float32)
                 + b_qkv_ref[lp, hd, 1]).reshape(n_notes, seq_len, head_dim)
            v = (jnp.dot(h, w_qkv_ref[lp, hd, 2],
                         preferred_element_type=jnp.float32)
                 + b_qkv_ref[lp, hd, 2]).reshape(n_notes, seq_len, head_dim)

            s = jnp.einsum("nqd,nkd->nqk", q, k,
                           preferred_element_type=jnp.float32) * scale + bias3
            s = s - jnp.max(s, axis=-1, keepdims=True)
            p = jnp.exp(s)
            p = p * pl.reciprocal(jnp.sum(p, axis=-1, keepdims=True), approx=True)

            ctx = jnp.einsum("nqk,nkd->nqd", p, v,
                             preferred_element_type=jnp.float32)
            ctx = ctx.reshape(rows, head_dim)
            # concat(heads) @ Wo  ==  sum_h ctx_h @ Wo_h
            attn_out = attn_out + jnp.dot(ctx, w_out_ref[lp, hd],
                                          preferred_element_type=jnp.float32)

        h = _ln(attn_out + h, ln1_g_ref[lp], ln1_b_ref[lp])

        # ---- feed-forward
        inter = (jnp.dot(h, w_ffn1_ref[lp], preferred_element_type=jnp.float32)
                 + b_ffn1_ref[lp])
        # TODO(synk): HF BERT default is erf-GELU; tanh approximation used here.
        inter = jax.nn.gelu(inter, approximate=True)
        ffn = (jnp.dot(inter, w_ffn2_ref[lp], preferred_element_type=jnp.float32)
               + b_ffn2_ref[lp])
        h = _ln(ffn + h, ln2_g_ref[lp], ln2_b_ref[lp])

    # ---- head: mean of CLS tokens (token 0 of every note) via selection matmul
    # TODO(synk): hidden_dropout after CLS is a no-op in eval mode (omitted).
    col = jax.lax.broadcasted_iota(jnp.int32, (1, rows), 1)
    sel = jnp.where(col % seq_len == 0, 1.0 / n_notes, 0.0).astype(jnp.float32)
    x_txt = jnp.dot(sel, h, preferred_element_type=jnp.float32)      # (1, H)

    feats = (jnp.dot(x_txt, proj_w_ref[...], preferred_element_type=jnp.float32)
             + proj_b_ref[...])                                       # (1, D_TXT)
    feats_ref[...] = feats
    logits = (jnp.dot(feats, cls_w_ref[...], preferred_element_type=jnp.float32)
              + cls_b_ref[...])                                       # (1, classes)
    preds_ref[...] = jax.nn.sigmoid(logits)


_WEIGHT_NAMES = (
    "emb_ln_g", "emb_ln_b",
    "w_qkv", "b_qkv", "w_out", "b_out",
    "ln1_g", "ln1_b",
    "w_ffn1", "b_ffn1", "w_ffn2", "b_ffn2",
    "ln2_g", "ln2_b",
    "proj_w", "proj_b", "cls_w", "cls_b",
)


def fused_forward(params, emb, attn_bias):
    """emb: (B, N*L, H) f32; attn_bias: (B, N, L) f32 additive mask bias."""
    b, rows, hidden = emb.shape
    n_notes, seq_len = attn_bias.shape[1], attn_bias.shape[2]
    weights = [params[n] for n in _WEIGHT_NAMES]

    def _resident(arr):
        nd = arr.ndim
        return pl.BlockSpec(arr.shape, lambda b_, _nd=nd: (0,) * _nd)

    in_specs = [
        pl.BlockSpec((None, rows, hidden), lambda b_: (b_, 0, 0)),
        pl.BlockSpec((None, n_notes, seq_len), lambda b_: (b_, 0, 0)),
    ] + [_resident(w) for w in weights]

    out_specs = (
        pl.BlockSpec((None, 1, D_TXT), lambda b_: (b_, 0, 0)),
        pl.BlockSpec((None, 1, NUM_CLASSES), lambda b_: (b_, 0, 0)),
    )
    out_shape = (
        jax.ShapeDtypeStruct((b, 1, D_TXT), jnp.float32),
        jax.ShapeDtypeStruct((b, 1, NUM_CLASSES), jnp.float32),
    )

    feats3, preds3 = pl.pallas_call(
        _fused_forward_kernel,
        grid=(b,),
        in_specs=in_specs,
        out_specs=out_specs,
        out_shape=out_shape,
        compiler_params=pltpu.CompilerParams(
            dimension_semantics=("parallel",)),   # v7x: shard sequences on 2 TCs
    )(emb, attn_bias, *weights)
    return feats3[:, 0, :], preds3[:, 0, :]


# --------------------------- full forward pass --------------------------------
def embed_notes(params, input_ids_sequence):
    b, n, l = input_ids_sequence.shape
    emb = (params["word_emb"][input_ids_sequence]
           + params["pos_emb"][:l][None, None, :, :]
           + params["type_emb"][0][None, None, None, :])
    return emb.reshape(b, n * l, HIDDEN).astype(jnp.float32)


def bert_for_representation(params, input_ids_sequence, attention_mask_sequence):
    """Mirrors BertForRepresentation.forward (inference; labels=None)."""
    emb = embed_notes(params, input_ids_sequence)
    attn_bias = (1.0 - attention_mask_sequence.astype(jnp.float32)) * (-1e9)
    txt_feats, preds = fused_forward(params, emb, attn_bias)
    lossvalue_bce = jnp.zeros((1,), jnp.float32)          # labels=None path
    return preds, lossvalue_bce, txt_feats


# ----------------------------- param init ------------------------------------
def init_params(key):
    def nrm(k, shape, scale=0.02):
        return (scale * jax.random.normal(k, shape)).astype(jnp.float32)

    keys = iter(jax.random.split(key, 12))
    return {
        "word_emb": nrm(next(keys), (VOCAB, HIDDEN)),
        "pos_emb": nrm(next(keys), (MAX_POS, HIDDEN)),
        "type_emb": nrm(next(keys), (2, HIDDEN)),
        "emb_ln_g": jnp.ones((1, HIDDEN), jnp.float32),
        "emb_ln_b": jnp.zeros((1, HIDDEN), jnp.float32),
        # attention weights stored per (layer, head, q/k/v) slab
        "w_qkv": nrm(next(keys), (N_LAYERS, N_HEADS, 3, HIDDEN, HEAD_DIM)),
        "b_qkv": jnp.zeros((N_LAYERS, N_HEADS, 3, 1, HEAD_DIM), jnp.float32),
        "w_out": nrm(next(keys), (N_LAYERS, N_HEADS, HEAD_DIM, HIDDEN)),
        "b_out": jnp.zeros((N_LAYERS, 1, HIDDEN), jnp.float32),
        "ln1_g": jnp.ones((N_LAYERS, 1, HIDDEN), jnp.float32),
        "ln1_b": jnp.zeros((N_LAYERS, 1, HIDDEN), jnp.float32),
        "w_ffn1": nrm(next(keys), (N_LAYERS, HIDDEN, INTERMEDIATE)),
        "b_ffn1": jnp.zeros((N_LAYERS, 1, INTERMEDIATE), jnp.float32),
        "w_ffn2": nrm(next(keys), (N_LAYERS, INTERMEDIATE, HIDDEN)),
        "b_ffn2": jnp.zeros((N_LAYERS, 1, HIDDEN), jnp.float32),
        "ln2_g": jnp.ones((N_LAYERS, 1, HIDDEN), jnp.float32),
        "ln2_b": jnp.zeros((N_LAYERS, 1, HIDDEN), jnp.float32),
        "proj_w": nrm(next(keys), (HIDDEN, D_TXT)),
        "proj_b": jnp.zeros((1, D_TXT), jnp.float32),
        "cls_w": nrm(next(keys), (D_TXT, NUM_CLASSES)),
        "cls_b": jnp.zeros((1, NUM_CLASSES), jnp.float32),
    }


# --------------------------------- main ---------------------------------------
if __name__ == "__main__":
    B, N, L = 2, 4, 8          # sequences, notes per sequence, tokens per note

    root = jax.random.PRNGKey(0)
    k_params, k_ids = jax.random.split(root)
    params = init_params(k_params)

    input_ids_sequence = jax.random.randint(
        k_ids, (B, N, L), 0, VOCAB, dtype=jnp.int32)
    # attention mask: 1 for real tokens, 0 for padding on the tail of some notes
    pos = jnp.arange(L)[None, None, :]
    note_len = 5 + (jnp.arange(B * N).reshape(B, N) % 4)       # lengths 5..8
    attention_mask_sequence = (pos < note_len[..., None]).astype(jnp.float32)

    fwd = jax.jit(functools.partial(bert_for_representation, params))
    preds, loss, feats = fwd(input_ids_sequence, attention_mask_sequence)
    jax.block_until_ready((preds, loss, feats))

    assert preds.shape == (B, NUM_CLASSES)
    assert feats.shape == (B, D_TXT)
    assert loss.shape == (1,)
    assert bool(jnp.all((preds >= 0.0) & (preds <= 1.0)))
    assert bool(jnp.all(jnp.isfinite(preds))) and bool(jnp.all(jnp.isfinite(feats)))
    print("KERNEL_OK")
</pallas_src>

<mosaic_0001>
module attributes {stable_mosaic.version = 11 : i64} {
  func.func @_fused_forward_kernel(%arg0: i32, %arg1: memref<1x32x32xf32, #tpu.memory_space<vmem>>, %arg2: memref<1x4x8xf32, #tpu.memory_space<vmem>>, %arg3: memref<1x32xf32, #tpu.memory_space<vmem>>, %arg4: memref<1x32xf32, #tpu.memory_space<vmem>>, %arg5: memref<2x2x3x32x16xf32, #tpu.memory_space<vmem>>, %arg6: memref<2x2x3x1x16xf32, #tpu.memory_space<vmem>>, %arg7: memref<2x2x16x32xf32, #tpu.memory_space<vmem>>, %arg8: memref<2x1x32xf32, #tpu.memory_space<vmem>>, %arg9: memref<2x1x32xf32, #tpu.memory_space<vmem>>, %arg10: memref<2x1x32xf32, #tpu.memory_space<vmem>>, %arg11: memref<2x32x64xf32, #tpu.memory_space<vmem>>, %arg12: memref<2x1x64xf32, #tpu.memory_space<vmem>>, %arg13: memref<2x64x32xf32, #tpu.memory_space<vmem>>, %arg14: memref<2x1x32xf32, #tpu.memory_space<vmem>>, %arg15: memref<2x1x32xf32, #tpu.memory_space<vmem>>, %arg16: memref<2x1x32xf32, #tpu.memory_space<vmem>>, %arg17: memref<32x16xf32, #tpu.memory_space<vmem>>, %arg18: memref<1x16xf32, #tpu.memory_space<vmem>>, %arg19: memref<16x3xf32, #tpu.memory_space<vmem>>, %arg20: memref<1x3xf32, #tpu.memory_space<vmem>>, %arg21: memref<1x1x16xf32, #tpu.memory_space<vmem>>, %arg22: memref<1x1x3xf32, #tpu.memory_space<vmem>>) attributes {dimension_semantics = [#tpu.dimension_semantics<parallel>], iteration_bounds = array<i64: 2>, scalar_prefetch = 0 : i64, scratch_operands = 0 : i64, tpu.core_type = #tpu.core_type<tc>, window_params = [{transform_indices = @transform_0, window_bounds = array<i64: 1, 32, 32>}, {transform_indices = @transform_1, window_bounds = array<i64: 1, 4, 8>}, {pipeline_mode = #tpu.pipeline_mode<synchronous>, transform_indices = @transform_2, window_bounds = array<i64: 1, 32>}, {pipeline_mode = #tpu.pipeline_mode<synchronous>, transform_indices = @transform_3, window_bounds = array<i64: 1, 32>}, {pipeline_mode = #tpu.pipeline_mode<synchronous>, transform_indices = @transform_4, window_bounds = array<i64: 2, 2, 3, 32, 16>}, {pipeline_mode = #tpu.pipeline_mode<synchronous>, transform_indices = @transform_5, window_bounds = array<i64: 2, 2, 3, 1, 16>}, {pipeline_mode = #tpu.pipeline_mode<synchronous>, transform_indices = @transform_6, window_bounds = array<i64: 2, 2, 16, 32>}, {pipeline_mode = #tpu.pipeline_mode<synchronous>, transform_indices = @transform_7, window_bounds = array<i64: 2, 1, 32>}, {pipeline_mode = #tpu.pipeline_mode<synchronous>, transform_indices = @transform_8, window_bounds = array<i64: 2, 1, 32>}, {pipeline_mode = #tpu.pipeline_mode<synchronous>, transform_indices = @transform_9, window_bounds = array<i64: 2, 1, 32>}, {pipeline_mode = #tpu.pipeline_mode<synchronous>, transform_indices = @transform_10, window_bounds = array<i64: 2, 32, 64>}, {pipeline_mode = #tpu.pipeline_mode<synchronous>, transform_indices = @transform_11, window_bounds = array<i64: 2, 1, 64>}, {pipeline_mode = #tpu.pipeline_mode<synchronous>, transform_indices = @transform_12, window_bounds = array<i64: 2, 64, 32>}, {pipeline_mode = #tpu.pipeline_mode<synchronous>, transform_indices = @transform_13, window_bounds = array<i64: 2, 1, 32>}, {pipeline_mode = #tpu.pipeline_mode<synchronous>, transform_indices = @transform_14, window_bounds = array<i64: 2, 1, 32>}, {pipeline_mode = #tpu.pipeline_mode<synchronous>, transform_indices = @transform_15, window_bounds = array<i64: 2, 1, 32>}, {pipeline_mode = #tpu.pipeline_mode<synchronous>, transform_indices = @transform_16, window_bounds = array<i64: 32, 16>}, {pipeline_mode = #tpu.pipeline_mode<synchronous>, transform_indices = @transform_17, window_bounds = array<i64: 1, 16>}, {pipeline_mode = #tpu.pipeline_mode<synchronous>, transform_indices = @transform_18, window_bounds = array<i64: 16, 3>}, {pipeline_mode = #tpu.pipeline_mode<synchronous>, transform_indices = @transform_19, window_bounds = array<i64: 1, 3>}, {transform_indices = @transform_20, window_bounds = array<i64: 1, 1, 16>}, {transform_indices = @transform_21, window_bounds = array<i64: 1, 1, 3>}]} {
    %c0 = arith.constant 0 : index
    %c0_0 = arith.constant 0 : index
    %c0_1 = arith.constant 0 : index
    %0 = vector.load %arg2[%c0, %c0_0, %c0_1] : memref<1x4x8xf32, #tpu.memory_space<vmem>>, vector<1x4x8xf32>
    %1 = vector.shape_cast %0 : vector<1x4x8xf32> to vector<4x8xf32>
    %2 = vector.shape_cast %1 : vector<4x8xf32> to vector<4x1x8xf32>
    %c0_2 = arith.constant 0 : index
    %c0_3 = arith.constant 0 : index
    %c0_4 = arith.constant 0 : index
    %3 = vector.load %arg1[%c0_2, %c0_3, %c0_4] : memref<1x32x32xf32, #tpu.memory_space<vmem>>, vector<1x32x32xf32>
    %4 = vector.shape_cast %3 : vector<1x32x32xf32> to vector<32x32xf32>
    %c0_5 = arith.constant 0 : index
    %c0_6 = arith.constant 0 : index
    %5 = vector.load %arg3[%c0_5, %c0_6] : memref<1x32xf32, #tpu.memory_space<vmem>>, vector<1x32xf32>
    %c0_7 = arith.constant 0 : index
    %c0_8 = arith.constant 0 : index
    %6 = vector.load %arg4[%c0_7, %c0_8] : memref<1x32xf32, #tpu.memory_space<vmem>>, vector<1x32xf32>
    %cst = arith.constant dense<0.000000e+00> : vector<32xf32>
    %7 = vector.multi_reduction <add>, %4, %cst [1] : vector<32x32xf32> to vector<32xf32>
    %8 = vector.shape_cast %7 : vector<32xf32> to vector<32x1xf32>
    %cst_9 = arith.constant 3.200000e+01 : f32
    %9 = vector.broadcast %cst_9 : f32 to vector<32x1xf32>
    %10 = arith.divf %8, %9 : vector<32x1xf32>
    %11 = vector.broadcast %10 : vector<32x1xf32> to vector<32x32xf32>
    %12 = arith.subf %4, %11 : vector<32x32xf32>
    %13 = arith.mulf %12, %12 : vector<32x32xf32>
    %cst_10 = arith.constant dense<0.000000e+00> : vector<32xf32>
    %14 = vector.multi_reduction <add>, %13, %cst_10 [1] : vector<32x32xf32> to vector<32xf32>
    %15 = vector.shape_cast %14 : vector<32xf32> to vector<32x1xf32>
    %cst_11 = arith.constant 3.200000e+01 : f32
    %16 = vector.broadcast %cst_11 : f32 to vector<32x1xf32>
    %17 = arith.divf %15, %16 : vector<32x1xf32>
    %18 = vector.broadcast %10 : vector<32x1xf32> to vector<32x32xf32>
    %19 = arith.subf %4, %18 : vector<32x32xf32>
    %cst_12 = arith.constant 9.99999996E-13 : f32
    %20 = vector.broadcast %cst_12 : f32 to vector<32x1xf32>
    %21 = arith.addf %17, %20 : vector<32x1xf32>
    %22 = math.rsqrt %21 : vector<32x1xf32>
    %23 = vector.broadcast %22 : vector<32x1xf32> to vector<32x32xf32>
    %24 = arith.mulf %19, %23 : vector<32x32xf32>
    %25 = vector.broadcast %5 : vector<1x32xf32> to vector<32x32xf32>
    %26 = arith.mulf %24, %25 : vector<32x32xf32>
    %27 = vector.broadcast %6 : vector<1x32xf32> to vector<32x32xf32>
    %28 = arith.addf %26, %27 : vector<32x32xf32>
    %c0_13 = arith.constant 0 : index
    %c0_14 = arith.constant 0 : index
    %c0_15 = arith.constant 0 : index
    %29 = vector.load %arg8[%c0_13, %c0_14, %c0_15] : memref<2x1x32xf32, #tpu.memory_space<vmem>>, vector<1x1x32xf32>
    %30 = vector.shape_cast %29 : vector<1x1x32xf32> to vector<1x32xf32>
    %c0_16 = arith.constant 0 : index
    %c0_17 = arith.constant 0 : index
    %c0_18 = arith.constant 0 : index
    %c0_19 = arith.constant 0 : index
    %c0_20 = arith.constant 0 : index
    %31 = vector.load %arg5[%c0_16, %c0_17, %c0_18, %c0_19, %c0_20] : memref<2x2x3x32x16xf32, #tpu.memory_space<vmem>>, vector<1x1x1x32x16xf32>
    %32 = vector.shape_cast %31 : vector<1x1x1x32x16xf32> to vector<32x16xf32>
    %cst_21 = arith.constant dense<0.000000e+00> : vector<32x16xf32>
    %33 = tpu.matmul %28, %32, %cst_21 {dimension_numbers = #tpu.dot_dimension_numbers<[1], [0], [0], [1], [0, 0, 1, 1], [], []>} : vector<32x32xf32>, vector<32x16xf32>, vector<32x16xf32> -> vector<32x16xf32>
    %c0_22 = arith.constant 0 : index
    %c0_23 = arith.constant 0 : index
    %c0_24 = arith.constant 0 : index
    %c0_25 = arith.constant 0 : index
    %c0_26 = arith.constant 0 : index
    %34 = vector.load %arg6[%c0_22, %c0_23, %c0_24, %c0_25, %c0_26] : memref<2x2x3x1x16xf32, #tpu.memory_space<vmem>>, vector<1x1x1x1x16xf32>
    %35 = vector.shape_cast %34 : vector<1x1x1x1x16xf32> to vector<1x16xf32>
    %36 = vector.broadcast %35 : vector<1x16xf32> to vector<32x16xf32>
    %37 = arith.addf %33, %36 : vector<32x16xf32>
    %38 = vector.shape_cast %37 : vector<32x16xf32> to vector<4x8x16xf32>
    %c0_27 = arith.constant 0 : index
    %c0_28 = arith.constant 0 : index
    %c1 = arith.constant 1 : index
    %c0_29 = arith.constant 0 : index
    %c0_30 = arith.constant 0 : index
    %39 = vector.load %arg5[%c0_27, %c0_28, %c1, %c0_29, %c0_30] : memref<2x2x3x32x16xf32, #tpu.memory_space<vmem>>, vector<1x1x1x32x16xf32>
    %40 = vector.shape_cast %39 : vector<1x1x1x32x16xf32> to vector<32x16xf32>
    %cst_31 = arith.constant dense<0.000000e+00> : vector<32x16xf32>
    %41 = tpu.matmul %28, %40, %cst_31 {dimension_numbers = #tpu.dot_dimension_numbers<[1], [0], [0], [1], [0, 0, 1, 1], [], []>} : vector<32x32xf32>, vector<32x16xf32>, vector<32x16xf32> -> vector<32x16xf32>
    %c0_32 = arith.constant 0 : index
    %c0_33 = arith.constant 0 : index
    %c1_34 = arith.constant 1 : index
    %c0_35 = arith.constant 0 : index
    %c0_36 = arith.constant 0 : index
    %42 = vector.load %arg6[%c0_32, %c0_33, %c1_34, %c0_35, %c0_36] : memref<2x2x3x1x16xf32, #tpu.memory_space<vmem>>, vector<1x1x1x1x16xf32>
    %43 = vector.shape_cast %42 : vector<1x1x1x1x16xf32> to vector<1x16xf32>
    %44 = vector.broadcast %43 : vector<1x16xf32> to vector<32x16xf32>
    %45 = arith.addf %41, %44 : vector<32x16xf32>
    %46 = vector.shape_cast %45 : vector<32x16xf32> to vector<4x8x16xf32>
    %c0_37 = arith.constant 0 : index
    %c0_38 = arith.constant 0 : index
    %c2 = arith.constant 2 : index
    %c0_39 = arith.constant 0 : index
    %c0_40 = arith.constant 0 : index
    %47 = vector.load %arg5[%c0_37, %c0_38, %c2, %c0_39, %c0_40] : memref<2x2x3x32x16xf32, #tpu.memory_space<vmem>>, vector<1x1x1x32x16xf32>
    %48 = vector.shape_cast %47 : vector<1x1x1x32x16xf32> to vector<32x16xf32>
    %cst_41 = arith.constant dense<0.000000e+00> : vector<32x16xf32>
    %49 = tpu.matmul %28, %48, %cst_41 {dimension_numbers = #tpu.dot_dimension_numbers<[1], [0], [0], [1], [0, 0, 1, 1], [], []>} : vector<32x32xf32>, vector<32x16xf32>, vector<32x16xf32> -> vector<32x16xf32>
    %c0_42 = arith.constant 0 : index
    %c0_43 = arith.constant 0 : index
    %c2_44 = arith.constant 2 : index
    %c0_45 = arith.constant 0 : index
    %c0_46 = arith.constant 0 : index
    %50 = vector.load %arg6[%c0_42, %c0_43, %c2_44, %c0_45, %c0_46] : memref<2x2x3x1x16xf32, #tpu.memory_space<vmem>>, vector<1x1x1x1x16xf32>
    %51 = vector.shape_cast %50 : vector<1x1x1x1x16xf32> to vector<1x16xf32>
    %52 = vector.broadcast %51 : vector<1x16xf32> to vector<32x16xf32>
    %53 = arith.addf %49, %52 : vector<32x16xf32>
    %54 = vector.shape_cast %53 : vector<32x16xf32> to vector<4x8x16xf32>
    "tpu.trace_start"() <{level = 10 : i32, message = "nqd,nkd->nqk"}> : () -> ()
    %cst_47 = arith.constant dense<0.000000e+00> : vector<4x8x8xf32>
    %55 = tpu.matmul %38, %46, %cst_47 {dimension_numbers = #tpu.dot_dimension_numbers<[2], [2], [1], [1], [0, 0, 0, 1, 1, 1], [0], [0]>} : vector<4x8x16xf32>, vector<4x8x16xf32>, vector<4x8x8xf32> -> vector<4x8x8xf32>
    "tpu.trace_stop"() : () -> ()
    %cst_48 = arith.constant 2.500000e-01 : f32
    %56 = vector.broadcast %cst_48 : f32 to vector<4x8x8xf32>
    %57 = arith.mulf %55, %56 : vector<4x8x8xf32>
    %58 = vector.broadcast %2 : vector<4x1x8xf32> to vector<4x8x8xf32>
    %59 = arith.addf %57, %58 : vector<4x8x8xf32>
    %cst_49 = arith.constant dense<0xFF800000> : vector<4x8xf32>
    %60 = vector.multi_reduction <maximumf>, %59, %cst_49 [2] : vector<4x8x8xf32> to vector<4x8xf32>
    %61 = vector.shape_cast %60 : vector<4x8xf32> to vector<4x8x1xf32>
    %62 = vector.broadcast %61 : vector<4x8x1xf32> to vector<4x8x8xf32>
    %63 = arith.subf %59, %62 : vector<4x8x8xf32>
    %64 = math.exp %63 : vector<4x8x8xf32>
    %cst_50 = arith.constant dense<0.000000e+00> : vector<4x8xf32>
    %65 = vector.multi_reduction <add>, %64, %cst_50 [2] : vector<4x8x8xf32> to vector<4x8xf32>
    %66 = vector.shape_cast %65 : vector<4x8xf32> to vector<4x8x1xf32>
    %67 = tpu.reciprocal %66 {approx = true} : vector<4x8x1xf32> -> vector<4x8x1xf32>
    %68 = vector.broadcast %67 : vector<4x8x1xf32> to vector<4x8x8xf32>
    %69 = arith.mulf %64, %68 : vector<4x8x8xf32>
    "tpu.trace_start"() <{level = 10 : i32, message = "nqk,nkd->nqd"}> : () -> ()
    %cst_51 = arith.constant dense<0.000000e+00> : vector<4x8x16xf32>
    %70 = tpu.matmul %69, %54, %cst_51 {dimension_numbers = #tpu.dot_dimension_numbers<[2], [1], [1], [2], [0, 0, 0, 1, 1, 2], [0], [0]>} : vector<4x8x8xf32>, vector<4x8x16xf32>, vector<4x8x16xf32> -> vector<4x8x16xf32>
    "tpu.trace_stop"() : () -> ()
    %71 = vector.shape_cast %70 : vector<4x8x16xf32> to vector<32x16xf32>
    %c0_52 = arith.constant 0 : index
    %c0_53 = arith.constant 0 : index
    %c0_54 = arith.constant 0 : index
    %c0_55 = arith.constant 0 : index
    %72 = vector.load %arg7[%c0_52, %c0_53, %c0_54, %c0_55] : memref<2x2x16x32xf32, #tpu.memory_space<vmem>>, vector<1x1x16x32xf32>
    %73 = vector.shape_cast %72 : vector<1x1x16x32xf32> to vector<16x32xf32>
    %cst_56 = arith.constant dense<0.000000e+00> : vector<32x32xf32>
    %74 = tpu.matmul %71, %73, %cst_56 {dimension_numbers = #tpu.dot_dimension_numbers<[1], [0], [0], [1], [0, 0, 1, 1], [], []>} : vector<32x16xf32>, vector<16x32xf32>, vector<32x32xf32> -> vector<32x32xf32>
    %75 = vector.broadcast %30 : vector<1x32xf32> to vector<32x32xf32>
    %76 = arith.addf %75, %74 : vector<32x32xf32>
    %c0_57 = arith.constant 0 : index
    %c1_58 = arith.constant 1 : index
    %c0_59 = arith.constant 0 : index
    %c0_60 = arith.constant 0 : index
    %c0_61 = arith.constant 0 : index
    %77 = vector.load %arg5[%c0_57, %c1_58, %c0_59, %c0_60, %c0_61] : memref<2x2x3x32x16xf32, #tpu.memory_space<vmem>>, vector<1x1x1x32x16xf32>
    %78 = vector.shape_cast %77 : vector<1x1x1x32x16xf32> to vector<32x16xf32>
    %cst_62 = arith.constant dense<0.000000e+00> : vector<32x16xf32>
    %79 = tpu.matmul %28, %78, %cst_62 {dimension_numbers = #tpu.dot_dimension_numbers<[1], [0], [0], [1], [0, 0, 1, 1], [], []>} : vector<32x32xf32>, vector<32x16xf32>, vector<32x16xf32> -> vector<32x16xf32>
    %c0_63 = arith.constant 0 : index
    %c1_64 = arith.constant 1 : index
    %c0_65 = arith.constant 0 : index
    %c0_66 = arith.constant 0 : index
    %c0_67 = arith.constant 0 : index
    %80 = vector.load %arg6[%c0_63, %c1_64, %c0_65, %c0_66, %c0_67] : memref<2x2x3x1x16xf32, #tpu.memory_space<vmem>>, vector<1x1x1x1x16xf32>
    %81 = vector.shape_cast %80 : vector<1x1x1x1x16xf32> to vector<1x16xf32>
    %82 = vector.broadcast %81 : vector<1x16xf32> to vector<32x16xf32>
    %83 = arith.addf %79, %82 : vector<32x16xf32>
    %84 = vector.shape_cast %83 : vector<32x16xf32> to vector<4x8x16xf32>
    %c0_68 = arith.constant 0 : index
    %c1_69 = arith.constant 1 : index
    %c1_70 = arith.constant 1 : index
    %c0_71 = arith.constant 0 : index
    %c0_72 = arith.constant 0 : index
    %85 = vector.load %arg5[%c0_68, %c1_69, %c1_70, %c0_71, %c0_72] : memref<2x2x3x32x16xf32, #tpu.memory_space<vmem>>, vector<1x1x1x32x16xf32>
    %86 = vector.shape_cast %85 : vector<1x1x1x32x16xf32> to vector<32x16xf32>
    %cst_73 = arith.constant dense<0.000000e+00> : vector<32x16xf32>
    %87 = tpu.matmul %28, %86, %cst_73 {dimension_numbers = #tpu.dot_dimension_numbers<[1], [0], [0], [1], [0, 0, 1, 1], [], []>} : vector<32x32xf32>, vector<32x16xf32>, vector<32x16xf32> -> vector<32x16xf32>
    %c0_74 = arith.constant 0 : index
    %c1_75 = arith.constant 1 : index
    %c1_76 = arith.constant 1 : index
    %c0_77 = arith.constant 0 : index
    %c0_78 = arith.constant 0 : index
    %88 = vector.load %arg6[%c0_74, %c1_75, %c1_76, %c0_77, %c0_78] : memref<2x2x3x1x16xf32, #tpu.memory_space<vmem>>, vector<1x1x1x1x16xf32>
    %89 = vector.shape_cast %88 : vector<1x1x1x1x16xf32> to vector<1x16xf32>
    %90 = vector.broadcast %89 : vector<1x16xf32> to vector<32x16xf32>
    %91 = arith.addf %87, %90 : vector<32x16xf32>
    %92 = vector.shape_cast %91 : vector<32x16xf32> to vector<4x8x16xf32>
    %c0_79 = arith.constant 0 : index
    %c1_80 = arith.constant 1 : index
    %c2_81 = arith.constant 2 : index
    %c0_82 = arith.constant 0 : index
    %c0_83 = arith.constant 0 : index
    %93 = vector.load %arg5[%c0_79, %c1_80, %c2_81, %c0_82, %c0_83] : memref<2x2x3x32x16xf32, #tpu.memory_space<vmem>>, vector<1x1x1x32x16xf32>
    %94 = vector.shape_cast %93 : vector<1x1x1x32x16xf32> to vector<32x16xf32>
    %cst_84 = arith.constant dense<0.000000e+00> : vector<32x16xf32>
    %95 = tpu.matmul %28, %94, %cst_84 {dimension_numbers = #tpu.dot_dimension_numbers<[1], [0], [0], [1], [0, 0, 1, 1], [], []>} : vector<32x32xf32>, vector<32x16xf32>, vector<32x16xf32> -> vector<32x16xf32>
    %c0_85 = arith.constant 0 : index
    %c1_86 = arith.constant 1 : index
    %c2_87 = arith.constant 2 : index
    %c0_88 = arith.constant 0 : index
    %c0_89 = arith.constant 0 : index
    %96 = vector.load %arg6[%c0_85, %c1_86, %c2_87, %c0_88, %c0_89] : memref<2x2x3x1x16xf32, #tpu.memory_space<vmem>>, vector<1x1x1x1x16xf32>
    %97 = vector.shape_cast %96 : vector<1x1x1x1x16xf32> to vector<1x16xf32>
    %98 = vector.broadcast %97 : vector<1x16xf32> to vector<32x16xf32>
    %99 = arith.addf %95, %98 : vector<32x16xf32>
    %100 = vector.shape_cast %99 : vector<32x16xf32> to vector<4x8x16xf32>
    "tpu.trace_start"() <{level = 10 : i32, message = "nqd,nkd->nqk"}> : () -> ()
    %cst_90 = arith.constant dense<0.000000e+00> : vector<4x8x8xf32>
    %101 = tpu.matmul %84, %92, %cst_90 {dimension_numbers = #tpu.dot_dimension_numbers<[2], [2], [1], [1], [0, 0, 0, 1, 1, 1], [0], [0]>} : vector<4x8x16xf32>, vector<4x8x16xf32>, vector<4x8x8xf32> -> vector<4x8x8xf32>
    "tpu.trace_stop"() : () -> ()
    %cst_91 = arith.constant 2.500000e-01 : f32
    %102 = vector.broadcast %cst_91 : f32 to vector<4x8x8xf32>
    %103 = arith.mulf %101, %102 : vector<4x8x8xf32>
    %104 = vector.broadcast %2 : vector<4x1x8xf32> to vector<4x8x8xf32>
    %105 = arith.addf %103, %104 : vector<4x8x8xf32>
    %cst_92 = arith.constant dense<0xFF800000> : vector<4x8xf32>
    %106 = vector.multi_reduction <maximumf>, %105, %cst_92 [2] : vector<4x8x8xf32> to vector<4x8xf32>
    %107 = vector.shape_cast %106 : vector<4x8xf32> to vector<4x8x1xf32>
    %108 = vector.broadcast %107 : vector<4x8x1xf32> to vector<4x8x8xf32>
    %109 = arith.subf %105, %108 : vector<4x8x8xf32>
    %110 = math.exp %109 : vector<4x8x8xf32>
    %cst_93 = arith.constant dense<0.000000e+00> : vector<4x8xf32>
    %111 = vector.multi_reduction <add>, %110, %cst_93 [2] : vector<4x8x8xf32> to vector<4x8xf32>
    %112 = vector.shape_cast %111 : vector<4x8xf32> to vector<4x8x1xf32>
    %113 = tpu.reciprocal %112 {approx = true} : vector<4x8x1xf32> -> vector<4x8x1xf32>
    %114 = vector.broadcast %113 : vector<4x8x1xf32> to vector<4x8x8xf32>
    %115 = arith.mulf %110, %114 : vector<4x8x8xf32>
    "tpu.trace_start"() <{level = 10 : i32, message = "nqk,nkd->nqd"}> : () -> ()
    %cst_94 = arith.constant dense<0.000000e+00> : vector<4x8x16xf32>
    %116 = tpu.matmul %115, %100, %cst_94 {dimension_numbers = #tpu.dot_dimension_numbers<[2], [1], [1], [2], [0, 0, 0, 1, 1, 2], [0], [0]>} : vector<4x8x8xf32>, vector<4x8x16xf32>, vector<4x8x16xf32> -> vector<4x8x16xf32>
    "tpu.trace_stop"() : () -> ()
    %117 = vector.shape_cast %116 : vector<4x8x16xf32> to vector<32x16xf32>
    %c0_95 = arith.constant 0 : index
    %c1_96 = arith.constant 1 : index
    %c0_97 = arith.constant 0 : index
    %c0_98 = arith.constant 0 : index
    %118 = vector.load %arg7[%c0_95, %c1_96, %c0_97, %c0_98] : memref<2x2x16x32xf32, #tpu.memory_space<vmem>>, vector<1x1x16x32xf32>
    %119 = vector.shape_cast %118 : vector<1x1x16x32xf32> to vector<16x32xf32>
    %cst_99 = arith.constant dense<0.000000e+00> : vector<32x32xf32>
    %120 = tpu.matmul %117, %119, %cst_99 {dimension_numbers = #tpu.dot_dimension_numbers<[1], [0], [0], [1], [0, 0, 1, 1], [], []>} : vector<32x16xf32>, vector<16x32xf32>, vector<32x32xf32> -> vector<32x32xf32>
    %121 = arith.addf %76, %120 : vector<32x32xf32>
    %122 = arith.addf %121, %28 : vector<32x32xf32>
    %c0_100 = arith.constant 0 : index
    %c0_101 = arith.constant 0 : index
    %c0_102 = arith.constant 0 : index
    %123 = vector.load %arg9[%c0_100, %c0_101, %c0_102] : memref<2x1x32xf32, #tpu.memory_space<vmem>>, vector<1x1x32xf32>
    %124 = vector.shape_cast %123 : vector<1x1x32xf32> to vector<1x32xf32>
    %c0_103 = arith.constant 0 : index
    %c0_104 = arith.constant 0 : index
    %c0_105 = arith.constant 0 : index
    %125 = vector.load %arg10[%c0_103, %c0_104, %c0_105] : memref<2x1x32xf32, #tpu.memory_space<vmem>>, vector<1x1x32xf32>
    %126 = vector.shape_cast %125 : vector<1x1x32xf32> to vector<1x32xf32>
    %cst_106 = arith.constant dense<0.000000e+00> : vector<32xf32>
    %127 = vector.multi_reduction <add>, %122, %cst_106 [1] : vector<32x32xf32> to vector<32xf32>
    %128 = vector.shape_cast %127 : vector<32xf32> to vector<32x1xf32>
    %cst_107 = arith.constant 3.200000e+01 : f32
    %129 = vector.broadcast %cst_107 : f32 to vector<32x1xf32>
    %130 = arith.divf %128, %129 : vector<32x1xf32>
    %131 = vector.broadcast %130 : vector<32x1xf32> to vector<32x32xf32>
    %132 = arith.subf %122, %131 : vector<32x32xf32>
    %133 = arith.mulf %132, %132 : vector<32x32xf32>
    %cst_108 = arith.constant dense<0.000000e+00> : vector<32xf32>
    %134 = vector.multi_reduction <add>, %133, %cst_108 [1] : vector<32x32xf32> to vector<32xf32>
    %135 = vector.shape_cast %134 : vector<32xf32> to vector<32x1xf32>
    %cst_109 = arith.constant 3.200000e+01 : f32
    %136 = vector.broadcast %cst_109 : f32 to vector<32x1xf32>
    %137 = arith.divf %135, %136 : vector<32x1xf32>
    %138 = vector.broadcast %130 : vector<32x1xf32> to vector<32x32xf32>
    %139 = arith.subf %122, %138 : vector<32x32xf32>
    %cst_110 = arith.constant 9.99999996E-13 : f32
    %140 = vector.broadcast %cst_110 : f32 to vector<32x1xf32>
    %141 = arith.addf %137, %140 : vector<32x1xf32>
    %142 = math.rsqrt %141 : vector<32x1xf32>
    %143 = vector.broadcast %142 : vector<32x1xf32> to vector<32x32xf32>
    %144 = arith.mulf %139, %143 : vector<32x32xf32>
    %145 = vector.broadcast %124 : vector<1x32xf32> to vector<32x32xf32>
    %146 = arith.mulf %144, %145 : vector<32x32xf32>
    %147 = vector.broadcast %126 : vector<1x32xf32> to vector<32x32xf32>
    %148 = arith.addf %146, %147 : vector<32x32xf32>
    %c0_111 = arith.constant 0 : index
    %c0_112 = arith.constant 0 : index
    %c0_113 = arith.constant 0 : index
    %149 = vector.load %arg11[%c0_111, %c0_112, %c0_113] : memref<2x32x64xf32, #tpu.memory_space<vmem>>, vector<1x32x64xf32>
    %150 = vector.shape_cast %149 : vector<1x32x64xf32> to vector<32x64xf32>
    %cst_114 = arith.constant dense<0.000000e+00> : vector<32x64xf32>
    %151 = tpu.matmul %148, %150, %cst_114 {dimension_numbers = #tpu.dot_dimension_numbers<[1], [0], [0], [1], [0, 0, 1, 1], [], []>} : vector<32x32xf32>, vector<32x64xf32>, vector<32x64xf32> -> vector<32x64xf32>
    %c0_115 = arith.constant 0 : index
    %c0_116 = arith.constant 0 : index
    %c0_117 = arith.constant 0 : index
    %152 = vector.load %arg12[%c0_115, %c0_116, %c0_117] : memref<2x1x64xf32, #tpu.memory_space<vmem>>, vector<1x1x64xf32>
    %153 = vector.shape_cast %152 : vector<1x1x64xf32> to vector<1x64xf32>
    %154 = vector.broadcast %153 : vector<1x64xf32> to vector<32x64xf32>
    %155 = arith.addf %151, %154 : vector<32x64xf32>
    %156 = arith.mulf %155, %155 : vector<32x64xf32>
    %157 = arith.mulf %155, %156 : vector<32x64xf32>
    %cst_118 = arith.constant 4.471500e-02 : f32
    %158 = vector.broadcast %cst_118 : f32 to vector<32x64xf32>
    %159 = arith.mulf %158, %157 : vector<32x64xf32>
    %160 = arith.addf %155, %159 : vector<32x64xf32>
    %cst_119 = arith.constant 0.797884583 : f32
    %161 = vector.broadcast %cst_119 : f32 to vector<32x64xf32>
    %162 = arith.mulf %161, %160 : vector<32x64xf32>
    %163 = math.tanh %162 : vector<32x64xf32>
    %cst_120 = arith.constant 1.000000e+00 : f32
    %164 = vector.broadcast %cst_120 : f32 to vector<32x64xf32>
    %165 = arith.addf %164, %163 : vector<32x64xf32>
    %cst_121 = arith.constant 5.000000e-01 : f32
    %166 = vector.broadcast %cst_121 : f32 to vector<32x64xf32>
    %167 = arith.mulf %166, %165 : vector<32x64xf32>
    %168 = arith.mulf %155, %167 : vector<32x64xf32>
    %c0_122 = arith.constant 0 : index
    %c0_123 = arith.constant 0 : index
    %c0_124 = arith.constant 0 : index
    %169 = vector.load %arg13[%c0_122, %c0_123, %c0_124] : memref<2x64x32xf32, #tpu.memory_space<vmem>>, vector<1x64x32xf32>
    %170 = vector.shape_cast %169 : vector<1x64x32xf32> to vector<64x32xf32>
    %cst_125 = arith.constant dense<0.000000e+00> : vector<32x32xf32>
    %171 = tpu.matmul %168, %170, %cst_125 {dimension_numbers = #tpu.dot_dimension_numbers<[1], [0], [0], [1], [0, 0, 1, 1], [], []>} : vector<32x64xf32>, vector<64x32xf32>, vector<32x32xf32> -> vector<32x32xf32>
    %c0_126 = arith.constant 0 : index
    %c0_127 = arith.constant 0 : index
    %c0_128 = arith.constant 0 : index
    %172 = vector.load %arg14[%c0_126, %c0_127, %c0_128] : memref<2x1x32xf32, #tpu.memory_space<vmem>>, vector<1x1x32xf32>
    %173 = vector.shape_cast %172 : vector<1x1x32xf32> to vector<1x32xf32>
    %174 = vector.broadcast %173 : vector<1x32xf32> to vector<32x32xf32>
    %175 = arith.addf %171, %174 : vector<32x32xf32>
    %176 = arith.addf %175, %148 : vector<32x32xf32>
    %c0_129 = arith.constant 0 : index
    %c0_130 = arith.constant 0 : index
    %c0_131 = arith.constant 0 : index
    %177 = vector.load %arg15[%c0_129, %c0_130, %c0_131] : memref<2x1x32xf32, #tpu.memory_space<vmem>>, vector<1x1x32xf32>
    %178 = vector.shape_cast %177 : vector<1x1x32xf32> to vector<1x32xf32>
    %c0_132 = arith.constant 0 : index
    %c0_133 = arith.constant 0 : index
    %c0_134 = arith.constant 0 : index
    %179 = vector.load %arg16[%c0_132, %c0_133, %c0_134] : memref<2x1x32xf32, #tpu.memory_space<vmem>>, vector<1x1x32xf32>
    %180 = vector.shape_cast %179 : vector<1x1x32xf32> to vector<1x32xf32>
    %cst_135 = arith.constant dense<0.000000e+00> : vector<32xf32>
    %181 = vector.multi_reduction <add>, %176, %cst_135 [1] : vector<32x32xf32> to vector<32xf32>
    %182 = vector.shape_cast %181 : vector<32xf32> to vector<32x1xf32>
    %cst_136 = arith.constant 3.200000e+01 : f32
    %183 = vector.broadcast %cst_136 : f32 to vector<32x1xf32>
    %184 = arith.divf %182, %183 : vector<32x1xf32>
    %185 = vector.broadcast %184 : vector<32x1xf32> to vector<32x32xf32>
    %186 = arith.subf %176, %185 : vector<32x32xf32>
    %187 = arith.mulf %186, %186 : vector<32x32xf32>
    %cst_137 = arith.constant dense<0.000000e+00> : vector<32xf32>
    %188 = vector.multi_reduction <add>, %187, %cst_137 [1] : vector<32x32xf32> to vector<32xf32>
    %189 = vector.shape_cast %188 : vector<32xf32> to vector<32x1xf32>
    %cst_138 = arith.constant 3.200000e+01 : f32
    %190 = vector.broadcast %cst_138 : f32 to vector<32x1xf32>
    %191 = arith.divf %189, %190 : vector<32x1xf32>
    %192 = vector.broadcast %184 : vector<32x1xf32> to vector<32x32xf32>
    %193 = arith.subf %176, %192 : vector<32x32xf32>
    %cst_139 = arith.constant 9.99999996E-13 : f32
    %194 = vector.broadcast %cst_139 : f32 to vector<32x1xf32>
    %195 = arith.addf %191, %194 : vector<32x1xf32>
    %196 = math.rsqrt %195 : vector<32x1xf32>
    %197 = vector.broadcast %196 : vector<32x1xf32> to vector<32x32xf32>
    %198 = arith.mulf %193, %197 : vector<32x32xf32>
    %199 = vector.broadcast %178 : vector<1x32xf32> to vector<32x32xf32>
    %200 = arith.mulf %198, %199 : vector<32x32xf32>
    %201 = vector.broadcast %180 : vector<1x32xf32> to vector<32x32xf32>
    %202 = arith.addf %200, %201 : vector<32x32xf32>
    %c1_140 = arith.constant 1 : index
    %c0_141 = arith.constant 0 : index
    %c0_142 = arith.constant 0 : index
    %203 = vector.load %arg8[%c1_140, %c0_141, %c0_142] : memref<2x1x32xf32, #tpu.memory_space<vmem>>, vector<1x1x32xf32>
    %204 = vector.shape_cast %203 : vector<1x1x32xf32> to vector<1x32xf32>
    %c1_143 = arith.constant 1 : index
    %c0_144 = arith.constant 0 : index
    %c0_145 = arith.constant 0 : index
    %c0_146 = arith.constant 0 : index
    %c0_147 = arith.constant 0 : index
    %205 = vector.load %arg5[%c1_143, %c0_144, %c0_145, %c0_146, %c0_147] : memref<2x2x3x32x16xf32, #tpu.memory_space<vmem>>, vector<1x1x1x32x16xf32>
    %206 = vector.shape_cast %205 : vector<1x1x1x32x16xf32> to vector<32x16xf32>
    %cst_148 = arith.constant dense<0.000000e+00> : vector<32x16xf32>
    %207 = tpu.matmul %202, %206, %cst_148 {dimension_numbers = #tpu.dot_dimension_numbers<[1], [0], [0], [1], [0, 0, 1, 1], [], []>} : vector<32x32xf32>, vector<32x16xf32>, vector<32x16xf32> -> vector<32x16xf32>
    %c1_149 = arith.constant 1 : index
    %c0_150 = arith.constant 0 : index
    %c0_151 = arith.constant 0 : index
    %c0_152 = arith.constant 0 : index
    %c0_153 = arith.constant 0 : index
    %208 = vector.load %arg6[%c1_149, %c0_150, %c0_151, %c0_152, %c0_153] : memref<2x2x3x1x16xf32, #tpu.memory_space<vmem>>, vector<1x1x1x1x16xf32>
    %209 = vector.shape_cast %208 : vector<1x1x1x1x16xf32> to vector<1x16xf32>
    %210 = vector.broadcast %209 : vector<1x16xf32> to vector<32x16xf32>
    %211 = arith.addf %207, %210 : vector<32x16xf32>
    %212 = vector.shape_cast %211 : vector<32x16xf32> to vector<4x8x16xf32>
    %c1_154 = arith.constant 1 : index
    %c0_155 = arith.constant 0 : index
    %c1_156 = arith.constant 1 : index
    %c0_157 = arith.constant 0 : index
    %c0_158 = arith.constant 0 : index
    %213 = vector.load %arg5[%c1_154, %c0_155, %c1_156, %c0_157, %c0_158] : memref<2x2x3x32x16xf32, #tpu.memory_space<vmem>>, vector<1x1x1x32x16xf32>
    %214 = vector.shape_cast %213 : vector<1x1x1x32x16xf32> to vector<32x16xf32>
    %cst_159 = arith.constant dense<0.000000e+00> : vector<32x16xf32>
    %215 = tpu.matmul %202, %214, %cst_159 {dimension_numbers = #tpu.dot_dimension_numbers<[1], [0], [0], [1], [0, 0, 1, 1], [], []>} : vector<32x32xf32>, vector<32x16xf32>, vector<32x16xf32> -> vector<32x16xf32>
    %c1_160 = arith.constant 1 : index
    %c0_161 = arith.constant 0 : index
    %c1_162 = arith.constant 1 : index
    %c0_163 = arith.constant 0 : index
    %c0_164 = arith.constant 0 : index
    %216 = vector.load %arg6[%c1_160, %c0_161, %c1_162, %c0_163, %c0_164] : memref<2x2x3x1x16xf32, #tpu.memory_space<vmem>>, vector<1x1x1x1x16xf32>
    %217 = vector.shape_cast %216 : vector<1x1x1x1x16xf32> to vector<1x16xf32>
    %218 = vector.broadcast %217 : vector<1x16xf32> to vector<32x16xf32>
    %219 = arith.addf %215, %218 : vector<32x16xf32>
    %220 = vector.shape_cast %219 : vector<32x16xf32> to vector<4x8x16xf32>
    %c1_165 = arith.constant 1 : index
    %c0_166 = arith.constant 0 : index
    %c2_167 = arith.constant 2 : index
    %c0_168 = arith.constant 0 : index
    %c0_169 = arith.constant 0 : index
    %221 = vector.load %arg5[%c1_165, %c0_166, %c2_167, %c0_168, %c0_169] : memref<2x2x3x32x16xf32, #tpu.memory_space<vmem>>, vector<1x1x1x32x16xf32>
    %222 = vector.shape_cast %221 : vector<1x1x1x32x16xf32> to vector<32x16xf32>
    %cst_170 = arith.constant dense<0.000000e+00> : vector<32x16xf32>
    %223 = tpu.matmul %202, %222, %cst_170 {dimension_numbers = #tpu.dot_dimension_numbers<[1], [0], [0], [1], [0, 0, 1, 1], [], []>} : vector<32x32xf32>, vector<32x16xf32>, vector<32x16xf32> -> vector<32x16xf32>
    %c1_171 = arith.constant 1 : index
    %c0_172 = arith.constant 0 : index
    %c2_173 = arith.constant 2 : index
    %c0_174 = arith.constant 0 : index
    %c0_175 = arith.constant 0 : index
    %224 = vector.load %arg6[%c1_171, %c0_172, %c2_173, %c0_174, %c0_175] : memref<2x2x3x1x16xf32, #tpu.memory_space<vmem>>, vector<1x1x1x1x16xf32>
    %225 = vector.shape_cast %224 : vector<1x1x1x1x16xf32> to vector<1x16xf32>
    %226 = vector.broadcast %225 : vector<1x16xf32> to vector<32x16xf32>
    %227 = arith.addf %223, %226 : vector<32x16xf32>
    %228 = vector.shape_cast %227 : vector<32x16xf32> to vector<4x8x16xf32>
    "tpu.trace_start"() <{level = 10 : i32, message = "nqd,nkd->nqk"}> : () -> ()
    %cst_176 = arith.constant dense<0.000000e+00> : vector<4x8x8xf32>
    %229 = tpu.matmul %212, %220, %cst_176 {dimension_numbers = #tpu.dot_dimension_numbers<[2], [2], [1], [1], [0, 0, 0, 1, 1, 1], [0], [0]>} : vector<4x8x16xf32>, vector<4x8x16xf32>, vector<4x8x8xf32> -> vector<4x8x8xf32>
    "tpu.trace_stop"() : () -> ()
    %cst_177 = arith.constant 2.500000e-01 : f32
    %230 = vector.broadcast %cst_177 : f32 to vector<4x8x8xf32>
    %231 = arith.mulf %229, %230 : vector<4x8x8xf32>
    %232 = vector.broadcast %2 : vector<4x1x8xf32> to vector<4x8x8xf32>
    %233 = arith.addf %231, %232 : vector<4x8x8xf32>
    %cst_178 = arith.constant dense<0xFF800000> : vector<4x8xf32>
    %234 = vector.multi_reduction <maximumf>, %233, %cst_178 [2] : vector<4x8x8xf32> to vector<4x8xf32>
    %235 = vector.shape_cast %234 : vector<4x8xf32> to vector<4x8x1xf32>
    %236 = vector.broadcast %235 : vector<4x8x1xf32> to vector<4x8x8xf32>
    %237 = arith.subf %233, %236 : vector<4x8x8xf32>
    %238 = math.exp %237 : vector<4x8x8xf32>
    %cst_179 = arith.constant dense<0.000000e+00> : vector<4x8xf32>
    %239 = vector.multi_reduction <add>, %238, %cst_179 [2] : vector<4x8x8xf32> to vector<4x8xf32>
    %240 = vector.shape_cast %239 : vector<4x8xf32> to vector<4x8x1xf32>
    %241 = tpu.reciprocal %240 {approx = true} : vector<4x8x1xf32> -> vector<4x8x1xf32>
    %242 = vector.broadcast %241 : vector<4x8x1xf32> to vector<4x8x8xf32>
    %243 = arith.mulf %238, %242 : vector<4x8x8xf32>
    "tpu.trace_start"() <{level = 10 : i32, message = "nqk,nkd->nqd"}> : () -> ()
    %cst_180 = arith.constant dense<0.000000e+00> : vector<4x8x16xf32>
    %244 = tpu.matmul %243, %228, %cst_180 {dimension_numbers = #tpu.dot_dimension_numbers<[2], [1], [1], [2], [0, 0, 0, 1, 1, 2], [0], [0]>} : vector<4x8x8xf32>, vector<4x8x16xf32>, vector<4x8x16xf32> -> vector<4x8x16xf32>
    "tpu.trace_stop"() : () -> ()
    %245 = vector.shape_cast %244 : vector<4x8x16xf32> to vector<32x16xf32>
    %c1_181 = arith.constant 1 : index
    %c0_182 = arith.constant 0 : index
    %c0_183 = arith.constant 0 : index
    %c0_184 = arith.constant 0 : index
    %246 = vector.load %arg7[%c1_181, %c0_182, %c0_183, %c0_184] : memref<2x2x16x32xf32, #tpu.memory_space<vmem>>, vector<1x1x16x32xf32>
    %247 = vector.shape_cast %246 : vector<1x1x16x32xf32> to vector<16x32xf32>
    %cst_185 = arith.constant dense<0.000000e+00> : vector<32x32xf32>
    %248 = tpu.matmul %245, %247, %cst_185 {dimension_numbers = #tpu.dot_dimension_numbers<[1], [0], [0], [1], [0, 0, 1, 1], [], []>} : vector<32x16xf32>, vector<16x32xf32>, vector<32x32xf32> -> vector<32x32xf32>
    %249 = vector.broadcast %204 : vector<1x32xf32> to vector<32x32xf32>
    %250 = arith.addf %249, %248 : vector<32x32xf32>
    %c1_186 = arith.constant 1 : index
    %c1_187 = arith.constant 1 : index
    %c0_188 = arith.constant 0 : index
    %c0_189 = arith.constant 0 : index
    %c0_190 = arith.constant 0 : index
    %251 = vector.load %arg5[%c1_186, %c1_187, %c0_188, %c0_189, %c0_190] : memref<2x2x3x32x16xf32, #tpu.memory_space<vmem>>, vector<1x1x1x32x16xf32>
    %252 = vector.shape_cast %251 : vector<1x1x1x32x16xf32> to vector<32x16xf32>
    %cst_191 = arith.constant dense<0.000000e+00> : vector<32x16xf32>
    %253 = tpu.matmul %202, %252, %cst_191 {dimension_numbers = #tpu.dot_dimension_numbers<[1], [0], [0], [1], [0, 0, 1, 1], [], []>} : vector<32x32xf32>, vector<32x16xf32>, vector<32x16xf32> -> vector<32x16xf32>
    %c1_192 = arith.constant 1 : index
    %c1_193 = arith.constant 1 : index
    %c0_194 = arith.constant 0 : index
    %c0_195 = arith.constant 0 : index
    %c0_196 = arith.constant 0 : index
    %254 = vector.load %arg6[%c1_192, %c1_193, %c0_194, %c0_195, %c0_196] : memref<2x2x3x1x16xf32, #tpu.memory_space<vmem>>, vector<1x1x1x1x16xf32>
    %255 = vector.shape_cast %254 : vector<1x1x1x1x16xf32> to vector<1x16xf32>
    %256 = vector.broadcast %255 : vector<1x16xf32> to vector<32x16xf32>
    %257 = arith.addf %253, %256 : vector<32x16xf32>
    %258 = vector.shape_cast %257 : vector<32x16xf32> to vector<4x8x16xf32>
    %c1_197 = arith.constant 1 : index
    %c1_198 = arith.constant 1 : index
    %c1_199 = arith.constant 1 : index
    %c0_200 = arith.constant 0 : index
    %c0_201 = arith.constant 0 : index
    %259 = vector.load %arg5[%c1_197, %c1_198, %c1_199, %c0_200, %c0_201] : memref<2x2x3x32x16xf32, #tpu.memory_space<vmem>>, vector<1x1x1x32x16xf32>
    %260 = vector.shape_cast %259 : vector<1x1x1x32x16xf32> to vector<32x16xf32>
    %cst_202 = arith.constant dense<0.000000e+00> : vector<32x16xf32>
    %261 = tpu.matmul %202, %260, %cst_202 {dimension_numbers = #tpu.dot_dimension_numbers<[1], [0], [0], [1], [0, 0, 1, 1], [], []>} : vector<32x32xf32>, vector<32x16xf32>, vector<32x16xf32> -> vector<32x16xf32>
    %c1_203 = arith.constant 1 : index
    %c1_204 = arith.constant 1 : index
    %c1_205 = arith.constant 1 : index
    %c0_206 = arith.constant 0 : index
    %c0_207 = arith.constant 0 : index
    %262 = vector.load %arg6[%c1_203, %c1_204, %c1_205, %c0_206, %c0_207] : memref<2x2x3x1x16xf32, #tpu.memory_space<vmem>>, vector<1x1x1x1x16xf32>
    %263 = vector.shape_cast %262 : vector<1x1x1x1x16xf32> to vector<1x16xf32>
    %264 = vector.broadcast %263 : vector<1x16xf32> to vector<32x16xf32>
    %265 = arith.addf %261, %264 : vector<32x16xf32>
    %266 = vector.shape_cast %265 : vector<32x16xf32> to vector<4x8x16xf32>
    %c1_208 = arith.constant 1 : index
    %c1_209 = arith.constant 1 : index
    %c2_210 = arith.constant 2 : index
    %c0_211 = arith.constant 0 : index
    %c0_212 = arith.constant 0 : index
    %267 = vector.load %arg5[%c1_208, %c1_209, %c2_210, %c0_211, %c0_212] : memref<2x2x3x32x16xf32, #tpu.memory_space<vmem>>, vector<1x1x1x32x16xf32>
    %268 = vector.shape_cast %267 : vector<1x1x1x32x16xf32> to vector<32x16xf32>
    %cst_213 = arith.constant dense<0.000000e+00> : vector<32x16xf32>
    %269 = tpu.matmul %202, %268, %cst_213 {dimension_numbers = #tpu.dot_dimension_numbers<[1], [0], [0], [1], [0, 0, 1, 1], [], []>} : vector<32x32xf32>, vector<32x16xf32>, vector<32x16xf32> -> vector<32x16xf32>
    %c1_214 = arith.constant 1 : index
    %c1_215 = arith.constant 1 : index
    %c2_216 = arith.constant 2 : index
    %c0_217 = arith.constant 0 : index
    %c0_218 = arith.constant 0 : index
    %270 = vector.load %arg6[%c1_214, %c1_215, %c2_216, %c0_217, %c0_218] : memref<2x2x3x1x16xf32, #tpu.memory_space<vmem>>, vector<1x1x1x1x16xf32>
    %271 = vector.shape_cast %270 : vector<1x1x1x1x16xf32> to vector<1x16xf32>
    %272 = vector.broadcast %271 : vector<1x16xf32> to vector<32x16xf32>
    %273 = arith.addf %269, %272 : vector<32x16xf32>
    %274 = vector.shape_cast %273 : vector<32x16xf32> to vector<4x8x16xf32>
    "tpu.trace_start"() <{level = 10 : i32, message = "nqd,nkd->nqk"}> : () -> ()
    %cst_219 = arith.constant dense<0.000000e+00> : vector<4x8x8xf32>
    %275 = tpu.matmul %258, %266, %cst_219 {dimension_numbers = #tpu.dot_dimension_numbers<[2], [2], [1], [1], [0, 0, 0, 1, 1, 1], [0], [0]>} : vector<4x8x16xf32>, vector<4x8x16xf32>, vector<4x8x8xf32> -> vector<4x8x8xf32>
    "tpu.trace_stop"() : () -> ()
    %cst_220 = arith.constant 2.500000e-01 : f32
    %276 = vector.broadcast %cst_220 : f32 to vector<4x8x8xf32>
    %277 = arith.mulf %275, %276 : vector<4x8x8xf32>
    %278 = vector.broadcast %2 : vector<4x1x8xf32> to vector<4x8x8xf32>
    %279 = arith.addf %277, %278 : vector<4x8x8xf32>
    %cst_221 = arith.constant dense<0xFF800000> : vector<4x8xf32>
    %280 = vector.multi_reduction <maximumf>, %279, %cst_221 [2] : vector<4x8x8xf32> to vector<4x8xf32>
    %281 = vector.shape_cast %280 : vector<4x8xf32> to vector<4x8x1xf32>
    %282 = vector.broadcast %281 : vector<4x8x1xf32> to vector<4x8x8xf32>
    %283 = arith.subf %279, %282 : vector<4x8x8xf32>
    %284 = math.exp %283 : vector<4x8x8xf32>
    %cst_222 = arith.constant dense<0.000000e+00> : vector<4x8xf32>
    %285 = vector.multi_reduction <add>, %284, %cst_222 [2] : vector<4x8x8xf32> to vector<4x8xf32>
    %286 = vector.shape_cast %285 : vector<4x8xf32> to vector<4x8x1xf32>
    %287 = tpu.reciprocal %286 {approx = true} : vector<4x8x1xf32> -> vector<4x8x1xf32>
    %288 = vector.broadcast %287 : vector<4x8x1xf32> to vector<4x8x8xf32>
    %289 = arith.mulf %284, %288 : vector<4x8x8xf32>
    "tpu.trace_start"() <{level = 10 : i32, message = "nqk,nkd->nqd"}> : () -> ()
    %cst_223 = arith.constant dense<0.000000e+00> : vector<4x8x16xf32>
    %290 = tpu.matmul %289, %274, %cst_223 {dimension_numbers = #tpu.dot_dimension_numbers<[2], [1], [1], [2], [0, 0, 0, 1, 1, 2], [0], [0]>} : vector<4x8x8xf32>, vector<4x8x16xf32>, vector<4x8x16xf32> -> vector<4x8x16xf32>
    "tpu.trace_stop"() : () -> ()
    %291 = vector.shape_cast %290 : vector<4x8x16xf32> to vector<32x16xf32>
    %c1_224 = arith.constant 1 : index
    %c1_225 = arith.constant 1 : index
    %c0_226 = arith.constant 0 : index
    %c0_227 = arith.constant 0 : index
    %292 = vector.load %arg7[%c1_224, %c1_225, %c0_226, %c0_227] : memref<2x2x16x32xf32, #tpu.memory_space<vmem>>, vector<1x1x16x32xf32>
    %293 = vector.shape_cast %292 : vector<1x1x16x32xf32> to vector<16x32xf32>
    %cst_228 = arith.constant dense<0.000000e+00> : vector<32x32xf32>
    %294 = tpu.matmul %291, %293, %cst_228 {dimension_numbers = #tpu.dot_dimension_numbers<[1], [0], [0], [1], [0, 0, 1, 1], [], []>} : vector<32x16xf32>, vector<16x32xf32>, vector<32x32xf32> -> vector<32x32xf32>
    %295 = arith.addf %250, %294 : vector<32x32xf32>
    %296 = arith.addf %295, %202 : vector<32x32xf32>
    %c1_229 = arith.constant 1 : index
    %c0_230 = arith.constant 0 : index
    %c0_231 = arith.constant 0 : index
    %297 = vector.load %arg9[%c1_229, %c0_230, %c0_231] : memref<2x1x32xf32, #tpu.memory_space<vmem>>, vector<1x1x32xf32>
    %298 = vector.shape_cast %297 : vector<1x1x32xf32> to vector<1x32xf32>
    %c1_232 = arith.constant 1 : index
    %c0_233 = arith.constant 0 : index
    %c0_234 = arith.constant 0 : index
    %299 = vector.load %arg10[%c1_232, %c0_233, %c0_234] : memref<2x1x32xf32, #tpu.memory_space<vmem>>, vector<1x1x32xf32>
    %300 = vector.shape_cast %299 : vector<1x1x32xf32> to vector<1x32xf32>
    %cst_235 = arith.constant dense<0.000000e+00> : vector<32xf32>
    %301 = vector.multi_reduction <add>, %296, %cst_235 [1] : vector<32x32xf32> to vector<32xf32>
    %302 = vector.shape_cast %301 : vector<32xf32> to vector<32x1xf32>
    %cst_236 = arith.constant 3.200000e+01 : f32
    %303 = vector.broadcast %cst_236 : f32 to vector<32x1xf32>
    %304 = arith.divf %302, %303 : vector<32x1xf32>
    %305 = vector.broadcast %304 : vector<32x1xf32> to vector<32x32xf32>
    %306 = arith.subf %296, %305 : vector<32x32xf32>
    %307 = arith.mulf %306, %306 : vector<32x32xf32>
    %cst_237 = arith.constant dense<0.000000e+00> : vector<32xf32>
    %308 = vector.multi_reduction <add>, %307, %cst_237 [1] : vector<32x32xf32> to vector<32xf32>
    %309 = vector.shape_cast %308 : vector<32xf32> to vector<32x1xf32>
    %cst_238 = arith.constant 3.200000e+01 : f32
    %310 = vector.broadcast %cst_238 : f32 to vector<32x1xf32>
    %311 = arith.divf %309, %310 : vector<32x1xf32>
    %312 = vector.broadcast %304 : vector<32x1xf32> to vector<32x32xf32>
    %313 = arith.subf %296, %312 : vector<32x32xf32>
    %cst_239 = arith.constant 9.99999996E-13 : f32
    %314 = vector.broadcast %cst_239 : f32 to vector<32x1xf32>
    %315 = arith.addf %311, %314 : vector<32x1xf32>
    %316 = math.rsqrt %315 : vector<32x1xf32>
    %317 = vector.broadcast %316 : vector<32x1xf32> to vector<32x32xf32>
    %318 = arith.mulf %313, %317 : vector<32x32xf32>
    %319 = vector.broadcast %298 : vector<1x32xf32> to vector<32x32xf32>
    %320 = arith.mulf %318, %319 : vector<32x32xf32>
    %321 = vector.broadcast %300 : vector<1x32xf32> to vector<32x32xf32>
    %322 = arith.addf %320, %321 : vector<32x32xf32>
    %c1_240 = arith.constant 1 : index
    %c0_241 = arith.constant 0 : index
    %c0_242 = arith.constant 0 : index
    %323 = vector.load %arg11[%c1_240, %c0_241, %c0_242] : memref<2x32x64xf32, #tpu.memory_space<vmem>>, vector<1x32x64xf32>
    %324 = vector.shape_cast %323 : vector<1x32x64xf32> to vector<32x64xf32>
    %cst_243 = arith.constant dense<0.000000e+00> : vector<32x64xf32>
    %325 = tpu.matmul %322, %324, %cst_243 {dimension_numbers = #tpu.dot_dimension_numbers<[1], [0], [0], [1], [0, 0, 1, 1], [], []>} : vector<32x32xf32>, vector<32x64xf32>, vector<32x64xf32> -> vector<32x64xf32>
    %c1_244 = arith.constant 1 : index
    %c0_245 = arith.constant 0 : index
    %c0_246 = arith.constant 0 : index
    %326 = vector.load %arg12[%c1_244, %c0_245, %c0_246] : memref<2x1x64xf32, #tpu.memory_space<vmem>>, vector<1x1x64xf32>
    %327 = vector.shape_cast %326 : vector<1x1x64xf32> to vector<1x64xf32>
    %328 = vector.broadcast %327 : vector<1x64xf32> to vector<32x64xf32>
    %329 = arith.addf %325, %328 : vector<32x64xf32>
    %330 = arith.mulf %329, %329 : vector<32x64xf32>
    %331 = arith.mulf %329, %330 : vector<32x64xf32>
    %cst_247 = arith.constant 4.471500e-02 : f32
    %332 = vector.broadcast %cst_247 : f32 to vector<32x64xf32>
    %333 = arith.mulf %332, %331 : vector<32x64xf32>
    %334 = arith.addf %329, %333 : vector<32x64xf32>
    %cst_248 = arith.constant 0.797884583 : f32
    %335 = vector.broadcast %cst_248 : f32 to vector<32x64xf32>
    %336 = arith.mulf %335, %334 : vector<32x64xf32>
    %337 = math.tanh %336 : vector<32x64xf32>
    %cst_249 = arith.constant 1.000000e+00 : f32
    %338 = vector.broadcast %cst_249 : f32 to vector<32x64xf32>
    %339 = arith.addf %338, %337 : vector<32x64xf32>
    %cst_250 = arith.constant 5.000000e-01 : f32
    %340 = vector.broadcast %cst_250 : f32 to vector<32x64xf32>
    %341 = arith.mulf %340, %339 : vector<32x64xf32>
    %342 = arith.mulf %329, %341 : vector<32x64xf32>
    %c1_251 = arith.constant 1 : index
    %c0_252 = arith.constant 0 : index
    %c0_253 = arith.constant 0 : index
    %343 = vector.load %arg13[%c1_251, %c0_252, %c0_253] : memref<2x64x32xf32, #tpu.memory_space<vmem>>, vector<1x64x32xf32>
    %344 = vector.shape_cast %343 : vector<1x64x32xf32> to vector<64x32xf32>
    %cst_254 = arith.constant dense<0.000000e+00> : vector<32x32xf32>
    %345 = tpu.matmul %342, %344, %cst_254 {dimension_numbers = #tpu.dot_dimension_numbers<[1], [0], [0], [1], [0, 0, 1, 1], [], []>} : vector<32x64xf32>, vector<64x32xf32>, vector<32x32xf32> -> vector<32x32xf32>
    %c1_255 = arith.constant 1 : index
    %c0_256 = arith.constant 0 : index
    %c0_257 = arith.constant 0 : index
    %346 = vector.load %arg14[%c1_255, %c0_256, %c0_257] : memref<2x1x32xf32, #tpu.memory_space<vmem>>, vector<1x1x32xf32>
    %347 = vector.shape_cast %346 : vector<1x1x32xf32> to vector<1x32xf32>
    %348 = vector.broadcast %347 : vector<1x32xf32> to vector<32x32xf32>
    %349 = arith.addf %345, %348 : vector<32x32xf32>
    %350 = arith.addf %349, %322 : vector<32x32xf32>
    %c1_258 = arith.constant 1 : index
    %c0_259 = arith.constant 0 : index
    %c0_260 = arith.constant 0 : index
    %351 = vector.load %arg15[%c1_258, %c0_259, %c0_260] : memref<2x1x32xf32, #tpu.memory_space<vmem>>, vector<1x1x32xf32>
    %352 = vector.shape_cast %351 : vector<1x1x32xf32> to vector<1x32xf32>
    %c1_261 = arith.constant 1 : index
    %c0_262 = arith.constant 0 : index
    %c0_263 = arith.constant 0 : index
    %353 = vector.load %arg16[%c1_261, %c0_262, %c0_263] : memref<2x1x32xf32, #tpu.memory_space<vmem>>, vector<1x1x32xf32>
    %354 = vector.shape_cast %353 : vector<1x1x32xf32> to vector<1x32xf32>
    %cst_264 = arith.constant dense<0.000000e+00> : vector<32xf32>
    %355 = vector.multi_reduction <add>, %350, %cst_264 [1] : vector<32x32xf32> to vector<32xf32>
    %356 = vector.shape_cast %355 : vector<32xf32> to vector<32x1xf32>
    %cst_265 = arith.constant 3.200000e+01 : f32
    %357 = vector.broadcast %cst_265 : f32 to vector<32x1xf32>
    %358 = arith.divf %356, %357 : vector<32x1xf32>
    %359 = vector.broadcast %358 : vector<32x1xf32> to vector<32x32xf32>
    %360 = arith.subf %350, %359 : vector<32x32xf32>
    %361 = arith.mulf %360, %360 : vector<32x32xf32>
    %cst_266 = arith.constant dense<0.000000e+00> : vector<32xf32>
    %362 = vector.multi_reduction <add>, %361, %cst_266 [1] : vector<32x32xf32> to vector<32xf32>
    %363 = vector.shape_cast %362 : vector<32xf32> to vector<32x1xf32>
    %cst_267 = arith.constant 3.200000e+01 : f32
    %364 = vector.broadcast %cst_267 : f32 to vector<32x1xf32>
    %365 = arith.divf %363, %364 : vector<32x1xf32>
    %366 = vector.broadcast %358 : vector<32x1xf32> to vector<32x32xf32>
    %367 = arith.subf %350, %366 : vector<32x32xf32>
    %cst_268 = arith.constant 9.99999996E-13 : f32
    %368 = vector.broadcast %cst_268 : f32 to vector<32x1xf32>
    %369 = arith.addf %365, %368 : vector<32x1xf32>
    %370 = math.rsqrt %369 : vector<32x1xf32>
    %371 = vector.broadcast %370 : vector<32x1xf32> to vector<32x32xf32>
    %372 = arith.mulf %367, %371 : vector<32x32xf32>
    %373 = vector.broadcast %352 : vector<1x32xf32> to vector<32x32xf32>
    %374 = arith.mulf %372, %373 : vector<32x32xf32>
    %375 = vector.broadcast %354 : vector<1x32xf32> to vector<32x32xf32>
    %376 = arith.addf %374, %375 : vector<32x32xf32>
    %377 = tpu.iota {dimensions = array<i32: 1>} : vector<1x32xi32>
    %c8_i32 = arith.constant 8 : i32
    %c0_i32 = arith.constant 0 : i32
    %378 = arith.cmpi eq, %c8_i32, %c0_i32 : i32
    %c1_i32 = arith.constant 1 : i32
    %379 = arith.select %378, %c1_i32, %c8_i32 : i32
    %380 = vector.broadcast %379 : i32 to vector<1x32xi32>
    %381 = arith.remsi %377, %380 : vector<1x32xi32>
    %c0_i32_269 = arith.constant 0 : i32
    %382 = vector.broadcast %c0_i32_269 : i32 to vector<1x32xi32>
    %383 = arith.cmpi ne, %381, %382 : vector<1x32xi32>
    %c0_i32_270 = arith.constant 0 : i32
    %384 = vector.broadcast %c0_i32_270 : i32 to vector<1x32xi32>
    %385 = arith.cmpi slt, %381, %384 : vector<1x32xi32>
    %c0_i32_271 = arith.constant 0 : i32
    %386 = arith.cmpi slt, %379, %c0_i32_271 : i32
    %387 = vector.broadcast %386 : i1 to vector<1x32xi1>
    %388 = vector.broadcast %387 : vector<1x32xi1> to vector<1x32xi1>
    %389 = arith.xori %385, %388 : vector<1x32xi1>
    %390 = arith.andi %389, %383 : vector<1x32xi1>
    %391 = vector.broadcast %379 : i32 to vector<1x32xi32>
    %392 = arith.addi %381, %391 : vector<1x32xi32>
    %393 = arith.select %390, %392, %381 : vector<1x32xi1>, vector<1x32xi32>
    %c0_i32_272 = arith.constant 0 : i32
    %394 = vector.broadcast %c0_i32_272 : i32 to vector<1x32xi32>
    %395 = arith.cmpi eq, %393, %394 : vector<1x32xi32>
    %cst_273 = arith.constant 2.500000e-01 : f32
    %cst_274 = arith.constant 0.000000e+00 : f32
    %396 = vector.broadcast %cst_273 : f32 to vector<1x32xf32>
    %397 = vector.broadcast %cst_274 : f32 to vector<1x32xf32>
    %398 = arith.select %395, %396, %397 : vector<1x32xi1>, vector<1x32xf32>
    %cst_275 = arith.constant dense<0.000000e+00> : vector<1x32xf32>
    %399 = tpu.matmul %398, %376, %cst_275 {dimension_numbers = #tpu.dot_dimension_numbers<[1], [0], [0], [1], [0, 0, 1, 1], [], []>} : vector<1x32xf32>, vector<32x32xf32>, vector<1x32xf32> -> vector<1x32xf32>
    %c0_276 = arith.constant 0 : index
    %c0_277 = arith.constant 0 : index
    %400 = vector.load %arg17[%c0_276, %c0_277] : memref<32x16xf32, #tpu.memory_space<vmem>>, vector<32x16xf32>
    %cst_278 = arith.constant dense<0.000000e+00> : vector<1x16xf32>
    %401 = tpu.matmul %399, %400, %cst_278 {dimension_numbers = #tpu.dot_dimension_numbers<[1], [0], [0], [1], [0, 0, 1, 1], [], []>} : vector<1x32xf32>, vector<32x16xf32>, vector<1x16xf32> -> vector<1x16xf32>
    %c0_279 = arith.constant 0 : index
    %c0_280 = arith.constant 0 : index
    %402 = vector.load %arg18[%c0_279, %c0_280] : memref<1x16xf32, #tpu.memory_space<vmem>>, vector<1x16xf32>
    %403 = arith.addf %401, %402 : vector<1x16xf32>
    %c0_281 = arith.constant 0 : index
    %c0_282 = arith.constant 0 : index
    %c0_283 = arith.constant 0 : index
    %404 = vector.load %arg21[%c0_281, %c0_282, %c0_283] : memref<1x1x16xf32, #tpu.memory_space<vmem>>, vector<1x1x16xf32>
    %405 = vector.shape_cast %404 : vector<1x1x16xf32> to vector<1x16xf32>
    %406 = vector.shape_cast %403 : vector<1x16xf32> to vector<1x1x16xf32>
    tpu.vector_store %arg21[%c0_281, %c0_282, %c0_283], %406 {strides = array<i32>} : memref<1x1x16xf32, #tpu.memory_space<vmem>>, vector<1x1x16xf32>,
    %c0_284 = arith.constant 0 : index
    %c0_285 = arith.constant 0 : index
    %407 = vector.load %arg19[%c0_284, %c0_285] : memref<16x3xf32, #tpu.memory_space<vmem>>, vector<16x3xf32>
    %cst_286 = arith.constant dense<0.000000e+00> : vector<1x3xf32>
    %408 = tpu.matmul %403, %407, %cst_286 {dimension_numbers = #tpu.dot_dimension_numbers<[1], [0], [0], [1], [0, 0, 1, 1], [], []>} : vector<1x16xf32>, vector<16x3xf32>, vector<1x3xf32> -> vector<1x3xf32>
    %c0_287 = arith.constant 0 : index
    %c0_288 = arith.constant 0 : index
    %409 = vector.load %arg20[%c0_287, %c0_288] : memref<1x3xf32, #tpu.memory_space<vmem>>, vector<1x3xf32>
    %410 = arith.addf %408, %409 : vector<1x3xf32>
    %411 = arith.negf %410 : vector<1x3xf32>
    %412 = math.exp %411 : vector<1x3xf32>
    %cst_289 = arith.constant 1.000000e+00 : f32
    %413 = vector.broadcast %cst_289 : f32 to vector<1x3xf32>
    %414 = arith.addf %413, %412 : vector<1x3xf32>
    %415 = arith.divf %413, %414 : vector<1x3xf32>
    %c0_290 = arith.constant 0 : index
    %c0_291 = arith.constant 0 : index
    %c0_292 = arith.constant 0 : index
    %416 = vector.load %arg22[%c0_290, %c0_291, %c0_292] : memref<1x1x3xf32, #tpu.memory_space<vmem>>, vector<1x1x3xf32>
    %417 = vector.shape_cast %416 : vector<1x1x3xf32> to vector<1x3xf32>
    %418 = vector.shape_cast %415 : vector<1x3xf32> to vector<1x1x3xf32>
    tpu.vector_store %arg22[%c0_290, %c0_291, %c0_292], %418 {strides = array<i32>} : memref<1x1x3xf32, #tpu.memory_space<vmem>>, vector<1x1x3xf32>,
    return
  }
  func.func @transform_0(%arg0: i32) -> (i32, i32, i32) {
    %c0_i32 = arith.constant 0 : i32
    %c0_i32_0 = arith.constant 0 : i32
    %c0_i32_1 = arith.constant 0 : i32
    return %arg0, %c0_i32, %c0_i32_0 : i32, i32, i32
  }
  func.func @transform_1(%arg0: i32) -> (i32, i32, i32) {
    %c0_i32 = arith.constant 0 : i32
    %c0_i32_0 = arith.constant 0 : i32
    %c0_i32_1 = arith.constant 0 : i32
    return %arg0, %c0_i32, %c0_i32_0 : i32, i32, i32
  }
  func.func @transform_2(%arg0: i32) -> (i32, i32) {
    %c0_i32 = arith.constant 0 : i32
    %c0_i32_0 = arith.constant 0 : i32
    %c0_i32_1 = arith.constant 0 : i32
    return %c0_i32, %c0_i32_0 : i32, i32
  }
  func.func @transform_3(%arg0: i32) -> (i32, i32) {
    %c0_i32 = arith.constant 0 : i32
    %c0_i32_0 = arith.constant 0 : i32
    %c0_i32_1 = arith.constant 0 : i32
    return %c0_i32, %c0_i32_0 : i32, i32
  }
  func.func @transform_4(%arg0: i32) -> (i32, i32, i32, i32, i32) {
    %c0_i32 = arith.constant 0 : i32
    %c0_i32_0 = arith.constant 0 : i32
    %c0_i32_1 = arith.constant 0 : i32
    %c0_i32_2 = arith.constant 0 : i32
    %c0_i32_3 = arith.constant 0 : i32
    %c0_i32_4 = arith.constant 0 : i32
    return %c0_i32, %c0_i32_0, %c0_i32_1, %c0_i32_2, %c0_i32_3 : i32, i32, i32, i32, i32
  }
  func.func @transform_5(%arg0: i32) -> (i32, i32, i32, i32, i32) {
    %c0_i32 = arith.constant 0 : i32
    %c0_i32_0 = arith.constant 0 : i32
    %c0_i32_1 = arith.constant 0 : i32
    %c0_i32_2 = arith.constant 0 : i32
    %c0_i32_3 = arith.constant 0 : i32
    %c0_i32_4 = arith.constant 0 : i32
    return %c0_i32, %c0_i32_0, %c0_i32_1, %c0_i32_2, %c0_i32_3 : i32, i32, i32, i32, i32
  }
  func.func @transform_6(%arg0: i32) -> (i32, i32, i32, i32) {
    %c0_i32 = arith.constant 0 : i32
    %c0_i32_0 = arith.constant 0 : i32
    %c0_i32_1 = arith.constant 0 : i32
    %c0_i32_2 = arith.constant 0 : i32
    %c0_i32_3 = arith.constant 0 : i32
    return %c0_i32, %c0_i32_0, %c0_i32_1, %c0_i32_2 : i32, i32, i32, i32
  }
  func.func @transform_7(%arg0: i32) -> (i32, i32, i32) {
    %c0_i32 = arith.constant 0 : i32
    %c0_i32_0 = arith.constant 0 : i32
    %c0_i32_1 = arith.constant 0 : i32
    %c0_i32_2 = arith.constant 0 : i32
    return %c0_i32, %c0_i32_0, %c0_i32_1 : i32, i32, i32
  }
  func.func @transform_8(%arg0: i32) -> (i32, i32, i32) {
    %c0_i32 = arith.constant 0 : i32
    %c0_i32_0 = arith.constant 0 : i32
    %c0_i32_1 = arith.constant 0 : i32
    %c0_i32_2 = arith.constant 0 : i32
    return %c0_i32, %c0_i32_0, %c0_i32_1 : i32, i32, i32
  }
  func.func @transform_9(%arg0: i32) -> (i32, i32, i32) {
    %c0_i32 = arith.constant 0 : i32
    %c0_i32_0 = arith.constant 0 : i32
    %c0_i32_1 = arith.constant 0 : i32
    %c0_i32_2 = arith.constant 0 : i32
    return %c0_i32, %c0_i32_0, %c0_i32_1 : i32, i32, i32
  }
  func.func @transform_10(%arg0: i32) -> (i32, i32, i32) {
    %c0_i32 = arith.constant 0 : i32
    %c0_i32_0 = arith.constant 0 : i32
    %c0_i32_1 = arith.constant 0 : i32
    %c0_i32_2 = arith.constant 0 : i32
    return %c0_i32, %c0_i32_0, %c0_i32_1 : i32, i32, i32
  }
  func.func @transform_11(%arg0: i32) -> (i32, i32, i32) {
    %c0_i32 = arith.constant 0 : i32
    %c0_i32_0 = arith.constant 0 : i32
    %c0_i32_1 = arith.constant 0 : i32
    %c0_i32_2 = arith.constant 0 : i32
    return %c0_i32, %c0_i32_0, %c0_i32_1 : i32, i32, i32
  }
  func.func @transform_12(%arg0: i32) -> (i32, i32, i32) {
    %c0_i32 = arith.constant 0 : i32
    %c0_i32_0 = arith.constant 0 : i32
    %c0_i32_1 = arith.constant 0 : i32
    %c0_i32_2 = arith.constant 0 : i32
    return %c0_i32, %c0_i32_0, %c0_i32_1 : i32, i32, i32
  }
  func.func @transform_13(%arg0: i32) -> (i32, i32, i32) {
    %c0_i32 = arith.constant 0 : i32
    %c0_i32_0 = arith.constant 0 : i32
    %c0_i32_1 = arith.constant 0 : i32
    %c0_i32_2 = arith.constant 0 : i32
    return %c0_i32, %c0_i32_0, %c0_i32_1 : i32, i32, i32
  }
  func.func @transform_14(%arg0: i32) -> (i32, i32, i32) {
    %c0_i32 = arith.constant 0 : i32
    %c0_i32_0 = arith.constant 0 : i32
    %c0_i32_1 = arith.constant 0 : i32
    %c0_i32_2 = arith.constant 0 : i32
    return %c0_i32, %c0_i32_0, %c0_i32_1 : i32, i32, i32
  }
  func.func @transform_15(%arg0: i32) -> (i32, i32, i32) {
    %c0_i32 = arith.constant 0 : i32
    %c0_i32_0 = arith.constant 0 : i32
    %c0_i32_1 = arith.constant 0 : i32
    %c0_i32_2 = arith.constant 0 : i32
    return %c0_i32, %c0_i32_0, %c0_i32_1 : i32, i32, i32
  }
  func.func @transform_16(%arg0: i32) -> (i32, i32) {
    %c0_i32 = arith.constant 0 : i32
    %c0_i32_0 = arith.constant 0 : i32
    %c0_i32_1 = arith.constant 0 : i32
    return %c0_i32, %c0_i32_0 : i32, i32
  }
  func.func @transform_17(%arg0: i32) -> (i32, i32) {
    %c0_i32 = arith.constant 0 : i32
    %c0_i32_0 = arith.constant 0 : i32
    %c0_i32_1 = arith.constant 0 : i32
    return %c0_i32, %c0_i32_0 : i32, i32
  }
  func.func @transform_18(%arg0: i32) -> (i32, i32) {
    %c0_i32 = arith.constant 0 : i32
    %c0_i32_0 = arith.constant 0 : i32
    %c0_i32_1 = arith.constant 0 : i32
    return %c0_i32, %c0_i32_0 : i32, i32
  }
  func.func @transform_19(%arg0: i32) -> (i32, i32) {
    %c0_i32 = arith.constant 0 : i32
    %c0_i32_0 = arith.constant 0 : i32
    %c0_i32_1 = arith.constant 0 : i32
    return %c0_i32, %c0_i32_0 : i32, i32
  }
  func.func @transform_20(%arg0: i32) -> (i32, i32, i32) {
    %c0_i32 = arith.constant 0 : i32
    %c0_i32_0 = arith.constant 0 : i32
    %c0_i32_1 = arith.constant 0 : i32
    return %arg0, %c0_i32, %c0_i32_0 : i32, i32, i32
  }
  func.func @transform_21(%arg0: i32) -> (i32, i32, i32) {
    %c0_i32 = arith.constant 0 : i32
    %c0_i32_0 = arith.constant 0 : i32
    %c0_i32_1 = arith.constant 0 : i32
    return %arg0, %c0_i32, %c0_i32_0 : i32, i32, i32
  }
}

</mosaic_0001>

<llo_original>
// kernel: bert_for_representation.1
$region0: #{bert_for_representation.1}
  #allocation0 [shape = 'u32[]', space=smem, size = 0x4, offset = 0x4, fixed_abs, tag = 'smem constant byte address 0x4 - core index']
  #allocation1 [shape = 'u32[144,128]{1,0:T(1,128)}', space=vmem, size = 0x12000, scoped, tag = 'internal scratch']
  %s0 = inlined_call_operand.vmem [shape: f32[2,32,32], index: 0, kind: input, shape index: {}]
  %s1 = inlined_call_operand.vmem [shape: f32[2,4,8], index: 1, kind: input, shape index: {}]
  %s2 = inlined_call_operand.vmem [shape: f32[1,32], index: 2, kind: input, shape index: {}]
  %s3 = inlined_call_operand.vmem [shape: f32[1,32], index: 3, kind: input, shape index: {}]
  %s4 = inlined_call_operand.vmem [shape: f32[2,2,3,32,16], index: 4, kind: input, shape index: {}]
  %s5 = inlined_call_operand.vmem [shape: f32[2,2,3,1,16], index: 5, kind: input, shape index: {}]
  %s6 = inlined_call_operand.vmem [shape: f32[2,2,16,32], index: 6, kind: input, shape index: {}]
  %s7 = inlined_call_operand.vmem [shape: f32[2,1,32], index: 7, kind: input, shape index: {}, may-alias: {7,9,13,15}]
  %s8 = inlined_call_operand.vmem [shape: f32[2,1,32], index: 8, kind: input, shape index: {}, may-alias: {8,14}]
  %s9 = inlined_call_operand.vmem [shape: f32[2,1,32], index: 9, kind: input, shape index: {}, may-alias: {7,9,13,15}]
  %s10 = inlined_call_operand.vmem [shape: f32[2,32,64], index: 10, kind: input, shape index: {}]
  %s11 = inlined_call_operand.vmem [shape: f32[2,1,64], index: 11, kind: input, shape index: {}]
  %s12 = inlined_call_operand.vmem [shape: f32[2,64,32], index: 12, kind: input, shape index: {}]
  %s13 = inlined_call_operand.vmem [shape: f32[2,1,32], index: 13, kind: input, shape index: {}, may-alias: {7,9,13,15}]
  %s14 = inlined_call_operand.vmem [shape: f32[2,1,32], index: 14, kind: input, shape index: {}, may-alias: {8,14}]
  %s15 = inlined_call_operand.vmem [shape: f32[2,1,32], index: 15, kind: input, shape index: {}, may-alias: {7,9,13,15}]
  %s16 = inlined_call_operand.vmem [shape: f32[32,16], index: 16, kind: input, shape index: {}]
  %s17 = inlined_call_operand.vmem [shape: f32[1,16], index: 17, kind: input, shape index: {}]
  %s18 = inlined_call_operand.vmem [shape: f32[16,3], index: 18, kind: input, shape index: {}]
  %s19 = inlined_call_operand.vmem [shape: f32[1,3], index: 19, kind: input, shape index: {}]
  %s20 = inlined_call_operand.hbm [shape: f32[2,1,16], index: 20, kind: output, shape index: {0}]
  %s21 = inlined_call_operand.hbm [shape: f32[2,1,3], index: 21, kind: output, shape index: {1}]
  %22 = xla_tuple %s20, %s21
  %s23 = sld [smem:[#allocation0]]
  $region121: #{bert_for_representation.1} parent=0
    _
  %s25 = ssub.s32 1, %s23
  %s26 = scalar_select 0, %s25, %s23
  $region1: #{bert_for_representation.1} parent=0
    #allocation2 [shape = 'u8[1024]{0}', space=vmem, size = 0x400, scoped, tag = 'output window, operand 0']
    #allocation3 [shape = 's32[2]{0}', space=sflag, size = 0x8, scoped, tag = 'scoped memory for bert_for_representation.1']
    #allocation4 [shape = 'u8[1024]{0}', space=vmem, size = 0x400, scoped, tag = 'output window, operand 1']
    #allocation5 [shape = 's32[2]{0}', space=sflag, size = 0x8, scoped, tag = 'scoped memory for bert_for_representation.1']
    %27 = vsyncpa [#allocation3], 0
    %s28 = scalar_lea.sflag [#allocation3], 1
    %29 = vsyncpa %s28, 0
    %30 = vsyncpa [#allocation5], 0
    %s31 = scalar_lea.sflag [#allocation5], 1
    %32 = vsyncpa %s31, 0
    loop: start=0, step=1, limit=4
    $region2: #{bert_for_representation.1} parent=1 // loop_pre_header
      _
    $region3: #{bert_for_representation.1} parent=1 // loop_header
      %s34 = sphi 0, %s38
      %p35 = scmp.ge.s32.totalorder %s34, 4
      %s44 = sphi 0, %s46
      %s47 = sphi 0, %s44
      %s48 = sphi 0, %s47
      %s64 = sphi 0, %s48
      %s70 = sphi 0, %s72
      %s73 = sphi 0, %s70
      %s74 = sphi 0, %s73
      %s90 = sphi 0, %s74
      %s94 = sphi 0, %s94
      %s96 = sphi 0, %s94
      %s97 = sphi 0, %s96
      %s111 = sphi 0, %s97
      %s115 = sphi 0, %s115
      %s117 = sphi 0, %s115
      %s118 = sphi 0, %s117
      %s132 = sphi 0, %s118
      %s136 = sphi 0, %s136
      %s138 = sphi 0, %s136
      %s139 = sphi 0, %s138
      %s153 = sphi 0, %s139
      %s157 = sphi 0, %s157
      %s159 = sphi 0, %s157
      %s160 = sphi 0, %s159
      %s174 = sphi 0, %s160
      %s178 = sphi 0, %s178
      %s180 = sphi 0, %s178
      %s181 = sphi 0, %s180
      %s195 = sphi 0, %s181
      %s199 = sphi 0, %s199
      %s201 = sphi 0, %s199
      %s202 = sphi 0, %s201
      %s216 = sphi 0, %s202
      %s220 = sphi 0, %s220
      %s222 = sphi 0, %s220
      %s223 = sphi 0, %s222
      %s237 = sphi 0, %s223
      %s241 = sphi 0, %s241
      %s243 = sphi 0, %s241
      %s244 = sphi 0, %s243
      %s258 = sphi 0, %s244
      %s262 = sphi 0, %s262
      %s264 = sphi 0, %s262
      %s265 = sphi 0, %s264
      %s279 = sphi 0, %s265
      %s283 = sphi 0, %s283
      %s285 = sphi 0, %s283
      %s286 = sphi 0, %s285
      %s300 = sphi 0, %s286
      %s304 = sphi 0, %s304
      %s306 = sphi 0, %s304
      %s307 = sphi 0, %s306
      %s321 = sphi 0, %s307
      %s325 = sphi 0, %s325
      %s327 = sphi 0, %s325
      %s328 = sphi 0, %s327
      %s342 = sphi 0, %s328
      %s346 = sphi 0, %s346
      %s348 = sphi 0, %s346
      %s349 = sphi 0, %s348
      %s363 = sphi 0, %s349
      %s367 = sphi 0, %s367
      %s369 = sphi 0, %s367
      %s370 = sphi 0, %s369
      %s384 = sphi 0, %s370
      %s388 = sphi 0, %s388
      %s390 = sphi 0, %s388
      %s391 = sphi 0, %s390
      %s405 = sphi 0, %s391
      %s409 = sphi 0, %s409
      %s411 = sphi 0, %s409
      %s412 = sphi 0, %s411
      %s426 = sphi 0, %s412
      %s430 = sphi 0, %s430
      %s432 = sphi 0, %s430
      %s433 = sphi 0, %s432
      %s447 = sphi 0, %s433
      %s451 = sphi 0, %s451
      %s453 = sphi 0, %s451
      %s454 = sphi 0, %s453
      %s468 = sphi 0, %s454
      %s474 = sphi 0, %s476
      %s477 = sphi 0, %s474
      %s478 = sphi 0, %s477
      %s494 = sphi 0, %s478
      %s500 = sphi 0, %s502
      %s503 = sphi 0, %s500
      %s504 = sphi 0, %s503
      %s520 = sphi 0, %s504
    $region4: #{bert_for_representation.1} parent=1 // loop_header_branch
      %37 = sbr.rel (%p35) target = $region8
    $region5: #{bert_for_representation.1} parent=1 // loop_body
      %s39 = ssub.s32 %s34, 1
      %s40 = ssub.s32 %s34, 2
      %s41 = sadd.s32 %s34, 1
      %s42 = ssub.s32 %s34, %s41
      %p43 = scmp.eq.s32.totalorder %s42, 0
      %s45 = sadd.s32 %s44, 1
      %s46 = scalar_select %p43, %s44, %s45
      %p49 = pneg %p43
      %p50 = scmp.eq.s32.totalorder %s34, 1
      %p51 = por %p49, %p50
      %p52 = scmp.ne.s32.totalorder %s44, %s47
      %p53 = scmp.eq.s32.totalorder %s34, 0
      %p54 = por %p52, %p53
      %p55 = scmp.ne.s32.totalorder %s44, %s47
      %p56 = scmp.eq.s32.totalorder %s39, 1
      %p57 = por %p55, %p56
      %p58 = scmp.ne.s32.totalorder %s47, %s48
      %p59 = scmp.eq.s32.totalorder %s39, 0
      %p60 = por %p58, %p59
      %p61 = scmp.ne.s32.totalorder %s47, %s48
      %p62 = scmp.eq.s32.totalorder %s40, 1
      %p63 = por %p61, %p62
      %p65 = scmp.ne.s32.totalorder %s48, %s64
      %p66 = scmp.eq.s32.totalorder %s40, 0
      %p67 = por %p65, %p66
      %s68 = ssub.s32 %s34, %s41
      %p69 = scmp.eq.s32.totalorder %s68, 0
      %s71 = sadd.s32 %s70, 1
      %s72 = scalar_select %p69, %s70, %s71
      %p75 = pneg %p69
      %p76 = scmp.eq.s32.totalorder %s34, 1
      %p77 = por %p75, %p76
      %p78 = scmp.ne.s32.totalorder %s70, %s73
      %p79 = scmp.eq.s32.totalorder %s34, 0
      %p80 = por %p78, %p79
      %p81 = scmp.ne.s32.totalorder %s70, %s73
      %p82 = scmp.eq.s32.totalorder %s39, 1
      %p83 = por %p81, %p82
      %p84 = scmp.ne.s32.totalorder %s73, %s74
      %p85 = scmp.eq.s32.totalorder %s39, 0
      %p86 = por %p84, %p85
      %p87 = scmp.ne.s32.totalorder %s73, %s74
      %p88 = scmp.eq.s32.totalorder %s40, 1
      %p89 = por %p87, %p88
      %p91 = scmp.ne.s32.totalorder %s74, %s90
      %p92 = scmp.eq.s32.totalorder %s40, 0
      %p93 = por %p91, %p92
      %s95 = sadd.s32 %s94, 1
      %p98 = scmp.eq.s32.totalorder %s34, 1
      %p99 = scmp.ne.s32.totalorder %s94, %s96
      %p100 = scmp.eq.s32.totalorder %s34, 0
      %p101 = por %p99, %p100
      %p102 = scmp.ne.s32.totalorder %s94, %s96
      %p103 = scmp.eq.s32.totalorder %s39, 1
      %p104 = por %p102, %p103
      %p105 = scmp.ne.s32.totalorder %s96, %s97
      %p106 = scmp.eq.s32.totalorder %s39, 0
      %p107 = por %p105, %p106
      %p108 = scmp.ne.s32.totalorder %s96, %s97
      %p109 = scmp.eq.s32.totalorder %s40, 1
      %p110 = por %p108, %p109
      %p112 = scmp.ne.s32.totalorder %s97, %s111
      %p113 = scmp.eq.s32.totalorder %s40, 0
      %p114 = por %p112, %p113
      %s116 = sadd.s32 %s115, 1
      %p119 = scmp.eq.s32.totalorder %s34, 1
      %p120 = scmp.ne.s32.totalorder %s115, %s117
      %p121 = scmp.eq.s32.totalorder %s34, 0
      %p122 = por %p120, %p121
      %p123 = scmp.ne.s32.totalorder %s115, %s117
      %p124 = scmp.eq.s32.totalorder %s39, 1
      %p125 = por %p123, %p124
      %p126 = scmp.ne.s32.totalorder %s117, %s118
      %p127 = scmp.eq.s32.totalorder %s39, 0
      %p128 = por %p126, %p127
      %p129 = scmp.ne.s32.totalorder %s117, %s118
      %p130 = scmp.eq.s32.totalorder %s40, 1
      %p131 = por %p129, %p130
      %p133 = scmp.ne.s32.totalorder %s118, %s132
      %p134 = scmp.eq.s32.totalorder %s40, 0
      %p135 = por %p133, %p134
      %s137 = sadd.s32 %s136, 1
      %p140 = scmp.eq.s32.totalorder %s34, 1
      %p141 = scmp.ne.s32.totalorder %s136, %s138
      %p142 = scmp.eq.s32.totalorder %s34, 0
      %p143 = por %p141, %p142
      %p144 = scmp.ne.s32.totalorder %s136, %s138
      %p145 = scmp.eq.s32.totalorder %s39, 1
      %p146 = por %p144, %p145
      %p147 = scmp.ne.s32.totalorder %s138, %s139
      %p148 = scmp.eq.s32.totalorder %s39, 0
      %p149 = por %p147, %p148
      %p150 = scmp.ne.s32.totalorder %s138, %s139
      %p151 = scmp.eq.s32.totalorder %s40, 1
      %p152 = por %p150, %p151
      %p154 = scmp.ne.s32.totalorder %s139, %s153
      %p155 = scmp.eq.s32.totalorder %s40, 0
      %p156 = por %p154, %p155
      %s158 = sadd.s32 %s157, 1
      %p161 = scmp.eq.s32.totalorder %s34, 1
      %p162 = scmp.ne.s32.totalorder %s157, %s159
      %p163 = scmp.eq.s32.totalorder %s34, 0
      %p164 = por %p162, %p163
      %p165 = scmp.ne.s32.totalorder %s157, %s159
      %p166 = scmp.eq.s32.totalorder %s39, 1
      %p167 = por %p165, %p166
      %p168 = scmp.ne.s32.totalorder %s159, %s160
      %p169 = scmp.eq.s32.totalorder %s39, 0
      %p170 = por %p168, %p169
      %p171 = scmp.ne.s32.totalorder %s159, %s160
      %p172 = scmp.eq.s32.totalorder %s40, 1
      %p173 = por %p171, %p172
      %p175 = scmp.ne.s32.totalorder %s160, %s174
      %p176 = scmp.eq.s32.totalorder %s40, 0
      %p177 = por %p175, %p176
      %s179 = sadd.s32 %s178, 1
      %p182 = scmp.eq.s32.totalorder %s34, 1
      %p183 = scmp.ne.s32.totalorder %s178, %s180
      %p184 = scmp.eq.s32.totalorder %s34, 0
      %p185 = por %p183, %p184
      %p186 = scmp.ne.s32.totalorder %s178, %s180
      %p187 = scmp.eq.s32.totalorder %s39, 1
      %p188 = por %p186, %p187
      %p189 = scmp.ne.s32.totalorder %s180, %s181
      %p190 = scmp.eq.s32.totalorder %s39, 0
      %p191 = por %p189, %p190
      %p192 = scmp.ne.s32.totalorder %s180, %s181
      %p193 = scmp.eq.s32.totalorder %s40, 1
      %p194 = por %p192, %p193
      %p196 = scmp.ne.s32.totalorder %s181, %s195
      %p197 = scmp.eq.s32.totalorder %s40, 0
      %p198 = por %p196, %p197
      %s200 = sadd.s32 %s199, 1
      %p203 = scmp.eq.s32.totalorder %s34, 1
      %p204 = scmp.ne.s32.totalorder %s199, %s201
      %p205 = scmp.eq.s32.totalorder %s34, 0
      %p206 = por %p204, %p205
      %p207 = scmp.ne.s32.totalorder %s199, %s201
      %p208 = scmp.eq.s32.totalorder %s39, 1
      %p209 = por %p207, %p208
      %p210 = scmp.ne.s32.totalorder %s201, %s202
      %p211 = scmp.eq.s32.totalorder %s39, 0
      %p212 = por %p210, %p211
      %p213 = scmp.ne.s32.totalorder %s201, %s202
      %p214 = scmp.eq.s32.totalorder %s40, 1
      %p215 = por %p213, %p214
      %p217 = scmp.ne.s32.totalorder %s202, %s216
      %p218 = scmp.eq.s32.totalorder %s40, 0
      %p219 = por %p217, %p218
      %s221 = sadd.s32 %s220, 1
      %p224 = scmp.eq.s32.totalorder %s34, 1
      %p225 = scmp.ne.s32.totalorder %s220, %s222
      %p226 = scmp.eq.s32.totalorder %s34, 0
      %p227 = por %p225, %p226
      %p228 = scmp.ne.s32.totalorder %s220, %s222
      %p229 = scmp.eq.s32.totalorder %s39, 1
      %p230 = por %p228, %p229
      %p231 = scmp.ne.s32.totalorder %s222, %s223
      %p232 = scmp.eq.s32.totalorder %s39, 0
      %p233 = por %p231, %p232
      %p234 = scmp.ne.s32.totalorder %s222, %s223
      %p235 = scmp.eq.s32.totalorder %s40, 1
      %p236 = por %p234, %p235
      %p238 = scmp.ne.s32.totalorder %s223, %s237
      %p239 = scmp.eq.s32.totalorder %s40, 0
      %p240 = por %p238, %p239
      %s242 = sadd.s32 %s241, 1
      %p245 = scmp.eq.s32.totalorder %s34, 1
      %p246 = scmp.ne.s32.totalorder %s241, %s243
      %p247 = scmp.eq.s32.totalorder %s34, 0
      %p248 = por %p246, %p247
      %p249 = scmp.ne.s32.totalorder %s241, %s243
      %p250 = scmp.eq.s32.totalorder %s39, 1
      %p251 = por %p249, %p250
      %p252 = scmp.ne.s32.totalorder %s243, %s244
      %p253 = scmp.eq.s32.totalorder %s39, 0
      %p254 = por %p252, %p253
      %p255 = scmp.ne.s32.totalorder %s243, %s244
      %p256 = scmp.eq.s32.totalorder %s40, 1
      %p257 = por %p255, %p256
      %p259 = scmp.ne.s32.totalorder %s244, %s258
      %p260 = scmp.eq.s32.totalorder %s40, 0
      %p261 = por %p259, %p260
      %s263 = sadd.s32 %s262, 1
      %p266 = scmp.eq.s32.totalorder %s34, 1
      %p267 = scmp.ne.s32.totalorder %s262, %s264
      %p268 = scmp.eq.s32.totalorder %s34, 0
      %p269 = por %p267, %p268
      %p270 = scmp.ne.s32.totalorder %s262, %s264
      %p271 = scmp.eq.s32.totalorder %s39, 1
      %p272 = por %p270, %p271
      %p273 = scmp.ne.s32.totalorder %s264, %s265
      %p274 = scmp.eq.s32.totalorder %s39, 0
      %p275 = por %p273, %p274
      %p276 = scmp.ne.s32.totalorder %s264, %s265
      %p277 = scmp.eq.s32.totalorder %s40, 1
      %p278 = por %p276, %p277
      %p280 = scmp.ne.s32.totalorder %s265, %s279
      %p281 = scmp.eq.s32.totalorder %s40, 0
      %p282 = por %p280, %p281
      %s284 = sadd.s32 %s283, 1
      %p287 = scmp.eq.s32.totalorder %s34, 1
      %p288 = scmp.ne.s32.totalorder %s283, %s285
      %p289 = scmp.eq.s32.totalorder %s34, 0
      %p290 = por %p288, %p289
      %p291 = scmp.ne.s32.totalorder %s283, %s285
      %p292 = scmp.eq.s32.totalorder %s39, 1
      %p293 = por %p291, %p292
      %p294 = scmp.ne.s32.totalorder %s285, %s286
      %p295 = scmp.eq.s32.totalorder %s39, 0
      %p296 = por %p294, %p295
      %p297 = scmp.ne.s32.totalorder %s285, %s286
      %p298 = scmp.eq.s32.totalorder %s40, 1
      %p299 = por %p297, %p298
      %p301 = scmp.ne.s32.totalorder %s286, %s300
      %p302 = scmp.eq.s32.totalorder %s40, 0
      %p303 = por %p301, %p302
      %s305 = sadd.s32 %s304, 1
      %p308 = scmp.eq.s32.totalorder %s34, 1
      %p309 = scmp.ne.s32.totalorder %s304, %s306
      %p310 = scmp.eq.s32.totalorder %s34, 0
      %p311 = por %p309, %p310
      %p312 = scmp.ne.s32.totalorder %s304, %s306
      %p313 = scmp.eq.s32.totalorder %s39, 1
      %p314 = por %p312, %p313
      %p315 = scmp.ne.s32.totalorder %s306, %s307
      %p316 = scmp.eq.s32.totalorder %s39, 0
      %p317 = por %p315, %p316
      %p318 = scmp.ne.s32.totalorder %s306, %s307
      %p319 = scmp.eq.s32.totalorder %s40, 1
      %p320 = por %p318, %p319
      %p322 = scmp.ne.s32.totalorder %s307, %s321
      %p323 = scmp.eq.s32.totalorder %s40, 0
      %p324 = por %p322, %p323
      %s326 = sadd.s32 %s325, 1
      %p329 = scmp.eq.s32.totalorder %s34, 1
      %p330 = scmp.ne.s32.totalorder %s325, %s327
      %p331 = scmp.eq.s32.totalorder %s34, 0
      %p332 = por %p330, %p331
      %p333 = scmp.ne.s32.totalorder %s325, %s327
      %p334 = scmp.eq.s32.totalorder %s39, 1
      %p335 = por %p333, %p334
      %p336 = scmp.ne.s32.totalorder %s327, %s328
      %p337 = scmp.eq.s32.totalorder %s39, 0
      %p338 = por %p336, %p337
      %p339 = scmp.ne.s32.totalorder %s327, %s328
      %p340 = scmp.eq.s32.totalorder %s40, 1
      %p341 = por %p339, %p340
      %p343 = scmp.ne.s32.totalorder %s328, %s342
      %p344 = scmp.eq.s32.totalorder %s40, 0
      %p345 = por %p343, %p344
      %s347 = sadd.s32 %s346, 1
      %p350 = scmp.eq.s32.totalorder %s34, 1
      %p351 = scmp.ne.s32.totalorder %s346, %s348
      %p352 = scmp.eq.s32.totalorder %s34, 0
      %p353 = por %p351, %p352
      %p354 = scmp.ne.s32.totalorder %s346, %s348
      %p355 = scmp.eq.s32.totalorder %s39, 1
      %p356 = por %p354, %p355
      %p357 = scmp.ne.s32.totalorder %s348, %s349
      %p358 = scmp.eq.s32.totalorder %s39, 0
      %p359 = por %p357, %p358
      %p360 = scmp.ne.s32.totalorder %s348, %s349
      %p361 = scmp.eq.s32.totalorder %s40, 1
      %p362 = por %p360, %p361
      %p364 = scmp.ne.s32.totalorder %s349, %s363
      %p365 = scmp.eq.s32.totalorder %s40, 0
      %p366 = por %p364, %p365
      %s368 = sadd.s32 %s367, 1
      %p371 = scmp.eq.s32.totalorder %s34, 1
      %p372 = scmp.ne.s32.totalorder %s367, %s369
      %p373 = scmp.eq.s32.totalorder %s34, 0
      %p374 = por %p372, %p373
      %p375 = scmp.ne.s32.totalorder %s367, %s369
      %p376 = scmp.eq.s32.totalorder %s39, 1
      %p377 = por %p375, %p376
      %p378 = scmp.ne.s32.totalorder %s369, %s370
      %p379 = scmp.eq.s32.totalorder %s39, 0
      %p380 = por %p378, %p379
      %p381 = scmp.ne.s32.totalorder %s369, %s370
      %p382 = scmp.eq.s32.totalorder %s40, 1
      %p383 = por %p381, %p382
      %p385 = scmp.ne.s32.totalorder %s370, %s384
      %p386 = scmp.eq.s32.totalorder %s40, 0
      %p387 = por %p385, %p386
      %s389 = sadd.s32 %s388, 1
      %p392 = scmp.eq.s32.totalorder %s34, 1
      %p393 = scmp.ne.s32.totalorder %s388, %s390
      %p394 = scmp.eq.s32.totalorder %s34, 0
      %p395 = por %p393, %p394
      %p396 = scmp.ne.s32.totalorder %s388, %s390
      %p397 = scmp.eq.s32.totalorder %s39, 1
      %p398 = por %p396, %p397
      %p399 = scmp.ne.s32.totalorder %s390, %s391
      %p400 = scmp.eq.s32.totalorder %s39, 0
      %p401 = por %p399, %p400
      %p402 = scmp.ne.s32.totalorder %s390, %s391
      %p403 = scmp.eq.s32.totalorder %s40, 1
      %p404 = por %p402, %p403
      %p406 = scmp.ne.s32.totalorder %s391, %s405
      %p407 = scmp.eq.s32.totalorder %s40, 0
      %p408 = por %p406, %p407
      %s410 = sadd.s32 %s409, 1
      %p413 = scmp.eq.s32.totalorder %s34, 1
      %p414 = scmp.ne.s32.totalorder %s409, %s411
      %p415 = scmp.eq.s32.totalorder %s34, 0
      %p416 = por %p414, %p415
      %p417 = scmp.ne.s32.totalorder %s409, %s411
      %p418 = scmp.eq.s32.totalorder %s39, 1
      %p419 = por %p417, %p418
      %p420 = scmp.ne.s32.totalorder %s411, %s412
      %p421 = scmp.eq.s32.totalorder %s39, 0
      %p422 = por %p420, %p421
      %p423 = scmp.ne.s32.totalorder %s411, %s412
      %p424 = scmp.eq.s32.totalorder %s40, 1
      %p425 = por %p423, %p424
      %p427 = scmp.ne.s32.totalorder %s412, %s426
      %p428 = scmp.eq.s32.totalorder %s40, 0
      %p429 = por %p427, %p428
      %s431 = sadd.s32 %s430, 1
      %p434 = scmp.eq.s32.totalorder %s34, 1
      %p435 = scmp.ne.s32.totalorder %s430, %s432
      %p436 = scmp.eq.s32.totalorder %s34, 0
      %p437 = por %p435, %p436
      %p438 = scmp.ne.s32.totalorder %s430, %s432
      %p439 = scmp.eq.s32.totalorder %s39, 1
      %p440 = por %p438, %p439
      %p441 = scmp.ne.s32.totalorder %s432, %s433
      %p442 = scmp.eq.s32.totalorder %s39, 0
      %p443 = por %p441, %p442
      %p444 = scmp.ne.s32.totalorder %s432, %s433
      %p445 = scmp.eq.s32.totalorder %s40, 1
      %p446 = por %p444, %p445
      %p448 = scmp.ne.s32.totalorder %s433, %s447
      %p449 = scmp.eq.s32.totalorder %s40, 0
      %p450 = por %p448, %p449
      %s452 = sadd.s32 %s451, 1
      %p455 = scmp.eq.s32.totalorder %s34, 1
      %p456 = scmp.ne.s32.totalorder %s451, %s453
      %p457 = scmp.eq.s32.totalorder %s34, 0
      %p458 = por %p456, %p457
      %p459 = scmp.ne.s32.totalorder %s451, %s453
      %p460 = scmp.eq.s32.totalorder %s39, 1
      %p461 = por %p459, %p460
      %p462 = scmp.ne.s32.totalorder %s453, %s454
      %p463 = scmp.eq.s32.totalorder %s39, 0
      %p464 = por %p462, %p463
      %p465 = scmp.ne.s32.totalorder %s453, %s454
      %p466 = scmp.eq.s32.totalorder %s40, 1
      %p467 = por %p465, %p466
      %p469 = scmp.ne.s32.totalorder %s454, %s468
      %p470 = scmp.eq.s32.totalorder %s40, 0
      %p471 = por %p469, %p470
      %s472 = ssub.s32 %s34, %s41
      %p473 = scmp.eq.s32.totalorder %s472, 0
      %s475 = sadd.s32 %s474, 1
      %s476 = scalar_select %p473, %s474, %s475
      %p479 = pneg %p473
      %p480 = scmp.eq.s32.totalorder %s34, 1
      %p481 = por %p479, %p480
      %p482 = scmp.ne.s32.totalorder %s474, %s477
      %p483 = scmp.eq.s32.totalorder %s34, 0
      %p484 = por %p482, %p483
      %p485 = scmp.ne.s32.totalorder %s474, %s477
      %p486 = scmp.eq.s32.totalorder %s39, 1
      %p487 = por %p485, %p486
      %p488 = scmp.ne.s32.totalorder %s477, %s478
      %p489 = scmp.eq.s32.totalorder %s39, 0
      %p490 = por %p488, %p489
      %p491 = scmp.ne.s32.totalorder %s477, %s478
      %p492 = scmp.eq.s32.totalorder %s40, 1
      %p493 = por %p491, %p492
      %p495 = scmp.ne.s32.totalorder %s478, %s494
      %p496 = scmp.eq.s32.totalorder %s40, 0
      %p497 = por %p495, %p496
      %s498 = ssub.s32 %s34, %s41
      %p499 = scmp.eq.s32.totalorder %s498, 0
      %s501 = sadd.s32 %s500, 1
      %s502 = scalar_select %p499, %s500, %s501
      %p505 = pneg %p499
      %p506 = scmp.eq.s32.totalorder %s34, 1
      %p507 = por %p505, %p506
      %p508 = scmp.ne.s32.totalorder %s500, %s503
      %p509 = scmp.eq.s32.totalorder %s34, 0
      %p510 = por %p508, %p509
      %p511 = scmp.ne.s32.totalorder %s500, %s503
      %p512 = scmp.eq.s32.totalorder %s39, 1
      %p513 = por %p511, %p512
      %p514 = scmp.ne.s32.totalorder %s503, %s504
      %p515 = scmp.eq.s32.totalorder %s39, 0
      %p516 = por %p514, %p515
      %p517 = scmp.ne.s32.totalorder %s503, %s504
      %p518 = scmp.eq.s32.totalorder %s40, 1
      %p519 = por %p517, %p518
      %p521 = scmp.ne.s32.totalorder %s504, %s520
      %p522 = scmp.eq.s32.totalorder %s40, 0
      %p523 = por %p521, %p522
      %p524 = scmp.le.s32.totalorder 1, %s34
      %p525 = scmp.lt.s32.totalorder %s34, 3
      %p526 = pnand %p524, %p525
      %p527 = pneg %p526
      // Predicated region
      $region9: #{bert_for_representation.1} parent=5 // pred_check
        _
      $region10: #{bert_for_representation.1} parent=5 // pred_check_branch
        %529 = sbr.rel (%p526) target = $region12
      $region11: #{bert_for_representation.1} parent=5 // pred_region
        %s530 = ssub.s32 %s34, 1
        // Predicated region
        $region13: #{bert_for_representation.1} parent=11 // pred_check
          %p531 = pneg %p107
        $region14: #{bert_for_representation.1} parent=11 // pred_check_branch
          %533 = sbr.rel (%p531) target = $region16
        $region15: #{bert_for_representation.1} parent=11 // pred_region
          _
        $region16: #{bert_for_representation.1} parent=11 // pred_fallthru
          _
        // Predicated region
        $region17: #{bert_for_representation.1} parent=11 // pred_check
          %p534 = pneg %p128
        $region18: #{bert_for_representation.1} parent=11 // pred_check_branch
          %536 = sbr.rel (%p534) target = $region20
        $region19: #{bert_for_representation.1} parent=11 // pred_region
          _
        $region20: #{bert_for_representation.1} parent=11 // pred_fallthru
          _
        // Predicated region
        $region21: #{bert_for_representation.1} parent=11 // pred_check
          %p537 = pneg %p149
        $region22: #{bert_for_representation.1} parent=11 // pred_check_branch
          %539 = sbr.rel (%p537) target = $region24
        $region23: #{bert_for_representation.1} parent=11 // pred_region
          _
        $region24: #{bert_for_representation.1} parent=11 // pred_fallthru
          _
        // Predicated region
        $region25: #{bert_for_representation.1} parent=11 // pred_check
          %p540 = pneg %p170
        $region26: #{bert_for_representation.1} parent=11 // pred_check_branch
          %542 = sbr.rel (%p540) target = $region28
        $region27: #{bert_for_representation.1} parent=11 // pred_region
          _
        $region28: #{bert_for_representation.1} parent=11 // pred_fallthru
          _
        // Predicated region
        $region29: #{bert_for_representation.1} parent=11 // pred_check
          %p543 = pneg %p191
        $region30: #{bert_for_representation.1} parent=11 // pred_check_branch
          %545 = sbr.rel (%p543) target = $region32
        $region31: #{bert_for_representation.1} parent=11 // pred_region
          _
        $region32: #{bert_for_representation.1} parent=11 // pred_fallthru
          _
        // Predicated region
        $region33: #{bert_for_representation.1} parent=11 // pred_check
          %p546 = pneg %p212
        $region34: #{bert_for_representation.1} parent=11 // pred_check_branch
          %548 = sbr.rel (%p546) target = $region36
        $region35: #{bert_for_representation.1} parent=11 // pred_region
          _
        $region36: #{bert_for_representation.1} parent=11 // pred_fallthru
          _
        // Predicated region
        $region37: #{bert_for_representation.1} parent=11 // pred_check
          %p549 = pneg %p233
        $region38: #{bert_for_representation.1} parent=11 // pred_check_branch
          %551 = sbr.rel (%p549) target = $region40
        $region39: #{bert_for_representation.1} parent=11 // pred_region
          _
        $region40: #{bert_for_representation.1} parent=11 // pred_fallthru
          _
        // Predicated region
        $region41: #{bert_for_representation.1} parent=11 // pred_check
          %p552 = pneg %p254
        $region42: #{bert_for_representation.1} parent=11 // pred_check_branch
          %554 = sbr.rel (%p552) target = $region44
        $region43: #{bert_for_representation.1} parent=11 // pred_region
          _
        $region44: #{bert_for_representation.1} parent=11 // pred_fallthru
          _
        // Predicated region
        $region45: #{bert_for_representation.1} parent=11 // pred_check
          %p555 = pneg %p275
        $region46: #{bert_for_representation.1} parent=11 // pred_check_branch
          %557 = sbr.rel (%p555) target = $region48
        $region47: #{bert_for_representation.1} parent=11 // pred_region
          _
        $region48: #{bert_for_representation.1} parent=11 // pred_fallthru
          _
        // Predicated region
        $region49: #{bert_for_representation.1} parent=11 // pred_check
          %p558 = pneg %p296
        $region50: #{bert_for_representation.1} parent=11 // pred_check_branch
          %560 = sbr.rel (%p558) target = $region52
        $region51: #{bert_for_representation.1} parent=11 // pred_region
          _
        $region52: #{bert_for_representation.1} parent=11 // pred_fallthru
          _
        // Predicated region
        $region53: #{bert_for_representation.1} parent=11 // pred_check
          %p561 = pneg %p317
        $region54: #{bert_for_representation.1} parent=11 // pred_check_branch
          %563 = sbr.rel (%p561) target = $region56
        $region55: #{bert_for_representation.1} parent=11 // pred_region
          _
        $region56: #{bert_for_representation.1} parent=11 // pred_fallthru
          _
        // Predicated region
        $region57: #{bert_for_representation.1} parent=11 // pred_check
          %p564 = pneg %p338
        $region58: #{bert_for_representation.1} parent=11 // pred_check_branch
          %566 = sbr.rel (%p564) target = $region60
        $region59: #{bert_for_representation.1} parent=11 // pred_region
          _
        $region60: #{bert_for_representation.1} parent=11 // pred_fallthru
          _
        // Predicated region
        $region61: #{bert_for_representation.1} parent=11 // pred_check
          %p567 = pneg %p359
        $region62: #{bert_for_representation.1} parent=11 // pred_check_branch
          %569 = sbr.rel (%p567) target = $region64
        $region63: #{bert_for_representation.1} parent=11 // pred_region
          _
        $region64: #{bert_for_representation.1} parent=11 // pred_fallthru
          _
        // Predicated region
        $region65: #{bert_for_representation.1} parent=11 // pred_check
          %p570 = pneg %p380
        $region66: #{bert_for_representation.1} parent=11 // pred_check_branch
          %572 = sbr.rel (%p570) target = $region68
        $region67: #{bert_for_representation.1} parent=11 // pred_region
          _
        $region68: #{bert_for_representation.1} parent=11 // pred_fallthru
          _
        // Predicated region
        $region69: #{bert_for_representation.1} parent=11 // pred_check
          %p573 = pneg %p401
        $region70: #{bert_for_representation.1} parent=11 // pred_check_branch
          %575 = sbr.rel (%p573) target = $region72
        $region71: #{bert_for_representation.1} parent=11 // pred_region
          _
        $region72: #{bert_for_representation.1} parent=11 // pred_fallthru
          _
        // Predicated region
        $region73: #{bert_for_representation.1} parent=11 // pred_check
          %p576 = pneg %p422
        $region74: #{bert_for_representation.1} parent=11 // pred_check_branch
          %578 = sbr.rel (%p576) target = $region76
        $region75: #{bert_for_representation.1} parent=11 // pred_region
          _
        $region76: #{bert_for_representation.1} parent=11 // pred_fallthru
          _
        // Predicated region
        $region77: #{bert_for_representation.1} parent=11 // pred_check
          %p579 = pneg %p443
        $region78: #{bert_for_representation.1} parent=11 // pred_check_branch
          %581 = sbr.rel (%p579) target = $region80
        $region79: #{bert_for_representation.1} parent=11 // pred_region
          _
        $region80: #{bert_for_representation.1} parent=11 // pred_fallthru
          _
        // Predicated region
        $region81: #{bert_for_representation.1} parent=11 // pred_check
          %p582 = pneg %p464
        $region82: #{bert_for_representation.1} parent=11 // pred_check_branch
          %584 = sbr.rel (%p582) target = $region84
        $region83: #{bert_for_representation.1} parent=11 // pred_region
          _
        $region84: #{bert_for_representation.1} parent=11 // pred_fallthru
          _
      $region12: #{bert_for_representation.1} parent=5 // pred_fallthru
        _
      %p585 = scmp.lt.s32.totalorder %s34, 2
      // Predicated region
      $region85: #{bert_for_representation.1} parent=5 // pred_check
        %p586 = pneg %p585
      $region86: #{bert_for_representation.1} parent=5 // pred_check_branch
        %588 = sbr.rel (%p586) target = $region88
      $region87: #{bert_for_representation.1} parent=5 // pred_region
        // Predicated region
        $region89: #{bert_for_representation.1} parent=87 // pred_check
          %p589 = pneg %p54
        $region90: #{bert_for_representation.1} parent=87 // pred_check_branch
          %591 = sbr.rel (%p589) target = $region92
        $region91: #{bert_for_representation.1} parent=87 // pred_region
          %p592 = scmp.lt.s32.totalorder %s34, 1
          %s593 = scalar_select %p592, %s34, 1
          %s594 = smul.addr %s593, 4
          %s595 = smul.addr %s594, 8
          %s596 = scalar_lea.vmem %s0, %s595
        $region92: #{bert_for_representation.1} parent=87 // pred_fallthru
          _
        // Predicated region
        $region93: #{bert_for_representation.1} parent=87 // pred_check
          %p597 = pneg %p80
        $region94: #{bert_for_representation.1} parent=87 // pred_check_branch
          %599 = sbr.rel (%p597) target = $region96
        $region95: #{bert_for_representation.1} parent=87 // pred_region
          %p600 = scmp.lt.s32.totalorder %s34, 1
          %s601 = scalar_select %p600, %s34, 1
          %s602 = smul.addr %s601, 4
          %s603 = scalar_lea.vmem %s1, %s602
        $region96: #{bert_for_representation.1} parent=87 // pred_fallthru
          _
      $region88: #{bert_for_representation.1} parent=5 // pred_fallthru
        _
      %p604 = scmp.le.s32.totalorder 1, %s34
      %p605 = scmp.lt.s32.totalorder %s34, 3
      %p606 = pnand %p604, %p605
      %p607 = pneg %p606
      // Predicated region
      $region97: #{bert_for_representation.1} parent=5 // pred_check
        _
      $region98: #{bert_for_representation.1} parent=5 // pred_check_branch
        %609 = sbr.rel (%p606) target = $region100
      $region99: #{bert_for_representation.1} parent=5 // pred_region
        %s610 = ssub.s32 %s34, 1
        %p611 = scmp.lt.s32.totalorder %s39, 1
        %s612 = scalar_select %p611, %s39, 1
        %s613 = smul.addr %s612, 4
        %s614 = smul.addr %s613, 8
        %s615 = scalar_lea.vmem %s0, %s614
        %p616 = pneg %p60
        %p617 = pneg %p57
        %p618 = scmp.lt.s32.totalorder %s39, 1
        %s619 = scalar_select %p618, %s39, 1
        %s620 = smul.addr %s619, 4
        %s621 = scalar_lea.vmem %s1, %s620
        %p622 = pneg %p86
        %p623 = pneg %p83
        %p624 = pneg %p107
        %p625 = pneg %p104
        %p626 = pneg %p128
        %p627 = pneg %p125
        %p628 = pneg %p149
        %p629 = pneg %p146
        %p630 = pneg %p170
        %p631 = pneg %p167
        %p632 = pneg %p191
        %p633 = pneg %p188
        %p634 = pneg %p212
        %p635 = pneg %p209
        %p636 = pneg %p233
        %p637 = pneg %p230
        %p638 = pneg %p254
        %p639 = pneg %p251
        %p640 = pneg %p275
        %p641 = pneg %p272
        %p642 = pneg %p296
        %p643 = pneg %p293
        %p644 = pneg %p317
        %p645 = pneg %p314
        %p646 = pneg %p338
        %p647 = pneg %p335
        %p648 = pneg %p359
        %p649 = pneg %p356
        %p650 = pneg %p380
        %p651 = pneg %p377
        %p652 = pneg %p401
        %p653 = pneg %p398
        %p654 = pneg %p422
        %p655 = pneg %p419
        %p656 = pneg %p443
        %p657 = pneg %p440
        %p658 = pneg %p464
        %p659 = pneg %p461
        %p660 = pneg %p490
        %p661 = pneg %p487
        %s662 = sand.u32 %s477, 1
        %s663 = scalar_lea.sflag [#allocation3], %s662
        %s664 = sand.u32 %s477, 1
        %s665 = scalar_lea.vmem [#allocation2], %s664
        %p666 = pneg %p516
        %p667 = pneg %p513
        %s668 = sand.u32 %s503, 1
        %s669 = scalar_lea.sflag [#allocation5], %s668
        %s670 = sand.u32 %s503, 1
        %s671 = scalar_lea.vmem [#allocation4], %s670
        %p672 = scmp.lt.s32.totalorder %s39, 1
        %s673 = scalar_select %p672, %s39, 1
        %s674 = smul.addr %s673, 4
        %s675 = smul.addr %s674, 8
        %s676 = scalar_lea.vmem %s0, %s675
        %p677 = scmp.lt.s32.totalorder %s39, 1
        %s678 = scalar_select %p677, %s39, 1
        %s679 = smul.addr %s678, 4
        %s680 = scalar_lea.vmem %s1, %s679
        %v681 = vld [vmem:[%s680] sm:$0xf]
        %v684 = vunpack.c.l.s4 1966171168
        %v685 = vunpack.c.0.s8 %v684
        %v686 = vlaneseq
        %v687 = vshrl.u32 %v686, 7
        %v688 = vsub.s32 %v685, %v687
        %v689 = vrot.slane %v681, %v688
        %v690 = vcombine.high %v689, %v689
        %v692 = vunpack.c.l.s4 1966171168
        %v693 = vunpack.c.0.s8 %v692
        %v694 = vlaneseq
        %v695 = vshrl.u32 %v694, 7
        %v696 = vsub.s32 %v693, %v695
        %v697 = vrot.slane %v689, %v696
        %v699 = vunpack.c.l.s4 1966171168
        %v700 = vunpack.c.0.s8 %v699
        %v701 = vlaneseq
        %v702 = vshrl.u32 %v701, 7
        %v703 = vsub.s32 %v700, %v702
        %v704 = vrot.slane %v690, %v703
        %v705 = vcombine.high %v697, %v697
        %v706 = vcombine.high %v704, %v704
        %v707 = vld [vmem:[%s676] sm:$0xff]
        %v708 = vld [vmem:[%s676 + $0x8] sm:$0xff]
        %v709 = vld [vmem:[%s676 + $0x10] sm:$0xff]
        %v710 = vld [vmem:[%s676 + $0x18] sm:$0xff]
        %v711 = vld [vmem:[%s2] sm:$0x1]
        %v712 = vld [vmem:[%s3] sm:$0x1]
        %vm713 = vcmask 261120
        %v714 = vsel %vm713, %v707, 0.0
        %715 = vadd.xlane.f32.xlu0 %v714
        %v716 = vpop.xlane.xlu0 %715
        %v717 = vsel %vm713, %v708, 0.0
        %718 = vadd.xlane.f32.xlu0 %v717
        %v719 = vpop.xlane.xlu0 %718
        %v720 = vsel %vm713, %v709, 0.0
        %721 = vadd.xlane.f32.xlu0 %v720
        %v722 = vpop.xlane.xlu0 %721
        %v723 = vsel %vm713, %v710, 0.0
        %724 = vadd.xlane.f32.xlu0 %v723
        %v725 = vpop.xlane.xlu0 %724
        %v726 = vrcp.pop 32.0
        %v727 = vmul.f32 %v716, %v726
        %v728 = vmul.f32 %v719, %v726
        %v729 = vmul.f32 %v722, %v726
        %v730 = vmul.f32 %v725, %v726
        %v731 = vsub.f32 %v707, %v727
        %v732 = vsub.f32 %v708, %v728
        %v733 = vsub.f32 %v709, %v729
        %v734 = vsub.f32 %v710, %v730
        %v735 = vmul.f32 %v731, %v731
        %v736 = vmul.f32 %v732, %v732
        %v737 = vmul.f32 %v733, %v733
        %v738 = vmul.f32 %v734, %v734
        %v739 = vsel %vm713, %v735, 0.0
        %740 = vadd.xlane.f32.xlu0 %v739
        %v741 = vpop.xlane.xlu0 %740
        %v742 = vsel %vm713, %v736, 0.0
        %743 = vadd.xlane.f32.xlu0 %v742
        %v744 = vpop.xlane.xlu0 %743
        %v745 = vsel %vm713, %v737, 0.0
        %746 = vadd.xlane.f32.xlu0 %v745
        %v747 = vpop.xlane.xlu0 %746
        %v748 = vsel %vm713, %v738, 0.0
        %749 = vadd.xlane.f32.xlu0 %v748
        %v750 = vpop.xlane.xlu0 %749
        %v751 = vmul.f32 %v741, %v726
        %v752 = vmul.f32 %v744, %v726
        %v753 = vmul.f32 %v747, %v726
        %v754 = vmul.f32 %v750, %v726
        %v755 = vadd.f32 %v751, 1e-12
        %v756 = vadd.f32 %v752, 1e-12
        %v757 = vadd.f32 %v753, 1e-12
        %v758 = vadd.f32 %v754, 1e-12
        %v759 = vrsqrt.pop %v755
        %v760 = vrsqrt.pop %v756
        %v761 = vrsqrt.pop %v757
        %v762 = vrsqrt.pop %v758
        %v763 = vmul.f32 %v731, %v759
        %v764 = vmul.f32 %v732, %v760
        %v765 = vmul.f32 %v733, %v761
        %v766 = vmul.f32 %v734, %v762
        %v768 = vlaneseq
        %v769 = vshrl.u32 %v768, 7
        %v770 = vsub.s32 0, %v769
        %v771 = vrot.slane %v711, %v770
        %v773 = vmul.f32 %v763, %v771
        %v774 = vmul.f32 %v764, %v771
        %v775 = vmul.f32 %v765, %v771
        %v776 = vmul.f32 %v766, %v771
        %v778 = vlaneseq
        %v779 = vshrl.u32 %v778, 7
        %v780 = vsub.s32 0, %v779
        %v781 = vrot.slane %v712, %v780
        %v783 = vadd.f32 %v773, %v781
        %v784 = vadd.f32 %v774, %v781
        %v785 = vadd.f32 %v775, %v781
        %v786 = vadd.f32 %v776, %v781
        %v787 = vld [vmem:[%s7] sm:$0x1]
        %v788 = vld [vmem:[%s4] sm:$0xff]
        %v789 = vld [vmem:[%s4 + $0x8] sm:$0xff]
        %v790 = vld [vmem:[%s4 + $0x10] sm:$0xff]
        %v791 = vld [vmem:[%s4 + $0x18] sm:$0xff]
        %v792 = vld [vmem:[%s5] sm:$0x1]
        %v794 = vlaneseq
        %v795 = vshrl.u32 %v794, 7
        %v796 = vsub.s32 0, %v795
        %v797 = vrot.slane %v792, %v796
        %v800 = vsel %vm713, %v783, 0
        %v803 = vsel %vm713, %v784, 0
        %v806 = vsel %vm713, %v785, 0
        %v809 = vsel %vm713, %v786, 0
        %811 = vmatprep.subr.mxu0 0.0
        %812 = vmatpush1.msra.mxu0 0.0
        %813 = vmatprep.subr.mxu0 0.0
        %814 = vmatpush1.msra.mxu0 0.0
        %815 = vmatprep.subr.mxu0 0.0
        %816 = vmatpush1.msra.mxu0 0.0
        %817 = vmatprep.subr.mxu0 0.0
        %818 = vmatpush1.msra.mxu0 0.0
        %819 = vmatprep.subr.mxu0 0.0
        %820 = vmatpush1.msra.mxu0 0.0
        %821 = vmatprep.subr.mxu0 0.0
        %822 = vmatpush1.msra.mxu0 0.0
        %823 = vmatprep.subr.mxu0 0.0
        %824 = vmatpush1.msra.mxu0 0.0
        %825 = vmatprep.subr.mxu0 0.0
        %826 = vmatpush1.msra.mxu0 0.0
        %827 = vmatprep.subr.mxu0 0.0
        %828 = vmatpush1.msra.mxu0 0.0
        %829 = vmatprep.subr.mxu0 0.0
        %830 = vmatpush1.msra.mxu0 0.0
        %831 = vmatprep.subr.mxu0 0.0
        %832 = vmatpush1.msra.mxu0 0.0
        %833 = vmatprep.subr.mxu0 0.0
        %834 = vmatpush1.msra.mxu0 0.0
        %835 = vmatprep.subr.mxu0 0.0
        %836 = vmatpush1.msra.mxu0 %v791
        %837 = vmatprep.subr.mxu0 0.0
        %838 = vmatpush1.msra.mxu0 %v790
        %839 = vmatprep.subr.mxu0 0.0
        %840 = vmatpush1.msra.mxu0 %v789
        %841 = vmatprep.subr.mxu0 0.0
        %842 = vmatpush1.msra.mxu0 %v788
        %843 = vmatprep.subr.mxu0 0.0
        %844 = vmatpush2.msra.mxu0 0.0
        %845 = vmatprep.subr.mxu0 0.0
        %846 = vmatpush2.msra.mxu0 0.0
        %847 = vmatprep.subr.mxu0 0.0
        %848 = vmatpush2.msra.mxu0 0.0
        %849 = vmatprep.subr.mxu0 0.0
        %850 = vmatpush2.msra.mxu0 0.0
        %851 = vmatprep.subr.mxu0 0.0
        %852 = vmatpush2.msra.mxu0 0.0
        %853 = vmatprep.subr.mxu0 0.0
        %854 = vmatpush2.msra.mxu0 0.0
        %855 = vmatprep.subr.mxu0 0.0
        %856 = vmatpush2.msra.mxu0 0.0
        %857 = vmatprep.subr.mxu0 0.0
        %858 = vmatpush2.msra.mxu0 0.0
        %859 = vmatprep.subr.mxu0 0.0
        %860 = vmatpush2.msra.mxu0 0.0
        %861 = vmatprep.subr.mxu0 0.0
        %862 = vmatpush2.msra.mxu0 0.0
        %863 = vmatprep.subr.mxu0 0.0
        %864 = vmatpush2.msra.mxu0 0.0
        %865 = vmatprep.subr.mxu0 0.0
        %866 = vmatpush2.msra.mxu0 0.0
        %867 = vmatprep.subr.mxu0 0.0
        %868 = vmatpush2.msra.mxu0 0.0
        %869 = vmatprep.subr.mxu0 0.0
        %870 = vmatpush2.msra.mxu0 0.0
        %871 = vmatprep.subr.mxu0 0.0
        %872 = vmatpush2.msra.mxu0 0.0
        %873 = vmatprep.subr.mxu0 0.0
        %874 = vmatpush2.msra.mxu0 0.0
        %875 = vmatprep.mubr.f32.mxu0 0.0
        %876 = vmatmul.mubr.f32.gmra.mxu0 %v800
        %v877 = vpop.f32.mrf.mxu0
        %v878 = vadd.f32 %v797, %v877
        %v879 = vpop.f32.mrf.mxu0
        %880 = vmatprep.mubr.f32.mxu0 0.0
        %881 = vmatmul.mubr.f32.gmra.mxu0 %v803
        %v882 = vpop.f32.mrf.mxu0
        %v883 = vadd.f32 %v797, %v882
        %v884 = vpop.f32.mrf.mxu0
        %885 = vmatprep.mubr.f32.mxu0 0.0
        %886 = vmatmul.mubr.f32.gmra.mxu0 %v806
        %v887 = vpop.f32.mrf.mxu0
        %v888 = vadd.f32 %v797, %v887
        %v889 = vpop.f32.mrf.mxu0
        %890 = vmatprep.mubr.f32.mxu0 0.0
        %891 = vmatmul.mubr.f32.gmra.mxu0 %v809
        %v892 = vpop.f32.mrf.mxu0
        %v893 = vadd.f32 %v797, %v892
        %v894 = vpop.f32.mrf.mxu0
        %895 = vdwg.mxu0
        %s896 = scalar_lea.vmem %s4, 32
        %v897 = vld [vmem:[%s896] sm:$0xff]
        %v898 = vld [vmem:[%s896 + $0x8] sm:$0xff]
        %v899 = vld [vmem:[%s896 + $0x10] sm:$0xff]
        %v900 = vld [vmem:[%s896 + $0x18] sm:$0xff]
        %s901 = scalar_lea.vmem %s5, 1
        %v902 = vld [vmem:[%s901] sm:$0x1]
        %v904 = vlaneseq
        %v905 = vshrl.u32 %v904, 7
        %v906 = vsub.s32 0, %v905
        %v907 = vrot.slane %v902, %v906
        %909 = vmatprep.subr.mxu0 0.0
        %910 = vmatpush1.msra.mxu0 0.0
        %911 = vmatprep.subr.mxu0 0.0
        %912 = vmatpush1.msra.mxu0 0.0
        %913 = vmatprep.subr.mxu0 0.0
        %914 = vmatpush1.msra.mxu0 0.0
        %915 = vmatprep.subr.mxu0 0.0
        %916 = vmatpush1.msra.mxu0 0.0
        %917 = vmatprep.subr.mxu0 0.0
        %918 = vmatpush1.msra.mxu0 0.0
        %919 = vmatprep.subr.mxu0 0.0
        %920 = vmatpush1.msra.mxu0 0.0
        %921 = vmatprep.subr.mxu0 0.0
        %922 = vmatpush1.msra.mxu0 0.0
        %923 = vmatprep.subr.mxu0 0.0
        %924 = vmatpush1.msra.mxu0 0.0
        %925 = vmatprep.subr.mxu0 0.0
        %926 = vmatpush1.msra.mxu0 0.0
        %927 = vmatprep.subr.mxu0 0.0
        %928 = vmatpush1.msra.mxu0 0.0
        %929 = vmatprep.subr.mxu0 0.0
        %930 = vmatpush1.msra.mxu0 0.0
        %931 = vmatprep.subr.mxu0 0.0
        %932 = vmatpush1.msra.mxu0 0.0
        %933 = vmatprep.subr.mxu0 0.0
        %934 = vmatpush1.msra.mxu0 %v900
        %935 = vmatprep.subr.mxu0 0.0
        %936 = vmatpush1.msra.mxu0 %v899
        %937 = vmatprep.subr.mxu0 0.0
        %938 = vmatpush1.msra.mxu0 %v898
        %939 = vmatprep.subr.mxu0 0.0
        %940 = vmatpush1.msra.mxu0 %v897
        %941 = vmatprep.subr.mxu0 0.0
        %942 = vmatpush2.msra.mxu0 0.0
        %943 = vmatprep.subr.mxu0 0.0
        %944 = vmatpush2.msra.mxu0 0.0
        %945 = vmatprep.subr.mxu0 0.0
        %946 = vmatpush2.msra.mxu0 0.0
        %947 = vmatprep.subr.mxu0 0.0
        %948 = vmatpush2.msra.mxu0 0.0
        %949 = vmatprep.subr.mxu0 0.0
        %950 = vmatpush2.msra.mxu0 0.0
        %951 = vmatprep.subr.mxu0 0.0
        %952 = vmatpush2.msra.mxu0 0.0
        %953 = vmatprep.subr.mxu0 0.0
        %954 = vmatpush2.msra.mxu0 0.0
        %955 = vmatprep.subr.mxu0 0.0
        %956 = vmatpush2.msra.mxu0 0.0
        %957 = vmatprep.subr.mxu0 0.0
        %958 = vmatpush2.msra.mxu0 0.0
        %959 = vmatprep.subr.mxu0 0.0
        %960 = vmatpush2.msra.mxu0 0.0
        %961 = vmatprep.subr.mxu0 0.0
        %962 = vmatpush2.msra.mxu0 0.0
        %963 = vmatprep.subr.mxu0 0.0
        %964 = vmatpush2.msra.mxu0 0.0
        %965 = vmatprep.subr.mxu0 0.0
        %966 = vmatpush2.msra.mxu0 0.0
        %967 = vmatprep.subr.mxu0 0.0
        %968 = vmatpush2.msra.mxu0 0.0
        %969 = vmatprep.subr.mxu0 0.0
        %970 = vmatpush2.msra.mxu0 0.0
        %971 = vmatprep.subr.mxu0 0.0
        %972 = vmatpush2.msra.mxu0 0.0
        %973 = vmatprep.mubr.f32.mxu0 0.0
        %974 = vmatmul.mubr.f32.gmra.mxu0 %v800
        %v975 = vpop.f32.mrf.mxu0
        %v976 = vadd.f32 %v907, %v975
        %v977 = vpop.f32.mrf.mxu0
        %978 = vmatprep.mubr.f32.mxu0 0.0
        %979 = vmatmul.mubr.f32.gmra.mxu0 %v803
        %v980 = vpop.f32.mrf.mxu0
        %v981 = vadd.f32 %v907, %v980
        %v982 = vpop.f32.mrf.mxu0
        %983 = vmatprep.mubr.f32.mxu0 0.0
        %984 = vmatmul.mubr.f32.gmra.mxu0 %v806
        %v985 = vpop.f32.mrf.mxu0
        %v986 = vadd.f32 %v907, %v985
        %v987 = vpop.f32.mrf.mxu0
        %988 = vmatprep.mubr.f32.mxu0 0.0
        %989 = vmatmul.mubr.f32.gmra.mxu0 %v809
        %v990 = vpop.f32.mrf.mxu0
        %v991 = vadd.f32 %v907, %v990
        %v992 = vpop.f32.mrf.mxu0
        %993 = vdwg.mxu0
        %s994 = scalar_lea.vmem %s4, 64
        %v995 = vld [vmem:[%s994] sm:$0xff]
        %v996 = vld [vmem:[%s994 + $0x8] sm:$0xff]
        %v997 = vld [vmem:[%s994 + $0x10] sm:$0xff]
        %v998 = vld [vmem:[%s994 + $0x18] sm:$0xff]
        %s999 = scalar_lea.vmem %s5, 2
        %v1000 = vld [vmem:[%s999] sm:$0x1]
        %v1002 = vlaneseq
        %v1003 = vshrl.u32 %v1002, 7
        %v1004 = vsub.s32 0, %v1003
        %v1005 = vrot.slane %v1000, %v1004
        %1007 = vmatprep.subr.mxu0 0.0
        %1008 = vmatpush1.msra.mxu0 0.0
        %1009 = vmatprep.subr.mxu0 0.0
        %1010 = vmatpush1.msra.mxu0 0.0
        %1011 = vmatprep.subr.mxu0 0.0
        %1012 = vmatpush1.msra.mxu0 0.0
        %1013 = vmatprep.subr.mxu0 0.0
        %1014 = vmatpush1.msra.mxu0 0.0
        %1015 = vmatprep.subr.mxu0 0.0
        %1016 = vmatpush1.msra.mxu0 0.0
        %1017 = vmatprep.subr.mxu0 0.0
        %1018 = vmatpush1.msra.mxu0 0.0
        %1019 = vmatprep.subr.mxu0 0.0
        %1020 = vmatpush1.msra.mxu0 0.0
        %1021 = vmatprep.subr.mxu0 0.0
        %1022 = vmatpush1.msra.mxu0 0.0
        %1023 = vmatprep.subr.mxu0 0.0
        %1024 = vmatpush1.msra.mxu0 0.0
        %1025 = vmatprep.subr.mxu0 0.0
        %1026 = vmatpush1.msra.mxu0 0.0
        %1027 = vmatprep.subr.mxu0 0.0
        %1028 = vmatpush1.msra.mxu0 0.0
        %1029 = vmatprep.subr.mxu0 0.0
        %1030 = vmatpush1.msra.mxu0 0.0
        %1031 = vmatprep.subr.mxu0 0.0
        %1032 = vmatpush1.msra.mxu0 %v998
        %1033 = vmatprep.subr.mxu0 0.0
        %1034 = vmatpush1.msra.mxu0 %v997
        %1035 = vmatprep.subr.mxu0 0.0
        %1036 = vmatpush1.msra.mxu0 %v996
        %1037 = vmatprep.subr.mxu0 0.0
        %1038 = vmatpush1.msra.mxu0 %v995
        %1039 = vmatprep.subr.mxu0 0.0
        %1040 = vmatpush2.msra.mxu0 0.0
        %1041 = vmatprep.subr.mxu0 0.0
        %1042 = vmatpush2.msra.mxu0 0.0
        %1043 = vmatprep.subr.mxu0 0.0
        %1044 = vmatpush2.msra.mxu0 0.0
        %1045 = vmatprep.subr.mxu0 0.0
        %1046 = vmatpush2.msra.mxu0 0.0
        %1047 = vmatprep.subr.mxu0 0.0
        %1048 = vmatpush2.msra.mxu0 0.0
        %1049 = vmatprep.subr.mxu0 0.0
        %1050 = vmatpush2.msra.mxu0 0.0
        %1051 = vmatprep.subr.mxu0 0.0
        %1052 = vmatpush2.msra.mxu0 0.0
        %1053 = vmatprep.subr.mxu0 0.0
        %1054 = vmatpush2.msra.mxu0 0.0
        %1055 = vmatprep.subr.mxu0 0.0
        %1056 = vmatpush2.msra.mxu0 0.0
        %1057 = vmatprep.subr.mxu0 0.0
        %1058 = vmatpush2.msra.mxu0 0.0
        %1059 = vmatprep.subr.mxu0 0.0
        %1060 = vmatpush2.msra.mxu0 0.0
        %1061 = vmatprep.subr.mxu0 0.0
        %1062 = vmatpush2.msra.mxu0 0.0
        %1063 = vmatprep.subr.mxu0 0.0
        %1064 = vmatpush2.msra.mxu0 0.0
        %1065 = vmatprep.subr.mxu0 0.0
        %1066 = vmatpush2.msra.mxu0 0.0
        %1067 = vmatprep.subr.mxu0 0.0
        %1068 = vmatpush2.msra.mxu0 0.0
        %1069 = vmatprep.subr.mxu0 0.0
        %1070 = vmatpush2.msra.mxu0 0.0
        %1071 = vmatprep.mubr.f32.mxu0 0.0
        %1072 = vmatmul.mubr.f32.gmra.mxu0 %v800
        %v1073 = vpop.f32.mrf.mxu0
        %v1074 = vadd.f32 %v1005, %v1073
        %v1075 = vpop.f32.mrf.mxu0
        %1076 = vmatprep.mubr.f32.mxu0 0.0
        %1077 = vmatmul.mubr.f32.gmra.mxu0 %v803
        %v1078 = vpop.f32.mrf.mxu0
        %v1079 = vadd.f32 %v1005, %v1078
        %v1080 = vpop.f32.mrf.mxu0
        %1081 = vmatprep.mubr.f32.mxu0 0.0
        %1082 = vmatmul.mubr.f32.gmra.mxu0 %v806
        %v1083 = vpop.f32.mrf.mxu0
        %v1084 = vadd.f32 %v1005, %v1083
        %v1085 = vpop.f32.mrf.mxu0
        %1086 = vmatprep.mubr.f32.mxu0 0.0
        %1087 = vmatmul.mubr.f32.gmra.mxu0 %v809
        %v1088 = vpop.f32.mrf.mxu0
        %v1089 = vadd.f32 %v1005, %v1088
        %v1090 = vpop.f32.mrf.mxu0
        %1091 = vdwg.mxu0
        %vm1092 = vcmask 130048
        %v1094 = vsel %vm1092, %v878, 0
        %v1097 = vsel %vm1092, %v976, 0
        %1099 = vmatprep.subr.mxu0 0.0
        %1100 = vmatpush1.xpose.msra.mxu0 0.0
        %1101 = vmatprep.subr.mxu0 0.0
        %1102 = vmatpush1.xpose.msra.mxu0 0.0
        %1103 = vmatprep.subr.mxu0 0.0
        %1104 = vmatpush1.xpose.msra.mxu0 0.0
        %1105 = vmatprep.subr.mxu0 0.0
        %1106 = vmatpush1.xpose.msra.mxu0 0.0
        %1107 = vmatprep.subr.mxu0 0.0
        %1108 = vmatpush1.xpose.msra.mxu0 0.0
        %1109 = vmatprep.subr.mxu0 0.0
        %1110 = vmatpush1.xpose.msra.mxu0 0.0
        %1111 = vmatprep.subr.mxu0 0.0
        %1112 = vmatpush1.xpose.msra.mxu0 0.0
        %1113 = vmatprep.subr.mxu0 0.0
        %1114 = vmatpush1.xpose.msra.mxu0 0.0
        %1115 = vmatprep.subr.mxu0 0.0
        %1116 = vmatpush1.xpose.msra.mxu0 0.0
        %1117 = vmatprep.subr.mxu0 0.0
        %1118 = vmatpush1.xpose.msra.mxu0 0.0
        %1119 = vmatprep.subr.mxu0 0.0
        %1120 = vmatpush1.xpose.msra.mxu0 0.0
        %1121 = vmatprep.subr.mxu0 0.0
        %1122 = vmatpush1.xpose.msra.mxu0 0.0
        %1123 = vmatprep.subr.mxu0 0.0
        %1124 = vmatpush1.xpose.msra.mxu0 0.0
        %1125 = vmatprep.subr.mxu0 0.0
        %1126 = vmatpush1.xpose.msra.mxu0 0.0
        %1127 = vmatprep.subr.mxu0 0.0
        %1128 = vmatpush1.xpose.msra.mxu0 0.0
        %1129 = vmatprep.subr.mxu0 0.0
        %1130 = vmatpush1.xpose.msra.mxu0 %v1097
        %1131 = vmatprep.subr.mxu0 0.0
        %1132 = vmatpush2.xpose.msra.mxu0 0.0
        %1133 = vmatprep.subr.mxu0 0.0
        %1134 = vmatpush2.xpose.msra.mxu0 0.0
        %1135 = vmatprep.subr.mxu0 0.0
        %1136 = vmatpush2.xpose.msra.mxu0 0.0
        %1137 = vmatprep.subr.mxu0 0.0
        %1138 = vmatpush2.xpose.msra.mxu0 0.0
        %1139 = vmatprep.subr.mxu0 0.0
        %1140 = vmatpush2.xpose.msra.mxu0 0.0
        %1141 = vmatprep.subr.mxu0 0.0
        %1142 = vmatpush2.xpose.msra.mxu0 0.0
        %1143 = vmatprep.subr.mxu0 0.0
        %1144 = vmatpush2.xpose.msra.mxu0 0.0
        %1145 = vmatprep.subr.mxu0 0.0
        %1146 = vmatpush2.xpose.msra.mxu0 0.0
        %1147 = vmatprep.subr.mxu0 0.0
        %1148 = vmatpush2.xpose.msra.mxu0 0.0
        %1149 = vmatprep.subr.mxu0 0.0
        %1150 = vmatpush2.xpose.msra.mxu0 0.0
        %1151 = vmatprep.subr.mxu0 0.0
        %1152 = vmatpush2.xpose.msra.mxu0 0.0
        %1153 = vmatprep.subr.mxu0 0.0
        %1154 = vmatpush2.xpose.msra.mxu0 0.0
        %1155 = vmatprep.subr.mxu0 0.0
        %1156 = vmatpush2.xpose.msra.mxu0 0.0
        %1157 = vmatprep.subr.mxu0 0.0
        %1158 = vmatpush2.xpose.msra.mxu0 0.0
        %1159 = vmatprep.subr.mxu0 0.0
        %1160 = vmatpush2.xpose.msra.mxu0 0.0
        %1161 = vmatprep.subr.mxu0 0.0
        %1162 = vmatpush2.xpose.msra.mxu0 0.0
        %1163 = vmatprep.mubr.f32.mxu0 0.0
        %1164 = vmatmul.mubr.f32.gmra.mxu0 %v1094
        %v1165 = vpop.f32.mrf.mxu0
        %v1166 = vadd.f32 0.0, %v1165
        %v1167 = vpop.f32.mrf.mxu0
        %1168 = vdwg.mxu0
        %v1170 = vsel %vm1092, %v883, 0
        %v1173 = vsel %vm1092, %v981, 0
        %1175 = vmatprep.subr.mxu0 0.0
        %1176 = vmatpush1.xpose.msra.mxu0 0.0
        %1177 = vmatprep.subr.mxu0 0.0
        %1178 = vmatpush1.xpose.msra.mxu0 0.0
        %1179 = vmatprep.subr.mxu0 0.0
        %1180 = vmatpush1.xpose.msra.mxu0 0.0
        %1181 = vmatprep.subr.mxu0 0.0
        %1182 = vmatpush1.xpose.msra.mxu0 0.0
        %1183 = vmatprep.subr.mxu0 0.0
        %1184 = vmatpush1.xpose.msra.mxu0 0.0
        %1185 = vmatprep.subr.mxu0 0.0
        %1186 = vmatpush1.xpose.msra.mxu0 0.0
        %1187 = vmatprep.subr.mxu0 0.0
        %1188 = vmatpush1.xpose.msra.mxu0 0.0
        %1189 = vmatprep.subr.mxu0 0.0
        %1190 = vmatpush1.xpose.msra.mxu0 0.0
        %1191 = vmatprep.subr.mxu0 0.0
        %1192 = vmatpush1.xpose.msra.mxu0 0.0
        %1193 = vmatprep.subr.mxu0 0.0
        %1194 = vmatpush1.xpose.msra.mxu0 0.0
        %1195 = vmatprep.subr.mxu0 0.0
        %1196 = vmatpush1.xpose.msra.mxu0 0.0
        %1197 = vmatprep.subr.mxu0 0.0
        %1198 = vmatpush1.xpose.msra.mxu0 0.0
        %1199 = vmatprep.subr.mxu0 0.0
        %1200 = vmatpush1.xpose.msra.mxu0 0.0
        %1201 = vmatprep.subr.mxu0 0.0
        %1202 = vmatpush1.xpose.msra.mxu0 0.0
        %1203 = vmatprep.subr.mxu0 0.0
        %1204 = vmatpush1.xpose.msra.mxu0 0.0
        %1205 = vmatprep.subr.mxu0 0.0
        %1206 = vmatpush1.xpose.msra.mxu0 %v1173
        %1207 = vmatprep.subr.mxu0 0.0
        %1208 = vmatpush2.xpose.msra.mxu0 0.0
        %1209 = vmatprep.subr.mxu0 0.0
        %1210 = vmatpush2.xpose.msra.mxu0 0.0
        %1211 = vmatprep.subr.mxu0 0.0
        %1212 = vmatpush2.xpose.msra.mxu0 0.0
        %1213 = vmatprep.subr.mxu0 0.0
        %1214 = vmatpush2.xpose.msra.mxu0 0.0
        %1215 = vmatprep.subr.mxu0 0.0
        %1216 = vmatpush2.xpose.msra.mxu0 0.0
        %1217 = vmatprep.subr.mxu0 0.0
        %1218 = vmatpush2.xpose.msra.mxu0 0.0
        %1219 = vmatprep.subr.mxu0 0.0
        %1220 = vmatpush2.xpose.msra.mxu0 0.0
        %1221 = vmatprep.subr.mxu0 0.0
        %1222 = vmatpush2.xpose.msra.mxu0 0.0
        %1223 = vmatprep.subr.mxu0 0.0
        %1224 = vmatpush2.xpose.msra.mxu0 0.0
        %1225 = vmatprep.subr.mxu0 0.0
        %1226 = vmatpush2.xpose.msra.mxu0 0.0
        %1227 = vmatprep.subr.mxu0 0.0
        %1228 = vmatpush2.xpose.msra.mxu0 0.0
        %1229 = vmatprep.subr.mxu0 0.0
        %1230 = vmatpush2.xpose.msra.mxu0 0.0
        %1231 = vmatprep.subr.mxu0 0.0
        %1232 = vmatpush2.xpose.msra.mxu0 0.0
        %1233 = vmatprep.subr.mxu0 0.0
        %1234 = vmatpush2.xpose.msra.mxu0 0.0
        %1235 = vmatprep.subr.mxu0 0.0
        %1236 = vmatpush2.xpose.msra.mxu0 0.0
        %1237 = vmatprep.subr.mxu0 0.0
        %1238 = vmatpush2.xpose.msra.mxu0 0.0
        %1239 = vmatprep.mubr.f32.mxu0 0.0
        %1240 = vmatmul.mubr.f32.gmra.mxu0 %v1170
        %v1241 = vpop.f32.mrf.mxu0
        %v1242 = vadd.f32 0.0, %v1241
        %v1243 = vpop.f32.mrf.mxu0
        %1244 = vdwg.mxu0
        %v1246 = vsel %vm1092, %v888, 0
        %v1249 = vsel %vm1092, %v986, 0
        %1251 = vmatprep.subr.mxu0 0.0
        %1252 = vmatpush1.xpose.msra.mxu0 0.0
        %1253 = vmatprep.subr.mxu0 0.0
        %1254 = vmatpush1.xpose.msra.mxu0 0.0
        %1255 = vmatprep.subr.mxu0 0.0
        %1256 = vmatpush1.xpose.msra.mxu0 0.0
        %1257 = vmatprep.subr.mxu0 0.0
        %1258 = vmatpush1.xpose.msra.mxu0 0.0
        %1259 = vmatprep.subr.mxu0 0.0
        %1260 = vmatpush1.xpose.msra.mxu0 0.0
        %1261 = vmatprep.subr.mxu0 0.0
        %1262 = vmatpush1.xpose.msra.mxu0 0.0
        %1263 = vmatprep.subr.mxu0 0.0
        %1264 = vmatpush1.xpose.msra.mxu0 0.0
        %1265 = vmatprep.subr.mxu0 0.0
        %1266 = vmatpush1.xpose.msra.mxu0 0.0
        %1267 = vmatprep.subr.mxu0 0.0
        %1268 = vmatpush1.xpose.msra.mxu0 0.0
        %1269 = vmatprep.subr.mxu0 0.0
        %1270 = vmatpush1.xpose.msra.mxu0 0.0
        %1271 = vmatprep.subr.mxu0 0.0
        %1272 = vmatpush1.xpose.msra.mxu0 0.0
        %1273 = vmatprep.subr.mxu0 0.0
        %1274 = vmatpush1.xpose.msra.mxu0 0.0
        %1275 = vmatprep.subr.mxu0 0.0
        %1276 = vmatpush1.xpose.msra.mxu0 0.0
        %1277 = vmatprep.subr.mxu0 0.0
        %1278 = vmatpush1.xpose.msra.mxu0 0.0
        %1279 = vmatprep.subr.mxu0 0.0
        %1280 = vmatpush1.xpose.msra.mxu0 0.0
        %1281 = vmatprep.subr.mxu0 0.0
        %1282 = vmatpush1.xpose.msra.mxu0 %v1249
        %1283 = vmatprep.subr.mxu0 0.0
        %1284 = vmatpush2.xpose.msra.mxu0 0.0
        %1285 = vmatprep.subr.mxu0 0.0
        %1286 = vmatpush2.xpose.msra.mxu0 0.0
        %1287 = vmatprep.subr.mxu0 0.0
        %1288 = vmatpush2.xpose.msra.mxu0 0.0
        %1289 = vmatprep.subr.mxu0 0.0
        %1290 = vmatpush2.xpose.msra.mxu0 0.0
        %1291 = vmatprep.subr.mxu0 0.0
        %1292 = vmatpush2.xpose.msra.mxu0 0.0
        %1293 = vmatprep.subr.mxu0 0.0
        %1294 = vmatpush2.xpose.msra.mxu0 0.0
        %1295 = vmatprep.subr.mxu0 0.0
        %1296 = vmatpush2.xpose.msra.mxu0 0.0
        %1297 = vmatprep.subr.mxu0 0.0
        %1298 = vmatpush2.xpose.msra.mxu0 0.0
        %1299 = vmatprep.subr.mxu0 0.0
        %1300 = vmatpush2.xpose.msra.mxu0 0.0
        %1301 = vmatprep.subr.mxu0 0.0
        %1302 = vmatpush2.xpose.msra.mxu0 0.0
        %1303 = vmatprep.subr.mxu0 0.0
        %1304 = vmatpush2.xpose.msra.mxu0 0.0
        %1305 = vmatprep.subr.mxu0 0.0
        %1306 = vmatpush2.xpose.msra.mxu0 0.0
        %1307 = vmatprep.subr.mxu0 0.0
        %1308 = vmatpush2.xpose.msra.mxu0 0.0
        %1309 = vmatprep.subr.mxu0 0.0
        %1310 = vmatpush2.xpose.msra.mxu0 0.0
        %1311 = vmatprep.subr.mxu0 0.0
        %1312 = vmatpush2.xpose.msra.mxu0 0.0
        %1313 = vmatprep.subr.mxu0 0.0
        %1314 = vmatpush2.xpose.msra.mxu0 0.0
        %1315 = vmatprep.mubr.f32.mxu0 0.0
        %1316 = vmatmul.mubr.f32.gmra.mxu0 %v1246
        %v1317 = vpop.f32.mrf.mxu0
        %v1318 = vadd.f32 0.0, %v1317
        %v1319 = vpop.f32.mrf.mxu0
        %1320 = vdwg.mxu0
        %v1322 = vsel %vm1092, %v893, 0
        %v1325 = vsel %vm1092, %v991, 0
        %1327 = vmatprep.subr.mxu0 0.0
        %1328 = vmatpush1.xpose.msra.mxu0 0.0
        %1329 = vmatprep.subr.mxu0 0.0
        %1330 = vmatpush1.xpose.msra.mxu0 0.0
        %1331 = vmatprep.subr.mxu0 0.0
        %1332 = vmatpush1.xpose.msra.mxu0 0.0
        %1333 = vmatprep.subr.mxu0 0.0
        %1334 = vmatpush1.xpose.msra.mxu0 0.0
        %1335 = vmatprep.subr.mxu0 0.0
        %1336 = vmatpush1.xpose.msra.mxu0 0.0
        %1337 = vmatprep.subr.mxu0 0.0
        %1338 = vmatpush1.xpose.msra.mxu0 0.0
        %1339 = vmatprep.subr.mxu0 0.0
        %1340 = vmatpush1.xpose.msra.mxu0 0.0
        %1341 = vmatprep.subr.mxu0 0.0
        %1342 = vmatpush1.xpose.msra.mxu0 0.0
        %1343 = vmatprep.subr.mxu0 0.0
        %1344 = vmatpush1.xpose.msra.mxu0 0.0
        %1345 = vmatprep.subr.mxu0 0.0
        %1346 = vmatpush1.xpose.msra.mxu0 0.0
        %1347 = vmatprep.subr.mxu0 0.0
        %1348 = vmatpush1.xpose.msra.mxu0 0.0
        %1349 = vmatprep.subr.mxu0 0.0
        %1350 = vmatpush1.xpose.msra.mxu0 0.0
        %1351 = vmatprep.subr.mxu0 0.0
        %1352 = vmatpush1.xpose.msra.mxu0 0.0
        %1353 = vmatprep.subr.mxu0 0.0
        %1354 = vmatpush1.xpose.msra.mxu0 0.0
        %1355 = vmatprep.subr.mxu0 0.0
        %1356 = vmatpush1.xpose.msra.mxu0 0.0
        %1357 = vmatprep.subr.mxu0 0.0
        %1358 = vmatpush1.xpose.msra.mxu0 %v1325
        %1359 = vmatprep.subr.mxu0 0.0
        %1360 = vmatpush2.xpose.msra.mxu0 0.0
        %1361 = vmatprep.subr.mxu0 0.0
        %1362 = vmatpush2.xpose.msra.mxu0 0.0
        %1363 = vmatprep.subr.mxu0 0.0
        %1364 = vmatpush2.xpose.msra.mxu0 0.0
        %1365 = vmatprep.subr.mxu0 0.0
        %1366 = vmatpush2.xpose.msra.mxu0 0.0
        %1367 = vmatprep.subr.mxu0 0.0
        %1368 = vmatpush2.xpose.msra.mxu0 0.0
        %1369 = vmatprep.subr.mxu0 0.0
        %1370 = vmatpush2.xpose.msra.mxu0 0.0
        %1371 = vmatprep.subr.mxu0 0.0
        %1372 = vmatpush2.xpose.msra.mxu0 0.0
        %1373 = vmatprep.subr.mxu0 0.0
        %1374 = vmatpush2.xpose.msra.mxu0 0.0
        %1375 = vmatprep.subr.mxu0 0.0
        %1376 = vmatpush2.xpose.msra.mxu0 0.0
        %1377 = vmatprep.subr.mxu0 0.0
        %1378 = vmatpush2.xpose.msra.mxu0 0.0
        %1379 = vmatprep.subr.mxu0 0.0
        %1380 = vmatpush2.xpose.msra.mxu0 0.0
        %1381 = vmatprep.subr.mxu0 0.0
        %1382 = vmatpush2.xpose.msra.mxu0 0.0
        %1383 = vmatprep.subr.mxu0 0.0
        %1384 = vmatpush2.xpose.msra.mxu0 0.0
        %1385 = vmatprep.subr.mxu0 0.0
        %1386 = vmatpush2.xpose.msra.mxu0 0.0
        %1387 = vmatprep.subr.mxu0 0.0
        %1388 = vmatpush2.xpose.msra.mxu0 0.0
        %1389 = vmatprep.subr.mxu0 0.0
        %1390 = vmatpush2.xpose.msra.mxu0 0.0
        %1391 = vmatprep.mubr.f32.mxu0 0.0
        %1392 = vmatmul.mubr.f32.gmra.mxu0 %v1322
        %v1393 = vpop.f32.mrf.mxu0
        %v1394 = vadd.f32 0.0, %v1393
        %v1395 = vpop.f32.mrf.mxu0
        %1396 = vdwg.mxu0
        %v1397 = vmul.f32 %v1166, 0.25
        %v1398 = vmul.f32 %v1242, 0.25
        %v1399 = vmul.f32 %v1318, 0.25
        %v1400 = vmul.f32 %v1394, 0.25
        %v1401 = vlaneseq
        %v1402 = vshrl.u32 %v1401, 7
        %v1403 = vsub.s32 0, %v1402
        %v1404 = vrot.slane %v697, %v1403
        %v1405 = vlaneseq
        %v1406 = vshrl.u32 %v1405, 7
        %v1407 = vsub.s32 0, %v1406
        %v1408 = vrot.slane %v704, %v1407
        %v1409 = vlaneseq
        %v1410 = vshrl.u32 %v1409, 7
        %v1411 = vsub.s32 0, %v1410
        %v1412 = vrot.slane %v705, %v1411
        %v1413 = vlaneseq
        %v1414 = vshrl.u32 %v1413, 7
        %v1415 = vsub.s32 0, %v1414
        %v1416 = vrot.slane %v706, %v1415
        %v1421 = vadd.f32 %v1397, %v1404
        %v1422 = vadd.f32 %v1398, %v1408
        %v1423 = vadd.f32 %v1399, %v1412
        %v1424 = vadd.f32 %v1400, %v1416
        %vm1425 = vcmask 64512
        %v1426 = vsel %vm1425, %v1421, -inf
        %1427 = vmax.xlane.f32.xlu0 %v1426
        %v1428 = vpop.xlane.xlu0 %1427
        %v1429 = vsel %vm1425, %v1422, -inf
        %1430 = vmax.xlane.f32.xlu0 %v1429
        %v1431 = vpop.xlane.xlu0 %1430
        %v1432 = vsel %vm1425, %v1423, -inf
        %1433 = vmax.xlane.f32.xlu0 %v1432
        %v1434 = vpop.xlane.xlu0 %1433
        %v1435 = vsel %vm1425, %v1424, -inf
        %1436 = vmax.xlane.f32.xlu0 %v1435
        %v1437 = vpop.xlane.xlu0 %1436
        %v1438 = vsub.f32 %v1421, %v1428
        %v1439 = vsub.f32 %v1422, %v1431
        %v1440 = vsub.f32 %v1423, %v1434
        %v1441 = vsub.f32 %v1424, %v1437
        %v1442 = vmul.f32 %v1438, 1.442695
        %v1443 = vpow.pop %v1442
        %v1444 = vmul.f32 %v1439, 1.442695
        %v1445 = vpow.pop %v1444
        %v1446 = vmul.f32 %v1440, 1.442695
        %v1447 = vpow.pop %v1446
        %v1448 = vmul.f32 %v1441, 1.442695
        %v1449 = vpow.pop %v1448
        %v1450 = vsel %vm1425, %v1443, 0.0
        %1451 = vadd.xlane.f32.xlu0 %v1450
        %v1452 = vpop.xlane.xlu0 %1451
        %v1453 = vsel %vm1425, %v1445, 0.0
        %1454 = vadd.xlane.f32.xlu0 %v1453
        %v1455 = vpop.xlane.xlu0 %1454
        %v1456 = vsel %vm1425, %v1447, 0.0
        %1457 = vadd.xlane.f32.xlu0 %v1456
        %v1458 = vpop.xlane.xlu0 %1457
        %v1459 = vsel %vm1425, %v1449, 0.0
        %1460 = vadd.xlane.f32.xlu0 %v1459
        %v1461 = vpop.xlane.xlu0 %1460
        %v1462 = vrcp.pop %v1452
        %v1463 = vrcp.pop %v1455
        %v1464 = vrcp.pop %v1458
        %v1465 = vrcp.pop %v1461
        %v1466 = vmul.f32 %v1443, %v1462
        %v1467 = vmul.f32 %v1445, %v1463
        %v1468 = vmul.f32 %v1447, %v1464
        %v1469 = vmul.f32 %v1449, %v1465
        %v1471 = vsel %vm1425, %v1466, 0
        %1473 = vmatprep.subr.mxu0 0.0
        %1474 = vmatpush1.msra.mxu0 0.0
        %1475 = vmatprep.subr.mxu0 0.0
        %1476 = vmatpush1.msra.mxu0 0.0
        %1477 = vmatprep.subr.mxu0 0.0
        %1478 = vmatpush1.msra.mxu0 0.0
        %1479 = vmatprep.subr.mxu0 0.0
        %1480 = vmatpush1.msra.mxu0 0.0
        %1481 = vmatprep.subr.mxu0 0.0
        %1482 = vmatpush1.msra.mxu0 0.0
        %1483 = vmatprep.subr.mxu0 0.0
        %1484 = vmatpush1.msra.mxu0 0.0
        %1485 = vmatprep.subr.mxu0 0.0
        %1486 = vmatpush1.msra.mxu0 0.0
        %1487 = vmatprep.subr.mxu0 0.0
        %1488 = vmatpush1.msra.mxu0 0.0
        %1489 = vmatprep.subr.mxu0 0.0
        %1490 = vmatpush1.msra.mxu0 0.0
        %1491 = vmatprep.subr.mxu0 0.0
        %1492 = vmatpush1.msra.mxu0 0.0
        %1493 = vmatprep.subr.mxu0 0.0
        %1494 = vmatpush1.msra.mxu0 0.0
        %1495 = vmatprep.subr.mxu0 0.0
        %1496 = vmatpush1.msra.mxu0 0.0
        %1497 = vmatprep.subr.mxu0 0.0
        %1498 = vmatpush1.msra.mxu0 0.0
        %1499 = vmatprep.subr.mxu0 0.0
        %1500 = vmatpush1.msra.mxu0 0.0
        %1501 = vmatprep.subr.mxu0 0.0
        %1502 = vmatpush1.msra.mxu0 0.0
        %1503 = vmatprep.subr.mxu0 0.0
        %1504 = vmatpush1.msra.mxu0 %v1074
        %1505 = vmatprep.subr.mxu0 0.0
        %1506 = vmatpush2.msra.mxu0 0.0
        %1507 = vmatprep.subr.mxu0 0.0
        %1508 = vmatpush2.msra.mxu0 0.0
        %1509 = vmatprep.subr.mxu0 0.0
        %1510 = vmatpush2.msra.mxu0 0.0
        %1511 = vmatprep.subr.mxu0 0.0
        %1512 = vmatpush2.msra.mxu0 0.0
        %1513 = vmatprep.subr.mxu0 0.0
        %1514 = vmatpush2.msra.mxu0 0.0
        %1515 = vmatprep.subr.mxu0 0.0
        %1516 = vmatpush2.msra.mxu0 0.0
        %1517 = vmatprep.subr.mxu0 0.0
        %1518 = vmatpush2.msra.mxu0 0.0
        %1519 = vmatprep.subr.mxu0 0.0
        %1520 = vmatpush2.msra.mxu0 0.0
        %1521 = vmatprep.subr.mxu0 0.0
        %1522 = vmatpush2.msra.mxu0 0.0
        %1523 = vmatprep.subr.mxu0 0.0
        %1524 = vmatpush2.msra.mxu0 0.0
        %1525 = vmatprep.subr.mxu0 0.0
        %1526 = vmatpush2.msra.mxu0 0.0
        %1527 = vmatprep.subr.mxu0 0.0
        %1528 = vmatpush2.msra.mxu0 0.0
        %1529 = vmatprep.subr.mxu0 0.0
        %1530 = vmatpush2.msra.mxu0 0.0
        %1531 = vmatprep.subr.mxu0 0.0
        %1532 = vmatpush2.msra.mxu0 0.0
        %1533 = vmatprep.subr.mxu0 0.0
        %1534 = vmatpush2.msra.mxu0 0.0
        %1535 = vmatprep.subr.mxu0 0.0
        %1536 = vmatpush2.msra.mxu0 0.0
        %1537 = vmatprep.mubr.f32.mxu0 0.0
        %1538 = vmatmul.mubr.f32.gmra.mxu0 %v1471
        %v1539 = vpop.f32.mrf.mxu0
        %v1540 = vadd.f32 0.0, %v1539
        %v1541 = vpop.f32.mrf.mxu0
        %1542 = vdwg.mxu0
        %v1544 = vsel %vm1425, %v1467, 0
        %1546 = vmatprep.subr.mxu0 0.0
        %1547 = vmatpush1.msra.mxu0 0.0
        %1548 = vmatprep.subr.mxu0 0.0
        %1549 = vmatpush1.msra.mxu0 0.0
        %1550 = vmatprep.subr.mxu0 0.0
        %1551 = vmatpush1.msra.mxu0 0.0
        %1552 = vmatprep.subr.mxu0 0.0
        %1553 = vmatpush1.msra.mxu0 0.0
        %1554 = vmatprep.subr.mxu0 0.0
        %1555 = vmatpush1.msra.mxu0 0.0
        %1556 = vmatprep.subr.mxu0 0.0
        %1557 = vmatpush1.msra.mxu0 0.0
        %1558 = vmatprep.subr.mxu0 0.0
        %1559 = vmatpush1.msra.mxu0 0.0
        %1560 = vmatprep.subr.mxu0 0.0
        %1561 = vmatpush1.msra.mxu0 0.0
        %1562 = vmatprep.subr.mxu0 0.0
        %1563 = vmatpush1.msra.mxu0 0.0
        %1564 = vmatprep.subr.mxu0 0.0
        %1565 = vmatpush1.msra.mxu0 0.0
        %1566 = vmatprep.subr.mxu0 0.0
        %1567 = vmatpush1.msra.mxu0 0.0
        %1568 = vmatprep.subr.mxu0 0.0
        %1569 = vmatpush1.msra.mxu0 0.0
        %1570 = vmatprep.subr.mxu0 0.0
        %1571 = vmatpush1.msra.mxu0 0.0
        %1572 = vmatprep.subr.mxu0 0.0
        %1573 = vmatpush1.msra.mxu0 0.0
        %1574 = vmatprep.subr.mxu0 0.0
        %1575 = vmatpush1.msra.mxu0 0.0
        %1576 = vmatprep.subr.mxu0 0.0
        %1577 = vmatpush1.msra.mxu0 %v1079
        %1578 = vmatprep.subr.mxu0 0.0
        %1579 = vmatpush2.msra.mxu0 0.0
        %1580 = vmatprep.subr.mxu0 0.0
        %1581 = vmatpush2.msra.mxu0 0.0
        %1582 = vmatprep.subr.mxu0 0.0
        %1583 = vmatpush2.msra.mxu0 0.0
        %1584 = vmatprep.subr.mxu0 0.0
        %1585 = vmatpush2.msra.mxu0 0.0
        %1586 = vmatprep.subr.mxu0 0.0
        %1587 = vmatpush2.msra.mxu0 0.0
        %1588 = vmatprep.subr.mxu0 0.0
        %1589 = vmatpush2.msra.mxu0 0.0
        %1590 = vmatprep.subr.mxu0 0.0
        %1591 = vmatpush2.msra.mxu0 0.0
        %1592 = vmatprep.subr.mxu0 0.0
        %1593 = vmatpush2.msra.mxu0 0.0
        %1594 = vmatprep.subr.mxu0 0.0
        %1595 = vmatpush2.msra.mxu0 0.0
        %1596 = vmatprep.subr.mxu0 0.0
        %1597 = vmatpush2.msra.mxu0 0.0
        %1598 = vmatprep.subr.mxu0 0.0
        %1599 = vmatpush2.msra.mxu0 0.0
        %1600 = vmatprep.subr.mxu0 0.0
        %1601 = vmatpush2.msra.mxu0 0.0
        %1602 = vmatprep.subr.mxu0 0.0
        %1603 = vmatpush2.msra.mxu0 0.0
        %1604 = vmatprep.subr.mxu0 0.0
        %1605 = vmatpush2.msra.mxu0 0.0
        %1606 = vmatprep.subr.mxu0 0.0
        %1607 = vmatpush2.msra.mxu0 0.0
        %1608 = vmatprep.subr.mxu0 0.0
        %1609 = vmatpush2.msra.mxu0 0.0
        %1610 = vmatprep.mubr.f32.mxu0 0.0
        %1611 = vmatmul.mubr.f32.gmra.mxu0 %v1544
        %v1612 = vpop.f32.mrf.mxu0
        %v1613 = vadd.f32 0.0, %v1612
        %v1614 = vpop.f32.mrf.mxu0
        %1615 = vdwg.mxu0
        %v1617 = vsel %vm1425, %v1468, 0
        %1619 = vmatprep.subr.mxu0 0.0
        %1620 = vmatpush1.msra.mxu0 0.0
        %1621 = vmatprep.subr.mxu0 0.0
        %1622 = vmatpush1.msra.mxu0 0.0
        %1623 = vmatprep.subr.mxu0 0.0
        %1624 = vmatpush1.msra.mxu0 0.0
        %1625 = vmatprep.subr.mxu0 0.0
        %1626 = vmatpush1.msra.mxu0 0.0
        %1627 = vmatprep.subr.mxu0 0.0
        %1628 = vmatpush1.msra.mxu0 0.0
        %1629 = vmatprep.subr.mxu0 0.0
        %1630 = vmatpush1.msra.mxu0 0.0
        %1631 = vmatprep.subr.mxu0 0.0
        %1632 = vmatpush1.msra.mxu0 0.0
        %1633 = vmatprep.subr.mxu0 0.0
        %1634 = vmatpush1.msra.mxu0 0.0
        %1635 = vmatprep.subr.mxu0 0.0
        %1636 = vmatpush1.msra.mxu0 0.0
        %1637 = vmatprep.subr.mxu0 0.0
        %1638 = vmatpush1.msra.mxu0 0.0
        %1639 = vmatprep.subr.mxu0 0.0
        %1640 = vmatpush1.msra.mxu0 0.0
        %1641 = vmatprep.subr.mxu0 0.0
        %1642 = vmatpush1.msra.mxu0 0.0
        %1643 = vmatprep.subr.mxu0 0.0
        %1644 = vmatpush1.msra.mxu0 0.0
        %1645 = vmatprep.subr.mxu0 0.0
        %1646 = vmatpush1.msra.mxu0 0.0
        %1647 = vmatprep.subr.mxu0 0.0
        %1648 = vmatpush1.msra.mxu0 0.0
        %1649 = vmatprep.subr.mxu0 0.0
        %1650 = vmatpush1.msra.mxu0 %v1084
        %1651 = vmatprep.subr.mxu0 0.0
        %1652 = vmatpush2.msra.mxu0 0.0
        %1653 = vmatprep.subr.mxu0 0.0
        %1654 = vmatpush2.msra.mxu0 0.0
        %1655 = vmatprep.subr.mxu0 0.0
        %1656 = vmatpush2.msra.mxu0 0.0
        %1657 = vmatprep.subr.mxu0 0.0
        %1658 = vmatpush2.msra.mxu0 0.0
        %1659 = vmatprep.subr.mxu0 0.0
        %1660 = vmatpush2.msra.mxu0 0.0
        %1661 = vmatprep.subr.mxu0 0.0
        %1662 = vmatpush2.msra.mxu0 0.0
        %1663 = vmatprep.subr.mxu0 0.0
        %1664 = vmatpush2.msra.mxu0 0.0
        %1665 = vmatprep.subr.mxu0 0.0
        %1666 = vmatpush2.msra.mxu0 0.0
        %1667 = vmatprep.subr.mxu0 0.0
        %1668 = vmatpush2.msra.mxu0 0.0
        %1669 = vmatprep.subr.mxu0 0.0
        %1670 = vmatpush2.msra.mxu0 0.0
        %1671 = vmatprep.subr.mxu0 0.0
        %1672 = vmatpush2.msra.mxu0 0.0
        %1673 = vmatprep.subr.mxu0 0.0
        %1674 = vmatpush2.msra.mxu0 0.0
        %1675 = vmatprep.subr.mxu0 0.0
        %1676 = vmatpush2.msra.mxu0 0.0
        %1677 = vmatprep.subr.mxu0 0.0
        %1678 = vmatpush2.msra.mxu0 0.0
        %1679 = vmatprep.subr.mxu0 0.0
        %1680 = vmatpush2.msra.mxu0 0.0
        %1681 = vmatprep.subr.mxu0 0.0
        %1682 = vmatpush2.msra.mxu0 0.0
        %1683 = vmatprep.mubr.f32.mxu0 0.0
        %1684 = vmatmul.mubr.f32.gmra.mxu0 %v1617
        %v1685 = vpop.f32.mrf.mxu0
        %v1686 = vadd.f32 0.0, %v1685
        %v1687 = vpop.f32.mrf.mxu0
        %1688 = vdwg.mxu0
        %v1690 = vsel %vm1425, %v1469, 0
        %1692 = vmatprep.subr.mxu0 0.0
        %1693 = vmatpush1.msra.mxu0 0.0
        %1694 = vmatprep.subr.mxu0 0.0
        %1695 = vmatpush1.msra.mxu0 0.0
        %1696 = vmatprep.subr.mxu0 0.0
        %1697 = vmatpush1.msra.mxu0 0.0
        %1698 = vmatprep.subr.mxu0 0.0
        %1699 = vmatpush1.msra.mxu0 0.0
        %1700 = vmatprep.subr.mxu0 0.0
        %1701 = vmatpush1.msra.mxu0 0.0
        %1702 = vmatprep.subr.mxu0 0.0
        %1703 = vmatpush1.msra.mxu0 0.0
        %1704 = vmatprep.subr.mxu0 0.0
        %1705 = vmatpush1.msra.mxu0 0.0
        %1706 = vmatprep.subr.mxu0 0.0
        %1707 = vmatpush1.msra.mxu0 0.0
        %1708 = vmatprep.subr.mxu0 0.0
        %1709 = vmatpush1.msra.mxu0 0.0
        %1710 = vmatprep.subr.mxu0 0.0
        %1711 = vmatpush1.msra.mxu0 0.0
        %1712 = vmatprep.subr.mxu0 0.0
        %1713 = vmatpush1.msra.mxu0 0.0
        %1714 = vmatprep.subr.mxu0 0.0
        %1715 = vmatpush1.msra.mxu0 0.0
        %1716 = vmatprep.subr.mxu0 0.0
        %1717 = vmatpush1.msra.mxu0 0.0
        %1718 = vmatprep.subr.mxu0 0.0
        %1719 = vmatpush1.msra.mxu0 0.0
        %1720 = vmatprep.subr.mxu0 0.0
        %1721 = vmatpush1.msra.mxu0 0.0
        %1722 = vmatprep.subr.mxu0 0.0
        %1723 = vmatpush1.msra.mxu0 %v1089
        %1724 = vmatprep.subr.mxu0 0.0
        %1725 = vmatpush2.msra.mxu0 0.0
        %1726 = vmatprep.subr.mxu0 0.0
        %1727 = vmatpush2.msra.mxu0 0.0
        %1728 = vmatprep.subr.mxu0 0.0
        %1729 = vmatpush2.msra.mxu0 0.0
        %1730 = vmatprep.subr.mxu0 0.0
        %1731 = vmatpush2.msra.mxu0 0.0
        %1732 = vmatprep.subr.mxu0 0.0
        %1733 = vmatpush2.msra.mxu0 0.0
        %1734 = vmatprep.subr.mxu0 0.0
        %1735 = vmatpush2.msra.mxu0 0.0
        %1736 = vmatprep.subr.mxu0 0.0
        %1737 = vmatpush2.msra.mxu0 0.0
        %1738 = vmatprep.subr.mxu0 0.0
        %1739 = vmatpush2.msra.mxu0 0.0
        %1740 = vmatprep.subr.mxu0 0.0
        %1741 = vmatpush2.msra.mxu0 0.0
        %1742 = vmatprep.subr.mxu0 0.0
        %1743 = vmatpush2.msra.mxu0 0.0
        %1744 = vmatprep.subr.mxu0 0.0
        %1745 = vmatpush2.msra.mxu0 0.0
        %1746 = vmatprep.subr.mxu0 0.0
        %1747 = vmatpush2.msra.mxu0 0.0
        %1748 = vmatprep.subr.mxu0 0.0
        %1749 = vmatpush2.msra.mxu0 0.0
        %1750 = vmatprep.subr.mxu0 0.0
        %1751 = vmatpush2.msra.mxu0 0.0
        %1752 = vmatprep.subr.mxu0 0.0
        %1753 = vmatpush2.msra.mxu0 0.0
        %1754 = vmatprep.subr.mxu0 0.0
        %1755 = vmatpush2.msra.mxu0 0.0
        %1756 = vmatprep.mubr.f32.mxu0 0.0
        %1757 = vmatmul.mubr.f32.gmra.mxu0 %v1690
        %v1758 = vpop.f32.mrf.mxu0
        %v1759 = vadd.f32 0.0, %v1758
        %v1760 = vpop.f32.mrf.mxu0
        %1761 = vdwg.mxu0
        %v1762 = vld [vmem:[%s6] sm:$0xff]
        %v1763 = vld [vmem:[%s6 + $0x8] sm:$0xff]
        %v1765 = vsel %vm1092, %v1540, 0
        %v1768 = vsel %vm1092, %v1613, 0
        %v1771 = vsel %vm1092, %v1686, 0
        %v1774 = vsel %vm1092, %v1759, 0
        %1776 = vmatprep.subr.mxu0 0.0
        %1777 = vmatpush1.msra.mxu0 0.0
        %1778 = vmatprep.subr.mxu0 0.0
        %1779 = vmatpush1.msra.mxu0 0.0
        %1780 = vmatprep.subr.mxu0 0.0
        %1781 = vmatpush1.msra.mxu0 0.0
        %1782 = vmatprep.subr.mxu0 0.0
        %1783 = vmatpush1.msra.mxu0 0.0
        %1784 = vmatprep.subr.mxu0 0.0
        %1785 = vmatpush1.msra.mxu0 0.0
        %1786 = vmatprep.subr.mxu0 0.0
        %1787 = vmatpush1.msra.mxu0 0.0
        %1788 = vmatprep.subr.mxu0 0.0
        %1789 = vmatpush1.msra.mxu0 0.0
        %1790 = vmatprep.subr.mxu0 0.0
        %1791 = vmatpush1.msra.mxu0 0.0
        %1792 = vmatprep.subr.mxu0 0.0
        %1793 = vmatpush1.msra.mxu0 0.0
        %1794 = vmatprep.subr.mxu0 0.0
        %1795 = vmatpush1.msra.mxu0 0.0
        %1796 = vmatprep.subr.mxu0 0.0
        %1797 = vmatpush1.msra.mxu0 0.0
        %1798 = vmatprep.subr.mxu0 0.0
        %1799 = vmatpush1.msra.mxu0 0.0
        %1800 = vmatprep.subr.mxu0 0.0
        %1801 = vmatpush1.msra.mxu0 0.0
        %1802 = vmatprep.subr.mxu0 0.0
        %1803 = vmatpush1.msra.mxu0 0.0
        %1804 = vmatprep.subr.mxu0 0.0
        %1805 = vmatpush1.msra.mxu0 %v1763
        %1806 = vmatprep.subr.mxu0 0.0
        %1807 = vmatpush1.msra.mxu0 %v1762
        %1808 = vmatprep.subr.mxu0 0.0
        %1809 = vmatpush2.msra.mxu0 0.0
        %1810 = vmatprep.subr.mxu0 0.0
        %1811 = vmatpush2.msra.mxu0 0.0
        %1812 = vmatprep.subr.mxu0 0.0
        %1813 = vmatpush2.msra.mxu0 0.0
        %1814 = vmatprep.subr.mxu0 0.0
        %1815 = vmatpush2.msra.mxu0 0.0
        %1816 = vmatprep.subr.mxu0 0.0
        %1817 = vmatpush2.msra.mxu0 0.0
        %1818 = vmatprep.subr.mxu0 0.0
        %1819 = vmatpush2.msra.mxu0 0.0
        %1820 = vmatprep.subr.mxu0 0.0
        %1821 = vmatpush2.msra.mxu0 0.0
        %1822 = vmatprep.subr.mxu0 0.0
        %1823 = vmatpush2.msra.mxu0 0.0
        %1824 = vmatprep.subr.mxu0 0.0
        %1825 = vmatpush2.msra.mxu0 0.0
        %1826 = vmatprep.subr.mxu0 0.0
        %1827 = vmatpush2.msra.mxu0 0.0
        %1828 = vmatprep.subr.mxu0 0.0
        %1829 = vmatpush2.msra.mxu0 0.0
        %1830 = vmatprep.subr.mxu0 0.0
        %1831 = vmatpush2.msra.mxu0 0.0
        %1832 = vmatprep.subr.mxu0 0.0
        %1833 = vmatpush2.msra.mxu0 0.0
        %1834 = vmatprep.subr.mxu0 0.0
        %1835 = vmatpush2.msra.mxu0 0.0
        %1836 = vmatprep.subr.mxu0 0.0
        %1837 = vmatpush2.msra.mxu0 0.0
        %1838 = vmatprep.subr.mxu0 0.0
        %1839 = vmatpush2.msra.mxu0 0.0
        %1840 = vmatprep.mubr.f32.mxu0 0.0
        %1841 = vmatmul.mubr.f32.gmra.mxu0 %v1765
        %v1842 = vpop.f32.mrf.mxu0
        %v1843 = vadd.f32 0.0, %v1842
        %v1844 = vpop.f32.mrf.mxu0
        %1845 = vmatprep.mubr.f32.mxu0 0.0
        %1846 = vmatmul.mubr.f32.gmra.mxu0 %v1768
        %v1847 = vpop.f32.mrf.mxu0
        %v1848 = vadd.f32 0.0, %v1847
        %v1849 = vpop.f32.mrf.mxu0
        %1850 = vmatprep.mubr.f32.mxu0 0.0
        %1851 = vmatmul.mubr.f32.gmra.mxu0 %v1771
        %v1852 = vpop.f32.mrf.mxu0
        %v1853 = vadd.f32 0.0, %v1852
        %v1854 = vpop.f32.mrf.mxu0
        %1855 = vmatprep.mubr.f32.mxu0 0.0
        %1856 = vmatmul.mubr.f32.gmra.mxu0 %v1774
        %v1857 = vpop.f32.mrf.mxu0
        %v1858 = vadd.f32 0.0, %v1857
        %v1859 = vpop.f32.mrf.mxu0
        %1860 = vdwg.mxu0
        %v1862 = vlaneseq
        %v1863 = vshrl.u32 %v1862, 7
        %v1864 = vsub.s32 0, %v1863
        %v1865 = vrot.slane %v787, %v1864
        %v1867 = vadd.f32 %v1865, %v1843
        %v1868 = vadd.f32 %v1865, %v1848
        %v1869 = vadd.f32 %v1865, %v1853
        %v1870 = vadd.f32 %v1865, %v1858
        %s1871 = scalar_lea.vmem %s4, 96
        %v1872 = vld [vmem:[%s1871] sm:$0xff]
        %v1873 = vld [vmem:[%s1871 + $0x8] sm:$0xff]
        %v1874 = vld [vmem:[%s1871 + $0x10] sm:$0xff]
        %v1875 = vld [vmem:[%s1871 + $0x18] sm:$0xff]
        %s1876 = scalar_lea.vmem %s5, 3
        %v1877 = vld [vmem:[%s1876] sm:$0x1]
        %v1879 = vlaneseq
        %v1880 = vshrl.u32 %v1879, 7
        %v1881 = vsub.s32 0, %v1880
        %v1882 = vrot.slane %v1877, %v1881
        %1884 = vmatprep.subr.mxu0 0.0
        %1885 = vmatpush1.msra.mxu0 0.0
        %1886 = vmatprep.subr.mxu0 0.0
        %1887 = vmatpush1.msra.mxu0 0.0
        %1888 = vmatprep.subr.mxu0 0.0
        %1889 = vmatpush1.msra.mxu0 0.0
        %1890 = vmatprep.subr.mxu0 0.0
        %1891 = vmatpush1.msra.mxu0 0.0
        %1892 = vmatprep.subr.mxu0 0.0
        %1893 = vmatpush1.msra.mxu0 0.0
        %1894 = vmatprep.subr.mxu0 0.0
        %1895 = vmatpush1.msra.mxu0 0.0
        %1896 = vmatprep.subr.mxu0 0.0
        %1897 = vmatpush1.msra.mxu0 0.0
        %1898 = vmatprep.subr.mxu0 0.0
        %1899 = vmatpush1.msra.mxu0 0.0
        %1900 = vmatprep.subr.mxu0 0.0
        %1901 = vmatpush1.msra.mxu0 0.0
        %1902 = vmatprep.subr.mxu0 0.0
        %1903 = vmatpush1.msra.mxu0 0.0
        %1904 = vmatprep.subr.mxu0 0.0
        %1905 = vmatpush1.msra.mxu0 0.0
        %1906 = vmatprep.subr.mxu0 0.0
        %1907 = vmatpush1.msra.mxu0 0.0
        %1908 = vmatprep.subr.mxu0 0.0
        %1909 = vmatpush1.msra.mxu0 %v1875
        %1910 = vmatprep.subr.mxu0 0.0
        %1911 = vmatpush1.msra.mxu0 %v1874
        %1912 = vmatprep.subr.mxu0 0.0
        %1913 = vmatpush1.msra.mxu0 %v1873
        %1914 = vmatprep.subr.mxu0 0.0
        %1915 = vmatpush1.msra.mxu0 %v1872
        %1916 = vmatprep.subr.mxu0 0.0
        %1917 = vmatpush2.msra.mxu0 0.0
        %1918 = vmatprep.subr.mxu0 0.0
        %1919 = vmatpush2.msra.mxu0 0.0
        %1920 = vmatprep.subr.mxu0 0.0
        %1921 = vmatpush2.msra.mxu0 0.0
        %1922 = vmatprep.subr.mxu0 0.0
        %1923 = vmatpush2.msra.mxu0 0.0
        %1924 = vmatprep.subr.mxu0 0.0
        %1925 = vmatpush2.msra.mxu0 0.0
        %1926 = vmatprep.subr.mxu0 0.0
        %1927 = vmatpush2.msra.mxu0 0.0
        %1928 = vmatprep.subr.mxu0 0.0
        %1929 = vmatpush2.msra.mxu0 0.0
        %1930 = vmatprep.subr.mxu0 0.0
        %1931 = vmatpush2.msra.mxu0 0.0
        %1932 = vmatprep.subr.mxu0 0.0
        %1933 = vmatpush2.msra.mxu0 0.0
        %1934 = vmatprep.subr.mxu0 0.0
        %1935 = vmatpush2.msra.mxu0 0.0
        %1936 = vmatprep.subr.mxu0 0.0
        %1937 = vmatpush2.msra.mxu0 0.0
        %1938 = vmatprep.subr.mxu0 0.0
        %1939 = vmatpush2.msra.mxu0 0.0
        %1940 = vmatprep.subr.mxu0 0.0
        %1941 = vmatpush2.msra.mxu0 0.0
        %1942 = vmatprep.subr.mxu0 0.0
        %1943 = vmatpush2.msra.mxu0 0.0
        %1944 = vmatprep.subr.mxu0 0.0
        %1945 = vmatpush2.msra.mxu0 0.0
        %1946 = vmatprep.subr.mxu0 0.0
        %1947 = vmatpush2.msra.mxu0 0.0
        %1948 = vmatprep.mubr.f32.mxu0 0.0
        %1949 = vmatmul.mubr.f32.gmra.mxu0 %v800
        %v1950 = vpop.f32.mrf.mxu0
        %v1951 = vadd.f32 %v1882, %v1950
        %v1952 = vpop.f32.mrf.mxu0
        %1953 = vmatprep.mubr.f32.mxu0 0.0
        %1954 = vmatmul.mubr.f32.gmra.mxu0 %v803
        %v1955 = vpop.f32.mrf.mxu0
        %v1956 = vadd.f32 %v1882, %v1955
        %v1957 = vpop.f32.mrf.mxu0
        %1958 = vmatprep.mubr.f32.mxu0 0.0
        %1959 = vmatmul.mubr.f32.gmra.mxu0 %v806
        %v1960 = vpop.f32.mrf.mxu0
        %v1961 = vadd.f32 %v1882, %v1960
        %v1962 = vpop.f32.mrf.mxu0
        %1963 = vmatprep.mubr.f32.mxu0 0.0
        %1964 = vmatmul.mubr.f32.gmra.mxu0 %v809
        %v1965 = vpop.f32.mrf.mxu0
        %v1966 = vadd.f32 %v1882, %v1965
        %v1967 = vpop.f32.mrf.mxu0
        %1968 = vdwg.mxu0
        %s1969 = scalar_lea.vmem %s4, 128
        %v1970 = vld [vmem:[%s1969] sm:$0xff]
        %v1971 = vld [vmem:[%s1969 + $0x8] sm:$0xff]
        %v1972 = vld [vmem:[%s1969 + $0x10] sm:$0xff]
        %v1973 = vld [vmem:[%s1969 + $0x18] sm:$0xff]
        %s1974 = scalar_lea.vmem %s5, 4
        %v1975 = vld [vmem:[%s1974] sm:$0x1]
        %v1977 = vlaneseq
        %v1978 = vshrl.u32 %v1977, 7
        %v1979 = vsub.s32 0, %v1978
        %v1980 = vrot.slane %v1975, %v1979
        %1982 = vmatprep.subr.mxu0 0.0
        %1983 = vmatpush1.msra.mxu0 0.0
        %1984 = vmatprep.subr.mxu0 0.0
        %1985 = vmatpush1.msra.mxu0 0.0
        %1986 = vmatprep.subr.mxu0 0.0
        %1987 = vmatpush1.msra.mxu0 0.0
        %1988 = vmatprep.subr.mxu0 0.0
        %1989 = vmatpush1.msra.mxu0 0.0
        %1990 = vmatprep.subr.mxu0 0.0
        %1991 = vmatpush1.msra.mxu0 0.0
        %1992 = vmatprep.subr.mxu0 0.0
        %1993 = vmatpush1.msra.mxu0 0.0
        %1994 = vmatprep.subr.mxu0 0.0
        %1995 = vmatpush1.msra.mxu0 0.0
        %1996 = vmatprep.subr.mxu0 0.0
        %1997 = vmatpush1.msra.mxu0 0.0
        %1998 = vmatprep.subr.mxu0 0.0
        %1999 = vmatpush1.msra.mxu0 0.0
        %2000 = vmatprep.subr.mxu0 0.0
        %2001 = vmatpush1.msra.mxu0 0.0
        %2002 = vmatprep.subr.mxu0 0.0
        %2003 = vmatpush1.msra.mxu0 0.0
        %2004 = vmatprep.subr.mxu0 0.0
        %2005 = vmatpush1.msra.mxu0 0.0
        %2006 = vmatprep.subr.mxu0 0.0
        %2007 = vmatpush1.msra.mxu0 %v1973
        %2008 = vmatprep.subr.mxu0 0.0
        %2009 = vmatpush1.msra.mxu0 %v1972
        %2010 = vmatprep.subr.mxu0 0.0
        %2011 = vmatpush1.msra.mxu0 %v1971
        %2012 = vmatprep.subr.mxu0 0.0
        %2013 = vmatpush1.msra.mxu0 %v1970
        %2014 = vmatprep.subr.mxu0 0.0
        %2015 = vmatpush2.msra.mxu0 0.0
        %2016 = vmatprep.subr.mxu0 0.0
        %2017 = vmatpush2.msra.mxu0 0.0
        %2018 = vmatprep.subr.mxu0 0.0
        %2019 = vmatpush2.msra.mxu0 0.0
        %2020 = vmatprep.subr.mxu0 0.0
        %2021 = vmatpush2.msra.mxu0 0.0
        %2022 = vmatprep.subr.mxu0 0.0
        %2023 = vmatpush2.msra.mxu0 0.0
        %2024 = vmatprep.subr.mxu0 0.0
        %2025 = vmatpush2.msra.mxu0 0.0
        %2026 = vmatprep.subr.mxu0 0.0
        %2027 = vmatpush2.msra.mxu0 0.0
        %2028 = vmatprep.subr.mxu0 0.0
        %2029 = vmatpush2.msra.mxu0 0.0
        %2030 = vmatprep.subr.mxu0 0.0
        %2031 = vmatpush2.msra.mxu0 0.0
        %2032 = vmatprep.subr.mxu0 0.0
        %2033 = vmatpush2.msra.mxu0 0.0
        %2034 = vmatprep.subr.mxu0 0.0
        %2035 = vmatpush2.msra.mxu0 0.0
        %2036 = vmatprep.subr.mxu0 0.0
        %2037 = vmatpush2.msra.mxu0 0.0
        %2038 = vmatprep.subr.mxu0 0.0
        %2039 = vmatpush2.msra.mxu0 0.0
        %2040 = vmatprep.subr.mxu0 0.0
        %2041 = vmatpush2.msra.mxu0 0.0
        %2042 = vmatprep.subr.mxu0 0.0
        %2043 = vmatpush2.msra.mxu0 0.0
        %2044 = vmatprep.subr.mxu0 0.0
        %2045 = vmatpush2.msra.mxu0 0.0
        %2046 = vmatprep.mubr.f32.mxu0 0.0
        %2047 = vmatmul.mubr.f32.gmra.mxu0 %v800
        %v2048 = vpop.f32.mrf.mxu0
        %v2049 = vadd.f32 %v1980, %v2048
        %v2050 = vpop.f32.mrf.mxu0
        %2051 = vmatprep.mubr.f32.mxu0 0.0
        %2052 = vmatmul.mubr.f32.gmra.mxu0 %v803
        %v2053 = vpop.f32.mrf.mxu0
        %v2054 = vadd.f32 %v1980, %v2053
        %v2055 = vpop.f32.mrf.mxu0
        %2056 = vmatprep.mubr.f32.mxu0 0.0
        %2057 = vmatmul.mubr.f32.gmra.mxu0 %v806
        %v2058 = vpop.f32.mrf.mxu0
        %v2059 = vadd.f32 %v1980, %v2058
        %v2060 = vpop.f32.mrf.mxu0
        %2061 = vmatprep.mubr.f32.mxu0 0.0
        %2062 = vmatmul.mubr.f32.gmra.mxu0 %v809
        %v2063 = vpop.f32.mrf.mxu0
        %v2064 = vadd.f32 %v1980, %v2063
        %v2065 = vpop.f32.mrf.mxu0
        %2066 = vdwg.mxu0
        %s2067 = scalar_lea.vmem %s4, 160
        %v2068 = vld [vmem:[%s2067] sm:$0xff]
        %v2069 = vld [vmem:[%s2067 + $0x8] sm:$0xff]
        %v2070 = vld [vmem:[%s2067 + $0x10] sm:$0xff]
        %v2071 = vld [vmem:[%s2067 + $0x18] sm:$0xff]
        %s2072 = scalar_lea.vmem %s5, 5
        %v2073 = vld [vmem:[%s2072] sm:$0x1]
        %v2075 = vlaneseq
        %v2076 = vshrl.u32 %v2075, 7
        %v2077 = vsub.s32 0, %v2076
        %v2078 = vrot.slane %v2073, %v2077
        %2080 = vmatprep.subr.mxu0 0.0
        %2081 = vmatpush1.msra.mxu0 0.0
        %2082 = vmatprep.subr.mxu0 0.0
        %2083 = vmatpush1.msra.mxu0 0.0
        %2084 = vmatprep.subr.mxu0 0.0
        %2085 = vmatpush1.msra.mxu0 0.0
        %2086 = vmatprep.subr.mxu0 0.0
        %2087 = vmatpush1.msra.mxu0 0.0
        %2088 = vmatprep.subr.mxu0 0.0
        %2089 = vmatpush1.msra.mxu0 0.0
        %2090 = vmatprep.subr.mxu0 0.0
        %2091 = vmatpush1.msra.mxu0 0.0
        %2092 = vmatprep.subr.mxu0 0.0
        %2093 = vmatpush1.msra.mxu0 0.0
        %2094 = vmatprep.subr.mxu0 0.0
        %2095 = vmatpush1.msra.mxu0 0.0
        %2096 = vmatprep.subr.mxu0 0.0
        %2097 = vmatpush1.msra.mxu0 0.0
        %2098 = vmatprep.subr.mxu0 0.0
        %2099 = vmatpush1.msra.mxu0 0.0
        %2100 = vmatprep.subr.mxu0 0.0
        %2101 = vmatpush1.msra.mxu0 0.0
        %2102 = vmatprep.subr.mxu0 0.0
        %2103 = vmatpush1.msra.mxu0 0.0
        %2104 = vmatprep.subr.mxu0 0.0
        %2105 = vmatpush1.msra.mxu0 %v2071
        %2106 = vmatprep.subr.mxu0 0.0
        %2107 = vmatpush1.msra.mxu0 %v2070
        %2108 = vmatprep.subr.mxu0 0.0
        %2109 = vmatpush1.msra.mxu0 %v2069
        %2110 = vmatprep.subr.mxu0 0.0
        %2111 = vmatpush1.msra.mxu0 %v2068
        %2112 = vmatprep.subr.mxu0 0.0
        %2113 = vmatpush2.msra.mxu0 0.0
        %2114 = vmatprep.subr.mxu0 0.0
        %2115 = vmatpush2.msra.mxu0 0.0
        %2116 = vmatprep.subr.mxu0 0.0
        %2117 = vmatpush2.msra.mxu0 0.0
        %2118 = vmatprep.subr.mxu0 0.0
        %2119 = vmatpush2.msra.mxu0 0.0
        %2120 = vmatprep.subr.mxu0 0.0
        %2121 = vmatpush2.msra.mxu0 0.0
        %2122 = vmatprep.subr.mxu0 0.0
        %2123 = vmatpush2.msra.mxu0 0.0
        %2124 = vmatprep.subr.mxu0 0.0
        %2125 = vmatpush2.msra.mxu0 0.0
        %2126 = vmatprep.subr.mxu0 0.0
        %2127 = vmatpush2.msra.mxu0 0.0
        %2128 = vmatprep.subr.mxu0 0.0
        %2129 = vmatpush2.msra.mxu0 0.0
        %2130 = vmatprep.subr.mxu0 0.0
        %2131 = vmatpush2.msra.mxu0 0.0
        %2132 = vmatprep.subr.mxu0 0.0
        %2133 = vmatpush2.msra.mxu0 0.0
        %2134 = vmatprep.subr.mxu0 0.0
        %2135 = vmatpush2.msra.mxu0 0.0
        %2136 = vmatprep.subr.mxu0 0.0
        %2137 = vmatpush2.msra.mxu0 0.0
        %2138 = vmatprep.subr.mxu0 0.0
        %2139 = vmatpush2.msra.mxu0 0.0
        %2140 = vmatprep.subr.mxu0 0.0
        %2141 = vmatpush2.msra.mxu0 0.0
        %2142 = vmatprep.subr.mxu0 0.0
        %2143 = vmatpush2.msra.mxu0 0.0
        %2144 = vmatprep.mubr.f32.mxu0 0.0
        %2145 = vmatmul.mubr.f32.gmra.mxu0 %v800
        %v2146 = vpop.f32.mrf.mxu0
        %v2147 = vadd.f32 %v2078, %v2146
        %v2148 = vpop.f32.mrf.mxu0
        %2149 = vmatprep.mubr.f32.mxu0 0.0
        %2150 = vmatmul.mubr.f32.gmra.mxu0 %v803
        %v2151 = vpop.f32.mrf.mxu0
        %v2152 = vadd.f32 %v2078, %v2151
        %v2153 = vpop.f32.mrf.mxu0
        %2154 = vmatprep.mubr.f32.mxu0 0.0
        %2155 = vmatmul.mubr.f32.gmra.mxu0 %v806
        %v2156 = vpop.f32.mrf.mxu0
        %v2157 = vadd.f32 %v2078, %v2156
        %v2158 = vpop.f32.mrf.mxu0
        %2159 = vmatprep.mubr.f32.mxu0 0.0
        %2160 = vmatmul.mubr.f32.gmra.mxu0 %v809
        %v2161 = vpop.f32.mrf.mxu0
        %v2162 = vadd.f32 %v2078, %v2161
        %v2163 = vpop.f32.mrf.mxu0
        %2164 = vdwg.mxu0
        %v2166 = vsel %vm1092, %v1951, 0
        %v2169 = vsel %vm1092, %v2049, 0
        %2171 = vmatprep.subr.mxu0 0.0
        %2172 = vmatpush1.xpose.msra.mxu0 0.0
        %2173 = vmatprep.subr.mxu0 0.0
        %2174 = vmatpush1.xpose.msra.mxu0 0.0
        %2175 = vmatprep.subr.mxu0 0.0
        %2176 = vmatpush1.xpose.msra.mxu0 0.0
        %2177 = vmatprep.subr.mxu0 0.0
        %2178 = vmatpush1.xpose.msra.mxu0 0.0
        %2179 = vmatprep.subr.mxu0 0.0
        %2180 = vmatpush1.xpose.msra.mxu0 0.0
        %2181 = vmatprep.subr.mxu0 0.0
        %2182 = vmatpush1.xpose.msra.mxu0 0.0
        %2183 = vmatprep.subr.mxu0 0.0
        %2184 = vmatpush1.xpose.msra.mxu0 0.0
        %2185 = vmatprep.subr.mxu0 0.0
        %2186 = vmatpush1.xpose.msra.mxu0 0.0
        %2187 = vmatprep.subr.mxu0 0.0
        %2188 = vmatpush1.xpose.msra.mxu0 0.0
        %2189 = vmatprep.subr.mxu0 0.0
        %2190 = vmatpush1.xpose.msra.mxu0 0.0
        %2191 = vmatprep.subr.mxu0 0.0
        %2192 = vmatpush1.xpose.msra.mxu0 0.0
        %2193 = vmatprep.subr.mxu0 0.0
        %2194 = vmatpush1.xpose.msra.mxu0 0.0
        %2195 = vmatprep.subr.mxu0 0.0
        %2196 = vmatpush1.xpose.msra.mxu0 0.0
        %2197 = vmatprep.subr.mxu0 0.0
        %2198 = vmatpush1.xpose.msra.mxu0 0.0
        %2199 = vmatprep.subr.mxu0 0.0
        %2200 = vmatpush1.xpose.msra.mxu0 0.0
        %2201 = vmatprep.subr.mxu0 0.0
        %2202 = vmatpush1.xpose.msra.mxu0 %v2169
        %2203 = vmatprep.subr.mxu0 0.0
        %2204 = vmatpush2.xpose.msra.mxu0 0.0
        %2205 = vmatprep.subr.mxu0 0.0
        %2206 = vmatpush2.xpose.msra.mxu0 0.0
        %2207 = vmatprep.subr.mxu0 0.0
        %2208 = vmatpush2.xpose.msra.mxu0 0.0
        %2209 = vmatprep.subr.mxu0 0.0
        %2210 = vmatpush2.xpose.msra.mxu0 0.0
        %2211 = vmatprep.subr.mxu0 0.0
        %2212 = vmatpush2.xpose.msra.mxu0 0.0
        %2213 = vmatprep.subr.mxu0 0.0
        %2214 = vmatpush2.xpose.msra.mxu0 0.0
        %2215 = vmatprep.subr.mxu0 0.0
        %2216 = vmatpush2.xpose.msra.mxu0 0.0
        %2217 = vmatprep.subr.mxu0 0.0
        %2218 = vmatpush2.xpose.msra.mxu0 0.0
        %2219 = vmatprep.subr.mxu0 0.0
        %2220 = vmatpush2.xpose.msra.mxu0 0.0
        %2221 = vmatprep.subr.mxu0 0.0
        %2222 = vmatpush2.xpose.msra.mxu0 0.0
        %2223 = vmatprep.subr.mxu0 0.0
        %2224 = vmatpush2.xpose.msra.mxu0 0.0
        %2225 = vmatprep.subr.mxu0 0.0
        %2226 = vmatpush2.xpose.msra.mxu0 0.0
        %2227 = vmatprep.subr.mxu0 0.0
        %2228 = vmatpush2.xpose.msra.mxu0 0.0
        %2229 = vmatprep.subr.mxu0 0.0
        %2230 = vmatpush2.xpose.msra.mxu0 0.0
        %2231 = vmatprep.subr.mxu0 0.0
        %2232 = vmatpush2.xpose.msra.mxu0 0.0
        %2233 = vmatprep.subr.mxu0 0.0
        %2234 = vmatpush2.xpose.msra.mxu0 0.0
        %2235 = vmatprep.mubr.f32.mxu0 0.0
        %2236 = vmatmul.mubr.f32.gmra.mxu0 %v2166
        %v2237 = vpop.f32.mrf.mxu0
        %v2238 = vadd.f32 0.0, %v2237
        %v2239 = vpop.f32.mrf.mxu0
        %2240 = vdwg.mxu0
        %v2242 = vsel %vm1092, %v1956, 0
        %v2245 = vsel %vm1092, %v2054, 0
        %2247 = vmatprep.subr.mxu0 0.0
        %2248 = vmatpush1.xpose.msra.mxu0 0.0
        %2249 = vmatprep.subr.mxu0 0.0
        %2250 = vmatpush1.xpose.msra.mxu0 0.0
        %2251 = vmatprep.subr.mxu0 0.0
        %2252 = vmatpush1.xpose.msra.mxu0 0.0
        %2253 = vmatprep.subr.mxu0 0.0
        %2254 = vmatpush1.xpose.msra.mxu0 0.0
        %2255 = vmatprep.subr.mxu0 0.0
        %2256 = vmatpush1.xpose.msra.mxu0 0.0
        %2257 = vmatprep.subr.mxu0 0.0
        %2258 = vmatpush1.xpose.msra.mxu0 0.0
        %2259 = vmatprep.subr.mxu0 0.0
        %2260 = vmatpush1.xpose.msra.mxu0 0.0
        %2261 = vmatprep.subr.mxu0 0.0
        %2262 = vmatpush1.xpose.msra.mxu0 0.0
        %2263 = vmatprep.subr.mxu0 0.0
        %2264 = vmatpush1.xpose.msra.mxu0 0.0
        %2265 = vmatprep.subr.mxu0 0.0
        %2266 = vmatpush1.xpose.msra.mxu0 0.0
        %2267 = vmatprep.subr.mxu0 0.0
        %2268 = vmatpush1.xpose.msra.mxu0 0.0
        %2269 = vmatprep.subr.mxu0 0.0
        %2270 = vmatpush1.xpose.msra.mxu0 0.0
        %2271 = vmatprep.subr.mxu0 0.0
        %2272 = vmatpush1.xpose.msra.mxu0 0.0
        %2273 = vmatprep.subr.mxu0 0.0
        %2274 = vmatpush1.xpose.msra.mxu0 0.0
        %2275 = vmatprep.subr.mxu0 0.0
        %2276 = vmatpush1.xpose.msra.mxu0 0.0
        %2277 = vmatprep.subr.mxu0 0.0
        %2278 = vmatpush1.xpose.msra.mxu0 %v2245
        %2279 = vmatprep.subr.mxu0 0.0
        %2280 = vmatpush2.xpose.msra.mxu0 0.0
        %2281 = vmatprep.subr.mxu0 0.0
        %2282 = vmatpush2.xpose.msra.mxu0 0.0
        %2283 = vmatprep.subr.mxu0 0.0
        %2284 = vmatpush2.xpose.msra.mxu0 0.0
        %2285 = vmatprep.subr.mxu0 0.0
        %2286 = vmatpush2.xpose.msra.mxu0 0.0
        %2287 = vmatprep.subr.mxu0 0.0
        %2288 = vmatpush2.xpose.msra.mxu0 0.0
        %2289 = vmatprep.subr.mxu0 0.0
        %2290 = vmatpush2.xpose.msra.mxu0 0.0
        %2291 = vmatprep.subr.mxu0 0.0
        %2292 = vmatpush2.xpose.msra.mxu0 0.0
        %2293 = vmatprep.subr.mxu0 0.0
        %2294 = vmatpush2.xpose.msra.mxu0 0.0
        %2295 = vmatprep.subr.mxu0 0.0
        %2296 = vmatpush2.xpose.msra.mxu0 0.0
        %2297 = vmatprep.subr.mxu0 0.0
        %2298 = vmatpush2.xpose.msra.mxu0 0.0
        %2299 = vmatprep.subr.mxu0 0.0
        %2300 = vmatpush2.xpose.msra.mxu0 0.0
        %2301 = vmatprep.subr.mxu0 0.0
        %2302 = vmatpush2.xpose.msra.mxu0 0.0
        %2303 = vmatprep.subr.mxu0 0.0
        %2304 = vmatpush2.xpose.msra.mxu0 0.0
        %2305 = vmatprep.subr.mxu0 0.0
        %2306 = vmatpush2.xpose.msra.mxu0 0.0
        %2307 = vmatprep.subr.mxu0 0.0
        %2308 = vmatpush2.xpose.msra.mxu0 0.0
        %2309 = vmatprep.subr.mxu0 0.0
        %2310 = vmatpush2.xpose.msra.mxu0 0.0
        %2311 = vmatprep.mubr.f32.mxu0 0.0
        %2312 = vmatmul.mubr.f32.gmra.mxu0 %v2242
        %v2313 = vpop.f32.mrf.mxu0
        %v2314 = vadd.f32 0.0, %v2313
        %v2315 = vpop.f32.mrf.mxu0
        %2316 = vdwg.mxu0
        %v2318 = vsel %vm1092, %v1961, 0
        %v2321 = vsel %vm1092, %v2059, 0
        %2323 = vmatprep.subr.mxu0 0.0
        %2324 = vmatpush1.xpose.msra.mxu0 0.0
        %2325 = vmatprep.subr.mxu0 0.0
        %2326 = vmatpush1.xpose.msra.mxu0 0.0
        %2327 = vmatprep.subr.mxu0 0.0
        %2328 = vmatpush1.xpose.msra.mxu0 0.0
        %2329 = vmatprep.subr.mxu0 0.0
        %2330 = vmatpush1.xpose.msra.mxu0 0.0
        %2331 = vmatprep.subr.mxu0 0.0
        %2332 = vmatpush1.xpose.msra.mxu0 0.0
        %2333 = vmatprep.subr.mxu0 0.0
        %2334 = vmatpush1.xpose.msra.mxu0 0.0
        %2335 = vmatprep.subr.mxu0 0.0
        %2336 = vmatpush1.xpose.msra.mxu0 0.0
        %2337 = vmatprep.subr.mxu0 0.0
        %2338 = vmatpush1.xpose.msra.mxu0 0.0
        %2339 = vmatprep.subr.mxu0 0.0
        %2340 = vmatpush1.xpose.msra.mxu0 0.0
        %2341 = vmatprep.subr.mxu0 0.0
        %2342 = vmatpush1.xpose.msra.mxu0 0.0
        %2343 = vmatprep.subr.mxu0 0.0
        %2344 = vmatpush1.xpose.msra.mxu0 0.0
        %2345 = vmatprep.subr.mxu0 0.0
        %2346 = vmatpush1.xpose.msra.mxu0 0.0
        %2347 = vmatprep.subr.mxu0 0.0
        %2348 = vmatpush1.xpose.msra.mxu0 0.0
        %2349 = vmatprep.subr.mxu0 0.0
        %2350 = vmatpush1.xpose.msra.mxu0 0.0
        %2351 = vmatprep.subr.mxu0 0.0
        %2352 = vmatpush1.xpose.msra.mxu0 0.0
        %2353 = vmatprep.subr.mxu0 0.0
        %2354 = vmatpush1.xpose.msra.mxu0 %v2321
        %2355 = vmatprep.subr.mxu0 0.0
        %2356 = vmatpush2.xpose.msra.mxu0 0.0
        %2357 = vmatprep.subr.mxu0 0.0
        %2358 = vmatpush2.xpose.msra.mxu0 0.0
        %2359 = vmatprep.subr.mxu0 0.0
        %2360 = vmatpush2.xpose.msra.mxu0 0.0
        %2361 = vmatprep.subr.mxu0 0.0
        %2362 = vmatpush2.xpose.msra.mxu0 0.0
        %2363 = vmatprep.subr.mxu0 0.0
        %2364 = vmatpush2.xpose.msra.mxu0 0.0
        %2365 = vmatprep.subr.mxu0 0.0
        %2366 = vmatpush2.xpose.msra.mxu0 0.0
        %2367 = vmatprep.subr.mxu0 0.0
        %2368 = vmatpush2.xpose.msra.mxu0 0.0
        %2369 = vmatprep.subr.mxu0 0.0
        %2370 = vmatpush2.xpose.msra.mxu0 0.0
        %2371 = vmatprep.subr.mxu0 0.0
        %2372 = vmatpush2.xpose.msra.mxu0 0.0
        %2373 = vmatprep.subr.mxu0 0.0
        %2374 = vmatpush2.xpose.msra.mxu0 0.0
        %2375 = vmatprep.subr.mxu0 0.0
        %2376 = vmatpush2.xpose.msra.mxu0 0.0
        %2377 = vmatprep.subr.mxu0 0.0
        %2378 = vmatpush2.xpose.msra.mxu0 0.0
        %2379 = vmatprep.subr.mxu0 0.0
        %2380 = vmatpush2.xpose.msra.mxu0 0.0
        %2381 = vmatprep.subr.mxu0 0.0
        %2382 = vmatpush2.xpose.msra.mxu0 0.0
        %2383 = vmatprep.subr.mxu0 0.0
        %2384 = vmatpush2.xpose.msra.mxu0 0.0
        %2385 = vmatprep.subr.mxu0 0.0
        %2386 = vmatpush2.xpose.msra.mxu0 0.0
        %2387 = vmatprep.mubr.f32.mxu0 0.0
        %2388 = vmatmul.mubr.f32.gmra.mxu0 %v2318
        %v2389 = vpop.f32.mrf.mxu0
        %v2390 = vadd.f32 0.0, %v2389
        %v2391 = vpop.f32.mrf.mxu0
        %2392 = vdwg.mxu0
        %v2394 = vsel %vm1092, %v1966, 0
        %v2397 = vsel %vm1092, %v2064, 0
        %2399 = vmatprep.subr.mxu0 0.0
        %2400 = vmatpush1.xpose.msra.mxu0 0.0
        %2401 = vmatprep.subr.mxu0 0.0
        %2402 = vmatpush1.xpose.msra.mxu0 0.0
        %2403 = vmatprep.subr.mxu0 0.0
        %2404 = vmatpush1.xpose.msra.mxu0 0.0
        %2405 = vmatprep.subr.mxu0 0.0
        %2406 = vmatpush1.xpose.msra.mxu0 0.0
        %2407 = vmatprep.subr.mxu0 0.0
        %2408 = vmatpush1.xpose.msra.mxu0 0.0
        %2409 = vmatprep.subr.mxu0 0.0
        %2410 = vmatpush1.xpose.msra.mxu0 0.0
        %2411 = vmatprep.subr.mxu0 0.0
        %2412 = vmatpush1.xpose.msra.mxu0 0.0
        %2413 = vmatprep.subr.mxu0 0.0
        %2414 = vmatpush1.xpose.msra.mxu0 0.0
        %2415 = vmatprep.subr.mxu0 0.0
        %2416 = vmatpush1.xpose.msra.mxu0 0.0
        %2417 = vmatprep.subr.mxu0 0.0
        %2418 = vmatpush1.xpose.msra.mxu0 0.0
        %2419 = vmatprep.subr.mxu0 0.0
        %2420 = vmatpush1.xpose.msra.mxu0 0.0
        %2421 = vmatprep.subr.mxu0 0.0
        %2422 = vmatpush1.xpose.msra.mxu0 0.0
        %2423 = vmatprep.subr.mxu0 0.0
        %2424 = vmatpush1.xpose.msra.mxu0 0.0
        %2425 = vmatprep.subr.mxu0 0.0
        %2426 = vmatpush1.xpose.msra.mxu0 0.0
        %2427 = vmatprep.subr.mxu0 0.0
        %2428 = vmatpush1.xpose.msra.mxu0 0.0
        %2429 = vmatprep.subr.mxu0 0.0
        %2430 = vmatpush1.xpose.msra.mxu0 %v2397
        %2431 = vmatprep.subr.mxu0 0.0
        %2432 = vmatpush2.xpose.msra.mxu0 0.0
        %2433 = vmatprep.subr.mxu0 0.0
        %2434 = vmatpush2.xpose.msra.mxu0 0.0
        %2435 = vmatprep.subr.mxu0 0.0
        %2436 = vmatpush2.xpose.msra.mxu0 0.0
        %2437 = vmatprep.subr.mxu0 0.0
        %2438 = vmatpush2.xpose.msra.mxu0 0.0
        %2439 = vmatprep.subr.mxu0 0.0
        %2440 = vmatpush2.xpose.msra.mxu0 0.0
        %2441 = vmatprep.subr.mxu0 0.0
        %2442 = vmatpush2.xpose.msra.mxu0 0.0
        %2443 = vmatprep.subr.mxu0 0.0
        %2444 = vmatpush2.xpose.msra.mxu0 0.0
        %2445 = vmatprep.subr.mxu0 0.0
        %2446 = vmatpush2.xpose.msra.mxu0 0.0
        %2447 = vmatprep.subr.mxu0 0.0
        %2448 = vmatpush2.xpose.msra.mxu0 0.0
        %2449 = vmatprep.subr.mxu0 0.0
        %2450 = vmatpush2.xpose.msra.mxu0 0.0
        %2451 = vmatprep.subr.mxu0 0.0
        %2452 = vmatpush2.xpose.msra.mxu0 0.0
        %2453 = vmatprep.subr.mxu0 0.0
        %2454 = vmatpush2.xpose.msra.mxu0 0.0
        %2455 = vmatprep.subr.mxu0 0.0
        %2456 = vmatpush2.xpose.msra.mxu0 0.0
        %2457 = vmatprep.subr.mxu0 0.0
        %2458 = vmatpush2.xpose.msra.mxu0 0.0
        %2459 = vmatprep.subr.mxu0 0.0
        %2460 = vmatpush2.xpose.msra.mxu0 0.0
        %2461 = vmatprep.subr.mxu0 0.0
        %2462 = vmatpush2.xpose.msra.mxu0 0.0
        %2463 = vmatprep.mubr.f32.mxu0 0.0
        %2464 = vmatmul.mubr.f32.gmra.mxu0 %v2394
        %v2465 = vpop.f32.mrf.mxu0
        %v2466 = vadd.f32 0.0, %v2465
        %v2467 = vpop.f32.mrf.mxu0
        %2468 = vdwg.mxu0
        %v2469 = vmul.f32 %v2238, 0.25
        %v2470 = vmul.f32 %v2314, 0.25
        %v2471 = vmul.f32 %v2390, 0.25
        %v2472 = vmul.f32 %v2466, 0.25
        %v2473 = vadd.f32 %v2469, %v1404
        %v2474 = vadd.f32 %v2470, %v1408
        %v2475 = vadd.f32 %v2471, %v1412
        %v2476 = vadd.f32 %v2472, %v1416
        %v2477 = vsel %vm1425, %v2473, -inf
        %2478 = vmax.xlane.f32.xlu0 %v2477
        %v2479 = vpop.xlane.xlu0 %2478
        %v2480 = vsel %vm1425, %v2474, -inf
        %2481 = vmax.xlane.f32.xlu0 %v2480
        %v2482 = vpop.xlane.xlu0 %2481
        %v2483 = vsel %vm1425, %v2475, -inf
        %2484 = vmax.xlane.f32.xlu0 %v2483
        %v2485 = vpop.xlane.xlu0 %2484
        %v2486 = vsel %vm1425, %v2476, -inf
        %2487 = vmax.xlane.f32.xlu0 %v2486
        %v2488 = vpop.xlane.xlu0 %2487
        %v2489 = vsub.f32 %v2473, %v2479
        %v2490 = vsub.f32 %v2474, %v2482
        %v2491 = vsub.f32 %v2475, %v2485
        %v2492 = vsub.f32 %v2476, %v2488
        %v2493 = vmul.f32 %v2489, 1.442695
        %v2494 = vpow.pop %v2493
        %v2495 = vmul.f32 %v2490, 1.442695
        %v2496 = vpow.pop %v2495
        %v2497 = vmul.f32 %v2491, 1.442695
        %v2498 = vpow.pop %v2497
        %v2499 = vmul.f32 %v2492, 1.442695
        %v2500 = vpow.pop %v2499
        %v2501 = vsel %vm1425, %v2494, 0.0
        %2502 = vadd.xlane.f32.xlu0 %v2501
        %v2503 = vpop.xlane.xlu0 %2502
        %v2504 = vsel %vm1425, %v2496, 0.0
        %2505 = vadd.xlane.f32.xlu0 %v2504
        %v2506 = vpop.xlane.xlu0 %2505
        %v2507 = vsel %vm1425, %v2498, 0.0
        %2508 = vadd.xlane.f32.xlu0 %v2507
        %v2509 = vpop.xlane.xlu0 %2508
        %v2510 = vsel %vm1425, %v2500, 0.0
        %2511 = vadd.xlane.f32.xlu0 %v2510
        %v2512 = vpop.xlane.xlu0 %2511
        %v2513 = vrcp.pop %v2503
        %v2514 = vrcp.pop %v2506
        %v2515 = vrcp.pop %v2509
        %v2516 = vrcp.pop %v2512
        %v2517 = vmul.f32 %v2494, %v2513
        %v2518 = vmul.f32 %v2496, %v2514
        %v2519 = vmul.f32 %v2498, %v2515
        %v2520 = vmul.f32 %v2500, %v2516
        %v2522 = vsel %vm1425, %v2517, 0
        %2524 = vmatprep.subr.mxu0 0.0
        %2525 = vmatpush1.msra.mxu0 0.0
        %2526 = vmatprep.subr.mxu0 0.0
        %2527 = vmatpush1.msra.mxu0 0.0
        %2528 = vmatprep.subr.mxu0 0.0
        %2529 = vmatpush1.msra.mxu0 0.0
        %2530 = vmatprep.subr.mxu0 0.0
        %2531 = vmatpush1.msra.mxu0 0.0
        %2532 = vmatprep.subr.mxu0 0.0
        %2533 = vmatpush1.msra.mxu0 0.0
        %2534 = vmatprep.subr.mxu0 0.0
        %2535 = vmatpush1.msra.mxu0 0.0
        %2536 = vmatprep.subr.mxu0 0.0
        %2537 = vmatpush1.msra.mxu0 0.0
        %2538 = vmatprep.subr.mxu0 0.0
        %2539 = vmatpush1.msra.mxu0 0.0
        %2540 = vmatprep.subr.mxu0 0.0
        %2541 = vmatpush1.msra.mxu0 0.0
        %2542 = vmatprep.subr.mxu0 0.0
        %2543 = vmatpush1.msra.mxu0 0.0
        %2544 = vmatprep.subr.mxu0 0.0
        %2545 = vmatpush1.msra.mxu0 0.0
        %2546 = vmatprep.subr.mxu0 0.0
        %2547 = vmatpush1.msra.mxu0 0.0
        %2548 = vmatprep.subr.mxu0 0.0
        %2549 = vmatpush1.msra.mxu0 0.0
        %2550 = vmatprep.subr.mxu0 0.0
        %2551 = vmatpush1.msra.mxu0 0.0
        %2552 = vmatprep.subr.mxu0 0.0
        %2553 = vmatpush1.msra.mxu0 0.0
        %2554 = vmatprep.subr.mxu0 0.0
        %2555 = vmatpush1.msra.mxu0 %v2147
        %2556 = vmatprep.subr.mxu0 0.0
        %2557 = vmatpush2.msra.mxu0 0.0
        %2558 = vmatprep.subr.mxu0 0.0
        %2559 = vmatpush2.msra.mxu0 0.0
        %2560 = vmatprep.subr.mxu0 0.0
        %2561 = vmatpush2.msra.mxu0 0.0
        %2562 = vmatprep.subr.mxu0 0.0
        %2563 = vmatpush2.msra.mxu0 0.0
        %2564 = vmatprep.subr.mxu0 0.0
        %2565 = vmatpush2.msra.mxu0 0.0
        %2566 = vmatprep.subr.mxu0 0.0
        %2567 = vmatpush2.msra.mxu0 0.0
        %2568 = vmatprep.subr.mxu0 0.0
        %2569 = vmatpush2.msra.mxu0 0.0
        %2570 = vmatprep.subr.mxu0 0.0
        %2571 = vmatpush2.msra.mxu0 0.0
        %2572 = vmatprep.subr.mxu0 0.0
        %2573 = vmatpush2.msra.mxu0 0.0
        %2574 = vmatprep.subr.mxu0 0.0
        %2575 = vmatpush2.msra.mxu0 0.0
        %2576 = vmatprep.subr.mxu0 0.0
        %2577 = vmatpush2.msra.mxu0 0.0
        %2578 = vmatprep.subr.mxu0 0.0
        %2579 = vmatpush2.msra.mxu0 0.0
        %2580 = vmatprep.subr.mxu0 0.0
        %2581 = vmatpush2.msra.mxu0 0.0
        %2582 = vmatprep.subr.mxu0 0.0
        %2583 = vmatpush2.msra.mxu0 0.0
        %2584 = vmatprep.subr.mxu0 0.0
        %2585 = vmatpush2.msra.mxu0 0.0
        %2586 = vmatprep.subr.mxu0 0.0
        %2587 = vmatpush2.msra.mxu0 0.0
        %2588 = vmatprep.mubr.f32.mxu0 0.0
        %2589 = vmatmul.mubr.f32.gmra.mxu0 %v2522
        %v2590 = vpop.f32.mrf.mxu0
        %v2591 = vadd.f32 0.0, %v2590
        %v2592 = vpop.f32.mrf.mxu0
        %2593 = vdwg.mxu0
        %v2595 = vsel %vm1425, %v2518, 0
        %2597 = vmatprep.subr.mxu0 0.0
        %2598 = vmatpush1.msra.mxu0 0.0
        %2599 = vmatprep.subr.mxu0 0.0
        %2600 = vmatpush1.msra.mxu0 0.0
        %2601 = vmatprep.subr.mxu0 0.0
        %2602 = vmatpush1.msra.mxu0 0.0
        %2603 = vmatprep.subr.mxu0 0.0
        %2604 = vmatpush1.msra.mxu0 0.0
        %2605 = vmatprep.subr.mxu0 0.0
        %2606 = vmatpush1.msra.mxu0 0.0
        %2607 = vmatprep.subr.mxu0 0.0
        %2608 = vmatpush1.msra.mxu0 0.0
        %2609 = vmatprep.subr.mxu0 0.0
        %2610 = vmatpush1.msra.mxu0 0.0
        %2611 = vmatprep.subr.mxu0 0.0
        %2612 = vmatpush1.msra.mxu0 0.0
        %2613 = vmatprep.subr.mxu0 0.0
        %2614 = vmatpush1.msra.mxu0 0.0
        %2615 = vmatprep.subr.mxu0 0.0
        %2616 = vmatpush1.msra.mxu0 0.0
        %2617 = vmatprep.subr.mxu0 0.0
        %2618 = vmatpush1.msra.mxu0 0.0
        %2619 = vmatprep.subr.mxu0 0.0
        %2620 = vmatpush1.msra.mxu0 0.0
        %2621 = vmatprep.subr.mxu0 0.0
        %2622 = vmatpush1.msra.mxu0 0.0
        %2623 = vmatprep.subr.mxu0 0.0
        %2624 = vmatpush1.msra.mxu0 0.0
        %2625 = vmatprep.subr.mxu0 0.0
        %2626 = vmatpush1.msra.mxu0 0.0
        %2627 = vmatprep.subr.mxu0 0.0
        %2628 = vmatpush1.msra.mxu0 %v2152
        %2629 = vmatprep.subr.mxu0 0.0
        %2630 = vmatpush2.msra.mxu0 0.0
        %2631 = vmatprep.subr.mxu0 0.0
        %2632 = vmatpush2.msra.mxu0 0.0
        %2633 = vmatprep.subr.mxu0 0.0
        %2634 = vmatpush2.msra.mxu0 0.0
        %2635 = vmatprep.subr.mxu0 0.0
        %2636 = vmatpush2.msra.mxu0 0.0
        %2637 = vmatprep.subr.mxu0 0.0
        %2638 = vmatpush2.msra.mxu0 0.0
        %2639 = vmatprep.subr.mxu0 0.0
        %2640 = vmatpush2.msra.mxu0 0.0
        %2641 = vmatprep.subr.mxu0 0.0
        %2642 = vmatpush2.msra.mxu0 0.0
        %2643 = vmatprep.subr.mxu0 0.0
        %2644 = vmatpush2.msra.mxu0 0.0
        %2645 = vmatprep.subr.mxu0 0.0
        %2646 = vmatpush2.msra.mxu0 0.0
        %2647 = vmatprep.subr.mxu0 0.0
        %2648 = vmatpush2.msra.mxu0 0.0
        %2649 = vmatprep.subr.mxu0 0.0
        %2650 = vmatpush2.msra.mxu0 0.0
        %2651 = vmatprep.subr.mxu0 0.0
        %2652 = vmatpush2.msra.mxu0 0.0
        %2653 = vmatprep.subr.mxu0 0.0
        %2654 = vmatpush2.msra.mxu0 0.0
        %2655 = vmatprep.subr.mxu0 0.0
        %2656 = vmatpush2.msra.mxu0 0.0
        %2657 = vmatprep.subr.mxu0 0.0
        %2658 = vmatpush2.msra.mxu0 0.0
        %2659 = vmatprep.subr.mxu0 0.0
        %2660 = vmatpush2.msra.mxu0 0.0
        %2661 = vmatprep.mubr.f32.mxu0 0.0
        %2662 = vmatmul.mubr.f32.gmra.mxu0 %v2595
        %v2663 = vpop.f32.mrf.mxu0
        %v2664 = vadd.f32 0.0, %v2663
        %v2665 = vpop.f32.mrf.mxu0
        %2666 = vdwg.mxu0
        %v2668 = vsel %vm1425, %v2519, 0
        %2670 = vmatprep.subr.mxu0 0.0
        %2671 = vmatpush1.msra.mxu0 0.0
        %2672 = vmatprep.subr.mxu0 0.0
        %2673 = vmatpush1.msra.mxu0 0.0
        %2674 = vmatprep.subr.mxu0 0.0
        %2675 = vmatpush1.msra.mxu0 0.0
        %2676 = vmatprep.subr.mxu0 0.0
        %2677 = vmatpush1.msra.mxu0 0.0
        %2678 = vmatprep.subr.mxu0 0.0
        %2679 = vmatpush1.msra.mxu0 0.0
        %2680 = vmatprep.subr.mxu0 0.0
        %2681 = vmatpush1.msra.mxu0 0.0
        %2682 = vmatprep.subr.mxu0 0.0
        %2683 = vmatpush1.msra.mxu0 0.0
        %2684 = vmatprep.subr.mxu0 0.0
        %2685 = vmatpush1.msra.mxu0 0.0
        %2686 = vmatprep.subr.mxu0 0.0
        %2687 = vmatpush1.msra.mxu0 0.0
        %2688 = vmatprep.subr.mxu0 0.0
        %2689 = vmatpush1.msra.mxu0 0.0
        %2690 = vmatprep.subr.mxu0 0.0
        %2691 = vmatpush1.msra.mxu0 0.0
        %2692 = vmatprep.subr.mxu0 0.0
        %2693 = vmatpush1.msra.mxu0 0.0
        %2694 = vmatprep.subr.mxu0 0.0
        %2695 = vmatpush1.msra.mxu0 0.0
        %2696 = vmatprep.subr.mxu0 0.0
        %2697 = vmatpush1.msra.mxu0 0.0
        %2698 = vmatprep.subr.mxu0 0.0
        %2699 = vmatpush1.msra.mxu0 0.0
        %2700 = vmatprep.subr.mxu0 0.0
        %2701 = vmatpush1.msra.mxu0 %v2157
        %2702 = vmatprep.subr.mxu0 0.0
        %2703 = vmatpush2.msra.mxu0 0.0
        %2704 = vmatprep.subr.mxu0 0.0
        %2705 = vmatpush2.msra.mxu0 0.0
        %2706 = vmatprep.subr.mxu0 0.0
        %2707 = vmatpush2.msra.mxu0 0.0
        %2708 = vmatprep.subr.mxu0 0.0
        %2709 = vmatpush2.msra.mxu0 0.0
        %2710 = vmatprep.subr.mxu0 0.0
        %2711 = vmatpush2.msra.mxu0 0.0
        %2712 = vmatprep.subr.mxu0 0.0
        %2713 = vmatpush2.msra.mxu0 0.0
        %2714 = vmatprep.subr.mxu0 0.0
        %2715 = vmatpush2.msra.mxu0 0.0
        %2716 = vmatprep.subr.mxu0 0.0
        %2717 = vmatpush2.msra.mxu0 0.0
        %2718 = vmatprep.subr.mxu0 0.0
        %2719 = vmatpush2.msra.mxu0 0.0
        %2720 = vmatprep.subr.mxu0 0.0
        %2721 = vmatpush2.msra.mxu0 0.0
        %2722 = vmatprep.subr.mxu0 0.0
        %2723 = vmatpush2.msra.mxu0 0.0
        %2724 = vmatprep.subr.mxu0 0.0
        %2725 = vmatpush2.msra.mxu0 0.0
        %2726 = vmatprep.subr.mxu0 0.0
        %2727 = vmatpush2.msra.mxu0 0.0
        %2728 = vmatprep.subr.mxu0 0.0
        %2729 = vmatpush2.msra.mxu0 0.0
        %2730 = vmatprep.subr.mxu0 0.0
        %2731 = vmatpush2.msra.mxu0 0.0
        %2732 = vmatprep.subr.mxu0 0.0
        %2733 = vmatpush2.msra.mxu0 0.0
        %2734 = vmatprep.mubr.f32.mxu0 0.0
        %2735 = vmatmul.mubr.f32.gmra.mxu0 %v2668
        %v2736 = vpop.f32.mrf.mxu0
        %v2737 = vadd.f32 0.0, %v2736
        %v2738 = vpop.f32.mrf.mxu0
        %2739 = vdwg.mxu0
        %v2741 = vsel %vm1425, %v2520, 0
        %2743 = vmatprep.subr.mxu0 0.0
        %2744 = vmatpush1.msra.mxu0 0.0
        %2745 = vmatprep.subr.mxu0 0.0
        %2746 = vmatpush1.msra.mxu0 0.0
        %2747 = vmatprep.subr.mxu0 0.0
        %2748 = vmatpush1.msra.mxu0 0.0
        %2749 = vmatprep.subr.mxu0 0.0
        %2750 = vmatpush1.msra.mxu0 0.0
        %2751 = vmatprep.subr.mxu0 0.0
        %2752 = vmatpush1.msra.mxu0 0.0
        %2753 = vmatprep.subr.mxu0 0.0
        %2754 = vmatpush1.msra.mxu0 0.0
        %2755 = vmatprep.subr.mxu0 0.0
        %2756 = vmatpush1.msra.mxu0 0.0
        %2757 = vmatprep.subr.mxu0 0.0
        %2758 = vmatpush1.msra.mxu0 0.0
        %2759 = vmatprep.subr.mxu0 0.0
        %2760 = vmatpush1.msra.mxu0 0.0
        %2761 = vmatprep.subr.mxu0 0.0
        %2762 = vmatpush1.msra.mxu0 0.0
        %2763 = vmatprep.subr.mxu0 0.0
        %2764 = vmatpush1.msra.mxu0 0.0
        %2765 = vmatprep.subr.mxu0 0.0
        %2766 = vmatpush1.msra.mxu0 0.0
        %2767 = vmatprep.subr.mxu0 0.0
        %2768 = vmatpush1.msra.mxu0 0.0
        %2769 = vmatprep.subr.mxu0 0.0
        %2770 = vmatpush1.msra.mxu0 0.0
        %2771 = vmatprep.subr.mxu0 0.0
        %2772 = vmatpush1.msra.mxu0 0.0
        %2773 = vmatprep.subr.mxu0 0.0
        %2774 = vmatpush1.msra.mxu0 %v2162
        %2775 = vmatprep.subr.mxu0 0.0
        %2776 = vmatpush2.msra.mxu0 0.0
        %2777 = vmatprep.subr.mxu0 0.0
        %2778 = vmatpush2.msra.mxu0 0.0
        %2779 = vmatprep.subr.mxu0 0.0
        %2780 = vmatpush2.msra.mxu0 0.0
        %2781 = vmatprep.subr.mxu0 0.0
        %2782 = vmatpush2.msra.mxu0 0.0
        %2783 = vmatprep.subr.mxu0 0.0
        %2784 = vmatpush2.msra.mxu0 0.0
        %2785 = vmatprep.subr.mxu0 0.0
        %2786 = vmatpush2.msra.mxu0 0.0
        %2787 = vmatprep.subr.mxu0 0.0
        %2788 = vmatpush2.msra.mxu0 0.0
        %2789 = vmatprep.subr.mxu0 0.0
        %2790 = vmatpush2.msra.mxu0 0.0
        %2791 = vmatprep.subr.mxu0 0.0
        %2792 = vmatpush2.msra.mxu0 0.0
        %2793 = vmatprep.subr.mxu0 0.0
        %2794 = vmatpush2.msra.mxu0 0.0
        %2795 = vmatprep.subr.mxu0 0.0
        %2796 = vmatpush2.msra.mxu0 0.0
        %2797 = vmatprep.subr.mxu0 0.0
        %2798 = vmatpush2.msra.mxu0 0.0
        %2799 = vmatprep.subr.mxu0 0.0
        %2800 = vmatpush2.msra.mxu0 0.0
        %2801 = vmatprep.subr.mxu0 0.0
        %2802 = vmatpush2.msra.mxu0 0.0
        %2803 = vmatprep.subr.mxu0 0.0
        %2804 = vmatpush2.msra.mxu0 0.0
        %2805 = vmatprep.subr.mxu0 0.0
        %2806 = vmatpush2.msra.mxu0 0.0
        %2807 = vmatprep.mubr.f32.mxu0 0.0
        %2808 = vmatmul.mubr.f32.gmra.mxu0 %v2741
        %v2809 = vpop.f32.mrf.mxu0
        %v2810 = vadd.f32 0.0, %v2809
        %v2811 = vpop.f32.mrf.mxu0
        %2812 = vdwg.mxu0
        %s2813 = scalar_lea.vmem %s6, 16
        %v2814 = vld [vmem:[%s2813] sm:$0xff]
        %v2815 = vld [vmem:[%s2813 + $0x8] sm:$0xff]
        %v2817 = vsel %vm1092, %v2591, 0
        %v2820 = vsel %vm1092, %v2664, 0
        %v2823 = vsel %vm1092, %v2737, 0
        %v2826 = vsel %vm1092, %v2810, 0
        %2828 = vmatprep.subr.mxu0 0.0
        %2829 = vmatpush1.msra.mxu0 0.0
        %2830 = vmatprep.subr.mxu0 0.0
        %2831 = vmatpush1.msra.mxu0 0.0
        %2832 = vmatprep.subr.mxu0 0.0
        %2833 = vmatpush1.msra.mxu0 0.0
        %2834 = vmatprep.subr.mxu0 0.0
        %2835 = vmatpush1.msra.mxu0 0.0
        %2836 = vmatprep.subr.mxu0 0.0
        %2837 = vmatpush1.msra.mxu0 0.0
        %2838 = vmatprep.subr.mxu0 0.0
        %2839 = vmatpush1.msra.mxu0 0.0
        %2840 = vmatprep.subr.mxu0 0.0
        %2841 = vmatpush1.msra.mxu0 0.0
        %2842 = vmatprep.subr.mxu0 0.0
        %2843 = vmatpush1.msra.mxu0 0.0
        %2844 = vmatprep.subr.mxu0 0.0
        %2845 = vmatpush1.msra.mxu0 0.0
        %2846 = vmatprep.subr.mxu0 0.0
        %2847 = vmatpush1.msra.mxu0 0.0
        %2848 = vmatprep.subr.mxu0 0.0
        %2849 = vmatpush1.msra.mxu0 0.0
        %2850 = vmatprep.subr.mxu0 0.0
        %2851 = vmatpush1.msra.mxu0 0.0
        %2852 = vmatprep.subr.mxu0 0.0
        %2853 = vmatpush1.msra.mxu0 0.0
        %2854 = vmatprep.subr.mxu0 0.0
        %2855 = vmatpush1.msra.mxu0 0.0
        %2856 = vmatprep.subr.mxu0 0.0
        %2857 = vmatpush1.msra.mxu0 %v2815
        %2858 = vmatprep.subr.mxu0 0.0
        %2859 = vmatpush1.msra.mxu0 %v2814
        %2860 = vmatprep.subr.mxu0 0.0
        %2861 = vmatpush2.msra.mxu0 0.0
        %2862 = vmatprep.subr.mxu0 0.0
        %2863 = vmatpush2.msra.mxu0 0.0
        %2864 = vmatprep.subr.mxu0 0.0
        %2865 = vmatpush2.msra.mxu0 0.0
        %2866 = vmatprep.subr.mxu0 0.0
        %2867 = vmatpush2.msra.mxu0 0.0
        %2868 = vmatprep.subr.mxu0 0.0
        %2869 = vmatpush2.msra.mxu0 0.0
        %2870 = vmatprep.subr.mxu0 0.0
        %2871 = vmatpush2.msra.mxu0 0.0
        %2872 = vmatprep.subr.mxu0 0.0
        %2873 = vmatpush2.msra.mxu0 0.0
        %2874 = vmatprep.subr.mxu0 0.0
        %2875 = vmatpush2.msra.mxu0 0.0
        %2876 = vmatprep.subr.mxu0 0.0
        %2877 = vmatpush2.msra.mxu0 0.0
        %2878 = vmatprep.subr.mxu0 0.0
        %2879 = vmatpush2.msra.mxu0 0.0
        %2880 = vmatprep.subr.mxu0 0.0
        %2881 = vmatpush2.msra.mxu0 0.0
        %2882 = vmatprep.subr.mxu0 0.0
        %2883 = vmatpush2.msra.mxu0 0.0
        %2884 = vmatprep.subr.mxu0 0.0
        %2885 = vmatpush2.msra.mxu0 0.0
        %2886 = vmatprep.subr.mxu0 0.0
        %2887 = vmatpush2.msra.mxu0 0.0
        %2888 = vmatprep.subr.mxu0 0.0
        %2889 = vmatpush2.msra.mxu0 0.0
        %2890 = vmatprep.subr.mxu0 0.0
        %2891 = vmatpush2.msra.mxu0 0.0
        %2892 = vmatprep.mubr.f32.mxu0 0.0
        %2893 = vmatmul.mubr.f32.gmra.mxu0 %v2817
        %v2894 = vpop.f32.mrf.mxu0
        %v2895 = vadd.f32 0.0, %v2894
        %v2896 = vpop.f32.mrf.mxu0
        %2897 = vmatprep.mubr.f32.mxu0 0.0
        %2898 = vmatmul.mubr.f32.gmra.mxu0 %v2820
        %v2899 = vpop.f32.mrf.mxu0
        %v2900 = vadd.f32 0.0, %v2899
        %v2901 = vpop.f32.mrf.mxu0
        %2902 = vmatprep.mubr.f32.mxu0 0.0
        %2903 = vmatmul.mubr.f32.gmra.mxu0 %v2823
        %v2904 = vpop.f32.mrf.mxu0
        %v2905 = vadd.f32 0.0, %v2904
        %v2906 = vpop.f32.mrf.mxu0
        %2907 = vmatprep.mubr.f32.mxu0 0.0
        %2908 = vmatmul.mubr.f32.gmra.mxu0 %v2826
        %v2909 = vpop.f32.mrf.mxu0
        %v2910 = vadd.f32 0.0, %v2909
        %v2911 = vpop.f32.mrf.mxu0
        %2912 = vdwg.mxu0
        %v2913 = vadd.f32 %v1867, %v2895
        %v2914 = vadd.f32 %v1868, %v2900
        %v2915 = vadd.f32 %v1869, %v2905
        %v2916 = vadd.f32 %v1870, %v2910
        %v2917 = vadd.f32 %v2913, %v783
        %v2918 = vadd.f32 %v2914, %v784
        %v2919 = vadd.f32 %v2915, %v785
        %v2920 = vadd.f32 %v2916, %v786
        %v2921 = vld [vmem:[%s8] sm:$0x1]
        %v2922 = vld [vmem:[%s9] sm:$0x1]
        %v2923 = vsel %vm713, %v2917, 0.0
        %2924 = vadd.xlane.f32.xlu0 %v2923
        %v2925 = vpop.xlane.xlu0 %2924
        %v2926 = vsel %vm713, %v2918, 0.0
        %2927 = vadd.xlane.f32.xlu0 %v2926
        %v2928 = vpop.xlane.xlu0 %2927
        %v2929 = vsel %vm713, %v2919, 0.0
        %2930 = vadd.xlane.f32.xlu0 %v2929
        %v2931 = vpop.xlane.xlu0 %2930
        %v2932 = vsel %vm713, %v2920, 0.0
        %2933 = vadd.xlane.f32.xlu0 %v2932
        %v2934 = vpop.xlane.xlu0 %2933
        %v2935 = vmul.f32 %v2925, %v726
        %v2936 = vmul.f32 %v2928, %v726
        %v2937 = vmul.f32 %v2931, %v726
        %v2938 = vmul.f32 %v2934, %v726
        %v2939 = vsub.f32 %v2917, %v2935
        %v2940 = vsub.f32 %v2918, %v2936
        %v2941 = vsub.f32 %v2919, %v2937
        %v2942 = vsub.f32 %v2920, %v2938
        %v2943 = vmul.f32 %v2939, %v2939
        %v2944 = vmul.f32 %v2940, %v2940
        %v2945 = vmul.f32 %v2941, %v2941
        %v2946 = vmul.f32 %v2942, %v2942
        %v2947 = vsel %vm713, %v2943, 0.0
        %2948 = vadd.xlane.f32.xlu0 %v2947
        %v2949 = vpop.xlane.xlu0 %2948
        %v2950 = vsel %vm713, %v2944, 0.0
        %2951 = vadd.xlane.f32.xlu0 %v2950
        %v2952 = vpop.xlane.xlu0 %2951
        %v2953 = vsel %vm713, %v2945, 0.0
        %2954 = vadd.xlane.f32.xlu0 %v2953
        %v2955 = vpop.xlane.xlu0 %2954
        %v2956 = vsel %vm713, %v2946, 0.0
        %2957 = vadd.xlane.f32.xlu0 %v2956
        %v2958 = vpop.xlane.xlu0 %2957
        %v2959 = vmul.f32 %v2949, %v726
        %v2960 = vmul.f32 %v2952, %v726
        %v2961 = vmul.f32 %v2955, %v726
        %v2962 = vmul.f32 %v2958, %v726
        %v2963 = vadd.f32 %v2959, 1e-12
        %v2964 = vadd.f32 %v2960, 1e-12
        %v2965 = vadd.f32 %v2961, 1e-12
        %v2966 = vadd.f32 %v2962, 1e-12
        %v2967 = vrsqrt.pop %v2963
        %v2968 = vrsqrt.pop %v2964
        %v2969 = vrsqrt.pop %v2965
        %v2970 = vrsqrt.pop %v2966
        %v2971 = vmul.f32 %v2939, %v2967
        %v2972 = vmul.f32 %v2940, %v2968
        %v2973 = vmul.f32 %v2941, %v2969
        %v2974 = vmul.f32 %v2942, %v2970
        %v2976 = vlaneseq
        %v2977 = vshrl.u32 %v2976, 7
        %v2978 = vsub.s32 0, %v2977
        %v2979 = vrot.slane %v2921, %v2978
        %v2981 = vmul.f32 %v2971, %v2979
        %v2982 = vmul.f32 %v2972, %v2979
        %v2983 = vmul.f32 %v2973, %v2979
        %v2984 = vmul.f32 %v2974, %v2979
        %v2986 = vlaneseq
        %v2987 = vshrl.u32 %v2986, 7
        %v2988 = vsub.s32 0, %v2987
        %v2989 = vrot.slane %v2922, %v2988
        %v2991 = vadd.f32 %v2981, %v2989
        %v2992 = vadd.f32 %v2982, %v2989
        %v2993 = vadd.f32 %v2983, %v2989
        %v2994 = vadd.f32 %v2984, %v2989
        %v2995 = vld [vmem:[%s10] sm:$0xff]
        %v2996 = vld [vmem:[%s10 + $0x8] sm:$0xff]
        %v2997 = vld [vmem:[%s10 + $0x10] sm:$0xff]
        %v2998 = vld [vmem:[%s10 + $0x18] sm:$0xff]
        %v2999 = vld [vmem:[%s11] sm:$0x1]
        %v3001 = vlaneseq
        %v3002 = vshrl.u32 %v3001, 7
        %v3003 = vsub.s32 0, %v3002
        %v3004 = vrot.slane %v2999, %v3003
        %v3007 = vsel %vm713, %v2991, 0
        %v3010 = vsel %vm713, %v2992, 0
        %v3013 = vsel %vm713, %v2993, 0
        %v3016 = vsel %vm713, %v2994, 0
        %3018 = vmatprep.subr.mxu0 0.0
        %3019 = vmatpush1.msra.mxu0 0.0
        %3020 = vmatprep.subr.mxu0 0.0
        %3021 = vmatpush1.msra.mxu0 0.0
        %3022 = vmatprep.subr.mxu0 0.0
        %3023 = vmatpush1.msra.mxu0 0.0
        %3024 = vmatprep.subr.mxu0 0.0
        %3025 = vmatpush1.msra.mxu0 0.0
        %3026 = vmatprep.subr.mxu0 0.0
        %3027 = vmatpush1.msra.mxu0 0.0
        %3028 = vmatprep.subr.mxu0 0.0
        %3029 = vmatpush1.msra.mxu0 0.0
        %3030 = vmatprep.subr.mxu0 0.0
        %3031 = vmatpush1.msra.mxu0 0.0
        %3032 = vmatprep.subr.mxu0 0.0
        %3033 = vmatpush1.msra.mxu0 0.0
        %3034 = vmatprep.subr.mxu0 0.0
        %3035 = vmatpush1.msra.mxu0 0.0
        %3036 = vmatprep.subr.mxu0 0.0
        %3037 = vmatpush1.msra.mxu0 0.0
        %3038 = vmatprep.subr.mxu0 0.0
        %3039 = vmatpush1.msra.mxu0 0.0
        %3040 = vmatprep.subr.mxu0 0.0
        %3041 = vmatpush1.msra.mxu0 0.0
        %3042 = vmatprep.subr.mxu0 0.0
        %3043 = vmatpush1.msra.mxu0 %v2998
        %3044 = vmatprep.subr.mxu0 0.0
        %3045 = vmatpush1.msra.mxu0 %v2997
        %3046 = vmatprep.subr.mxu0 0.0
        %3047 = vmatpush1.msra.mxu0 %v2996
        %3048 = vmatprep.subr.mxu0 0.0
        %3049 = vmatpush1.msra.mxu0 %v2995
        %3050 = vmatprep.subr.mxu0 0.0
        %3051 = vmatpush2.msra.mxu0 0.0
        %3052 = vmatprep.subr.mxu0 0.0
        %3053 = vmatpush2.msra.mxu0 0.0
        %3054 = vmatprep.subr.mxu0 0.0
        %3055 = vmatpush2.msra.mxu0 0.0
        %3056 = vmatprep.subr.mxu0 0.0
        %3057 = vmatpush2.msra.mxu0 0.0
        %3058 = vmatprep.subr.mxu0 0.0
        %3059 = vmatpush2.msra.mxu0 0.0
        %3060 = vmatprep.subr.mxu0 0.0
        %3061 = vmatpush2.msra.mxu0 0.0
        %3062 = vmatprep.subr.mxu0 0.0
        %3063 = vmatpush2.msra.mxu0 0.0
        %3064 = vmatprep.subr.mxu0 0.0
        %3065 = vmatpush2.msra.mxu0 0.0
        %3066 = vmatprep.subr.mxu0 0.0
        %3067 = vmatpush2.msra.mxu0 0.0
        %3068 = vmatprep.subr.mxu0 0.0
        %3069 = vmatpush2.msra.mxu0 0.0
        %3070 = vmatprep.subr.mxu0 0.0
        %3071 = vmatpush2.msra.mxu0 0.0
        %3072 = vmatprep.subr.mxu0 0.0
        %3073 = vmatpush2.msra.mxu0 0.0
        %3074 = vmatprep.subr.mxu0 0.0
        %3075 = vmatpush2.msra.mxu0 0.0
        %3076 = vmatprep.subr.mxu0 0.0
        %3077 = vmatpush2.msra.mxu0 0.0
        %3078 = vmatprep.subr.mxu0 0.0
        %3079 = vmatpush2.msra.mxu0 0.0
        %3080 = vmatprep.subr.mxu0 0.0
        %3081 = vmatpush2.msra.mxu0 0.0
        %3082 = vmatprep.mubr.f32.mxu0 0.0
        %3083 = vmatmul.mubr.f32.gmra.mxu0 %v3007
        %v3084 = vpop.f32.mrf.mxu0
        %v3085 = vadd.f32 %v3004, %v3084
        %v3086 = vpop.f32.mrf.mxu0
        %3087 = vmatprep.mubr.f32.mxu0 0.0
        %3088 = vmatmul.mubr.f32.gmra.mxu0 %v3010
        %v3089 = vpop.f32.mrf.mxu0
        %v3090 = vadd.f32 %v3004, %v3089
        %v3091 = vpop.f32.mrf.mxu0
        %3092 = vmatprep.mubr.f32.mxu0 0.0
        %3093 = vmatmul.mubr.f32.gmra.mxu0 %v3013
        %v3094 = vpop.f32.mrf.mxu0
        %v3095 = vadd.f32 %v3004, %v3094
        %v3096 = vpop.f32.mrf.mxu0
        %3097 = vmatprep.mubr.f32.mxu0 0.0
        %3098 = vmatmul.mubr.f32.gmra.mxu0 %v3016
        %v3099 = vpop.f32.mrf.mxu0
        %v3100 = vadd.f32 %v3004, %v3099
        %v3101 = vpop.f32.mrf.mxu0
        %3102 = vdwg.mxu0
        %v3103 = vmul.f32 %v3085, %v3085
        %v3104 = vmul.f32 %v3090, %v3090
        %v3105 = vmul.f32 %v3095, %v3095
        %v3106 = vmul.f32 %v3100, %v3100
        %v3107 = vmul.f32 %v3085, %v3103
        %v3108 = vmul.f32 %v3090, %v3104
        %v3109 = vmul.f32 %v3095, %v3105
        %v3110 = vmul.f32 %v3100, %v3106
        %v3111 = vmul.f32 %v3107, 0.044715
        %v3112 = vmul.f32 %v3108, 0.044715
        %v3113 = vmul.f32 %v3109, 0.044715
        %v3114 = vmul.f32 %v3110, 0.044715
        %v3115 = vadd.f32 %v3085, %v3111
        %v3116 = vadd.f32 %v3090, %v3112
        %v3117 = vadd.f32 %v3095, %v3113
        %v3118 = vadd.f32 %v3100, %v3114
        %v3119 = vmul.f32 %v3115, 0.7978846
        %v3120 = vmul.f32 %v3116, 0.7978846
        %v3121 = vmul.f32 %v3117, 0.7978846
        %v3122 = vmul.f32 %v3118, 0.7978846
        %v3123 = vtanh.pop %v3119
        %v3124 = vtanh.pop %v3120
        %v3125 = vtanh.pop %v3121
        %v3126 = vtanh.pop %v3122
        %v3127 = vadd.f32 %v3123, 1.0
        %v3128 = vadd.f32 %v3124, 1.0
        %v3129 = vadd.f32 %v3125, 1.0
        %v3130 = vadd.f32 %v3126, 1.0
        %v3131 = vmul.f32 %v3127, 0.5
        %v3132 = vmul.f32 %v3128, 0.5
        %v3133 = vmul.f32 %v3129, 0.5
        %v3134 = vmul.f32 %v3130, 0.5
        %v3135 = vmul.f32 %v3085, %v3131
        %v3136 = vmul.f32 %v3090, %v3132
        %v3137 = vmul.f32 %v3095, %v3133
        %v3138 = vmul.f32 %v3100, %v3134
        %v3139 = vld [vmem:[%s12] sm:$0xff]
        %v3140 = vld [vmem:[%s12 + $0x8] sm:$0xff]
        %v3141 = vld [vmem:[%s12 + $0x10] sm:$0xff]
        %v3142 = vld [vmem:[%s12 + $0x18] sm:$0xff]
        %v3143 = vld [vmem:[%s12 + $0x20] sm:$0xff]
        %v3144 = vld [vmem:[%s12 + $0x28] sm:$0xff]
        %v3145 = vld [vmem:[%s12 + $0x30] sm:$0xff]
        %v3146 = vld [vmem:[%s12 + $0x38] sm:$0xff]
        %v3147 = vld [vmem:[%s13] sm:$0x1]
        %v3149 = vlaneseq
        %v3150 = vshrl.u32 %v3149, 7
        %v3151 = vsub.s32 0, %v3150
        %v3152 = vrot.slane %v3147, %v3151
        %vm3154 = vcmask 523264
        %v3156 = vsel %vm3154, %v3135, 0
        %v3159 = vsel %vm3154, %v3136, 0
        %v3162 = vsel %vm3154, %v3137, 0
        %v3165 = vsel %vm3154, %v3138, 0
        %3167 = vmatprep.subr.mxu0 0.0
        %3168 = vmatpush1.msra.mxu0 0.0
        %3169 = vmatprep.subr.mxu0 0.0
        %3170 = vmatpush1.msra.mxu0 0.0
        %3171 = vmatprep.subr.mxu0 0.0
        %3172 = vmatpush1.msra.mxu0 0.0
        %3173 = vmatprep.subr.mxu0 0.0
        %3174 = vmatpush1.msra.mxu0 0.0
        %3175 = vmatprep.subr.mxu0 0.0
        %3176 = vmatpush1.msra.mxu0 0.0
        %3177 = vmatprep.subr.mxu0 0.0
        %3178 = vmatpush1.msra.mxu0 0.0
        %3179 = vmatprep.subr.mxu0 0.0
        %3180 = vmatpush1.msra.mxu0 0.0
        %3181 = vmatprep.subr.mxu0 0.0
        %3182 = vmatpush1.msra.mxu0 0.0
        %3183 = vmatprep.subr.mxu0 0.0
        %3184 = vmatpush1.msra.mxu0 %v3146
        %3185 = vmatprep.subr.mxu0 0.0
        %3186 = vmatpush1.msra.mxu0 %v3145
        %3187 = vmatprep.subr.mxu0 0.0
        %3188 = vmatpush1.msra.mxu0 %v3144
        %3189 = vmatprep.subr.mxu0 0.0
        %3190 = vmatpush1.msra.mxu0 %v3143
        %3191 = vmatprep.subr.mxu0 0.0
        %3192 = vmatpush1.msra.mxu0 %v3142
        %3193 = vmatprep.subr.mxu0 0.0
        %3194 = vmatpush1.msra.mxu0 %v3141
        %3195 = vmatprep.subr.mxu0 0.0
        %3196 = vmatpush1.msra.mxu0 %v3140
        %3197 = vmatprep.subr.mxu0 0.0
        %3198 = vmatpush1.msra.mxu0 %v3139
        %3199 = vmatprep.subr.mxu0 0.0
        %3200 = vmatpush2.msra.mxu0 0.0
        %3201 = vmatprep.subr.mxu0 0.0
        %3202 = vmatpush2.msra.mxu0 0.0
        %3203 = vmatprep.subr.mxu0 0.0
        %3204 = vmatpush2.msra.mxu0 0.0
        %3205 = vmatprep.subr.mxu0 0.0
        %3206 = vmatpush2.msra.mxu0 0.0
        %3207 = vmatprep.subr.mxu0 0.0
        %3208 = vmatpush2.msra.mxu0 0.0
        %3209 = vmatprep.subr.mxu0 0.0
        %3210 = vmatpush2.msra.mxu0 0.0
        %3211 = vmatprep.subr.mxu0 0.0
        %3212 = vmatpush2.msra.mxu0 0.0
        %3213 = vmatprep.subr.mxu0 0.0
        %3214 = vmatpush2.msra.mxu0 0.0
        %3215 = vmatprep.subr.mxu0 0.0
        %3216 = vmatpush2.msra.mxu0 0.0
        %3217 = vmatprep.subr.mxu0 0.0
        %3218 = vmatpush2.msra.mxu0 0.0
        %3219 = vmatprep.subr.mxu0 0.0
        %3220 = vmatpush2.msra.mxu0 0.0
        %3221 = vmatprep.subr.mxu0 0.0
        %3222 = vmatpush2.msra.mxu0 0.0
        %3223 = vmatprep.subr.mxu0 0.0
        %3224 = vmatpush2.msra.mxu0 0.0
        %3225 = vmatprep.subr.mxu0 0.0
        %3226 = vmatpush2.msra.mxu0 0.0
        %3227 = vmatprep.subr.mxu0 0.0
        %3228 = vmatpush2.msra.mxu0 0.0
        %3229 = vmatprep.subr.mxu0 0.0
        %3230 = vmatpush2.msra.mxu0 0.0
        %3231 = vmatprep.mubr.f32.mxu0 0.0
        %3232 = vmatmul.mubr.f32.gmra.mxu0 %v3156
        %v3233 = vpop.f32.mrf.mxu0
        %v3234 = vadd.f32 %v3152, %v3233
        %v3235 = vpop.f32.mrf.mxu0
        %3236 = vmatprep.mubr.f32.mxu0 0.0
        %3237 = vmatmul.mubr.f32.gmra.mxu0 %v3159
        %v3238 = vpop.f32.mrf.mxu0
        %v3239 = vadd.f32 %v3152, %v3238
        %v3240 = vpop.f32.mrf.mxu0
        %3241 = vmatprep.mubr.f32.mxu0 0.0
        %3242 = vmatmul.mubr.f32.gmra.mxu0 %v3162
        %v3243 = vpop.f32.mrf.mxu0
        %v3244 = vadd.f32 %v3152, %v3243
        %v3245 = vpop.f32.mrf.mxu0
        %3246 = vmatprep.mubr.f32.mxu0 0.0
        %3247 = vmatmul.mubr.f32.gmra.mxu0 %v3165
        %v3248 = vpop.f32.mrf.mxu0
        %v3249 = vadd.f32 %v3152, %v3248
        %v3250 = vpop.f32.mrf.mxu0
        %3251 = vdwg.mxu0
        %v3252 = vadd.f32 %v3234, %v2991
        %v3253 = vadd.f32 %v3239, %v2992
        %v3254 = vadd.f32 %v3244, %v2993
        %v3255 = vadd.f32 %v3249, %v2994
        %v3256 = vld [vmem:[%s14] sm:$0x1]
        %v3257 = vld [vmem:[%s15] sm:$0x1]
        %v3258 = vsel %vm713, %v3252, 0.0
        %3259 = vadd.xlane.f32.xlu0 %v3258
        %v3260 = vpop.xlane.xlu0 %3259
        %v3261 = vsel %vm713, %v3253, 0.0
        %3262 = vadd.xlane.f32.xlu0 %v3261
        %v3263 = vpop.xlane.xlu0 %3262
        %v3264 = vsel %vm713, %v3254, 0.0
        %3265 = vadd.xlane.f32.xlu0 %v3264
        %v3266 = vpop.xlane.xlu0 %3265
        %v3267 = vsel %vm713, %v3255, 0.0
        %3268 = vadd.xlane.f32.xlu0 %v3267
        %v3269 = vpop.xlane.xlu0 %3268
        %v3270 = vmul.f32 %v3260, %v726
        %v3271 = vmul.f32 %v3263, %v726
        %v3272 = vmul.f32 %v3266, %v726
        %v3273 = vmul.f32 %v3269, %v726
        %v3274 = vsub.f32 %v3252, %v3270
        %v3275 = vsub.f32 %v3253, %v3271
        %v3276 = vsub.f32 %v3254, %v3272
        %v3277 = vsub.f32 %v3255, %v3273
        %v3278 = vmul.f32 %v3274, %v3274
        %v3279 = vmul.f32 %v3275, %v3275
        %v3280 = vmul.f32 %v3276, %v3276
        %v3281 = vmul.f32 %v3277, %v3277
        %v3282 = vsel %vm713, %v3278, 0.0
        %3283 = vadd.xlane.f32.xlu0 %v3282
        %v3284 = vpop.xlane.xlu0 %3283
        %v3285 = vsel %vm713, %v3279, 0.0
        %3286 = vadd.xlane.f32.xlu0 %v3285
        %v3287 = vpop.xlane.xlu0 %3286
        %v3288 = vsel %vm713, %v3280, 0.0
        %3289 = vadd.xlane.f32.xlu0 %v3288
        %v3290 = vpop.xlane.xlu0 %3289
        %v3291 = vsel %vm713, %v3281, 0.0
        %3292 = vadd.xlane.f32.xlu0 %v3291
        %v3293 = vpop.xlane.xlu0 %3292
        %v3294 = vmul.f32 %v3284, %v726
        %v3295 = vmul.f32 %v3287, %v726
        %v3296 = vmul.f32 %v3290, %v726
        %v3297 = vmul.f32 %v3293, %v726
        %v3298 = vadd.f32 %v3294, 1e-12
        %v3299 = vadd.f32 %v3295, 1e-12
        %v3300 = vadd.f32 %v3296, 1e-12
        %v3301 = vadd.f32 %v3297, 1e-12
        %v3302 = vrsqrt.pop %v3298
        %v3303 = vrsqrt.pop %v3299
        %v3304 = vrsqrt.pop %v3300
        %v3305 = vrsqrt.pop %v3301
        %v3306 = vmul.f32 %v3274, %v3302
        %v3307 = vmul.f32 %v3275, %v3303
        %v3308 = vmul.f32 %v3276, %v3304
        %v3309 = vmul.f32 %v3277, %v3305
        %v3311 = vlaneseq
        %v3312 = vshrl.u32 %v3311, 7
        %v3313 = vsub.s32 0, %v3312
        %v3314 = vrot.slane %v3256, %v3313
        %v3316 = vmul.f32 %v3306, %v3314
        %v3317 = vmul.f32 %v3307, %v3314
        %v3318 = vmul.f32 %v3308, %v3314
        %v3319 = vmul.f32 %v3309, %v3314
        %v3321 = vlaneseq
        %v3322 = vshrl.u32 %v3321, 7
        %v3323 = vsub.s32 0, %v3322
        %v3324 = vrot.slane %v3257, %v3323
        %v3326 = vadd.f32 %v3316, %v3324
        %v3327 = vadd.f32 %v3317, %v3324
        %v3328 = vadd.f32 %v3318, %v3324
        %v3329 = vadd.f32 %v3319, %v3324
        %s3330 = scalar_lea.vmem %s7, 1
        %v3331 = vld [vmem:[%s3330] sm:$0x1]
        %s3332 = scalar_lea.vmem %s4, 192
        %v3333 = vld [vmem:[%s3332] sm:$0xff]
        %v3334 = vld [vmem:[%s3332 + $0x8] sm:$0xff]
        %v3335 = vld [vmem:[%s3332 + $0x10] sm:$0xff]
        %v3336 = vld [vmem:[%s3332 + $0x18] sm:$0xff]
        %s3337 = scalar_lea.vmem %s5, 6
        %v3338 = vld [vmem:[%s3337] sm:$0x1]
        %v3340 = vlaneseq
        %v3341 = vshrl.u32 %v3340, 7
        %v3342 = vsub.s32 0, %v3341
        %v3343 = vrot.slane %v3338, %v3342
        %v3346 = vsel %vm713, %v3326, 0
        %v3349 = vsel %vm713, %v3327, 0
        %v3352 = vsel %vm713, %v3328, 0
        %v3355 = vsel %vm713, %v3329, 0
        %3357 = vmatprep.subr.mxu0 0.0
        %3358 = vmatpush1.msra.mxu0 0.0
        %3359 = vmatprep.subr.mxu0 0.0
        %3360 = vmatpush1.msra.mxu0 0.0
        %3361 = vmatprep.subr.mxu0 0.0
        %3362 = vmatpush1.msra.mxu0 0.0
        %3363 = vmatprep.subr.mxu0 0.0
        %3364 = vmatpush1.msra.mxu0 0.0
        %3365 = vmatprep.subr.mxu0 0.0
        %3366 = vmatpush1.msra.mxu0 0.0
        %3367 = vmatprep.subr.mxu0 0.0
        %3368 = vmatpush1.msra.mxu0 0.0
        %3369 = vmatprep.subr.mxu0 0.0
        %3370 = vmatpush1.msra.mxu0 0.0
        %3371 = vmatprep.subr.mxu0 0.0
        %3372 = vmatpush1.msra.mxu0 0.0
        %3373 = vmatprep.subr.mxu0 0.0
        %3374 = vmatpush1.msra.mxu0 0.0
        %3375 = vmatprep.subr.mxu0 0.0
        %3376 = vmatpush1.msra.mxu0 0.0
        %3377 = vmatprep.subr.mxu0 0.0
        %3378 = vmatpush1.msra.mxu0 0.0
        %3379 = vmatprep.subr.mxu0 0.0
        %3380 = vmatpush1.msra.mxu0 0.0
        %3381 = vmatprep.subr.mxu0 0.0
        %3382 = vmatpush1.msra.mxu0 %v3336
        %3383 = vmatprep.subr.mxu0 0.0
        %3384 = vmatpush1.msra.mxu0 %v3335
        %3385 = vmatprep.subr.mxu0 0.0
        %3386 = vmatpush1.msra.mxu0 %v3334
        %3387 = vmatprep.subr.mxu0 0.0
        %3388 = vmatpush1.msra.mxu0 %v3333
        %3389 = vmatprep.subr.mxu0 0.0
        %3390 = vmatpush2.msra.mxu0 0.0
        %3391 = vmatprep.subr.mxu0 0.0
        %3392 = vmatpush2.msra.mxu0 0.0
        %3393 = vmatprep.subr.mxu0 0.0
        %3394 = vmatpush2.msra.mxu0 0.0
        %3395 = vmatprep.subr.mxu0 0.0
        %3396 = vmatpush2.msra.mxu0 0.0
        %3397 = vmatprep.subr.mxu0 0.0
        %3398 = vmatpush2.msra.mxu0 0.0
        %3399 = vmatprep.subr.mxu0 0.0
        %3400 = vmatpush2.msra.mxu0 0.0
        %3401 = vmatprep.subr.mxu0 0.0
        %3402 = vmatpush2.msra.mxu0 0.0
        %3403 = vmatprep.subr.mxu0 0.0
        %3404 = vmatpush2.msra.mxu0 0.0
        %3405 = vmatprep.subr.mxu0 0.0
        %3406 = vmatpush2.msra.mxu0 0.0
        %3407 = vmatprep.subr.mxu0 0.0
        %3408 = vmatpush2.msra.mxu0 0.0
        %3409 = vmatprep.subr.mxu0 0.0
        %3410 = vmatpush2.msra.mxu0 0.0
        %3411 = vmatprep.subr.mxu0 0.0
        %3412 = vmatpush2.msra.mxu0 0.0
        %3413 = vmatprep.subr.mxu0 0.0
        %3414 = vmatpush2.msra.mxu0 0.0
        %3415 = vmatprep.subr.mxu0 0.0
        %3416 = vmatpush2.msra.mxu0 0.0
        %3417 = vmatprep.subr.mxu0 0.0
        %3418 = vmatpush2.msra.mxu0 0.0
        %3419 = vmatprep.subr.mxu0 0.0
        %3420 = vmatpush2.msra.mxu0 0.0
        %3421 = vmatprep.mubr.f32.mxu0 0.0
        %3422 = vmatmul.mubr.f32.gmra.mxu0 %v3346
        %v3423 = vpop.f32.mrf.mxu0
        %v3424 = vadd.f32 %v3343, %v3423
        %v3425 = vpop.f32.mrf.mxu0
        %3426 = vmatprep.mubr.f32.mxu0 0.0
        %3427 = vmatmul.mubr.f32.gmra.mxu0 %v3349
        %v3428 = vpop.f32.mrf.mxu0
        %v3429 = vadd.f32 %v3343, %v3428
        %v3430 = vpop.f32.mrf.mxu0
        %3431 = vmatprep.mubr.f32.mxu0 0.0
        %3432 = vmatmul.mubr.f32.gmra.mxu0 %v3352
        %v3433 = vpop.f32.mrf.mxu0
        %v3434 = vadd.f32 %v3343, %v3433
        %v3435 = vpop.f32.mrf.mxu0
        %3436 = vmatprep.mubr.f32.mxu0 0.0
        %3437 = vmatmul.mubr.f32.gmra.mxu0 %v3355
        %v3438 = vpop.f32.mrf.mxu0
        %v3439 = vadd.f32 %v3343, %v3438
        %v3440 = vpop.f32.mrf.mxu0
        %3441 = vdwg.mxu0
        %s3442 = scalar_lea.vmem %s4, 224
        %v3443 = vld [vmem:[%s3442] sm:$0xff]
        %v3444 = vld [vmem:[%s3442 + $0x8] sm:$0xff]
        %v3445 = vld [vmem:[%s3442 + $0x10] sm:$0xff]
        %v3446 = vld [vmem:[%s3442 + $0x18] sm:$0xff]
        %s3447 = scalar_lea.vmem %s5, 7
        %v3448 = vld [vmem:[%s3447] sm:$0x1]
        %v3450 = vlaneseq
        %v3451 = vshrl.u32 %v3450, 7
        %v3452 = vsub.s32 0, %v3451
        %v3453 = vrot.slane %v3448, %v3452
        %3455 = vmatprep.subr.mxu0 0.0
        %3456 = vmatpush1.msra.mxu0 0.0
        %3457 = vmatprep.subr.mxu0 0.0
        %3458 = vmatpush1.msra.mxu0 0.0
        %3459 = vmatprep.subr.mxu0 0.0
        %3460 = vmatpush1.msra.mxu0 0.0
        %3461 = vmatprep.subr.mxu0 0.0
        %3462 = vmatpush1.msra.mxu0 0.0
        %3463 = vmatprep.subr.mxu0 0.0
        %3464 = vmatpush1.msra.mxu0 0.0
        %3465 = vmatprep.subr.mxu0 0.0
        %3466 = vmatpush1.msra.mxu0 0.0
        %3467 = vmatprep.subr.mxu0 0.0
        %3468 = vmatpush1.msra.mxu0 0.0
        %3469 = vmatprep.subr.mxu0 0.0
        %3470 = vmatpush1.msra.mxu0 0.0
        %3471 = vmatprep.subr.mxu0 0.0
        %3472 = vmatpush1.msra.mxu0 0.0
        %3473 = vmatprep.subr.mxu0 0.0
        %3474 = vmatpush1.msra.mxu0 0.0
        %3475 = vmatprep.subr.mxu0 0.0
        %3476 = vmatpush1.msra.mxu0 0.0
        %3477 = vmatprep.subr.mxu0 0.0
        %3478 = vmatpush1.msra.mxu0 0.0
        %3479 = vmatprep.subr.mxu0 0.0
        %3480 = vmatpush1.msra.mxu0 %v3446
        %3481 = vmatprep.subr.mxu0 0.0
        %3482 = vmatpush1.msra.mxu0 %v3445
        %3483 = vmatprep.subr.mxu0 0.0
        %3484 = vmatpush1.msra.mxu0 %v3444
        %3485 = vmatprep.subr.mxu0 0.0
        %3486 = vmatpush1.msra.mxu0 %v3443
        %3487 = vmatprep.subr.mxu0 0.0
        %3488 = vmatpush2.msra.mxu0 0.0
        %3489 = vmatprep.subr.mxu0 0.0
        %3490 = vmatpush2.msra.mxu0 0.0
        %3491 = vmatprep.subr.mxu0 0.0
        %3492 = vmatpush2.msra.mxu0 0.0
        %3493 = vmatprep.subr.mxu0 0.0
        %3494 = vmatpush2.msra.mxu0 0.0
        %3495 = vmatprep.subr.mxu0 0.0
        %3496 = vmatpush2.msra.mxu0 0.0
        %3497 = vmatprep.subr.mxu0 0.0
        %3498 = vmatpush2.msra.mxu0 0.0
        %3499 = vmatprep.subr.mxu0 0.0
        %3500 = vmatpush2.msra.mxu0 0.0
        %3501 = vmatprep.subr.mxu0 0.0
        %3502 = vmatpush2.msra.mxu0 0.0
        %3503 = vmatprep.subr.mxu0 0.0
        %3504 = vmatpush2.msra.mxu0 0.0
        %3505 = vmatprep.subr.mxu0 0.0
        %3506 = vmatpush2.msra.mxu0 0.0
        %3507 = vmatprep.subr.mxu0 0.0
        %3508 = vmatpush2.msra.mxu0 0.0
        %3509 = vmatprep.subr.mxu0 0.0
        %3510 = vmatpush2.msra.mxu0 0.0
        %3511 = vmatprep.subr.mxu0 0.0
        %3512 = vmatpush2.msra.mxu0 0.0
        %3513 = vmatprep.subr.mxu0 0.0
        %3514 = vmatpush2.msra.mxu0 0.0
        %3515 = vmatprep.subr.mxu0 0.0
        %3516 = vmatpush2.msra.mxu0 0.0
        %3517 = vmatprep.subr.mxu0 0.0
        %3518 = vmatpush2.msra.mxu0 0.0
        %3519 = vmatprep.mubr.f32.mxu0 0.0
        %3520 = vmatmul.mubr.f32.gmra.mxu0 %v3346
        %v3521 = vpop.f32.mrf.mxu0
        %v3522 = vadd.f32 %v3453, %v3521
        %v3523 = vpop.f32.mrf.mxu0
        %3524 = vmatprep.mubr.f32.mxu0 0.0
        %3525 = vmatmul.mubr.f32.gmra.mxu0 %v3349
        %v3526 = vpop.f32.mrf.mxu0
        %v3527 = vadd.f32 %v3453, %v3526
        %v3528 = vpop.f32.mrf.mxu0
        %3529 = vmatprep.mubr.f32.mxu0 0.0
        %3530 = vmatmul.mubr.f32.gmra.mxu0 %v3352
        %v3531 = vpop.f32.mrf.mxu0
        %v3532 = vadd.f32 %v3453, %v3531
        %v3533 = vpop.f32.mrf.mxu0
        %3534 = vmatprep.mubr.f32.mxu0 0.0
        %3535 = vmatmul.mubr.f32.gmra.mxu0 %v3355
        %v3536 = vpop.f32.mrf.mxu0
        %v3537 = vadd.f32 %v3453, %v3536
        %v3538 = vpop.f32.mrf.mxu0
        %3539 = vdwg.mxu0
        %s3540 = scalar_lea.vmem %s4, 256
        %v3541 = vld [vmem:[%s3540] sm:$0xff]
        %v3542 = vld [vmem:[%s3540 + $0x8] sm:$0xff]
        %v3543 = vld [vmem:[%s3540 + $0x10] sm:$0xff]
        %v3544 = vld [vmem:[%s3540 + $0x18] sm:$0xff]
        %s3545 = scalar_lea.vmem %s5, 8
        %v3546 = vld [vmem:[%s3545] sm:$0x1]
        %v3548 = vlaneseq
        %v3549 = vshrl.u32 %v3548, 7
        %v3550 = vsub.s32 0, %v3549
        %v3551 = vrot.slane %v3546, %v3550
        %3553 = vmatprep.subr.mxu0 0.0
        %3554 = vmatpush1.msra.mxu0 0.0
        %3555 = vmatprep.subr.mxu0 0.0
        %3556 = vmatpush1.msra.mxu0 0.0
        %3557 = vmatprep.subr.mxu0 0.0
        %3558 = vmatpush1.msra.mxu0 0.0
        %3559 = vmatprep.subr.mxu0 0.0
        %3560 = vmatpush1.msra.mxu0 0.0
        %3561 = vmatprep.subr.mxu0 0.0
        %3562 = vmatpush1.msra.mxu0 0.0
        %3563 = vmatprep.subr.mxu0 0.0
        %3564 = vmatpush1.msra.mxu0 0.0
        %3565 = vmatprep.subr.mxu0 0.0
        %3566 = vmatpush1.msra.mxu0 0.0
        %3567 = vmatprep.subr.mxu0 0.0
        %3568 = vmatpush1.msra.mxu0 0.0
        %3569 = vmatprep.subr.mxu0 0.0
        %3570 = vmatpush1.msra.mxu0 0.0
        %3571 = vmatprep.subr.mxu0 0.0
        %3572 = vmatpush1.msra.mxu0 0.0
        %3573 = vmatprep.subr.mxu0 0.0
        %3574 = vmatpush1.msra.mxu0 0.0
        %3575 = vmatprep.subr.mxu0 0.0
        %3576 = vmatpush1.msra.mxu0 0.0
        %3577 = vmatprep.subr.mxu0 0.0
        %3578 = vmatpush1.msra.mxu0 %v3544
        %3579 = vmatprep.subr.mxu0 0.0
        %3580 = vmatpush1.msra.mxu0 %v3543
        %3581 = vmatprep.subr.mxu0 0.0
        %3582 = vmatpush1.msra.mxu0 %v3542
        %3583 = vmatprep.subr.mxu0 0.0
        %3584 = vmatpush1.msra.mxu0 %v3541
        %3585 = vmatprep.subr.mxu0 0.0
        %3586 = vmatpush2.msra.mxu0 0.0
        %3587 = vmatprep.subr.mxu0 0.0
        %3588 = vmatpush2.msra.mxu0 0.0
        %3589 = vmatprep.subr.mxu0 0.0
        %3590 = vmatpush2.msra.mxu0 0.0
        %3591 = vmatprep.subr.mxu0 0.0
        %3592 = vmatpush2.msra.mxu0 0.0
        %3593 = vmatprep.subr.mxu0 0.0
        %3594 = vmatpush2.msra.mxu0 0.0
        %3595 = vmatprep.subr.mxu0 0.0
        %3596 = vmatpush2.msra.mxu0 0.0
        %3597 = vmatprep.subr.mxu0 0.0
        %3598 = vmatpush2.msra.mxu0 0.0
        %3599 = vmatprep.subr.mxu0 0.0
        %3600 = vmatpush2.msra.mxu0 0.0
        %3601 = vmatprep.subr.mxu0 0.0
        %3602 = vmatpush2.msra.mxu0 0.0
        %3603 = vmatprep.subr.mxu0 0.0
        %3604 = vmatpush2.msra.mxu0 0.0
        %3605 = vmatprep.subr.mxu0 0.0
        %3606 = vmatpush2.msra.mxu0 0.0
        %3607 = vmatprep.subr.mxu0 0.0
        %3608 = vmatpush2.msra.mxu0 0.0
        %3609 = vmatprep.subr.mxu0 0.0
        %3610 = vmatpush2.msra.mxu0 0.0
        %3611 = vmatprep.subr.mxu0 0.0
        %3612 = vmatpush2.msra.mxu0 0.0
        %3613 = vmatprep.subr.mxu0 0.0
        %3614 = vmatpush2.msra.mxu0 0.0
        %3615 = vmatprep.subr.mxu0 0.0
        %3616 = vmatpush2.msra.mxu0 0.0
        %3617 = vmatprep.mubr.f32.mxu0 0.0
        %3618 = vmatmul.mubr.f32.gmra.mxu0 %v3346
        %v3619 = vpop.f32.mrf.mxu0
        %v3620 = vadd.f32 %v3551, %v3619
        %v3621 = vpop.f32.mrf.mxu0
        %3622 = vmatprep.mubr.f32.mxu0 0.0
        %3623 = vmatmul.mubr.f32.gmra.mxu0 %v3349
        %v3624 = vpop.f32.mrf.mxu0
        %v3625 = vadd.f32 %v3551, %v3624
        %v3626 = vpop.f32.mrf.mxu0
        %3627 = vmatprep.mubr.f32.mxu0 0.0
        %3628 = vmatmul.mubr.f32.gmra.mxu0 %v3352
        %v3629 = vpop.f32.mrf.mxu0
        %v3630 = vadd.f32 %v3551, %v3629
        %v3631 = vpop.f32.mrf.mxu0
        %3632 = vmatprep.mubr.f32.mxu0 0.0
        %3633 = vmatmul.mubr.f32.gmra.mxu0 %v3355
        %v3634 = vpop.f32.mrf.mxu0
        %v3635 = vadd.f32 %v3551, %v3634
        %v3636 = vpop.f32.mrf.mxu0
        %3637 = vdwg.mxu0
        %v3639 = vsel %vm1092, %v3424, 0
        %v3642 = vsel %vm1092, %v3522, 0
        %3644 = vmatprep.subr.mxu0 0.0
        %3645 = vmatpush1.xpose.msra.mxu0 0.0
        %3646 = vmatprep.subr.mxu0 0.0
        %3647 = vmatpush1.xpose.msra.mxu0 0.0
        %3648 = vmatprep.subr.mxu0 0.0
        %3649 = vmatpush1.xpose.msra.mxu0 0.0
        %3650 = vmatprep.subr.mxu0 0.0
        %3651 = vmatpush1.xpose.msra.mxu0 0.0
        %3652 = vmatprep.subr.mxu0 0.0
        %3653 = vmatpush1.xpose.msra.mxu0 0.0
        %3654 = vmatprep.subr.mxu0 0.0
        %3655 = vmatpush1.xpose.msra.mxu0 0.0
        %3656 = vmatprep.subr.mxu0 0.0
        %3657 = vmatpush1.xpose.msra.mxu0 0.0
        %3658 = vmatprep.subr.mxu0 0.0
        %3659 = vmatpush1.xpose.msra.mxu0 0.0
        %3660 = vmatprep.subr.mxu0 0.0
        %3661 = vmatpush1.xpose.msra.mxu0 0.0
        %3662 = vmatprep.subr.mxu0 0.0
        %3663 = vmatpush1.xpose.msra.mxu0 0.0
        %3664 = vmatprep.subr.mxu0 0.0
        %3665 = vmatpush1.xpose.msra.mxu0 0.0
        %3666 = vmatprep.subr.mxu0 0.0
        %3667 = vmatpush1.xpose.msra.mxu0 0.0
        %3668 = vmatprep.subr.mxu0 0.0
        %3669 = vmatpush1.xpose.msra.mxu0 0.0
        %3670 = vmatprep.subr.mxu0 0.0
        %3671 = vmatpush1.xpose.msra.mxu0 0.0
        %3672 = vmatprep.subr.mxu0 0.0
        %3673 = vmatpush1.xpose.msra.mxu0 0.0
        %3674 = vmatprep.subr.mxu0 0.0
        %3675 = vmatpush1.xpose.msra.mxu0 %v3642
        %3676 = vmatprep.subr.mxu0 0.0
        %3677 = vmatpush2.xpose.msra.mxu0 0.0
        %3678 = vmatprep.subr.mxu0 0.0
        %3679 = vmatpush2.xpose.msra.mxu0 0.0
        %3680 = vmatprep.subr.mxu0 0.0
        %3681 = vmatpush2.xpose.msra.mxu0 0.0
        %3682 = vmatprep.subr.mxu0 0.0
        %3683 = vmatpush2.xpose.msra.mxu0 0.0
        %3684 = vmatprep.subr.mxu0 0.0
        %3685 = vmatpush2.xpose.msra.mxu0 0.0
        %3686 = vmatprep.subr.mxu0 0.0
        %3687 = vmatpush2.xpose.msra.mxu0 0.0
        %3688 = vmatprep.subr.mxu0 0.0
        %3689 = vmatpush2.xpose.msra.mxu0 0.0
        %3690 = vmatprep.subr.mxu0 0.0
        %3691 = vmatpush2.xpose.msra.mxu0 0.0
        %3692 = vmatprep.subr.mxu0 0.0
        %3693 = vmatpush2.xpose.msra.mxu0 0.0
        %3694 = vmatprep.subr.mxu0 0.0
        %3695 = vmatpush2.xpose.msra.mxu0 0.0
        %3696 = vmatprep.subr.mxu0 0.0
        %3697 = vmatpush2.xpose.msra.mxu0 0.0
        %3698 = vmatprep.subr.mxu0 0.0
        %3699 = vmatpush2.xpose.msra.mxu0 0.0
        %3700 = vmatprep.subr.mxu0 0.0
        %3701 = vmatpush2.xpose.msra.mxu0 0.0
        %3702 = vmatprep.subr.mxu0 0.0
        %3703 = vmatpush2.xpose.msra.mxu0 0.0
        %3704 = vmatprep.subr.mxu0 0.0
        %3705 = vmatpush2.xpose.msra.mxu0 0.0
        %3706 = vmatprep.subr.mxu0 0.0
        %3707 = vmatpush2.xpose.msra.mxu0 0.0
        %3708 = vmatprep.mubr.f32.mxu0 0.0
        %3709 = vmatmul.mubr.f32.gmra.mxu0 %v3639
        %v3710 = vpop.f32.mrf.mxu0
        %v3711 = vadd.f32 0.0, %v3710
        %v3712 = vpop.f32.mrf.mxu0
        %3713 = vdwg.mxu0
        %v3715 = vsel %vm1092, %v3429, 0
        %v3718 = vsel %vm1092, %v3527, 0
        %3720 = vmatprep.subr.mxu0 0.0
        %3721 = vmatpush1.xpose.msra.mxu0 0.0
        %3722 = vmatprep.subr.mxu0 0.0
        %3723 = vmatpush1.xpose.msra.mxu0 0.0
        %3724 = vmatprep.subr.mxu0 0.0
        %3725 = vmatpush1.xpose.msra.mxu0 0.0
        %3726 = vmatprep.subr.mxu0 0.0
        %3727 = vmatpush1.xpose.msra.mxu0 0.0
        %3728 = vmatprep.subr.mxu0 0.0
        %3729 = vmatpush1.xpose.msra.mxu0 0.0
        %3730 = vmatprep.subr.mxu0 0.0
        %3731 = vmatpush1.xpose.msra.mxu0 0.0
        %3732 = vmatprep.subr.mxu0 0.0
        %3733 = vmatpush1.xpose.msra.mxu0 0.0
        %3734 = vmatprep.subr.mxu0 0.0
        %3735 = vmatpush1.xpose.msra.mxu0 0.0
        %3736 = vmatprep.subr.mxu0 0.0
        %3737 = vmatpush1.xpose.msra.mxu0 0.0
        %3738 = vmatprep.subr.mxu0 0.0
        %3739 = vmatpush1.xpose.msra.mxu0 0.0
        %3740 = vmatprep.subr.mxu0 0.0
        %3741 = vmatpush1.xpose.msra.mxu0 0.0
        %3742 = vmatprep.subr.mxu0 0.0
        %3743 = vmatpush1.xpose.msra.mxu0 0.0
        %3744 = vmatprep.subr.mxu0 0.0
        %3745 = vmatpush1.xpose.msra.mxu0 0.0
        %3746 = vmatprep.subr.mxu0 0.0
        %3747 = vmatpush1.xpose.msra.mxu0 0.0
        %3748 = vmatprep.subr.mxu0 0.0
        %3749 = vmatpush1.xpose.msra.mxu0 0.0
        %3750 = vmatprep.subr.mxu0 0.0
        %3751 = vmatpush1.xpose.msra.mxu0 %v3718
        %3752 = vmatprep.subr.mxu0 0.0
        %3753 = vmatpush2.xpose.msra.mxu0 0.0
        %3754 = vmatprep.subr.mxu0 0.0
        %3755 = vmatpush2.xpose.msra.mxu0 0.0
        %3756 = vmatprep.subr.mxu0 0.0
        %3757 = vmatpush2.xpose.msra.mxu0 0.0
        %3758 = vmatprep.subr.mxu0 0.0
        %3759 = vmatpush2.xpose.msra.mxu0 0.0
        %3760 = vmatprep.subr.mxu0 0.0
        %3761 = vmatpush2.xpose.msra.mxu0 0.0
        %3762 = vmatprep.subr.mxu0 0.0
        %3763 = vmatpush2.xpose.msra.mxu0 0.0
        %3764 = vmatprep.subr.mxu0 0.0
        %3765 = vmatpush2.xpose.msra.mxu0 0.0
        %3766 = vmatprep.subr.mxu0 0.0
        %3767 = vmatpush2.xpose.msra.mxu0 0.0
        %3768 = vmatprep.subr.mxu0 0.0
        %3769 = vmatpush2.xpose.msra.mxu0 0.0
        %3770 = vmatprep.subr.mxu0 0.0
        %3771 = vmatpush2.xpose.msra.mxu0 0.0
        %3772 = vmatprep.subr.mxu0 0.0
        %3773 = vmatpush2.xpose.msra.mxu0 0.0
        %3774 = vmatprep.subr.mxu0 0.0
        %3775 = vmatpush2.xpose.msra.mxu0 0.0
        %3776 = vmatprep.subr.mxu0 0.0
        %3777 = vmatpush2.xpose.msra.mxu0 0.0
        %3778 = vmatprep.subr.mxu0 0.0
        %3779 = vmatpush2.xpose.msra.mxu0 0.0
        %3780 = vmatprep.subr.mxu0 0.0
        %3781 = vmatpush2.xpose.msra.mxu0 0.0
        %3782 = vmatprep.subr.mxu0 0.0
        %3783 = vmatpush2.xpose.msra.mxu0 0.0
        %3784 = vmatprep.mubr.f32.mxu0 0.0
        %3785 = vmatmul.mubr.f32.gmra.mxu0 %v3715
        %v3786 = vpop.f32.mrf.mxu0
        %v3787 = vadd.f32 0.0, %v3786
        %v3788 = vpop.f32.mrf.mxu0
        %3789 = vdwg.mxu0
        %v3791 = vsel %vm1092, %v3434, 0
        %v3794 = vsel %vm1092, %v3532, 0
        %3796 = vmatprep.subr.mxu0 0.0
        %3797 = vmatpush1.xpose.msra.mxu0 0.0
        %3798 = vmatprep.subr.mxu0 0.0
        %3799 = vmatpush1.xpose.msra.mxu0 0.0
        %3800 = vmatprep.subr.mxu0 0.0
        %3801 = vmatpush1.xpose.msra.mxu0 0.0
        %3802 = vmatprep.subr.mxu0 0.0
        %3803 = vmatpush1.xpose.msra.mxu0 0.0
        %3804 = vmatprep.subr.mxu0 0.0
        %3805 = vmatpush1.xpose.msra.mxu0 0.0
        %3806 = vmatprep.subr.mxu0 0.0
        %3807 = vmatpush1.xpose.msra.mxu0 0.0
        %3808 = vmatprep.subr.mxu0 0.0
        %3809 = vmatpush1.xpose.msra.mxu0 0.0
        %3810 = vmatprep.subr.mxu0 0.0
        %3811 = vmatpush1.xpose.msra.mxu0 0.0
        %3812 = vmatprep.subr.mxu0 0.0
        %3813 = vmatpush1.xpose.msra.mxu0 0.0
        %3814 = vmatprep.subr.mxu0 0.0
        %3815 = vmatpush1.xpose.msra.mxu0 0.0
        %3816 = vmatprep.subr.mxu0 0.0
        %3817 = vmatpush1.xpose.msra.mxu0 0.0
        %3818 = vmatprep.subr.mxu0 0.0
        %3819 = vmatpush1.xpose.msra.mxu0 0.0
        %3820 = vmatprep.subr.mxu0 0.0
        %3821 = vmatpush1.xpose.msra.mxu0 0.0
        %3822 = vmatprep.subr.mxu0 0.0
        %3823 = vmatpush1.xpose.msra.mxu0 0.0
        %3824 = vmatprep.subr.mxu0 0.0
        %3825 = vmatpush1.xpose.msra.mxu0 0.0
        %3826 = vmatprep.subr.mxu0 0.0
        %3827 = vmatpush1.xpose.msra.mxu0 %v3794
        %3828 = vmatprep.subr.mxu0 0.0
        %3829 = vmatpush2.xpose.msra.mxu0 0.0
        %3830 = vmatprep.subr.mxu0 0.0
        %3831 = vmatpush2.xpose.msra.mxu0 0.0
        %3832 = vmatprep.subr.mxu0 0.0
        %3833 = vmatpush2.xpose.msra.mxu0 0.0
        %3834 = vmatprep.subr.mxu0 0.0
        %3835 = vmatpush2.xpose.msra.mxu0 0.0
        %3836 = vmatprep.subr.mxu0 0.0
        %3837 = vmatpush2.xpose.msra.mxu0 0.0
        %3838 = vmatprep.subr.mxu0 0.0
        %3839 = vmatpush2.xpose.msra.mxu0 0.0
        %3840 = vmatprep.subr.mxu0 0.0
        %3841 = vmatpush2.xpose.msra.mxu0 0.0
        %3842 = vmatprep.subr.mxu0 0.0
        %3843 = vmatpush2.xpose.msra.mxu0 0.0
        %3844 = vmatprep.subr.mxu0 0.0
        %3845 = vmatpush2.xpose.msra.mxu0 0.0
        %3846 = vmatprep.subr.mxu0 0.0
        %3847 = vmatpush2.xpose.msra.mxu0 0.0
        %3848 = vmatprep.subr.mxu0 0.0
        %3849 = vmatpush2.xpose.msra.mxu0 0.0
        %3850 = vmatprep.subr.mxu0 0.0
        %3851 = vmatpush2.xpose.msra.mxu0 0.0
        %3852 = vmatprep.subr.mxu0 0.0
        %3853 = vmatpush2.xpose.msra.mxu0 0.0
        %3854 = vmatprep.subr.mxu0 0.0
        %3855 = vmatpush2.xpose.msra.mxu0 0.0
        %3856 = vmatprep.subr.mxu0 0.0
        %3857 = vmatpush2.xpose.msra.mxu0 0.0
        %3858 = vmatprep.subr.mxu0 0.0
        %3859 = vmatpush2.xpose.msra.mxu0 0.0
        %3860 = vmatprep.mubr.f32.mxu0 0.0
        %3861 = vmatmul.mubr.f32.gmra.mxu0 %v3791
        %v3862 = vpop.f32.mrf.mxu0
        %v3863 = vadd.f32 0.0, %v3862
        %v3864 = vpop.f32.mrf.mxu0
        %3865 = vdwg.mxu0
        %v3867 = vsel %vm1092, %v3439, 0
        %v3870 = vsel %vm1092, %v3537, 0
        %3872 = vmatprep.subr.mxu0 0.0
        %3873 = vmatpush1.xpose.msra.mxu0 0.0
        %3874 = vmatprep.subr.mxu0 0.0
        %3875 = vmatpush1.xpose.msra.mxu0 0.0
        %3876 = vmatprep.subr.mxu0 0.0
        %3877 = vmatpush1.xpose.msra.mxu0 0.0
        %3878 = vmatprep.subr.mxu0 0.0
        %3879 = vmatpush1.xpose.msra.mxu0 0.0
        %3880 = vmatprep.subr.mxu0 0.0
        %3881 = vmatpush1.xpose.msra.mxu0 0.0
        %3882 = vmatprep.subr.mxu0 0.0
        %3883 = vmatpush1.xpose.msra.mxu0 0.0
        %3884 = vmatprep.subr.mxu0 0.0
        %3885 = vmatpush1.xpose.msra.mxu0 0.0
        %3886 = vmatprep.subr.mxu0 0.0
        %3887 = vmatpush1.xpose.msra.mxu0 0.0
        %3888 = vmatprep.subr.mxu0 0.0
        %3889 = vmatpush1.xpose.msra.mxu0 0.0
        %3890 = vmatprep.subr.mxu0 0.0
        %3891 = vmatpush1.xpose.msra.mxu0 0.0
        %3892 = vmatprep.subr.mxu0 0.0
        %3893 = vmatpush1.xpose.msra.mxu0 0.0
        %3894 = vmatprep.subr.mxu0 0.0
        %3895 = vmatpush1.xpose.msra.mxu0 0.0
        %3896 = vmatprep.subr.mxu0 0.0
        %3897 = vmatpush1.xpose.msra.mxu0 0.0
        %3898 = vmatprep.subr.mxu0 0.0
        %3899 = vmatpush1.xpose.msra.mxu0 0.0
        %3900 = vmatprep.subr.mxu0 0.0
        %3901 = vmatpush1.xpose.msra.mxu0 0.0
        %3902 = vmatprep.subr.mxu0 0.0
        %3903 = vmatpush1.xpose.msra.mxu0 %v3870
        %3904 = vmatprep.subr.mxu0 0.0
        %3905 = vmatpush2.xpose.msra.mxu0 0.0
        %3906 = vmatprep.subr.mxu0 0.0
        %3907 = vmatpush2.xpose.msra.mxu0 0.0
        %3908 = vmatprep.subr.mxu0 0.0
        %3909 = vmatpush2.xpose.msra.mxu0 0.0
        %3910 = vmatprep.subr.mxu0 0.0
        %3911 = vmatpush2.xpose.msra.mxu0 0.0
        %3912 = vmatprep.subr.mxu0 0.0
        %3913 = vmatpush2.xpose.msra.mxu0 0.0
        %3914 = vmatprep.subr.mxu0 0.0
        %3915 = vmatpush2.xpose.msra.mxu0 0.0
        %3916 = vmatprep.subr.mxu0 0.0
        %3917 = vmatpush2.xpose.msra.mxu0 0.0
        %3918 = vmatprep.subr.mxu0 0.0
        %3919 = vmatpush2.xpose.msra.mxu0 0.0
        %3920 = vmatprep.subr.mxu0 0.0
        %3921 = vmatpush2.xpose.msra.mxu0 0.0
        %3922 = vmatprep.subr.mxu0 0.0
        %3923 = vmatpush2.xpose.msra.mxu0 0.0
        %3924 = vmatprep.subr.mxu0 0.0
        %3925 = vmatpush2.xpose.msra.mxu0 0.0
        %3926 = vmatprep.subr.mxu0 0.0
        %3927 = vmatpush2.xpose.msra.mxu0 0.0
        %3928 = vmatprep.subr.mxu0 0.0
        %3929 = vmatpush2.xpose.msra.mxu0 0.0
        %3930 = vmatprep.subr.mxu0 0.0
        %3931 = vmatpush2.xpose.msra.mxu0 0.0
        %3932 = vmatprep.subr.mxu0 0.0
        %3933 = vmatpush2.xpose.msra.mxu0 0.0
        %3934 = vmatprep.subr.mxu0 0.0
        %3935 = vmatpush2.xpose.msra.mxu0 0.0
        %3936 = vmatprep.mubr.f32.mxu0 0.0
        %3937 = vmatmul.mubr.f32.gmra.mxu0 %v3867
        %v3938 = vpop.f32.mrf.mxu0
        %v3939 = vadd.f32 0.0, %v3938
        %v3940 = vpop.f32.mrf.mxu0
        %3941 = vdwg.mxu0
        %v3942 = vmul.f32 %v3711, 0.25
        %v3943 = vmul.f32 %v3787, 0.25
        %v3944 = vmul.f32 %v3863, 0.25
        %v3945 = vmul.f32 %v3939, 0.25
        %v3946 = vadd.f32 %v3942, %v1404
        %v3947 = vadd.f32 %v3943, %v1408
        %v3948 = vadd.f32 %v3944, %v1412
        %v3949 = vadd.f32 %v3945, %v1416
        %v3950 = vsel %vm1425, %v3946, -inf
        %3951 = vmax.xlane.f32.xlu0 %v3950
        %v3952 = vpop.xlane.xlu0 %3951
        %v3953 = vsel %vm1425, %v3947, -inf
        %3954 = vmax.xlane.f32.xlu0 %v3953
        %v3955 = vpop.xlane.xlu0 %3954
        %v3956 = vsel %vm1425, %v3948, -inf
        %3957 = vmax.xlane.f32.xlu0 %v3956
        %v3958 = vpop.xlane.xlu0 %3957
        %v3959 = vsel %vm1425, %v3949, -inf
        %3960 = vmax.xlane.f32.xlu0 %v3959
        %v3961 = vpop.xlane.xlu0 %3960
        %v3962 = vsub.f32 %v3946, %v3952
        %v3963 = vsub.f32 %v3947, %v3955
        %v3964 = vsub.f32 %v3948, %v3958
        %v3965 = vsub.f32 %v3949, %v3961
        %v3966 = vmul.f32 %v3962, 1.442695
        %v3967 = vpow.pop %v3966
        %v3968 = vmul.f32 %v3963, 1.442695
        %v3969 = vpow.pop %v3968
        %v3970 = vmul.f32 %v3964, 1.442695
        %v3971 = vpow.pop %v3970
        %v3972 = vmul.f32 %v3965, 1.442695
        %v3973 = vpow.pop %v3972
        %v3974 = vsel %vm1425, %v3967, 0.0
        %3975 = vadd.xlane.f32.xlu0 %v3974
        %v3976 = vpop.xlane.xlu0 %3975
        %v3977 = vsel %vm1425, %v3969, 0.0
        %3978 = vadd.xlane.f32.xlu0 %v3977
        %v3979 = vpop.xlane.xlu0 %3978
        %v3980 = vsel %vm1425, %v3971, 0.0
        %3981 = vadd.xlane.f32.xlu0 %v3980
        %v3982 = vpop.xlane.xlu0 %3981
        %v3983 = vsel %vm1425, %v3973, 0.0
        %3984 = vadd.xlane.f32.xlu0 %v3983
        %v3985 = vpop.xlane.xlu0 %3984
        %v3986 = vrcp.pop %v3976
        %v3987 = vrcp.pop %v3979
        %v3988 = vrcp.pop %v3982
        %v3989 = vrcp.pop %v3985
        %v3990 = vmul.f32 %v3967, %v3986
        %v3991 = vmul.f32 %v3969, %v3987
        %v3992 = vmul.f32 %v3971, %v3988
        %v3993 = vmul.f32 %v3973, %v3989
        %v3995 = vsel %vm1425, %v3990, 0
        %3997 = vmatprep.subr.mxu0 0.0
        %3998 = vmatpush1.msra.mxu0 0.0
        %3999 = vmatprep.subr.mxu0 0.0
        %4000 = vmatpush1.msra.mxu0 0.0
        %4001 = vmatprep.subr.mxu0 0.0
        %4002 = vmatpush1.msra.mxu0 0.0
        %4003 = vmatprep.subr.mxu0 0.0
        %4004 = vmatpush1.msra.mxu0 0.0
        %4005 = vmatprep.subr.mxu0 0.0
        %4006 = vmatpush1.msra.mxu0 0.0
        %4007 = vmatprep.subr.mxu0 0.0
        %4008 = vmatpush1.msra.mxu0 0.0
        %4009 = vmatprep.subr.mxu0 0.0
        %4010 = vmatpush1.msra.mxu0 0.0
        %4011 = vmatprep.subr.mxu0 0.0
        %4012 = vmatpush1.msra.mxu0 0.0
        %4013 = vmatprep.subr.mxu0 0.0
        %4014 = vmatpush1.msra.mxu0 0.0
        %4015 = vmatprep.subr.mxu0 0.0
        %4016 = vmatpush1.msra.mxu0 0.0
        %4017 = vmatprep.subr.mxu0 0.0
        %4018 = vmatpush1.msra.mxu0 0.0
        %4019 = vmatprep.subr.mxu0 0.0
        %4020 = vmatpush1.msra.mxu0 0.0
        %4021 = vmatprep.subr.mxu0 0.0
        %4022 = vmatpush1.msra.mxu0 0.0
        %4023 = vmatprep.subr.mxu0 0.0
        %4024 = vmatpush1.msra.mxu0 0.0
        %4025 = vmatprep.subr.mxu0 0.0
        %4026 = vmatpush1.msra.mxu0 0.0
        %4027 = vmatprep.subr.mxu0 0.0
        %4028 = vmatpush1.msra.mxu0 %v3620
        %4029 = vmatprep.subr.mxu0 0.0
        %4030 = vmatpush2.msra.mxu0 0.0
        %4031 = vmatprep.subr.mxu0 0.0
        %4032 = vmatpush2.msra.mxu0 0.0
        %4033 = vmatprep.subr.mxu0 0.0
        %4034 = vmatpush2.msra.mxu0 0.0
        %4035 = vmatprep.subr.mxu0 0.0
        %4036 = vmatpush2.msra.mxu0 0.0
        %4037 = vmatprep.subr.mxu0 0.0
        %4038 = vmatpush2.msra.mxu0 0.0
        %4039 = vmatprep.subr.mxu0 0.0
        %4040 = vmatpush2.msra.mxu0 0.0
        %4041 = vmatprep.subr.mxu0 0.0
        %4042 = vmatpush2.msra.mxu0 0.0
        %4043 = vmatprep.subr.mxu0 0.0
        %4044 = vmatpush2.msra.mxu0 0.0
        %4045 = vmatprep.subr.mxu0 0.0
        %4046 = vmatpush2.msra.mxu0 0.0
        %4047 = vmatprep.subr.mxu0 0.0
        %4048 = vmatpush2.msra.mxu0 0.0
        %4049 = vmatprep.subr.mxu0 0.0
        %4050 = vmatpush2.msra.mxu0 0.0
        %4051 = vmatprep.subr.mxu0 0.0
        %4052 = vmatpush2.msra.mxu0 0.0
        %4053 = vmatprep.subr.mxu0 0.0
        %4054 = vmatpush2.msra.mxu0 0.0
        %4055 = vmatprep.subr.mxu0 0.0
        %4056 = vmatpush2.msra.mxu0 0.0
        %4057 = vmatprep.subr.mxu0 0.0
        %4058 = vmatpush2.msra.mxu0 0.0
        %4059 = vmatprep.subr.mxu0 0.0
        %4060 = vmatpush2.msra.mxu0 0.0
        %4061 = vmatprep.mubr.f32.mxu0 0.0
        %4062 = vmatmul.mubr.f32.gmra.mxu0 %v3995
        %v4063 = vpop.f32.mrf.mxu0
        %v4064 = vadd.f32 0.0, %v4063
        %v4065 = vpop.f32.mrf.mxu0
        %4066 = vdwg.mxu0
        %v4068 = vsel %vm1425, %v3991, 0
        %4070 = vmatprep.subr.mxu0 0.0
        %4071 = vmatpush1.msra.mxu0 0.0
        %4072 = vmatprep.subr.mxu0 0.0
        %4073 = vmatpush1.msra.mxu0 0.0
        %4074 = vmatprep.subr.mxu0 0.0
        %4075 = vmatpush1.msra.mxu0 0.0
        %4076 = vmatprep.subr.mxu0 0.0
        %4077 = vmatpush1.msra.mxu0 0.0
        %4078 = vmatprep.subr.mxu0 0.0
        %4079 = vmatpush1.msra.mxu0 0.0
        %4080 = vmatprep.subr.mxu0 0.0
        %4081 = vmatpush1.msra.mxu0 0.0
        %4082 = vmatprep.subr.mxu0 0.0
        %4083 = vmatpush1.msra.mxu0 0.0
        %4084 = vmatprep.subr.mxu0 0.0
        %4085 = vmatpush1.msra.mxu0 0.0
        %4086 = vmatprep.subr.mxu0 0.0
        %4087 = vmatpush1.msra.mxu0 0.0
        %4088 = vmatprep.subr.mxu0 0.0
        %4089 = vmatpush1.msra.mxu0 0.0
        %4090 = vmatprep.subr.mxu0 0.0
        %4091 = vmatpush1.msra.mxu0 0.0
        %4092 = vmatprep.subr.mxu0 0.0
        %4093 = vmatpush1.msra.mxu0 0.0
        %4094 = vmatprep.subr.mxu0 0.0
        %4095 = vmatpush1.msra.mxu0 0.0
        %4096 = vmatprep.subr.mxu0 0.0
        %4097 = vmatpush1.msra.mxu0 0.0
        %4098 = vmatprep.subr.mxu0 0.0
        %4099 = vmatpush1.msra.mxu0 0.0
        %4100 = vmatprep.subr.mxu0 0.0
        %4101 = vmatpush1.msra.mxu0 %v3625
        %4102 = vmatprep.subr.mxu0 0.0
        %4103 = vmatpush2.msra.mxu0 0.0
        %4104 = vmatprep.subr.mxu0 0.0
        %4105 = vmatpush2.msra.mxu0 0.0
        %4106 = vmatprep.subr.mxu0 0.0
        %4107 = vmatpush2.msra.mxu0 0.0
        %4108 = vmatprep.subr.mxu0 0.0
        %4109 = vmatpush2.msra.mxu0 0.0
        %4110 = vmatprep.subr.mxu0 0.0
        %4111 = vmatpush2.msra.mxu0 0.0
        %4112 = vmatprep.subr.mxu0 0.0
        %4113 = vmatpush2.msra.mxu0 0.0
        %4114 = vmatprep.subr.mxu0 0.0
        %4115 = vmatpush2.msra.mxu0 0.0
        %4116 = vmatprep.subr.mxu0 0.0
        %4117 = vmatpush2.msra.mxu0 0.0
        %4118 = vmatprep.subr.mxu0 0.0
        %4119 = vmatpush2.msra.mxu0 0.0
        %4120 = vmatprep.subr.mxu0 0.0
        %4121 = vmatpush2.msra.mxu0 0.0
        %4122 = vmatprep.subr.mxu0 0.0
        %4123 = vmatpush2.msra.mxu0 0.0
        %4124 = vmatprep.subr.mxu0 0.0
        %4125 = vmatpush2.msra.mxu0 0.0
        %4126 = vmatprep.subr.mxu0 0.0
        %4127 = vmatpush2.msra.mxu0 0.0
        %4128 = vmatprep.subr.mxu0 0.0
        %4129 = vmatpush2.msra.mxu0 0.0
        %4130 = vmatprep.subr.mxu0 0.0
        %4131 = vmatpush2.msra.mxu0 0.0
        %4132 = vmatprep.subr.mxu0 0.0
        %4133 = vmatpush2.msra.mxu0 0.0
        %4134 = vmatprep.mubr.f32.mxu0 0.0
        %4135 = vmatmul.mubr.f32.gmra.mxu0 %v4068
        %v4136 = vpop.f32.mrf.mxu0
        %v4137 = vadd.f32 0.0, %v4136
        %v4138 = vpop.f32.mrf.mxu0
        %4139 = vdwg.mxu0
        %v4141 = vsel %vm1425, %v3992, 0
        %4143 = vmatprep.subr.mxu0 0.0
        %4144 = vmatpush1.msra.mxu0 0.0
        %4145 = vmatprep.subr.mxu0 0.0
        %4146 = vmatpush1.msra.mxu0 0.0
        %4147 = vmatprep.subr.mxu0 0.0
        %4148 = vmatpush1.msra.mxu0 0.0
        %4149 = vmatprep.subr.mxu0 0.0
        %4150 = vmatpush1.msra.mxu0 0.0
        %4151 = vmatprep.subr.mxu0 0.0
        %4152 = vmatpush1.msra.mxu0 0.0
        %4153 = vmatprep.subr.mxu0 0.0
        %4154 = vmatpush1.msra.mxu0 0.0
        %4155 = vmatprep.subr.mxu0 0.0
        %4156 = vmatpush1.msra.mxu0 0.0
        %4157 = vmatprep.subr.mxu0 0.0
        %4158 = vmatpush1.msra.mxu0 0.0
        %4159 = vmatprep.subr.mxu0 0.0
        %4160 = vmatpush1.msra.mxu0 0.0
        %4161 = vmatprep.subr.mxu0 0.0
        %4162 = vmatpush1.msra.mxu0 0.0
        %4163 = vmatprep.subr.mxu0 0.0
        %4164 = vmatpush1.msra.mxu0 0.0
        %4165 = vmatprep.subr.mxu0 0.0
        %4166 = vmatpush1.msra.mxu0 0.0
        %4167 = vmatprep.subr.mxu0 0.0
        %4168 = vmatpush1.msra.mxu0 0.0
        %4169 = vmatprep.subr.mxu0 0.0
        %4170 = vmatpush1.msra.mxu0 0.0
        %4171 = vmatprep.subr.mxu0 0.0
        %4172 = vmatpush1.msra.mxu0 0.0
        %4173 = vmatprep.subr.mxu0 0.0
        %4174 = vmatpush1.msra.mxu0 %v3630
        %4175 = vmatprep.subr.mxu0 0.0
        %4176 = vmatpush2.msra.mxu0 0.0
        %4177 = vmatprep.subr.mxu0 0.0
        %4178 = vmatpush2.msra.mxu0 0.0
        %4179 = vmatprep.subr.mxu0 0.0
        %4180 = vmatpush2.msra.mxu0 0.0
        %4181 = vmatprep.subr.mxu0 0.0
        %4182 = vmatpush2.msra.mxu0 0.0
        %4183 = vmatprep.subr.mxu0 0.0
        %4184 = vmatpush2.msra.mxu0 0.0
        %4185 = vmatprep.subr.mxu0 0.0
        %4186 = vmatpush2.msra.mxu0 0.0
        %4187 = vmatprep.subr.mxu0 0.0
        %4188 = vmatpush2.msra.mxu0 0.0
        %4189 = vmatprep.subr.mxu0 0.0
        %4190 = vmatpush2.msra.mxu0 0.0
        %4191 = vmatprep.subr.mxu0 0.0
        %4192 = vmatpush2.msra.mxu0 0.0
        %4193 = vmatprep.subr.mxu0 0.0
        %4194 = vmatpush2.msra.mxu0 0.0
        %4195 = vmatprep.subr.mxu0 0.0
        %4196 = vmatpush2.msra.mxu0 0.0
        %4197 = vmatprep.subr.mxu0 0.0
        %4198 = vmatpush2.msra.mxu0 0.0
        %4199 = vmatprep.subr.mxu0 0.0
        %4200 = vmatpush2.msra.mxu0 0.0
        %4201 = vmatprep.subr.mxu0 0.0
        %4202 = vmatpush2.msra.mxu0 0.0
        %4203 = vmatprep.subr.mxu0 0.0
        %4204 = vmatpush2.msra.mxu0 0.0
        %4205 = vmatprep.subr.mxu0 0.0
        %4206 = vmatpush2.msra.mxu0 0.0
        %4207 = vmatprep.mubr.f32.mxu0 0.0
        %4208 = vmatmul.mubr.f32.gmra.mxu0 %v4141
        %v4209 = vpop.f32.mrf.mxu0
        %v4210 = vadd.f32 0.0, %v4209
        %v4211 = vpop.f32.mrf.mxu0
        %4212 = vdwg.mxu0
        %v4214 = vsel %vm1425, %v3993, 0
        %4216 = vmatprep.subr.mxu0 0.0
        %4217 = vmatpush1.msra.mxu0 0.0
        %4218 = vmatprep.subr.mxu0 0.0
        %4219 = vmatpush1.msra.mxu0 0.0
        %4220 = vmatprep.subr.mxu0 0.0
        %4221 = vmatpush1.msra.mxu0 0.0
        %4222 = vmatprep.subr.mxu0 0.0
        %4223 = vmatpush1.msra.mxu0 0.0
        %4224 = vmatprep.subr.mxu0 0.0
        %4225 = vmatpush1.msra.mxu0 0.0
        %4226 = vmatprep.subr.mxu0 0.0
        %4227 = vmatpush1.msra.mxu0 0.0
        %4228 = vmatprep.subr.mxu0 0.0
        %4229 = vmatpush1.msra.mxu0 0.0
        %4230 = vmatprep.subr.mxu0 0.0
        %4231 = vmatpush1.msra.mxu0 0.0
        %4232 = vmatprep.subr.mxu0 0.0
        %4233 = vmatpush1.msra.mxu0 0.0
        %4234 = vmatprep.subr.mxu0 0.0
        %4235 = vmatpush1.msra.mxu0 0.0
        %4236 = vmatprep.subr.mxu0 0.0
        %4237 = vmatpush1.msra.mxu0 0.0
        %4238 = vmatprep.subr.mxu0 0.0
        %4239 = vmatpush1.msra.mxu0 0.0
        %4240 = vmatprep.subr.mxu0 0.0
        %4241 = vmatpush1.msra.mxu0 0.0
        %4242 = vmatprep.subr.mxu0 0.0
        %4243 = vmatpush1.msra.mxu0 0.0
        %4244 = vmatprep.subr.mxu0 0.0
        %4245 = vmatpush1.msra.mxu0 0.0
        %4246 = vmatprep.subr.mxu0 0.0
        %4247 = vmatpush1.msra.mxu0 %v3635
        %4248 = vmatprep.subr.mxu0 0.0
        %4249 = vmatpush2.msra.mxu0 0.0
        %4250 = vmatprep.subr.mxu0 0.0
        %4251 = vmatpush2.msra.mxu0 0.0
        %4252 = vmatprep.subr.mxu0 0.0
        %4253 = vmatpush2.msra.mxu0 0.0
        %4254 = vmatprep.subr.mxu0 0.0
        %4255 = vmatpush2.msra.mxu0 0.0
        %4256 = vmatprep.subr.mxu0 0.0
        %4257 = vmatpush2.msra.mxu0 0.0
        %4258 = vmatprep.subr.mxu0 0.0
        %4259 = vmatpush2.msra.mxu0 0.0
        %4260 = vmatprep.subr.mxu0 0.0
        %4261 = vmatpush2.msra.mxu0 0.0
        %4262 = vmatprep.subr.mxu0 0.0
        %4263 = vmatpush2.msra.mxu0 0.0
        %4264 = vmatprep.subr.mxu0 0.0
        %4265 = vmatpush2.msra.mxu0 0.0
        %4266 = vmatprep.subr.mxu0 0.0
        %4267 = vmatpush2.msra.mxu0 0.0
        %4268 = vmatprep.subr.mxu0 0.0
        %4269 = vmatpush2.msra.mxu0 0.0
        %4270 = vmatprep.subr.mxu0 0.0
        %4271 = vmatpush2.msra.mxu0 0.0
        %4272 = vmatprep.subr.mxu0 0.0
        %4273 = vmatpush2.msra.mxu0 0.0
        %4274 = vmatprep.subr.mxu0 0.0
        %4275 = vmatpush2.msra.mxu0 0.0
        %4276 = vmatprep.subr.mxu0 0.0
        %4277 = vmatpush2.msra.mxu0 0.0
        %4278 = vmatprep.subr.mxu0 0.0
        %4279 = vmatpush2.msra.mxu0 0.0
        %4280 = vmatprep.mubr.f32.mxu0 0.0
        %4281 = vmatmul.mubr.f32.gmra.mxu0 %v4214
        %v4282 = vpop.f32.mrf.mxu0
        %v4283 = vadd.f32 0.0, %v4282
        %v4284 = vpop.f32.mrf.mxu0
        %4285 = vdwg.mxu0
        %s4286 = scalar_lea.vmem %s6, 32
        %v4287 = vld [vmem:[%s4286] sm:$0xff]
        %v4288 = vld [vmem:[%s4286 + $0x8] sm:$0xff]
        %v4290 = vsel %vm1092, %v4064, 0
        %v4293 = vsel %vm1092, %v4137, 0
        %v4296 = vsel %vm1092, %v4210, 0
        %v4299 = vsel %vm1092, %v4283, 0
        %4301 = vmatprep.subr.mxu0 0.0
        %4302 = vmatpush1.msra.mxu0 0.0
        %4303 = vmatprep.subr.mxu0 0.0
        %4304 = vmatpush1.msra.mxu0 0.0
        %4305 = vmatprep.subr.mxu0 0.0
        %4306 = vmatpush1.msra.mxu0 0.0
        %4307 = vmatprep.subr.mxu0 0.0
        %4308 = vmatpush1.msra.mxu0 0.0
        %4309 = vmatprep.subr.mxu0 0.0
        %4310 = vmatpush1.msra.mxu0 0.0
        %4311 = vmatprep.subr.mxu0 0.0
        %4312 = vmatpush1.msra.mxu0 0.0
        %4313 = vmatprep.subr.mxu0 0.0
        %4314 = vmatpush1.msra.mxu0 0.0
        %4315 = vmatprep.subr.mxu0 0.0
        %4316 = vmatpush1.msra.mxu0 0.0
        %4317 = vmatprep.subr.mxu0 0.0
        %4318 = vmatpush1.msra.mxu0 0.0
        %4319 = vmatprep.subr.mxu0 0.0
        %4320 = vmatpush1.msra.mxu0 0.0
        %4321 = vmatprep.subr.mxu0 0.0
        %4322 = vmatpush1.msra.mxu0 0.0
        %4323 = vmatprep.subr.mxu0 0.0
        %4324 = vmatpush1.msra.mxu0 0.0
        %4325 = vmatprep.subr.mxu0 0.0
        %4326 = vmatpush1.msra.mxu0 0.0
        %4327 = vmatprep.subr.mxu0 0.0
        %4328 = vmatpush1.msra.mxu0 0.0
        %4329 = vmatprep.subr.mxu0 0.0
        %4330 = vmatpush1.msra.mxu0 %v4288
        %4331 = vmatprep.subr.mxu0 0.0
        %4332 = vmatpush1.msra.mxu0 %v4287
        %4333 = vmatprep.subr.mxu0 0.0
        %4334 = vmatpush2.msra.mxu0 0.0
        %4335 = vmatprep.subr.mxu0 0.0
        %4336 = vmatpush2.msra.mxu0 0.0
        %4337 = vmatprep.subr.mxu0 0.0
        %4338 = vmatpush2.msra.mxu0 0.0
        %4339 = vmatprep.subr.mxu0 0.0
        %4340 = vmatpush2.msra.mxu0 0.0
        %4341 = vmatprep.subr.mxu0 0.0
        %4342 = vmatpush2.msra.mxu0 0.0
        %4343 = vmatprep.subr.mxu0 0.0
        %4344 = vmatpush2.msra.mxu0 0.0
        %4345 = vmatprep.subr.mxu0 0.0
        %4346 = vmatpush2.msra.mxu0 0.0
        %4347 = vmatprep.subr.mxu0 0.0
        %4348 = vmatpush2.msra.mxu0 0.0
        %4349 = vmatprep.subr.mxu0 0.0
        %4350 = vmatpush2.msra.mxu0 0.0
        %4351 = vmatprep.subr.mxu0 0.0
        %4352 = vmatpush2.msra.mxu0 0.0
        %4353 = vmatprep.subr.mxu0 0.0
        %4354 = vmatpush2.msra.mxu0 0.0
        %4355 = vmatprep.subr.mxu0 0.0
        %4356 = vmatpush2.msra.mxu0 0.0
        %4357 = vmatprep.subr.mxu0 0.0
        %4358 = vmatpush2.msra.mxu0 0.0
        %4359 = vmatprep.subr.mxu0 0.0
        %4360 = vmatpush2.msra.mxu0 0.0
        %4361 = vmatprep.subr.mxu0 0.0
        %4362 = vmatpush2.msra.mxu0 0.0
        %4363 = vmatprep.subr.mxu0 0.0
        %4364 = vmatpush2.msra.mxu0 0.0
        %4365 = vmatprep.mubr.f32.mxu0 0.0
        %4366 = vmatmul.mubr.f32.gmra.mxu0 %v4290
        %v4367 = vpop.f32.mrf.mxu0
        %v4368 = vadd.f32 0.0, %v4367
        %v4369 = vpop.f32.mrf.mxu0
        %4370 = vmatprep.mubr.f32.mxu0 0.0
        %4371 = vmatmul.mubr.f32.gmra.mxu0 %v4293
        %v4372 = vpop.f32.mrf.mxu0
        %v4373 = vadd.f32 0.0, %v4372
        %v4374 = vpop.f32.mrf.mxu0
        %4375 = vmatprep.mubr.f32.mxu0 0.0
        %4376 = vmatmul.mubr.f32.gmra.mxu0 %v4296
        %v4377 = vpop.f32.mrf.mxu0
        %v4378 = vadd.f32 0.0, %v4377
        %v4379 = vpop.f32.mrf.mxu0
        %4380 = vmatprep.mubr.f32.mxu0 0.0
        %4381 = vmatmul.mubr.f32.gmra.mxu0 %v4299
        %v4382 = vpop.f32.mrf.mxu0
        %v4383 = vadd.f32 0.0, %v4382
        %v4384 = vpop.f32.mrf.mxu0
        %4385 = vdwg.mxu0
        %v4387 = vlaneseq
        %v4388 = vshrl.u32 %v4387, 7
        %v4389 = vsub.s32 0, %v4388
        %v4390 = vrot.slane %v3331, %v4389
        %v4392 = vadd.f32 %v4390, %v4368
        %v4393 = vadd.f32 %v4390, %v4373
        %v4394 = vadd.f32 %v4390, %v4378
        %v4395 = vadd.f32 %v4390, %v4383
        %s4396 = scalar_lea.vmem %s4, 288
        %v4397 = vld [vmem:[%s4396] sm:$0xff]
        %v4398 = vld [vmem:[%s4396 + $0x8] sm:$0xff]
        %v4399 = vld [vmem:[%s4396 + $0x10] sm:$0xff]
        %v4400 = vld [vmem:[%s4396 + $0x18] sm:$0xff]
        %s4401 = scalar_lea.vmem %s5, 9
        %v4402 = vld [vmem:[%s4401] sm:$0x1]
        %v4404 = vlaneseq
        %v4405 = vshrl.u32 %v4404, 7
        %v4406 = vsub.s32 0, %v4405
        %v4407 = vrot.slane %v4402, %v4406
        %4409 = vmatprep.subr.mxu0 0.0
        %4410 = vmatpush1.msra.mxu0 0.0
        %4411 = vmatprep.subr.mxu0 0.0
        %4412 = vmatpush1.msra.mxu0 0.0
        %4413 = vmatprep.subr.mxu0 0.0
        %4414 = vmatpush1.msra.mxu0 0.0
        %4415 = vmatprep.subr.mxu0 0.0
        %4416 = vmatpush1.msra.mxu0 0.0
        %4417 = vmatprep.subr.mxu0 0.0
        %4418 = vmatpush1.msra.mxu0 0.0
        %4419 = vmatprep.subr.mxu0 0.0
        %4420 = vmatpush1.msra.mxu0 0.0
        %4421 = vmatprep.subr.mxu0 0.0
        %4422 = vmatpush1.msra.mxu0 0.0
        %4423 = vmatprep.subr.mxu0 0.0
        %4424 = vmatpush1.msra.mxu0 0.0
        %4425 = vmatprep.subr.mxu0 0.0
        %4426 = vmatpush1.msra.mxu0 0.0
        %4427 = vmatprep.subr.mxu0 0.0
        %4428 = vmatpush1.msra.mxu0 0.0
        %4429 = vmatprep.subr.mxu0 0.0
        %4430 = vmatpush1.msra.mxu0 0.0
        %4431 = vmatprep.subr.mxu0 0.0
        %4432 = vmatpush1.msra.mxu0 0.0
        %4433 = vmatprep.subr.mxu0 0.0
        %4434 = vmatpush1.msra.mxu0 %v4400
        %4435 = vmatprep.subr.mxu0 0.0
        %4436 = vmatpush1.msra.mxu0 %v4399
        %4437 = vmatprep.subr.mxu0 0.0
        %4438 = vmatpush1.msra.mxu0 %v4398
        %4439 = vmatprep.subr.mxu0 0.0
        %4440 = vmatpush1.msra.mxu0 %v4397
        %4441 = vmatprep.subr.mxu0 0.0
        %4442 = vmatpush2.msra.mxu0 0.0
        %4443 = vmatprep.subr.mxu0 0.0
        %4444 = vmatpush2.msra.mxu0 0.0
        %4445 = vmatprep.subr.mxu0 0.0
        %4446 = vmatpush2.msra.mxu0 0.0
        %4447 = vmatprep.subr.mxu0 0.0
        %4448 = vmatpush2.msra.mxu0 0.0
        %4449 = vmatprep.subr.mxu0 0.0
        %4450 = vmatpush2.msra.mxu0 0.0
        %4451 = vmatprep.subr.mxu0 0.0
        %4452 = vmatpush2.msra.mxu0 0.0
        %4453 = vmatprep.subr.mxu0 0.0
        %4454 = vmatpush2.msra.mxu0 0.0
        %4455 = vmatprep.subr.mxu0 0.0
        %4456 = vmatpush2.msra.mxu0 0.0
        %4457 = vmatprep.subr.mxu0 0.0
        %4458 = vmatpush2.msra.mxu0 0.0
        %4459 = vmatprep.subr.mxu0 0.0
        %4460 = vmatpush2.msra.mxu0 0.0
        %4461 = vmatprep.subr.mxu0 0.0
        %4462 = vmatpush2.msra.mxu0 0.0
        %4463 = vmatprep.subr.mxu0 0.0
        %4464 = vmatpush2.msra.mxu0 0.0
        %4465 = vmatprep.subr.mxu0 0.0
        %4466 = vmatpush2.msra.mxu0 0.0
        %4467 = vmatprep.subr.mxu0 0.0
        %4468 = vmatpush2.msra.mxu0 0.0
        %4469 = vmatprep.subr.mxu0 0.0
        %4470 = vmatpush2.msra.mxu0 0.0
        %4471 = vmatprep.subr.mxu0 0.0
        %4472 = vmatpush2.msra.mxu0 0.0
        %4473 = vmatprep.mubr.f32.mxu0 0.0
        %4474 = vmatmul.mubr.f32.gmra.mxu0 %v3346
        %v4475 = vpop.f32.mrf.mxu0
        %v4476 = vadd.f32 %v4407, %v4475
        %v4477 = vpop.f32.mrf.mxu0
        %4478 = vmatprep.mubr.f32.mxu0 0.0
        %4479 = vmatmul.mubr.f32.gmra.mxu0 %v3349
        %v4480 = vpop.f32.mrf.mxu0
        %v4481 = vadd.f32 %v4407, %v4480
        %v4482 = vpop.f32.mrf.mxu0
        %4483 = vmatprep.mubr.f32.mxu0 0.0
        %4484 = vmatmul.mubr.f32.gmra.mxu0 %v3352
        %v4485 = vpop.f32.mrf.mxu0
        %v4486 = vadd.f32 %v4407, %v4485
        %v4487 = vpop.f32.mrf.mxu0
        %4488 = vmatprep.mubr.f32.mxu0 0.0
        %4489 = vmatmul.mubr.f32.gmra.mxu0 %v3355
        %v4490 = vpop.f32.mrf.mxu0
        %v4491 = vadd.f32 %v4407, %v4490
        %v4492 = vpop.f32.mrf.mxu0
        %4493 = vdwg.mxu0
        %s4494 = scalar_lea.vmem %s4, 320
        %v4495 = vld [vmem:[%s4494] sm:$0xff]
        %v4496 = vld [vmem:[%s4494 + $0x8] sm:$0xff]
        %v4497 = vld [vmem:[%s4494 + $0x10] sm:$0xff]
        %v4498 = vld [vmem:[%s4494 + $0x18] sm:$0xff]
        %s4499 = scalar_lea.vmem %s5, 10
        %v4500 = vld [vmem:[%s4499] sm:$0x1]
        %v4502 = vlaneseq
        %v4503 = vshrl.u32 %v4502, 7
        %v4504 = vsub.s32 0, %v4503
        %v4505 = vrot.slane %v4500, %v4504
        %4507 = vmatprep.subr.mxu0 0.0
        %4508 = vmatpush1.msra.mxu0 0.0
        %4509 = vmatprep.subr.mxu0 0.0
        %4510 = vmatpush1.msra.mxu0 0.0
        %4511 = vmatprep.subr.mxu0 0.0
        %4512 = vmatpush1.msra.mxu0 0.0
        %4513 = vmatprep.subr.mxu0 0.0
        %4514 = vmatpush1.msra.mxu0 0.0
        %4515 = vmatprep.subr.mxu0 0.0
        %4516 = vmatpush1.msra.mxu0 0.0
        %4517 = vmatprep.subr.mxu0 0.0
        %4518 = vmatpush1.msra.mxu0 0.0
        %4519 = vmatprep.subr.mxu0 0.0
        %4520 = vmatpush1.msra.mxu0 0.0
        %4521 = vmatprep.subr.mxu0 0.0
        %4522 = vmatpush1.msra.mxu0 0.0
        %4523 = vmatprep.subr.mxu0 0.0
        %4524 = vmatpush1.msra.mxu0 0.0
        %4525 = vmatprep.subr.mxu0 0.0
        %4526 = vmatpush1.msra.mxu0 0.0
        %4527 = vmatprep.subr.mxu0 0.0
        %4528 = vmatpush1.msra.mxu0 0.0
        %4529 = vmatprep.subr.mxu0 0.0
        %4530 = vmatpush1.msra.mxu0 0.0
        %4531 = vmatprep.subr.mxu0 0.0
        %4532 = vmatpush1.msra.mxu0 %v4498
        %4533 = vmatprep.subr.mxu0 0.0
        %4534 = vmatpush1.msra.mxu0 %v4497
        %4535 = vmatprep.subr.mxu0 0.0
        %4536 = vmatpush1.msra.mxu0 %v4496
        %4537 = vmatprep.subr.mxu0 0.0
        %4538 = vmatpush1.msra.mxu0 %v4495
        %4539 = vmatprep.subr.mxu0 0.0
        %4540 = vmatpush2.msra.mxu0 0.0
        %4541 = vmatprep.subr.mxu0 0.0
        %4542 = vmatpush2.msra.mxu0 0.0
        %4543 = vmatprep.subr.mxu0 0.0
        %4544 = vmatpush2.msra.mxu0 0.0
        %4545 = vmatprep.subr.mxu0 0.0
        %4546 = vmatpush2.msra.mxu0 0.0
        %4547 = vmatprep.subr.mxu0 0.0
        %4548 = vmatpush2.msra.mxu0 0.0
        %4549 = vmatprep.subr.mxu0 0.0
        %4550 = vmatpush2.msra.mxu0 0.0
        %4551 = vmatprep.subr.mxu0 0.0
        %4552 = vmatpush2.msra.mxu0 0.0
        %4553 = vmatprep.subr.mxu0 0.0
        %4554 = vmatpush2.msra.mxu0 0.0
        %4555 = vmatprep.subr.mxu0 0.0
        %4556 = vmatpush2.msra.mxu0 0.0
        %4557 = vmatprep.subr.mxu0 0.0
        %4558 = vmatpush2.msra.mxu0 0.0
        %4559 = vmatprep.subr.mxu0 0.0
        %4560 = vmatpush2.msra.mxu0 0.0
        %4561 = vmatprep.subr.mxu0 0.0
        %4562 = vmatpush2.msra.mxu0 0.0
        %4563 = vmatprep.subr.mxu0 0.0
        %4564 = vmatpush2.msra.mxu0 0.0
        %4565 = vmatprep.subr.mxu0 0.0
        %4566 = vmatpush2.msra.mxu0 0.0
        %4567 = vmatprep.subr.mxu0 0.0
        %4568 = vmatpush2.msra.mxu0 0.0
        %4569 = vmatprep.subr.mxu0 0.0
        %4570 = vmatpush2.msra.mxu0 0.0
        %4571 = vmatprep.mubr.f32.mxu0 0.0
        %4572 = vmatmul.mubr.f32.gmra.mxu0 %v3346
        %v4573 = vpop.f32.mrf.mxu0
        %v4574 = vadd.f32 %v4505, %v4573
        %v4575 = vpop.f32.mrf.mxu0
        %4576 = vmatprep.mubr.f32.mxu0 0.0
        %4577 = vmatmul.mubr.f32.gmra.mxu0 %v3349
        %v4578 = vpop.f32.mrf.mxu0
        %v4579 = vadd.f32 %v4505, %v4578
        %v4580 = vpop.f32.mrf.mxu0
        %4581 = vmatprep.mubr.f32.mxu0 0.0
        %4582 = vmatmul.mubr.f32.gmra.mxu0 %v3352
        %v4583 = vpop.f32.mrf.mxu0
        %v4584 = vadd.f32 %v4505, %v4583
        %v4585 = vpop.f32.mrf.mxu0
        %4586 = vmatprep.mubr.f32.mxu0 0.0
        %4587 = vmatmul.mubr.f32.gmra.mxu0 %v3355
        %v4588 = vpop.f32.mrf.mxu0
        %v4589 = vadd.f32 %v4505, %v4588
        %v4590 = vpop.f32.mrf.mxu0
        %4591 = vdwg.mxu0
        %s4592 = scalar_lea.vmem %s4, 352
        %v4593 = vld [vmem:[%s4592] sm:$0xff]
        %v4594 = vld [vmem:[%s4592 + $0x8] sm:$0xff]
        %v4595 = vld [vmem:[%s4592 + $0x10] sm:$0xff]
        %v4596 = vld [vmem:[%s4592 + $0x18] sm:$0xff]
        %s4597 = scalar_lea.vmem %s5, 11
        %v4598 = vld [vmem:[%s4597] sm:$0x1]
        %v4600 = vlaneseq
        %v4601 = vshrl.u32 %v4600, 7
        %v4602 = vsub.s32 0, %v4601
        %v4603 = vrot.slane %v4598, %v4602
        %4605 = vmatprep.subr.mxu0 0.0
        %4606 = vmatpush1.msra.mxu0 0.0
        %4607 = vmatprep.subr.mxu0 0.0
        %4608 = vmatpush1.msra.mxu0 0.0
        %4609 = vmatprep.subr.mxu0 0.0
        %4610 = vmatpush1.msra.mxu0 0.0
        %4611 = vmatprep.subr.mxu0 0.0
        %4612 = vmatpush1.msra.mxu0 0.0
        %4613 = vmatprep.subr.mxu0 0.0
        %4614 = vmatpush1.msra.mxu0 0.0
        %4615 = vmatprep.subr.mxu0 0.0
        %4616 = vmatpush1.msra.mxu0 0.0
        %4617 = vmatprep.subr.mxu0 0.0
        %4618 = vmatpush1.msra.mxu0 0.0
        %4619 = vmatprep.subr.mxu0 0.0
        %4620 = vmatpush1.msra.mxu0 0.0
        %4621 = vmatprep.subr.mxu0 0.0
        %4622 = vmatpush1.msra.mxu0 0.0
        %4623 = vmatprep.subr.mxu0 0.0
        %4624 = vmatpush1.msra.mxu0 0.0
        %4625 = vmatprep.subr.mxu0 0.0
        %4626 = vmatpush1.msra.mxu0 0.0
        %4627 = vmatprep.subr.mxu0 0.0
        %4628 = vmatpush1.msra.mxu0 0.0
        %4629 = vmatprep.subr.mxu0 0.0
        %4630 = vmatpush1.msra.mxu0 %v4596
        %4631 = vmatprep.subr.mxu0 0.0
        %4632 = vmatpush1.msra.mxu0 %v4595
        %4633 = vmatprep.subr.mxu0 0.0
        %4634 = vmatpush1.msra.mxu0 %v4594
        %4635 = vmatprep.subr.mxu0 0.0
        %4636 = vmatpush1.msra.mxu0 %v4593
        %4637 = vmatprep.subr.mxu0 0.0
        %4638 = vmatpush2.msra.mxu0 0.0
        %4639 = vmatprep.subr.mxu0 0.0
        %4640 = vmatpush2.msra.mxu0 0.0
        %4641 = vmatprep.subr.mxu0 0.0
        %4642 = vmatpush2.msra.mxu0 0.0
        %4643 = vmatprep.subr.mxu0 0.0
        %4644 = vmatpush2.msra.mxu0 0.0
        %4645 = vmatprep.subr.mxu0 0.0
        %4646 = vmatpush2.msra.mxu0 0.0
        %4647 = vmatprep.subr.mxu0 0.0
        %4648 = vmatpush2.msra.mxu0 0.0
        %4649 = vmatprep.subr.mxu0 0.0
        %4650 = vmatpush2.msra.mxu0 0.0
        %4651 = vmatprep.subr.mxu0 0.0
        %4652 = vmatpush2.msra.mxu0 0.0
        %4653 = vmatprep.subr.mxu0 0.0
        %4654 = vmatpush2.msra.mxu0 0.0
        %4655 = vmatprep.subr.mxu0 0.0
        %4656 = vmatpush2.msra.mxu0 0.0
        %4657 = vmatprep.subr.mxu0 0.0
        %4658 = vmatpush2.msra.mxu0 0.0
        %4659 = vmatprep.subr.mxu0 0.0
        %4660 = vmatpush2.msra.mxu0 0.0
        %4661 = vmatprep.subr.mxu0 0.0
        %4662 = vmatpush2.msra.mxu0 0.0
        %4663 = vmatprep.subr.mxu0 0.0
        %4664 = vmatpush2.msra.mxu0 0.0
        %4665 = vmatprep.subr.mxu0 0.0
        %4666 = vmatpush2.msra.mxu0 0.0
        %4667 = vmatprep.subr.mxu0 0.0
        %4668 = vmatpush2.msra.mxu0 0.0
        %4669 = vmatprep.mubr.f32.mxu0 0.0
        %4670 = vmatmul.mubr.f32.gmra.mxu0 %v3346
        %v4671 = vpop.f32.mrf.mxu0
        %v4672 = vadd.f32 %v4603, %v4671
        %v4673 = vpop.f32.mrf.mxu0
        %4674 = vmatprep.mubr.f32.mxu0 0.0
        %4675 = vmatmul.mubr.f32.gmra.mxu0 %v3349
        %v4676 = vpop.f32.mrf.mxu0
        %v4677 = vadd.f32 %v4603, %v4676
        %v4678 = vpop.f32.mrf.mxu0
        %4679 = vmatprep.mubr.f32.mxu0 0.0
        %4680 = vmatmul.mubr.f32.gmra.mxu0 %v3352
        %v4681 = vpop.f32.mrf.mxu0
        %v4682 = vadd.f32 %v4603, %v4681
        %v4683 = vpop.f32.mrf.mxu0
        %4684 = vmatprep.mubr.f32.mxu0 0.0
        %4685 = vmatmul.mubr.f32.gmra.mxu0 %v3355
        %v4686 = vpop.f32.mrf.mxu0
        %v4687 = vadd.f32 %v4603, %v4686
        %v4688 = vpop.f32.mrf.mxu0
        %4689 = vdwg.mxu0
        %v4691 = vsel %vm1092, %v4476, 0
        %v4694 = vsel %vm1092, %v4574, 0
        %4696 = vmatprep.subr.mxu0 0.0
        %4697 = vmatpush1.xpose.msra.mxu0 0.0
        %4698 = vmatprep.subr.mxu0 0.0
        %4699 = vmatpush1.xpose.msra.mxu0 0.0
        %4700 = vmatprep.subr.mxu0 0.0
        %4701 = vmatpush1.xpose.msra.mxu0 0.0
        %4702 = vmatprep.subr.mxu0 0.0
        %4703 = vmatpush1.xpose.msra.mxu0 0.0
        %4704 = vmatprep.subr.mxu0 0.0
        %4705 = vmatpush1.xpose.msra.mxu0 0.0
        %4706 = vmatprep.subr.mxu0 0.0
        %4707 = vmatpush1.xpose.msra.mxu0 0.0
        %4708 = vmatprep.subr.mxu0 0.0
        %4709 = vmatpush1.xpose.msra.mxu0 0.0
        %4710 = vmatprep.subr.mxu0 0.0
        %4711 = vmatpush1.xpose.msra.mxu0 0.0
        %4712 = vmatprep.subr.mxu0 0.0
        %4713 = vmatpush1.xpose.msra.mxu0 0.0
        %4714 = vmatprep.subr.mxu0 0.0
        %4715 = vmatpush1.xpose.msra.mxu0 0.0
        %4716 = vmatprep.subr.mxu0 0.0
        %4717 = vmatpush1.xpose.msra.mxu0 0.0
        %4718 = vmatprep.subr.mxu0 0.0
        %4719 = vmatpush1.xpose.msra.mxu0 0.0
        %4720 = vmatprep.subr.mxu0 0.0
        %4721 = vmatpush1.xpose.msra.mxu0 0.0
        %4722 = vmatprep.subr.mxu0 0.0
        %4723 = vmatpush1.xpose.msra.mxu0 0.0
        %4724 = vmatprep.subr.mxu0 0.0
        %4725 = vmatpush1.xpose.msra.mxu0 0.0
        %4726 = vmatprep.subr.mxu0 0.0
        %4727 = vmatpush1.xpose.msra.mxu0 %v4694
        %4728 = vmatprep.subr.mxu0 0.0
        %4729 = vmatpush2.xpose.msra.mxu0 0.0
        %4730 = vmatprep.subr.mxu0 0.0
        %4731 = vmatpush2.xpose.msra.mxu0 0.0
        %4732 = vmatprep.subr.mxu0 0.0
        %4733 = vmatpush2.xpose.msra.mxu0 0.0
        %4734 = vmatprep.subr.mxu0 0.0
        %4735 = vmatpush2.xpose.msra.mxu0 0.0
        %4736 = vmatprep.subr.mxu0 0.0
        %4737 = vmatpush2.xpose.msra.mxu0 0.0
        %4738 = vmatprep.subr.mxu0 0.0
        %4739 = vmatpush2.xpose.msra.mxu0 0.0
        %4740 = vmatprep.subr.mxu0 0.0
        %4741 = vmatpush2.xpose.msra.mxu0 0.0
        %4742 = vmatprep.subr.mxu0 0.0
        %4743 = vmatpush2.xpose.msra.mxu0 0.0
        %4744 = vmatprep.subr.mxu0 0.0
        %4745 = vmatpush2.xpose.msra.mxu0 0.0
        %4746 = vmatprep.subr.mxu0 0.0
        %4747 = vmatpush2.xpose.msra.mxu0 0.0
        %4748 = vmatprep.subr.mxu0 0.0
        %4749 = vmatpush2.xpose.msra.mxu0 0.0
        %4750 = vmatprep.subr.mxu0 0.0
        %4751 = vmatpush2.xpose.msra.mxu0 0.0
        %4752 = vmatprep.subr.mxu0 0.0
        %4753 = vmatpush2.xpose.msra.mxu0 0.0
        %4754 = vmatprep.subr.mxu0 0.0
        %4755 = vmatpush2.xpose.msra.mxu0 0.0
        %4756 = vmatprep.subr.mxu0 0.0
        %4757 = vmatpush2.xpose.msra.mxu0 0.0
        %4758 = vmatprep.subr.mxu0 0.0
        %4759 = vmatpush2.xpose.msra.mxu0 0.0
        %4760 = vmatprep.mubr.f32.mxu0 0.0
        %4761 = vmatmul.mubr.f32.gmra.mxu0 %v4691
        %v4762 = vpop.f32.mrf.mxu0
        %v4763 = vadd.f32 0.0, %v4762
        %v4764 = vpop.f32.mrf.mxu0
        %4765 = vdwg.mxu0
        %v4767 = vsel %vm1092, %v4481, 0
        %v4770 = vsel %vm1092, %v4579, 0
        %4772 = vmatprep.subr.mxu0 0.0
        %4773 = vmatpush1.xpose.msra.mxu0 0.0
        %4774 = vmatprep.subr.mxu0 0.0
        %4775 = vmatpush1.xpose.msra.mxu0 0.0
        %4776 = vmatprep.subr.mxu0 0.0
        %4777 = vmatpush1.xpose.msra.mxu0 0.0
        %4778 = vmatprep.subr.mxu0 0.0
        %4779 = vmatpush1.xpose.msra.mxu0 0.0
        %4780 = vmatprep.subr.mxu0 0.0
        %4781 = vmatpush1.xpose.msra.mxu0 0.0
        %4782 = vmatprep.subr.mxu0 0.0
        %4783 = vmatpush1.xpose.msra.mxu0 0.0
        %4784 = vmatprep.subr.mxu0 0.0
        %4785 = vmatpush1.xpose.msra.mxu0 0.0
        %4786 = vmatprep.subr.mxu0 0.0
        %4787 = vmatpush1.xpose.msra.mxu0 0.0
        %4788 = vmatprep.subr.mxu0 0.0
        %4789 = vmatpush1.xpose.msra.mxu0 0.0
        %4790 = vmatprep.subr.mxu0 0.0
        %4791 = vmatpush1.xpose.msra.mxu0 0.0
        %4792 = vmatprep.subr.mxu0 0.0
        %4793 = vmatpush1.xpose.msra.mxu0 0.0
        %4794 = vmatprep.subr.mxu0 0.0
        %4795 = vmatpush1.xpose.msra.mxu0 0.0
        %4796 = vmatprep.subr.mxu0 0.0
        %4797 = vmatpush1.xpose.msra.mxu0 0.0
        %4798 = vmatprep.subr.mxu0 0.0
        %4799 = vmatpush1.xpose.msra.mxu0 0.0
        %4800 = vmatprep.subr.mxu0 0.0
        %4801 = vmatpush1.xpose.msra.mxu0 0.0
        %4802 = vmatprep.subr.mxu0 0.0
        %4803 = vmatpush1.xpose.msra.mxu0 %v4770
        %4804 = vmatprep.subr.mxu0 0.0
        %4805 = vmatpush2.xpose.msra.mxu0 0.0
        %4806 = vmatprep.subr.mxu0 0.0
        %4807 = vmatpush2.xpose.msra.mxu0 0.0
        %4808 = vmatprep.subr.mxu0 0.0
        %4809 = vmatpush2.xpose.msra.mxu0 0.0
        %4810 = vmatprep.subr.mxu0 0.0
        %4811 = vmatpush2.xpose.msra.mxu0 0.0
        %4812 = vmatprep.subr.mxu0 0.0
        %4813 = vmatpush2.xpose.msra.mxu0 0.0
        %4814 = vmatprep.subr.mxu0 0.0
        %4815 = vmatpush2.xpose.msra.mxu0 0.0
        %4816 = vmatprep.subr.mxu0 0.0
        %4817 = vmatpush2.xpose.msra.mxu0 0.0
        %4818 = vmatprep.subr.mxu0 0.0
        %4819 = vmatpush2.xpose.msra.mxu0 0.0
        %4820 = vmatprep.subr.mxu0 0.0
        %4821 = vmatpush2.xpose.msra.mxu0 0.0
        %4822 = vmatprep.subr.mxu0 0.0
        %4823 = vmatpush2.xpose.msra.mxu0 0.0
        %4824 = vmatprep.subr.mxu0 0.0
        %4825 = vmatpush2.xpose.msra.mxu0 0.0
        %4826 = vmatprep.subr.mxu0 0.0
        %4827 = vmatpush2.xpose.msra.mxu0 0.0
        %4828 = vmatprep.subr.mxu0 0.0
        %4829 = vmatpush2.xpose.msra.mxu0 0.0
        %4830 = vmatprep.subr.mxu0 0.0
        %4831 = vmatpush2.xpose.msra.mxu0 0.0
        %4832 = vmatprep.subr.mxu0 0.0
        %4833 = vmatpush2.xpose.msra.mxu0 0.0
        %4834 = vmatprep.subr.mxu0 0.0
        %4835 = vmatpush2.xpose.msra.mxu0 0.0
        %4836 = vmatprep.mubr.f32.mxu0 0.0
        %4837 = vmatmul.mubr.f32.gmra.mxu0 %v4767
        %v4838 = vpop.f32.mrf.mxu0
        %v4839 = vadd.f32 0.0, %v4838
        %v4840 = vpop.f32.mrf.mxu0
        %4841 = vdwg.mxu0
        %v4843 = vsel %vm1092, %v4486, 0
        %v4846 = vsel %vm1092, %v4584, 0
        %4848 = vmatprep.subr.mxu0 0.0
        %4849 = vmatpush1.xpose.msra.mxu0 0.0
        %4850 = vmatprep.subr.mxu0 0.0
        %4851 = vmatpush1.xpose.msra.mxu0 0.0
        %4852 = vmatprep.subr.mxu0 0.0
        %4853 = vmatpush1.xpose.msra.mxu0 0.0
        %4854 = vmatprep.subr.mxu0 0.0
        %4855 = vmatpush1.xpose.msra.mxu0 0.0
        %4856 = vmatprep.subr.mxu0 0.0
        %4857 = vmatpush1.xpose.msra.mxu0 0.0
        %4858 = vmatprep.subr.mxu0 0.0
        %4859 = vmatpush1.xpose.msra.mxu0 0.0
        %4860 = vmatprep.subr.mxu0 0.0
        %4861 = vmatpush1.xpose.msra.mxu0 0.0
        %4862 = vmatprep.subr.mxu0 0.0
        %4863 = vmatpush1.xpose.msra.mxu0 0.0
        %4864 = vmatprep.subr.mxu0 0.0
        %4865 = vmatpush1.xpose.msra.mxu0 0.0
        %4866 = vmatprep.subr.mxu0 0.0
        %4867 = vmatpush1.xpose.msra.mxu0 0.0
        %4868 = vmatprep.subr.mxu0 0.0
        %4869 = vmatpush1.xpose.msra.mxu0 0.0
        %4870 = vmatprep.subr.mxu0 0.0
        %4871 = vmatpush1.xpose.msra.mxu0 0.0
        %4872 = vmatprep.subr.mxu0 0.0
        %4873 = vmatpush1.xpose.msra.mxu0 0.0
        %4874 = vmatprep.subr.mxu0 0.0
        %4875 = vmatpush1.xpose.msra.mxu0 0.0
        %4876 = vmatprep.subr.mxu0 0.0
        %4877 = vmatpush1.xpose.msra.mxu0 0.0
        %4878 = vmatprep.subr.mxu0 0.0
        %4879 = vmatpush1.xpose.msra.mxu0 %v4846
        %4880 = vmatprep.subr.mxu0 0.0
        %4881 = vmatpush2.xpose.msra.mxu0 0.0
        %4882 = vmatprep.subr.mxu0 0.0
        %4883 = vmatpush2.xpose.msra.mxu0 0.0
        %4884 = vmatprep.subr.mxu0 0.0
        %4885 = vmatpush2.xpose.msra.mxu0 0.0
        %4886 = vmatprep.subr.mxu0 0.0
        %4887 = vmatpush2.xpose.msra.mxu0 0.0
        %4888 = vmatprep.subr.mxu0 0.0
        %4889 = vmatpush2.xpose.msra.mxu0 0.0
        %4890 = vmatprep.subr.mxu0 0.0
        %4891 = vmatpush2.xpose.msra.mxu0 0.0
        %4892 = vmatprep.subr.mxu0 0.0
        %4893 = vmatpush2.xpose.msra.mxu0 0.0
        %4894 = vmatprep.subr.mxu0 0.0
        %4895 = vmatpush2.xpose.msra.mxu0 0.0
        %4896 = vmatprep.subr.mxu0 0.0
        %4897 = vmatpush2.xpose.msra.mxu0 0.0
        %4898 = vmatprep.subr.mxu0 0.0
        %4899 = vmatpush2.xpose.msra.mxu0 0.0
        %4900 = vmatprep.subr.mxu0 0.0
        %4901 = vmatpush2.xpose.msra.mxu0 0.0
        %4902 = vmatprep.subr.mxu0 0.0
        %4903 = vmatpush2.xpose.msra.mxu0 0.0
        %4904 = vmatprep.subr.mxu0 0.0
        %4905 = vmatpush2.xpose.msra.mxu0 0.0
        %4906 = vmatprep.subr.mxu0 0.0
        %4907 = vmatpush2.xpose.msra.mxu0 0.0
        %4908 = vmatprep.subr.mxu0 0.0
        %4909 = vmatpush2.xpose.msra.mxu0 0.0
        %4910 = vmatprep.subr.mxu0 0.0
        %4911 = vmatpush2.xpose.msra.mxu0 0.0
        %4912 = vmatprep.mubr.f32.mxu0 0.0
        %4913 = vmatmul.mubr.f32.gmra.mxu0 %v4843
        %v4914 = vpop.f32.mrf.mxu0
        %v4915 = vadd.f32 0.0, %v4914
        %v4916 = vpop.f32.mrf.mxu0
        %4917 = vdwg.mxu0
        %v4919 = vsel %vm1092, %v4491, 0
        %v4922 = vsel %vm1092, %v4589, 0
        %4924 = vmatprep.subr.mxu0 0.0
        %4925 = vmatpush1.xpose.msra.mxu0 0.0
        %4926 = vmatprep.subr.mxu0 0.0
        %4927 = vmatpush1.xpose.msra.mxu0 0.0
        %4928 = vmatprep.subr.mxu0 0.0
        %4929 = vmatpush1.xpose.msra.mxu0 0.0
        %4930 = vmatprep.subr.mxu0 0.0
        %4931 = vmatpush1.xpose.msra.mxu0 0.0
        %4932 = vmatprep.subr.mxu0 0.0
        %4933 = vmatpush1.xpose.msra.mxu0 0.0
        %4934 = vmatprep.subr.mxu0 0.0
        %4935 = vmatpush1.xpose.msra.mxu0 0.0
        %4936 = vmatprep.subr.mxu0 0.0
        %4937 = vmatpush1.xpose.msra.mxu0 0.0
        %4938 = vmatprep.subr.mxu0 0.0
        %4939 = vmatpush1.xpose.msra.mxu0 0.0
        %4940 = vmatprep.subr.mxu0 0.0
        %4941 = vmatpush1.xpose.msra.mxu0 0.0
        %4942 = vmatprep.subr.mxu0 0.0
        %4943 = vmatpush1.xpose.msra.mxu0 0.0
        %4944 = vmatprep.subr.mxu0 0.0
        %4945 = vmatpush1.xpose.msra.mxu0 0.0
        %4946 = vmatprep.subr.mxu0 0.0
        %4947 = vmatpush1.xpose.msra.mxu0 0.0
        %4948 = vmatprep.subr.mxu0 0.0
        %4949 = vmatpush1.xpose.msra.mxu0 0.0
        %4950 = vmatprep.subr.mxu0 0.0
        %4951 = vmatpush1.xpose.msra.mxu0 0.0
        %4952 = vmatprep.subr.mxu0 0.0
        %4953 = vmatpush1.xpose.msra.mxu0 0.0
        %4954 = vmatprep.subr.mxu0 0.0
        %4955 = vmatpush1.xpose.msra.mxu0 %v4922
        %4956 = vmatprep.subr.mxu0 0.0
        %4957 = vmatpush2.xpose.msra.mxu0 0.0
        %4958 = vmatprep.subr.mxu0 0.0
        %4959 = vmatpush2.xpose.msra.mxu0 0.0
        %4960 = vmatprep.subr.mxu0 0.0
        %4961 = vmatpush2.xpose.msra.mxu0 0.0
        %4962 = vmatprep.subr.mxu0 0.0
        %4963 = vmatpush2.xpose.msra.mxu0 0.0
        %4964 = vmatprep.subr.mxu0 0.0
        %4965 = vmatpush2.xpose.msra.mxu0 0.0
        %4966 = vmatprep.subr.mxu0 0.0
        %4967 = vmatpush2.xpose.msra.mxu0 0.0
        %4968 = vmatprep.subr.mxu0 0.0
        %4969 = vmatpush2.xpose.msra.mxu0 0.0
        %4970 = vmatprep.subr.mxu0 0.0
        %4971 = vmatpush2.xpose.msra.mxu0 0.0
        %4972 = vmatprep.subr.mxu0 0.0
        %4973 = vmatpush2.xpose.msra.mxu0 0.0
        %4974 = vmatprep.subr.mxu0 0.0
        %4975 = vmatpush2.xpose.msra.mxu0 0.0
        %4976 = vmatprep.subr.mxu0 0.0
        %4977 = vmatpush2.xpose.msra.mxu0 0.0
        %4978 = vmatprep.subr.mxu0 0.0
        %4979 = vmatpush2.xpose.msra.mxu0 0.0
        %4980 = vmatprep.subr.mxu0 0.0
        %4981 = vmatpush2.xpose.msra.mxu0 0.0
        %4982 = vmatprep.subr.mxu0 0.0
        %4983 = vmatpush2.xpose.msra.mxu0 0.0
        %4984 = vmatprep.subr.mxu0 0.0
        %4985 = vmatpush2.xpose.msra.mxu0 0.0
        %4986 = vmatprep.subr.mxu0 0.0
        %4987 = vmatpush2.xpose.msra.mxu0 0.0
        %4988 = vmatprep.mubr.f32.mxu0 0.0
        %4989 = vmatmul.mubr.f32.gmra.mxu0 %v4919
        %v4990 = vpop.f32.mrf.mxu0
        %v4991 = vadd.f32 0.0, %v4990
        %v4992 = vpop.f32.mrf.mxu0
        %4993 = vdwg.mxu0
        %v4994 = vmul.f32 %v4763, 0.25
        %v4995 = vmul.f32 %v4839, 0.25
        %v4996 = vmul.f32 %v4915, 0.25
        %v4997 = vmul.f32 %v4991, 0.25
        %v4998 = vadd.f32 %v4994, %v1404
        %v4999 = vadd.f32 %v4995, %v1408
        %v5000 = vadd.f32 %v4996, %v1412
        %v5001 = vadd.f32 %v4997, %v1416
        %v5002 = vsel %vm1425, %v4998, -inf
        %5003 = vmax.xlane.f32.xlu0 %v5002
        %v5004 = vpop.xlane.xlu0 %5003
        %v5005 = vsel %vm1425, %v4999, -inf
        %5006 = vmax.xlane.f32.xlu0 %v5005
        %v5007 = vpop.xlane.xlu0 %5006
        %v5008 = vsel %vm1425, %v5000, -inf
        %5009 = vmax.xlane.f32.xlu0 %v5008
        %v5010 = vpop.xlane.xlu0 %5009
        %v5011 = vsel %vm1425, %v5001, -inf
        %5012 = vmax.xlane.f32.xlu0 %v5011
        %v5013 = vpop.xlane.xlu0 %5012
        %v5014 = vsub.f32 %v4998, %v5004
        %v5015 = vsub.f32 %v4999, %v5007
        %v5016 = vsub.f32 %v5000, %v5010
        %v5017 = vsub.f32 %v5001, %v5013
        %v5018 = vmul.f32 %v5014, 1.442695
        %v5019 = vpow.pop %v5018
        %v5020 = vmul.f32 %v5015, 1.442695
        %v5021 = vpow.pop %v5020
        %v5022 = vmul.f32 %v5016, 1.442695
        %v5023 = vpow.pop %v5022
        %v5024 = vmul.f32 %v5017, 1.442695
        %v5025 = vpow.pop %v5024
        %v5026 = vsel %vm1425, %v5019, 0.0
        %5027 = vadd.xlane.f32.xlu0 %v5026
        %v5028 = vpop.xlane.xlu0 %5027
        %v5029 = vsel %vm1425, %v5021, 0.0
        %5030 = vadd.xlane.f32.xlu0 %v5029
        %v5031 = vpop.xlane.xlu0 %5030
        %v5032 = vsel %vm1425, %v5023, 0.0
        %5033 = vadd.xlane.f32.xlu0 %v5032
        %v5034 = vpop.xlane.xlu0 %5033
        %v5035 = vsel %vm1425, %v5025, 0.0
        %5036 = vadd.xlane.f32.xlu0 %v5035
        %v5037 = vpop.xlane.xlu0 %5036
        %v5038 = vrcp.pop %v5028
        %v5039 = vrcp.pop %v5031
        %v5040 = vrcp.pop %v5034
        %v5041 = vrcp.pop %v5037
        %v5042 = vmul.f32 %v5019, %v5038
        %v5043 = vmul.f32 %v5021, %v5039
        %v5044 = vmul.f32 %v5023, %v5040
        %v5045 = vmul.f32 %v5025, %v5041
        %v5047 = vsel %vm1425, %v5042, 0
        %5049 = vmatprep.subr.mxu0 0.0
        %5050 = vmatpush1.msra.mxu0 0.0
        %5051 = vmatprep.subr.mxu0 0.0
        %5052 = vmatpush1.msra.mxu0 0.0
        %5053 = vmatprep.subr.mxu0 0.0
        %5054 = vmatpush1.msra.mxu0 0.0
        %5055 = vmatprep.subr.mxu0 0.0
        %5056 = vmatpush1.msra.mxu0 0.0
        %5057 = vmatprep.subr.mxu0 0.0
        %5058 = vmatpush1.msra.mxu0 0.0
        %5059 = vmatprep.subr.mxu0 0.0
        %5060 = vmatpush1.msra.mxu0 0.0
        %5061 = vmatprep.subr.mxu0 0.0
        %5062 = vmatpush1.msra.mxu0 0.0
        %5063 = vmatprep.subr.mxu0 0.0
        %5064 = vmatpush1.msra.mxu0 0.0
        %5065 = vmatprep.subr.mxu0 0.0
        %5066 = vmatpush1.msra.mxu0 0.0
        %5067 = vmatprep.subr.mxu0 0.0
        %5068 = vmatpush1.msra.mxu0 0.0
        %5069 = vmatprep.subr.mxu0 0.0
        %5070 = vmatpush1.msra.mxu0 0.0
        %5071 = vmatprep.subr.mxu0 0.0
        %5072 = vmatpush1.msra.mxu0 0.0
        %5073 = vmatprep.subr.mxu0 0.0
        %5074 = vmatpush1.msra.mxu0 0.0
        %5075 = vmatprep.subr.mxu0 0.0
        %5076 = vmatpush1.msra.mxu0 0.0
        %5077 = vmatprep.subr.mxu0 0.0
        %5078 = vmatpush1.msra.mxu0 0.0
        %5079 = vmatprep.subr.mxu0 0.0
        %5080 = vmatpush1.msra.mxu0 %v4672
        %5081 = vmatprep.subr.mxu0 0.0
        %5082 = vmatpush2.msra.mxu0 0.0
        %5083 = vmatprep.subr.mxu0 0.0
        %5084 = vmatpush2.msra.mxu0 0.0
        %5085 = vmatprep.subr.mxu0 0.0
        %5086 = vmatpush2.msra.mxu0 0.0
        %5087 = vmatprep.subr.mxu0 0.0
        %5088 = vmatpush2.msra.mxu0 0.0
        %5089 = vmatprep.subr.mxu0 0.0
        %5090 = vmatpush2.msra.mxu0 0.0
        %5091 = vmatprep.subr.mxu0 0.0
        %5092 = vmatpush2.msra.mxu0 0.0
        %5093 = vmatprep.subr.mxu0 0.0
        %5094 = vmatpush2.msra.mxu0 0.0
        %5095 = vmatprep.subr.mxu0 0.0
        %5096 = vmatpush2.msra.mxu0 0.0
        %5097 = vmatprep.subr.mxu0 0.0
        %5098 = vmatpush2.msra.mxu0 0.0
        %5099 = vmatprep.subr.mxu0 0.0
        %5100 = vmatpush2.msra.mxu0 0.0
        %5101 = vmatprep.subr.mxu0 0.0
        %5102 = vmatpush2.msra.mxu0 0.0
        %5103 = vmatprep.subr.mxu0 0.0
        %5104 = vmatpush2.msra.mxu0 0.0
        %5105 = vmatprep.subr.mxu0 0.0
        %5106 = vmatpush2.msra.mxu0 0.0
        %5107 = vmatprep.subr.mxu0 0.0
        %5108 = vmatpush2.msra.mxu0 0.0
        %5109 = vmatprep.subr.mxu0 0.0
        %5110 = vmatpush2.msra.mxu0 0.0
        %5111 = vmatprep.subr.mxu0 0.0
        %5112 = vmatpush2.msra.mxu0 0.0
        %5113 = vmatprep.mubr.f32.mxu0 0.0
        %5114 = vmatmul.mubr.f32.gmra.mxu0 %v5047
        %v5115 = vpop.f32.mrf.mxu0
        %v5116 = vadd.f32 0.0, %v5115
        %v5117 = vpop.f32.mrf.mxu0
        %5118 = vdwg.mxu0
        %v5120 = vsel %vm1425, %v5043, 0
        %5122 = vmatprep.subr.mxu0 0.0
        %5123 = vmatpush1.msra.mxu0 0.0
        %5124 = vmatprep.subr.mxu0 0.0
        %5125 = vmatpush1.msra.mxu0 0.0
        %5126 = vmatprep.subr.mxu0 0.0
        %5127 = vmatpush1.msra.mxu0 0.0
        %5128 = vmatprep.subr.mxu0 0.0
        %5129 = vmatpush1.msra.mxu0 0.0
        %5130 = vmatprep.subr.mxu0 0.0
        %5131 = vmatpush1.msra.mxu0 0.0
        %5132 = vmatprep.subr.mxu0 0.0
        %5133 = vmatpush1.msra.mxu0 0.0
        %5134 = vmatprep.subr.mxu0 0.0
        %5135 = vmatpush1.msra.mxu0 0.0
        %5136 = vmatprep.subr.mxu0 0.0
        %5137 = vmatpush1.msra.mxu0 0.0
        %5138 = vmatprep.subr.mxu0 0.0
        %5139 = vmatpush1.msra.mxu0 0.0
        %5140 = vmatprep.subr.mxu0 0.0
        %5141 = vmatpush1.msra.mxu0 0.0
        %5142 = vmatprep.subr.mxu0 0.0
        %5143 = vmatpush1.msra.mxu0 0.0
        %5144 = vmatprep.subr.mxu0 0.0
        %5145 = vmatpush1.msra.mxu0 0.0
        %5146 = vmatprep.subr.mxu0 0.0
        %5147 = vmatpush1.msra.mxu0 0.0
        %5148 = vmatprep.subr.mxu0 0.0
        %5149 = vmatpush1.msra.mxu0 0.0
        %5150 = vmatprep.subr.mxu0 0.0
        %5151 = vmatpush1.msra.mxu0 0.0
        %5152 = vmatprep.subr.mxu0 0.0
        %5153 = vmatpush1.msra.mxu0 %v4677
        %5154 = vmatprep.subr.mxu0 0.0
        %5155 = vmatpush2.msra.mxu0 0.0
        %5156 = vmatprep.subr.mxu0 0.0
        %5157 = vmatpush2.msra.mxu0 0.0
        %5158 = vmatprep.subr.mxu0 0.0
        %5159 = vmatpush2.msra.mxu0 0.0
        %5160 = vmatprep.subr.mxu0 0.0
        %5161 = vmatpush2.msra.mxu0 0.0
        %5162 = vmatprep.subr.mxu0 0.0
        %5163 = vmatpush2.msra.mxu0 0.0
        %5164 = vmatprep.subr.mxu0 0.0
        %5165 = vmatpush2.msra.mxu0 0.0
        %5166 = vmatprep.subr.mxu0 0.0
        %5167 = vmatpush2.msra.mxu0 0.0
        %5168 = vmatprep.subr.mxu0 0.0
        %5169 = vmatpush2.msra.mxu0 0.0
        %5170 = vmatprep.subr.mxu0 0.0
        %5171 = vmatpush2.msra.mxu0 0.0
        %5172 = vmatprep.subr.mxu0 0.0
        %5173 = vmatpush2.msra.mxu0 0.0
        %5174 = vmatprep.subr.mxu0 0.0
        %5175 = vmatpush2.msra.mxu0 0.0
        %5176 = vmatprep.subr.mxu0 0.0
        %5177 = vmatpush2.msra.mxu0 0.0
        %5178 = vmatprep.subr.mxu0 0.0
        %5179 = vmatpush2.msra.mxu0 0.0
        %5180 = vmatprep.subr.mxu0 0.0
        %5181 = vmatpush2.msra.mxu0 0.0
        %5182 = vmatprep.subr.mxu0 0.0
        %5183 = vmatpush2.msra.mxu0 0.0
        %5184 = vmatprep.subr.mxu0 0.0
        %5185 = vmatpush2.msra.mxu0 0.0
        %5186 = vmatprep.mubr.f32.mxu0 0.0
        %5187 = vmatmul.mubr.f32.gmra.mxu0 %v5120
        %v5188 = vpop.f32.mrf.mxu0
        %v5189 = vadd.f32 0.0, %v5188
        %v5190 = vpop.f32.mrf.mxu0
        %5191 = vdwg.mxu0
        %v5193 = vsel %vm1425, %v5044, 0
        %5195 = vmatprep.subr.mxu0 0.0
        %5196 = vmatpush1.msra.mxu0 0.0
        %5197 = vmatprep.subr.mxu0 0.0
        %5198 = vmatpush1.msra.mxu0 0.0
        %5199 = vmatprep.subr.mxu0 0.0
        %5200 = vmatpush1.msra.mxu0 0.0
        %5201 = vmatprep.subr.mxu0 0.0
        %5202 = vmatpush1.msra.mxu0 0.0
        %5203 = vmatprep.subr.mxu0 0.0
        %5204 = vmatpush1.msra.mxu0 0.0
        %5205 = vmatprep.subr.mxu0 0.0
        %5206 = vmatpush1.msra.mxu0 0.0
        %5207 = vmatprep.subr.mxu0 0.0
        %5208 = vmatpush1.msra.mxu0 0.0
        %5209 = vmatprep.subr.mxu0 0.0
        %5210 = vmatpush1.msra.mxu0 0.0
        %5211 = vmatprep.subr.mxu0 0.0
        %5212 = vmatpush1.msra.mxu0 0.0
        %5213 = vmatprep.subr.mxu0 0.0
        %5214 = vmatpush1.msra.mxu0 0.0
        %5215 = vmatprep.subr.mxu0 0.0
        %5216 = vmatpush1.msra.mxu0 0.0
        %5217 = vmatprep.subr.mxu0 0.0
        %5218 = vmatpush1.msra.mxu0 0.0
        %5219 = vmatprep.subr.mxu0 0.0
        %5220 = vmatpush1.msra.mxu0 0.0
        %5221 = vmatprep.subr.mxu0 0.0
        %5222 = vmatpush1.msra.mxu0 0.0
        %5223 = vmatprep.subr.mxu0 0.0
        %5224 = vmatpush1.msra.mxu0 0.0
        %5225 = vmatprep.subr.mxu0 0.0
        %5226 = vmatpush1.msra.mxu0 %v4682
        %5227 = vmatprep.subr.mxu0 0.0
        %5228 = vmatpush2.msra.mxu0 0.0
        %5229 = vmatprep.subr.mxu0 0.0
        %5230 = vmatpush2.msra.mxu0 0.0
        %5231 = vmatprep.subr.mxu0 0.0
        %5232 = vmatpush2.msra.mxu0 0.0
        %5233 = vmatprep.subr.mxu0 0.0
        %5234 = vmatpush2.msra.mxu0 0.0
        %5235 = vmatprep.subr.mxu0 0.0
        %5236 = vmatpush2.msra.mxu0 0.0
        %5237 = vmatprep.subr.mxu0 0.0
        %5238 = vmatpush2.msra.mxu0 0.0
        %5239 = vmatprep.subr.mxu0 0.0
        %5240 = vmatpush2.msra.mxu0 0.0
        %5241 = vmatprep.subr.mxu0 0.0
        %5242 = vmatpush2.msra.mxu0 0.0
        %5243 = vmatprep.subr.mxu0 0.0
        %5244 = vmatpush2.msra.mxu0 0.0
        %5245 = vmatprep.subr.mxu0 0.0
        %5246 = vmatpush2.msra.mxu0 0.0
        %5247 = vmatprep.subr.mxu0 0.0
        %5248 = vmatpush2.msra.mxu0 0.0
        %5249 = vmatprep.subr.mxu0 0.0
        %5250 = vmatpush2.msra.mxu0 0.0
        %5251 = vmatprep.subr.mxu0 0.0
        %5252 = vmatpush2.msra.mxu0 0.0
        %5253 = vmatprep.subr.mxu0 0.0
        %5254 = vmatpush2.msra.mxu0 0.0
        %5255 = vmatprep.subr.mxu0 0.0
        %5256 = vmatpush2.msra.mxu0 0.0
        %5257 = vmatprep.subr.mxu0 0.0
        %5258 = vmatpush2.msra.mxu0 0.0
        %5259 = vmatprep.mubr.f32.mxu0 0.0
        %5260 = vmatmul.mubr.f32.gmra.mxu0 %v5193
        %v5261 = vpop.f32.mrf.mxu0
        %v5262 = vadd.f32 0.0, %v5261
        %v5263 = vpop.f32.mrf.mxu0
        %5264 = vdwg.mxu0
        %v5266 = vsel %vm1425, %v5045, 0
        %5268 = vmatprep.subr.mxu0 0.0
        %5269 = vmatpush1.msra.mxu0 0.0
        %5270 = vmatprep.subr.mxu0 0.0
        %5271 = vmatpush1.msra.mxu0 0.0
        %5272 = vmatprep.subr.mxu0 0.0
        %5273 = vmatpush1.msra.mxu0 0.0
        %5274 = vmatprep.subr.mxu0 0.0
        %5275 = vmatpush1.msra.mxu0 0.0
        %5276 = vmatprep.subr.mxu0 0.0
        %5277 = vmatpush1.msra.mxu0 0.0
        %5278 = vmatprep.subr.mxu0 0.0
        %5279 = vmatpush1.msra.mxu0 0.0
        %5280 = vmatprep.subr.mxu0 0.0
        %5281 = vmatpush1.msra.mxu0 0.0
        %5282 = vmatprep.subr.mxu0 0.0
        %5283 = vmatpush1.msra.mxu0 0.0
        %5284 = vmatprep.subr.mxu0 0.0
        %5285 = vmatpush1.msra.mxu0 0.0
        %5286 = vmatprep.subr.mxu0 0.0
        %5287 = vmatpush1.msra.mxu0 0.0
        %5288 = vmatprep.subr.mxu0 0.0
        %5289 = vmatpush1.msra.mxu0 0.0
        %5290 = vmatprep.subr.mxu0 0.0
        %5291 = vmatpush1.msra.mxu0 0.0
        %5292 = vmatprep.subr.mxu0 0.0
        %5293 = vmatpush1.msra.mxu0 0.0
        %5294 = vmatprep.subr.mxu0 0.0
        %5295 = vmatpush1.msra.mxu0 0.0
        %5296 = vmatprep.subr.mxu0 0.0
        %5297 = vmatpush1.msra.mxu0 0.0
        %5298 = vmatprep.subr.mxu0 0.0
        %5299 = vmatpush1.msra.mxu0 %v4687
        %5300 = vmatprep.subr.mxu0 0.0
        %5301 = vmatpush2.msra.mxu0 0.0
        %5302 = vmatprep.subr.mxu0 0.0
        %5303 = vmatpush2.msra.mxu0 0.0
        %5304 = vmatprep.subr.mxu0 0.0
        %5305 = vmatpush2.msra.mxu0 0.0
        %5306 = vmatprep.subr.mxu0 0.0
        %5307 = vmatpush2.msra.mxu0 0.0
        %5308 = vmatprep.subr.mxu0 0.0
        %5309 = vmatpush2.msra.mxu0 0.0
        %5310 = vmatprep.subr.mxu0 0.0
        %5311 = vmatpush2.msra.mxu0 0.0
        %5312 = vmatprep.subr.mxu0 0.0
        %5313 = vmatpush2.msra.mxu0 0.0
        %5314 = vmatprep.subr.mxu0 0.0
        %5315 = vmatpush2.msra.mxu0 0.0
        %5316 = vmatprep.subr.mxu0 0.0
        %5317 = vmatpush2.msra.mxu0 0.0
        %5318 = vmatprep.subr.mxu0 0.0
        %5319 = vmatpush2.msra.mxu0 0.0
        %5320 = vmatprep.subr.mxu0 0.0
        %5321 = vmatpush2.msra.mxu0 0.0
        %5322 = vmatprep.subr.mxu0 0.0
        %5323 = vmatpush2.msra.mxu0 0.0
        %5324 = vmatprep.subr.mxu0 0.0
        %5325 = vmatpush2.msra.mxu0 0.0
        %5326 = vmatprep.subr.mxu0 0.0
        %5327 = vmatpush2.msra.mxu0 0.0
        %5328 = vmatprep.subr.mxu0 0.0
        %5329 = vmatpush2.msra.mxu0 0.0
        %5330 = vmatprep.subr.mxu0 0.0
        %5331 = vmatpush2.msra.mxu0 0.0
        %5332 = vmatprep.mubr.f32.mxu0 0.0
        %5333 = vmatmul.mubr.f32.gmra.mxu0 %v5266
        %v5334 = vpop.f32.mrf.mxu0
        %v5335 = vadd.f32 0.0, %v5334
        %v5336 = vpop.f32.mrf.mxu0
        %5337 = vdwg.mxu0
        %s5338 = scalar_lea.vmem %s6, 48
        %v5339 = vld [vmem:[%s5338] sm:$0xff]
        %v5340 = vld [vmem:[%s5338 + $0x8] sm:$0xff]
        %v5342 = vsel %vm1092, %v5116, 0
        %v5345 = vsel %vm1092, %v5189, 0
        %v5348 = vsel %vm1092, %v5262, 0
        %v5351 = vsel %vm1092, %v5335, 0
        %5353 = vmatprep.subr.mxu0 0.0
        %5354 = vmatpush1.msra.mxu0 0.0
        %5355 = vmatprep.subr.mxu0 0.0
        %5356 = vmatpush1.msra.mxu0 0.0
        %5357 = vmatprep.subr.mxu0 0.0
        %5358 = vmatpush1.msra.mxu0 0.0
        %5359 = vmatprep.subr.mxu0 0.0
        %5360 = vmatpush1.msra.mxu0 0.0
        %5361 = vmatprep.subr.mxu0 0.0
        %5362 = vmatpush1.msra.mxu0 0.0
        %5363 = vmatprep.subr.mxu0 0.0
        %5364 = vmatpush1.msra.mxu0 0.0
        %5365 = vmatprep.subr.mxu0 0.0
        %5366 = vmatpush1.msra.mxu0 0.0
        %5367 = vmatprep.subr.mxu0 0.0
        %5368 = vmatpush1.msra.mxu0 0.0
        %5369 = vmatprep.subr.mxu0 0.0
        %5370 = vmatpush1.msra.mxu0 0.0
        %5371 = vmatprep.subr.mxu0 0.0
        %5372 = vmatpush1.msra.mxu0 0.0
        %5373 = vmatprep.subr.mxu0 0.0
        %5374 = vmatpush1.msra.mxu0 0.0
        %5375 = vmatprep.subr.mxu0 0.0
        %5376 = vmatpush1.msra.mxu0 0.0
        %5377 = vmatprep.subr.mxu0 0.0
        %5378 = vmatpush1.msra.mxu0 0.0
        %5379 = vmatprep.subr.mxu0 0.0
        %5380 = vmatpush1.msra.mxu0 0.0
        %5381 = vmatprep.subr.mxu0 0.0
        %5382 = vmatpush1.msra.mxu0 %v5340
        %5383 = vmatprep.subr.mxu0 0.0
        %5384 = vmatpush1.msra.mxu0 %v5339
        %5385 = vmatprep.subr.mxu0 0.0
        %5386 = vmatpush2.msra.mxu0 0.0
        %5387 = vmatprep.subr.mxu0 0.0
        %5388 = vmatpush2.msra.mxu0 0.0
        %5389 = vmatprep.subr.mxu0 0.0
        %5390 = vmatpush2.msra.mxu0 0.0
        %5391 = vmatprep.subr.mxu0 0.0
        %5392 = vmatpush2.msra.mxu0 0.0
        %5393 = vmatprep.subr.mxu0 0.0
        %5394 = vmatpush2.msra.mxu0 0.0
        %5395 = vmatprep.subr.mxu0 0.0
        %5396 = vmatpush2.msra.mxu0 0.0
        %5397 = vmatprep.subr.mxu0 0.0
        %5398 = vmatpush2.msra.mxu0 0.0
        %5399 = vmatprep.subr.mxu0 0.0
        %5400 = vmatpush2.msra.mxu0 0.0
        %5401 = vmatprep.subr.mxu0 0.0
        %5402 = vmatpush2.msra.mxu0 0.0
        %5403 = vmatprep.subr.mxu0 0.0
        %5404 = vmatpush2.msra.mxu0 0.0
        %5405 = vmatprep.subr.mxu0 0.0
        %5406 = vmatpush2.msra.mxu0 0.0
        %5407 = vmatprep.subr.mxu0 0.0
        %5408 = vmatpush2.msra.mxu0 0.0
        %5409 = vmatprep.subr.mxu0 0.0
        %5410 = vmatpush2.msra.mxu0 0.0
        %5411 = vmatprep.subr.mxu0 0.0
        %5412 = vmatpush2.msra.mxu0 0.0
        %5413 = vmatprep.subr.mxu0 0.0
        %5414 = vmatpush2.msra.mxu0 0.0
        %5415 = vmatprep.subr.mxu0 0.0
        %5416 = vmatpush2.msra.mxu0 0.0
        %5417 = vmatprep.mubr.f32.mxu0 0.0
        %5418 = vmatmul.mubr.f32.gmra.mxu0 %v5342
        %v5419 = vpop.f32.mrf.mxu0
        %v5420 = vadd.f32 0.0, %v5419
        %v5421 = vpop.f32.mrf.mxu0
        %5422 = vmatprep.mubr.f32.mxu0 0.0
        %5423 = vmatmul.mubr.f32.gmra.mxu0 %v5345
        %v5424 = vpop.f32.mrf.mxu0
        %v5425 = vadd.f32 0.0, %v5424
        %v5426 = vpop.f32.mrf.mxu0
        %5427 = vmatprep.mubr.f32.mxu0 0.0
        %5428 = vmatmul.mubr.f32.gmra.mxu0 %v5348
        %v5429 = vpop.f32.mrf.mxu0
        %v5430 = vadd.f32 0.0, %v5429
        %v5431 = vpop.f32.mrf.mxu0
        %5432 = vmatprep.mubr.f32.mxu0 0.0
        %5433 = vmatmul.mubr.f32.gmra.mxu0 %v5351
        %v5434 = vpop.f32.mrf.mxu0
        %v5435 = vadd.f32 0.0, %v5434
        %v5436 = vpop.f32.mrf.mxu0
        %5437 = vdwg.mxu0
        %v5438 = vadd.f32 %v4392, %v5420
        %v5439 = vadd.f32 %v4393, %v5425
        %v5440 = vadd.f32 %v4394, %v5430
        %v5441 = vadd.f32 %v4395, %v5435
        %v5442 = vadd.f32 %v5438, %v3326
        %v5443 = vadd.f32 %v5439, %v3327
        %v5444 = vadd.f32 %v5440, %v3328
        %v5445 = vadd.f32 %v5441, %v3329
        %s5446 = scalar_lea.vmem %s8, 1
        %v5447 = vld [vmem:[%s5446] sm:$0x1]
        %s5448 = scalar_lea.vmem %s9, 1
        %v5449 = vld [vmem:[%s5448] sm:$0x1]
        %v5450 = vsel %vm713, %v5442, 0.0
        %5451 = vadd.xlane.f32.xlu0 %v5450
        %v5452 = vpop.xlane.xlu0 %5451
        %v5453 = vsel %vm713, %v5443, 0.0
        %5454 = vadd.xlane.f32.xlu0 %v5453
        %v5455 = vpop.xlane.xlu0 %5454
        %v5456 = vsel %vm713, %v5444, 0.0
        %5457 = vadd.xlane.f32.xlu0 %v5456
        %v5458 = vpop.xlane.xlu0 %5457
        %v5459 = vsel %vm713, %v5445, 0.0
        %5460 = vadd.xlane.f32.xlu0 %v5459
        %v5461 = vpop.xlane.xlu0 %5460
        %v5462 = vmul.f32 %v5452, %v726
        %v5463 = vmul.f32 %v5455, %v726
        %v5464 = vmul.f32 %v5458, %v726
        %v5465 = vmul.f32 %v5461, %v726
        %v5466 = vsub.f32 %v5442, %v5462
        %v5467 = vsub.f32 %v5443, %v5463
        %v5468 = vsub.f32 %v5444, %v5464
        %v5469 = vsub.f32 %v5445, %v5465
        %v5470 = vmul.f32 %v5466, %v5466
        %v5471 = vmul.f32 %v5467, %v5467
        %v5472 = vmul.f32 %v5468, %v5468
        %v5473 = vmul.f32 %v5469, %v5469
        %v5474 = vsel %vm713, %v5470, 0.0
        %5475 = vadd.xlane.f32.xlu0 %v5474
        %v5476 = vpop.xlane.xlu0 %5475
        %v5477 = vsel %vm713, %v5471, 0.0
        %5478 = vadd.xlane.f32.xlu0 %v5477
        %v5479 = vpop.xlane.xlu0 %5478
        %v5480 = vsel %vm713, %v5472, 0.0
        %5481 = vadd.xlane.f32.xlu0 %v5480
        %v5482 = vpop.xlane.xlu0 %5481
        %v5483 = vsel %vm713, %v5473, 0.0
        %5484 = vadd.xlane.f32.xlu0 %v5483
        %v5485 = vpop.xlane.xlu0 %5484
        %v5486 = vmul.f32 %v5476, %v726
        %v5487 = vmul.f32 %v5479, %v726
        %v5488 = vmul.f32 %v5482, %v726
        %v5489 = vmul.f32 %v5485, %v726
        %v5490 = vadd.f32 %v5486, 1e-12
        %v5491 = vadd.f32 %v5487, 1e-12
        %v5492 = vadd.f32 %v5488, 1e-12
        %v5493 = vadd.f32 %v5489, 1e-12
        %v5494 = vrsqrt.pop %v5490
        %v5495 = vrsqrt.pop %v5491
        %v5496 = vrsqrt.pop %v5492
        %v5497 = vrsqrt.pop %v5493
        %v5498 = vmul.f32 %v5466, %v5494
        %v5499 = vmul.f32 %v5467, %v5495
        %v5500 = vmul.f32 %v5468, %v5496
        %v5501 = vmul.f32 %v5469, %v5497
        %v5503 = vlaneseq
        %v5504 = vshrl.u32 %v5503, 7
        %v5505 = vsub.s32 0, %v5504
        %v5506 = vrot.slane %v5447, %v5505
        %v5508 = vmul.f32 %v5498, %v5506
        %v5509 = vmul.f32 %v5499, %v5506
        %v5510 = vmul.f32 %v5500, %v5506
        %v5511 = vmul.f32 %v5501, %v5506
        %v5513 = vlaneseq
        %v5514 = vshrl.u32 %v5513, 7
        %v5515 = vsub.s32 0, %v5514
        %v5516 = vrot.slane %v5449, %v5515
        %v5518 = vadd.f32 %v5508, %v5516
        %v5519 = vadd.f32 %v5509, %v5516
        %v5520 = vadd.f32 %v5510, %v5516
        %v5521 = vadd.f32 %v5511, %v5516
        %s5522 = scalar_lea.vmem %s10, 32
        %v5523 = vld [vmem:[%s5522] sm:$0xff]
        %v5524 = vld [vmem:[%s5522 + $0x8] sm:$0xff]
        %v5525 = vld [vmem:[%s5522 + $0x10] sm:$0xff]
        %v5526 = vld [vmem:[%s5522 + $0x18] sm:$0xff]
        %s5527 = scalar_lea.vmem %s11, 1
        %v5528 = vld [vmem:[%s5527] sm:$0x1]
        %v5530 = vlaneseq
        %v5531 = vshrl.u32 %v5530, 7
        %v5532 = vsub.s32 0, %v5531
        %v5533 = vrot.slane %v5528, %v5532
        %v5536 = vsel %vm713, %v5518, 0
        %v5539 = vsel %vm713, %v5519, 0
        %v5542 = vsel %vm713, %v5520, 0
        %v5545 = vsel %vm713, %v5521, 0
        %5547 = vmatprep.subr.mxu0 0.0
        %5548 = vmatpush1.msra.mxu0 0.0
        %5549 = vmatprep.subr.mxu0 0.0
        %5550 = vmatpush1.msra.mxu0 0.0
        %5551 = vmatprep.subr.mxu0 0.0
        %5552 = vmatpush1.msra.mxu0 0.0
        %5553 = vmatprep.subr.mxu0 0.0
        %5554 = vmatpush1.msra.mxu0 0.0
        %5555 = vmatprep.subr.mxu0 0.0
        %5556 = vmatpush1.msra.mxu0 0.0
        %5557 = vmatprep.subr.mxu0 0.0
        %5558 = vmatpush1.msra.mxu0 0.0
        %5559 = vmatprep.subr.mxu0 0.0
        %5560 = vmatpush1.msra.mxu0 0.0
        %5561 = vmatprep.subr.mxu0 0.0
        %5562 = vmatpush1.msra.mxu0 0.0
        %5563 = vmatprep.subr.mxu0 0.0
        %5564 = vmatpush1.msra.mxu0 0.0
        %5565 = vmatprep.subr.mxu0 0.0
        %5566 = vmatpush1.msra.mxu0 0.0
        %5567 = vmatprep.subr.mxu0 0.0
        %5568 = vmatpush1.msra.mxu0 0.0
        %5569 = vmatprep.subr.mxu0 0.0
        %5570 = vmatpush1.msra.mxu0 0.0
        %5571 = vmatprep.subr.mxu0 0.0
        %5572 = vmatpush1.msra.mxu0 %v5526
        %5573 = vmatprep.subr.mxu0 0.0
        %5574 = vmatpush1.msra.mxu0 %v5525
        %5575 = vmatprep.subr.mxu0 0.0
        %5576 = vmatpush1.msra.mxu0 %v5524
        %5577 = vmatprep.subr.mxu0 0.0
        %5578 = vmatpush1.msra.mxu0 %v5523
        %5579 = vmatprep.subr.mxu0 0.0
        %5580 = vmatpush2.msra.mxu0 0.0
        %5581 = vmatprep.subr.mxu0 0.0
        %5582 = vmatpush2.msra.mxu0 0.0
        %5583 = vmatprep.subr.mxu0 0.0
        %5584 = vmatpush2.msra.mxu0 0.0
        %5585 = vmatprep.subr.mxu0 0.0
        %5586 = vmatpush2.msra.mxu0 0.0
        %5587 = vmatprep.subr.mxu0 0.0
        %5588 = vmatpush2.msra.mxu0 0.0
        %5589 = vmatprep.subr.mxu0 0.0
        %5590 = vmatpush2.msra.mxu0 0.0
        %5591 = vmatprep.subr.mxu0 0.0
        %5592 = vmatpush2.msra.mxu0 0.0
        %5593 = vmatprep.subr.mxu0 0.0
        %5594 = vmatpush2.msra.mxu0 0.0
        %5595 = vmatprep.subr.mxu0 0.0
        %5596 = vmatpush2.msra.mxu0 0.0
        %5597 = vmatprep.subr.mxu0 0.0
        %5598 = vmatpush2.msra.mxu0 0.0
        %5599 = vmatprep.subr.mxu0 0.0
        %5600 = vmatpush2.msra.mxu0 0.0
        %5601 = vmatprep.subr.mxu0 0.0
        %5602 = vmatpush2.msra.mxu0 0.0
        %5603 = vmatprep.subr.mxu0 0.0
        %5604 = vmatpush2.msra.mxu0 0.0
        %5605 = vmatprep.subr.mxu0 0.0
        %5606 = vmatpush2.msra.mxu0 0.0
        %5607 = vmatprep.subr.mxu0 0.0
        %5608 = vmatpush2.msra.mxu0 0.0
        %5609 = vmatprep.subr.mxu0 0.0
        %5610 = vmatpush2.msra.mxu0 0.0
        %5611 = vmatprep.mubr.f32.mxu0 0.0
        %5612 = vmatmul.mubr.f32.gmra.mxu0 %v5536
        %v5613 = vpop.f32.mrf.mxu0
        %v5614 = vadd.f32 %v5533, %v5613
        %v5615 = vpop.f32.mrf.mxu0
        %5616 = vmatprep.mubr.f32.mxu0 0.0
        %5617 = vmatmul.mubr.f32.gmra.mxu0 %v5539
        %v5618 = vpop.f32.mrf.mxu0
        %v5619 = vadd.f32 %v5533, %v5618
        %v5620 = vpop.f32.mrf.mxu0
        %5621 = vmatprep.mubr.f32.mxu0 0.0
        %5622 = vmatmul.mubr.f32.gmra.mxu0 %v5542
        %v5623 = vpop.f32.mrf.mxu0
        %v5624 = vadd.f32 %v5533, %v5623
        %v5625 = vpop.f32.mrf.mxu0
        %5626 = vmatprep.mubr.f32.mxu0 0.0
        %5627 = vmatmul.mubr.f32.gmra.mxu0 %v5545
        %v5628 = vpop.f32.mrf.mxu0
        %v5629 = vadd.f32 %v5533, %v5628
        %v5630 = vpop.f32.mrf.mxu0
        %5631 = vdwg.mxu0
        %v5632 = vmul.f32 %v5614, %v5614
        %v5633 = vmul.f32 %v5619, %v5619
        %v5634 = vmul.f32 %v5624, %v5624
        %v5635 = vmul.f32 %v5629, %v5629
        %v5636 = vmul.f32 %v5614, %v5632
        %v5637 = vmul.f32 %v5619, %v5633
        %v5638 = vmul.f32 %v5624, %v5634
        %v5639 = vmul.f32 %v5629, %v5635
        %v5640 = vmul.f32 %v5636, 0.044715
        %v5641 = vmul.f32 %v5637, 0.044715
        %v5642 = vmul.f32 %v5638, 0.044715
        %v5643 = vmul.f32 %v5639, 0.044715
        %v5644 = vadd.f32 %v5614, %v5640
        %v5645 = vadd.f32 %v5619, %v5641
        %v5646 = vadd.f32 %v5624, %v5642
        %v5647 = vadd.f32 %v5629, %v5643
        %v5648 = vmul.f32 %v5644, 0.7978846
        %v5649 = vmul.f32 %v5645, 0.7978846
        %v5650 = vmul.f32 %v5646, 0.7978846
        %v5651 = vmul.f32 %v5647, 0.7978846
        %v5652 = vtanh.pop %v5648
        %v5653 = vtanh.pop %v5649
        %v5654 = vtanh.pop %v5650
        %v5655 = vtanh.pop %v5651
        %v5656 = vadd.f32 %v5652, 1.0
        %v5657 = vadd.f32 %v5653, 1.0
        %v5658 = vadd.f32 %v5654, 1.0
        %v5659 = vadd.f32 %v5655, 1.0
        %v5660 = vmul.f32 %v5656, 0.5
        %v5661 = vmul.f32 %v5657, 0.5
        %v5662 = vmul.f32 %v5658, 0.5
        %v5663 = vmul.f32 %v5659, 0.5
        %v5664 = vmul.f32 %v5614, %v5660
        %v5665 = vmul.f32 %v5619, %v5661
        %v5666 = vmul.f32 %v5624, %v5662
        %v5667 = vmul.f32 %v5629, %v5663
        %s5668 = scalar_lea.vmem %s12, 64
        %v5669 = vld [vmem:[%s5668] sm:$0xff]
        %v5670 = vld [vmem:[%s5668 + $0x8] sm:$0xff]
        %v5671 = vld [vmem:[%s5668 + $0x10] sm:$0xff]
        %v5672 = vld [vmem:[%s5668 + $0x18] sm:$0xff]
        %v5673 = vld [vmem:[%s5668 + $0x20] sm:$0xff]
        %v5674 = vld [vmem:[%s5668 + $0x28] sm:$0xff]
        %v5675 = vld [vmem:[%s5668 + $0x30] sm:$0xff]
        %v5676 = vld [vmem:[%s5668 + $0x38] sm:$0xff]
        %s5677 = scalar_lea.vmem %s13, 1
        %v5678 = vld [vmem:[%s5677] sm:$0x1]
        %v5680 = vlaneseq
        %v5681 = vshrl.u32 %v5680, 7
        %v5682 = vsub.s32 0, %v5681
        %v5683 = vrot.slane %v5678, %v5682
        %v5686 = vsel %vm3154, %v5664, 0
        %v5689 = vsel %vm3154, %v5665, 0
        %v5692 = vsel %vm3154, %v5666, 0
        %v5695 = vsel %vm3154, %v5667, 0
        %5697 = vmatprep.subr.mxu0 0.0
        %5698 = vmatpush1.msra.mxu0 0.0
        %5699 = vmatprep.subr.mxu0 0.0
        %5700 = vmatpush1.msra.mxu0 0.0
        %5701 = vmatprep.subr.mxu0 0.0
        %5702 = vmatpush1.msra.mxu0 0.0
        %5703 = vmatprep.subr.mxu0 0.0
        %5704 = vmatpush1.msra.mxu0 0.0
        %5705 = vmatprep.subr.mxu0 0.0
        %5706 = vmatpush1.msra.mxu0 0.0
        %5707 = vmatprep.subr.mxu0 0.0
        %5708 = vmatpush1.msra.mxu0 0.0
        %5709 = vmatprep.subr.mxu0 0.0
        %5710 = vmatpush1.msra.mxu0 0.0
        %5711 = vmatprep.subr.mxu0 0.0
        %5712 = vmatpush1.msra.mxu0 0.0
        %5713 = vmatprep.subr.mxu0 0.0
        %5714 = vmatpush1.msra.mxu0 %v5676
        %5715 = vmatprep.subr.mxu0 0.0
        %5716 = vmatpush1.msra.mxu0 %v5675
        %5717 = vmatprep.subr.mxu0 0.0
        %5718 = vmatpush1.msra.mxu0 %v5674
        %5719 = vmatprep.subr.mxu0 0.0
        %5720 = vmatpush1.msra.mxu0 %v5673
        %5721 = vmatprep.subr.mxu0 0.0
        %5722 = vmatpush1.msra.mxu0 %v5672
        %5723 = vmatprep.subr.mxu0 0.0
        %5724 = vmatpush1.msra.mxu0 %v5671
        %5725 = vmatprep.subr.mxu0 0.0
        %5726 = vmatpush1.msra.mxu0 %v5670
        %5727 = vmatprep.subr.mxu0 0.0
        %5728 = vmatpush1.msra.mxu0 %v5669
        %5729 = vmatprep.subr.mxu0 0.0
        %5730 = vmatpush2.msra.mxu0 0.0
        %5731 = vmatprep.subr.mxu0 0.0
        %5732 = vmatpush2.msra.mxu0 0.0
        %5733 = vmatprep.subr.mxu0 0.0
        %5734 = vmatpush2.msra.mxu0 0.0
        %5735 = vmatprep.subr.mxu0 0.0
        %5736 = vmatpush2.msra.mxu0 0.0
        %5737 = vmatprep.subr.mxu0 0.0
        %5738 = vmatpush2.msra.mxu0 0.0
        %5739 = vmatprep.subr.mxu0 0.0
        %5740 = vmatpush2.msra.mxu0 0.0
        %5741 = vmatprep.subr.mxu0 0.0
        %5742 = vmatpush2.msra.mxu0 0.0
        %5743 = vmatprep.subr.mxu0 0.0
        %5744 = vmatpush2.msra.mxu0 0.0
        %5745 = vmatprep.subr.mxu0 0.0
        %5746 = vmatpush2.msra.mxu0 0.0
        %5747 = vmatprep.subr.mxu0 0.0
        %5748 = vmatpush2.msra.mxu0 0.0
        %5749 = vmatprep.subr.mxu0 0.0
        %5750 = vmatpush2.msra.mxu0 0.0
        %5751 = vmatprep.subr.mxu0 0.0
        %5752 = vmatpush2.msra.mxu0 0.0
        %5753 = vmatprep.subr.mxu0 0.0
        %5754 = vmatpush2.msra.mxu0 0.0
        %5755 = vmatprep.subr.mxu0 0.0
        %5756 = vmatpush2.msra.mxu0 0.0
        %5757 = vmatprep.subr.mxu0 0.0
        %5758 = vmatpush2.msra.mxu0 0.0
        %5759 = vmatprep.subr.mxu0 0.0
        %5760 = vmatpush2.msra.mxu0 0.0
        %5761 = vmatprep.mubr.f32.mxu0 0.0
        %5762 = vmatmul.mubr.f32.gmra.mxu0 %v5686
        %v5763 = vpop.f32.mrf.mxu0
        %v5764 = vadd.f32 %v5683, %v5763
        %v5765 = vpop.f32.mrf.mxu0
        %5766 = vmatprep.mubr.f32.mxu0 0.0
        %5767 = vmatmul.mubr.f32.gmra.mxu0 %v5689
        %v5768 = vpop.f32.mrf.mxu0
        %v5769 = vadd.f32 %v5683, %v5768
        %v5770 = vpop.f32.mrf.mxu0
        %5771 = vmatprep.mubr.f32.mxu0 0.0
        %5772 = vmatmul.mubr.f32.gmra.mxu0 %v5692
        %v5773 = vpop.f32.mrf.mxu0
        %v5774 = vadd.f32 %v5683, %v5773
        %v5775 = vpop.f32.mrf.mxu0
        %5776 = vmatprep.mubr.f32.mxu0 0.0
        %5777 = vmatmul.mubr.f32.gmra.mxu0 %v5695
        %v5778 = vpop.f32.mrf.mxu0
        %v5779 = vadd.f32 %v5683, %v5778
        %v5780 = vpop.f32.mrf.mxu0
        %5781 = vdwg.mxu0
        %v5782 = vadd.f32 %v5764, %v5518
        %v5783 = vadd.f32 %v5769, %v5519
        %v5784 = vadd.f32 %v5774, %v5520
        %v5785 = vadd.f32 %v5779, %v5521
        %s5786 = scalar_lea.vmem %s14, 1
        %v5787 = vld [vmem:[%s5786] sm:$0x1]
        %s5788 = scalar_lea.vmem %s15, 1
        %v5789 = vld [vmem:[%s5788] sm:$0x1]
        %v5790 = vsel %vm713, %v5782, 0.0
        %5791 = vadd.xlane.f32.xlu0 %v5790
        %v5792 = vpop.xlane.xlu0 %5791
        %v5793 = vsel %vm713, %v5783, 0.0
        %5794 = vadd.xlane.f32.xlu0 %v5793
        %v5795 = vpop.xlane.xlu0 %5794
        %v5796 = vsel %vm713, %v5784, 0.0
        %5797 = vadd.xlane.f32.xlu0 %v5796
        %v5798 = vpop.xlane.xlu0 %5797
        %v5799 = vsel %vm713, %v5785, 0.0
        %5800 = vadd.xlane.f32.xlu0 %v5799
        %v5801 = vpop.xlane.xlu0 %5800
        %v5802 = vmul.f32 %v5792, %v726
        %v5803 = vmul.f32 %v5795, %v726
        %v5804 = vmul.f32 %v5798, %v726
        %v5805 = vmul.f32 %v5801, %v726
        %v5806 = vsub.f32 %v5782, %v5802
        %v5807 = vsub.f32 %v5783, %v5803
        %v5808 = vsub.f32 %v5784, %v5804
        %v5809 = vsub.f32 %v5785, %v5805
        %v5810 = vmul.f32 %v5806, %v5806
        %v5811 = vmul.f32 %v5807, %v5807
        %v5812 = vmul.f32 %v5808, %v5808
        %v5813 = vmul.f32 %v5809, %v5809
        %v5814 = vsel %vm713, %v5810, 0.0
        %5815 = vadd.xlane.f32.xlu0 %v5814
        %v5816 = vpop.xlane.xlu0 %5815
        %v5817 = vsel %vm713, %v5811, 0.0
        %5818 = vadd.xlane.f32.xlu0 %v5817
        %v5819 = vpop.xlane.xlu0 %5818
        %v5820 = vsel %vm713, %v5812, 0.0
        %5821 = vadd.xlane.f32.xlu0 %v5820
        %v5822 = vpop.xlane.xlu0 %5821
        %v5823 = vsel %vm713, %v5813, 0.0
        %5824 = vadd.xlane.f32.xlu0 %v5823
        %v5825 = vpop.xlane.xlu0 %5824
        %v5826 = vmul.f32 %v5816, %v726
        %v5827 = vmul.f32 %v5819, %v726
        %v5828 = vmul.f32 %v5822, %v726
        %v5829 = vmul.f32 %v5825, %v726
        %v5830 = vadd.f32 %v5826, 1e-12
        %v5831 = vadd.f32 %v5827, 1e-12
        %v5832 = vadd.f32 %v5828, 1e-12
        %v5833 = vadd.f32 %v5829, 1e-12
        %v5834 = vrsqrt.pop %v5830
        %v5835 = vrsqrt.pop %v5831
        %v5836 = vrsqrt.pop %v5832
        %v5837 = vrsqrt.pop %v5833
        %v5838 = vmul.f32 %v5806, %v5834
        %v5839 = vmul.f32 %v5807, %v5835
        %v5840 = vmul.f32 %v5808, %v5836
        %v5841 = vmul.f32 %v5809, %v5837
        %v5843 = vlaneseq
        %v5844 = vshrl.u32 %v5843, 7
        %v5845 = vsub.s32 0, %v5844
        %v5846 = vrot.slane %v5787, %v5845
        %v5848 = vmul.f32 %v5838, %v5846
        %v5849 = vmul.f32 %v5839, %v5846
        %v5850 = vmul.f32 %v5840, %v5846
        %v5851 = vmul.f32 %v5841, %v5846
        %v5853 = vlaneseq
        %v5854 = vshrl.u32 %v5853, 7
        %v5855 = vsub.s32 0, %v5854
        %v5856 = vrot.slane %v5789, %v5855
        %v5858 = vadd.f32 %v5848, %v5856
        %v5859 = vadd.f32 %v5849, %v5856
        %v5860 = vadd.f32 %v5850, %v5856
        %v5861 = vadd.f32 %v5851, %v5856
        %v5862 = vlaneseq
        %v5863 = vand.u32 %v5862, 127
        %vm5864 = vcmp.lt.s32.totalorder %v5863, 0
        %v5865 = vsub.s32 0, %v5863
        %v5866 = vsel %vm5864, %v5865, %v5863
        %v5867 = vshrl.u32 %v5866, 3
        %v5868 = vand.u32 %v5866, 7
        %v5869 = vsub.s32 0, %v5868
        %v5870 = vsel %vm5864, %v5869, %v5868
        %vm5871 = vcmp.ne.s32.totalorder %v5870, 0
        %vm5872 = vcmp.lt.s32.totalorder %v5870, 0
        %vm5873 = vmand %vm5872, %vm5871
        %v5874 = vadd.s32 %v5870, 8
        %v5875 = vsel %vm5873, %v5874, %v5870
        %vm5876 = vcmp.eq.s32.totalorder %v5875, 0
        %v5877 = vsel %vm5876, 0.25, 0.0
        %v5879 = vsel %vm713, %v5877, 0
        %5881 = vmatprep.subr.mxu0 0.0
        %5882 = vmatpush1.msra.mxu0 0.0
        %5883 = vmatprep.subr.mxu0 0.0
        %5884 = vmatpush1.msra.mxu0 0.0
        %5885 = vmatprep.subr.mxu0 0.0
        %5886 = vmatpush1.msra.mxu0 0.0
        %5887 = vmatprep.subr.mxu0 0.0
        %5888 = vmatpush1.msra.mxu0 0.0
        %5889 = vmatprep.subr.mxu0 0.0
        %5890 = vmatpush1.msra.mxu0 0.0
        %5891 = vmatprep.subr.mxu0 0.0
        %5892 = vmatpush1.msra.mxu0 0.0
        %5893 = vmatprep.subr.mxu0 0.0
        %5894 = vmatpush1.msra.mxu0 0.0
        %5895 = vmatprep.subr.mxu0 0.0
        %5896 = vmatpush1.msra.mxu0 0.0
        %5897 = vmatprep.subr.mxu0 0.0
        %5898 = vmatpush1.msra.mxu0 0.0
        %5899 = vmatprep.subr.mxu0 0.0
        %5900 = vmatpush1.msra.mxu0 0.0
        %5901 = vmatprep.subr.mxu0 0.0
        %5902 = vmatpush1.msra.mxu0 0.0
        %5903 = vmatprep.subr.mxu0 0.0
        %5904 = vmatpush1.msra.mxu0 0.0
        %5905 = vmatprep.subr.mxu0 0.0
        %5906 = vmatpush1.msra.mxu0 %v5861
        %5907 = vmatprep.subr.mxu0 0.0
        %5908 = vmatpush1.msra.mxu0 %v5860
        %5909 = vmatprep.subr.mxu0 0.0
        %5910 = vmatpush1.msra.mxu0 %v5859
        %5911 = vmatprep.subr.mxu0 0.0
        %5912 = vmatpush1.msra.mxu0 %v5858
        %5913 = vmatprep.subr.mxu0 0.0
        %5914 = vmatpush2.msra.mxu0 0.0
        %5915 = vmatprep.subr.mxu0 0.0
        %5916 = vmatpush2.msra.mxu0 0.0
        %5917 = vmatprep.subr.mxu0 0.0
        %5918 = vmatpush2.msra.mxu0 0.0
        %5919 = vmatprep.subr.mxu0 0.0
        %5920 = vmatpush2.msra.mxu0 0.0
        %5921 = vmatprep.subr.mxu0 0.0
        %5922 = vmatpush2.msra.mxu0 0.0
        %5923 = vmatprep.subr.mxu0 0.0
        %5924 = vmatpush2.msra.mxu0 0.0
        %5925 = vmatprep.subr.mxu0 0.0
        %5926 = vmatpush2.msra.mxu0 0.0
        %5927 = vmatprep.subr.mxu0 0.0
        %5928 = vmatpush2.msra.mxu0 0.0
        %5929 = vmatprep.subr.mxu0 0.0
        %5930 = vmatpush2.msra.mxu0 0.0
        %5931 = vmatprep.subr.mxu0 0.0
        %5932 = vmatpush2.msra.mxu0 0.0
        %5933 = vmatprep.subr.mxu0 0.0
        %5934 = vmatpush2.msra.mxu0 0.0
        %5935 = vmatprep.subr.mxu0 0.0
        %5936 = vmatpush2.msra.mxu0 0.0
        %5937 = vmatprep.subr.mxu0 0.0
        %5938 = vmatpush2.msra.mxu0 0.0
        %5939 = vmatprep.subr.mxu0 0.0
        %5940 = vmatpush2.msra.mxu0 0.0
        %5941 = vmatprep.subr.mxu0 0.0
        %5942 = vmatpush2.msra.mxu0 0.0
        %5943 = vmatprep.subr.mxu0 0.0
        %5944 = vmatpush2.msra.mxu0 0.0
        %5945 = vmatprep.mubr.f32.mxu0 0.0
        %5946 = vmatmul.mubr.f32.gmra.mxu0 %v5879
        %v5947 = vpop.f32.mrf.mxu0
        %v5948 = vadd.f32 0.0, %v5947
        %v5949 = vpop.f32.mrf.mxu0
        %5950 = vdwg.mxu0
        %v5951 = vld [vmem:[%s16] sm:$0xff]
        %v5952 = vld [vmem:[%s16 + $0x8] sm:$0xff]
        %v5953 = vld [vmem:[%s16 + $0x10] sm:$0xff]
        %v5954 = vld [vmem:[%s16 + $0x18] sm:$0xff]
        %v5955 = vld [vmem:[%s17] sm:$0x1]
        %v5957 = vsel %vm713, %v5948, 0
        %5959 = vmatprep.subr.mxu0 0.0
        %5960 = vmatpush1.msra.mxu0 0.0
        %5961 = vmatprep.subr.mxu0 0.0
        %5962 = vmatpush1.msra.mxu0 0.0
        %5963 = vmatprep.subr.mxu0 0.0
        %5964 = vmatpush1.msra.mxu0 0.0
        %5965 = vmatprep.subr.mxu0 0.0
        %5966 = vmatpush1.msra.mxu0 0.0
        %5967 = vmatprep.subr.mxu0 0.0
        %5968 = vmatpush1.msra.mxu0 0.0
        %5969 = vmatprep.subr.mxu0 0.0
        %5970 = vmatpush1.msra.mxu0 0.0
        %5971 = vmatprep.subr.mxu0 0.0
        %5972 = vmatpush1.msra.mxu0 0.0
        %5973 = vmatprep.subr.mxu0 0.0
        %5974 = vmatpush1.msra.mxu0 0.0
        %5975 = vmatprep.subr.mxu0 0.0
        %5976 = vmatpush1.msra.mxu0 0.0
        %5977 = vmatprep.subr.mxu0 0.0
        %5978 = vmatpush1.msra.mxu0 0.0
        %5979 = vmatprep.subr.mxu0 0.0
        %5980 = vmatpush1.msra.mxu0 0.0
        %5981 = vmatprep.subr.mxu0 0.0
        %5982 = vmatpush1.msra.mxu0 0.0
        %5983 = vmatprep.subr.mxu0 0.0
        %5984 = vmatpush1.msra.mxu0 %v5954
        %5985 = vmatprep.subr.mxu0 0.0
        %5986 = vmatpush1.msra.mxu0 %v5953
        %5987 = vmatprep.subr.mxu0 0.0
        %5988 = vmatpush1.msra.mxu0 %v5952
        %5989 = vmatprep.subr.mxu0 0.0
        %5990 = vmatpush1.msra.mxu0 %v5951
        %5991 = vmatprep.subr.mxu0 0.0
        %5992 = vmatpush2.msra.mxu0 0.0
        %5993 = vmatprep.subr.mxu0 0.0
        %5994 = vmatpush2.msra.mxu0 0.0
        %5995 = vmatprep.subr.mxu0 0.0
        %5996 = vmatpush2.msra.mxu0 0.0
        %5997 = vmatprep.subr.mxu0 0.0
        %5998 = vmatpush2.msra.mxu0 0.0
        %5999 = vmatprep.subr.mxu0 0.0
        %6000 = vmatpush2.msra.mxu0 0.0
        %6001 = vmatprep.subr.mxu0 0.0
        %6002 = vmatpush2.msra.mxu0 0.0
        %6003 = vmatprep.subr.mxu0 0.0
        %6004 = vmatpush2.msra.mxu0 0.0
        %6005 = vmatprep.subr.mxu0 0.0
        %6006 = vmatpush2.msra.mxu0 0.0
        %6007 = vmatprep.subr.mxu0 0.0
        %6008 = vmatpush2.msra.mxu0 0.0
        %6009 = vmatprep.subr.mxu0 0.0
        %6010 = vmatpush2.msra.mxu0 0.0
        %6011 = vmatprep.subr.mxu0 0.0
        %6012 = vmatpush2.msra.mxu0 0.0
        %6013 = vmatprep.subr.mxu0 0.0
        %6014 = vmatpush2.msra.mxu0 0.0
        %6015 = vmatprep.subr.mxu0 0.0
        %6016 = vmatpush2.msra.mxu0 0.0
        %6017 = vmatprep.subr.mxu0 0.0
        %6018 = vmatpush2.msra.mxu0 0.0
        %6019 = vmatprep.subr.mxu0 0.0
        %6020 = vmatpush2.msra.mxu0 0.0
        %6021 = vmatprep.subr.mxu0 0.0
        %6022 = vmatpush2.msra.mxu0 0.0
        %6023 = vmatprep.mubr.f32.mxu0 0.0
        %6024 = vmatmul.mubr.f32.gmra.mxu0 %v5957
        %v6025 = vpop.f32.mrf.mxu0
        %v6026 = vadd.f32 %v5955, %v6025
        %v6027 = vpop.f32.mrf.mxu0
        %6028 = vdwg.mxu0
        %vm6029 = vcmask 122880
        %6030 = vst.msk [vmem:[%s665] sm:$0x1] %vm6029, %v6026
        %v6031 = vld [vmem:[%s18] sm:$0xff]
        %v6032 = vld [vmem:[%s18 + $0x8] sm:$0xff]
        %v6033 = vld [vmem:[%s19] sm:$0x1]
        %v6035 = vsel %vm1092, %v6026, 0
        %6037 = vmatprep.subr.mxu0 0.0
        %6038 = vmatpush1.msra.mxu0 0.0
        %6039 = vmatprep.subr.mxu0 0.0
        %6040 = vmatpush1.msra.mxu0 0.0
        %6041 = vmatprep.subr.mxu0 0.0
        %6042 = vmatpush1.msra.mxu0 0.0
        %6043 = vmatprep.subr.mxu0 0.0
        %6044 = vmatpush1.msra.mxu0 0.0
        %6045 = vmatprep.subr.mxu0 0.0
        %6046 = vmatpush1.msra.mxu0 0.0
        %6047 = vmatprep.subr.mxu0 0.0
        %6048 = vmatpush1.msra.mxu0 0.0
        %6049 = vmatprep.subr.mxu0 0.0
        %6050 = vmatpush1.msra.mxu0 0.0
        %6051 = vmatprep.subr.mxu0 0.0
        %6052 = vmatpush1.msra.mxu0 0.0
        %6053 = vmatprep.subr.mxu0 0.0
        %6054 = vmatpush1.msra.mxu0 0.0
        %6055 = vmatprep.subr.mxu0 0.0
        %6056 = vmatpush1.msra.mxu0 0.0
        %6057 = vmatprep.subr.mxu0 0.0
        %6058 = vmatpush1.msra.mxu0 0.0
        %6059 = vmatprep.subr.mxu0 0.0
        %6060 = vmatpush1.msra.mxu0 0.0
        %6061 = vmatprep.subr.mxu0 0.0
        %6062 = vmatpush1.msra.mxu0 0.0
        %6063 = vmatprep.subr.mxu0 0.0
        %6064 = vmatpush1.msra.mxu0 0.0
        %6065 = vmatprep.subr.mxu0 0.0
        %6066 = vmatpush1.msra.mxu0 %v6032
        %6067 = vmatprep.subr.mxu0 0.0
        %6068 = vmatpush1.msra.mxu0 %v6031
        %6069 = vmatprep.subr.mxu0 0.0
        %6070 = vmatpush2.msra.mxu0 0.0
        %6071 = vmatprep.subr.mxu0 0.0
        %6072 = vmatpush2.msra.mxu0 0.0
        %6073 = vmatprep.subr.mxu0 0.0
        %6074 = vmatpush2.msra.mxu0 0.0
        %6075 = vmatprep.subr.mxu0 0.0
        %6076 = vmatpush2.msra.mxu0 0.0
        %6077 = vmatprep.subr.mxu0 0.0
        %6078 = vmatpush2.msra.mxu0 0.0
        %6079 = vmatprep.subr.mxu0 0.0
        %6080 = vmatpush2.msra.mxu0 0.0
        %6081 = vmatprep.subr.mxu0 0.0
        %6082 = vmatpush2.msra.mxu0 0.0
        %6083 = vmatprep.subr.mxu0 0.0
        %6084 = vmatpush2.msra.mxu0 0.0
        %6085 = vmatprep.subr.mxu0 0.0
        %6086 = vmatpush2.msra.mxu0 0.0
        %6087 = vmatprep.subr.mxu0 0.0
        %6088 = vmatpush2.msra.mxu0 0.0
        %6089 = vmatprep.subr.mxu0 0.0
        %6090 = vmatpush2.msra.mxu0 0.0
        %6091 = vmatprep.subr.mxu0 0.0
        %6092 = vmatpush2.msra.mxu0 0.0
        %6093 = vmatprep.subr.mxu0 0.0
        %6094 = vmatpush2.msra.mxu0 0.0
        %6095 = vmatprep.subr.mxu0 0.0
        %6096 = vmatpush2.msra.mxu0 0.0
        %6097 = vmatprep.subr.mxu0 0.0
        %6098 = vmatpush2.msra.mxu0 0.0
        %6099 = vmatprep.subr.mxu0 0.0
        %6100 = vmatpush2.msra.mxu0 0.0
        %6101 = vmatprep.mubr.f32.mxu0 0.0
        %6102 = vmatmul.mubr.f32.gmra.mxu0 %v6035
        %v6103 = vpop.f32.mrf.mxu0
        %v6104 = vadd.f32 %v6033, %v6103
        %v6105 = vpop.f32.mrf.mxu0
        %6106 = vdwg.mxu0
        %v6107 = vxor.u32 %v6104, 2147483648
        %v6108 = vmul.f32 %v6107, 1.442695
        %v6109 = vpow.pop %v6108
        %v6110 = vadd.f32 %v6109, 1.0
        %v6111 = vrcp.pop %v6110
        %v6112 = vmul.f32 1.0, %v6111
        %vm6113 = vcmask 16384
        %6114 = vst.msk [vmem:[%s671] sm:$0x1] %vm6113, %v6112
        %s6115 = sand.u32 %s477, 1
        %s6116 = scalar_lea.sflag [#allocation3], %s6115
        %s6117 = sand.u32 %s477, 1
        %s6118 = scalar_lea.vmem [#allocation2], %s6117
        %s6119 = sand.u32 %s503, 1
        %s6120 = scalar_lea.sflag [#allocation5], %s6119
        %s6121 = sand.u32 %s503, 1
        %s6122 = scalar_lea.vmem [#allocation4], %s6121
        // Predicated region
        $region101: #{bert_for_representation.1} parent=99 // pred_check
          %p6123 = pneg %p487
        $region102: #{bert_for_representation.1} parent=99 // pred_check_branch
          %6125 = sbr.rel (%p6123) target = $region104
        $region103: #{bert_for_representation.1} parent=99 // pred_region
          %s6127 = ssub.s32 16, 16
          %6128 = vsyncadd %s6116, %s6127
          %s6129 = smul.addr %s39, 16
          %s6130 = scalar_lea.hbm %s20, %s6129
          %s6132 = sshll.u32 %s6118, 4
          %s6133 = int_to_ptr.vmem [resolvable:$true] %s6132
          %6135 = dma.vmem_to_hbm [thread:$0]  %s6133, 16, %s6130, %s6116
        $region104: #{bert_for_representation.1} parent=99 // pred_fallthru
          _
        // Predicated region
        $region105: #{bert_for_representation.1} parent=99 // pred_check
          %p6136 = pneg %p513
        $region106: #{bert_for_representation.1} parent=99 // pred_check_branch
          %6138 = sbr.rel (%p6136) target = $region108
        $region107: #{bert_for_representation.1} parent=99 // pred_region
          %s6140 = ssub.s32 16, 16
          %6141 = vsyncadd %s6120, %s6140
          %s6142 = smul.addr %s39, 16
          %s6143 = scalar_lea.hbm %s21, %s6142
          %s6145 = sshll.u32 %s6122, 4
          %s6146 = int_to_ptr.vmem [resolvable:$true] %s6145
          %6148 = dma.vmem_to_hbm [thread:$0]  %s6146, 16, %s6143, %s6120
        $region108: #{bert_for_representation.1} parent=99 // pred_fallthru
          _
      $region100: #{bert_for_representation.1} parent=5 // pred_fallthru
        _
      %p6149 = scmp.le.s32.totalorder 2, %s34
      // Predicated region
      $region109: #{bert_for_representation.1} parent=5 // pred_check
        %p6150 = pneg %p6149
      $region110: #{bert_for_representation.1} parent=5 // pred_check_branch
        %6152 = sbr.rel (%p6150) target = $region112
      $region111: #{bert_for_representation.1} parent=5 // pred_region
        %s6153 = ssub.s32 %s34, 2
        // Predicated region
        $region113: #{bert_for_representation.1} parent=111 // pred_check
          %p6154 = pneg %p493
        $region114: #{bert_for_representation.1} parent=111 // pred_check_branch
          %6156 = sbr.rel (%p6154) target = $region116
        $region115: #{bert_for_representation.1} parent=111 // pred_region
          %s6157 = sand.u32 %s478, 1
          %s6158 = scalar_lea.sflag [#allocation3], %s6157
          %s6159 = sand.u32 %s478, 1
          %s6160 = scalar_lea.vmem [#allocation2], %s6159
          %6161 = dma.done %s6158, 16
        $region116: #{bert_for_representation.1} parent=111 // pred_fallthru
          _
        // Predicated region
        $region117: #{bert_for_representation.1} parent=111 // pred_check
          %p6162 = pneg %p519
        $region118: #{bert_for_representation.1} parent=111 // pred_check_branch
          %6164 = sbr.rel (%p6162) target = $region120
        $region119: #{bert_for_representation.1} parent=111 // pred_region
          %s6165 = sand.u32 %s504, 1
          %s6166 = scalar_lea.sflag [#allocation5], %s6165
          %s6167 = sand.u32 %s504, 1
          %s6168 = scalar_lea.vmem [#allocation4], %s6167
          %6169 = dma.done %s6166, 16
        $region120: #{bert_for_representation.1} parent=111 // pred_fallthru
          _
      $region112: #{bert_for_representation.1} parent=5 // pred_fallthru
        _
    $region6: #{bert_for_representation.1} parent=1 // loop_footer
      %s38 = sadd.s32 1, %s34
    $region7: #{bert_for_representation.1} parent=1 // loop_footer_branch
      %33 = sbr.rel target = $region3
    $region8: #{bert_for_representation.1} parent=1 // loop_exit
      _
    %6170 = vsyncpa [#allocation3], 1
    %s6171 = scalar_lea.sflag [#allocation3], 1
    %6172 = vsyncpa %s6171, 1
    %6173 = vsyncpa [#allocation5], 1
    %s6174 = scalar_lea.sflag [#allocation5], 1
    %6175 = vsyncpa %s6174, 1

</llo_original>
